<compile_context>
chip_gen: v7x
topology: tpu7x:2x2x1
jax: 0.10.0
libtpu: 0.0.40
codegen_flags: <defaults>
</compile_context>

<pallas_src>
import numpy as np

import jax
import jax.numpy as jnp
from jax import lax
from jax.experimental import pallas as pl
from jax.experimental.pallas import tpu as pltpu

H_IN, W_IN = 28, 40          # input spatial size required by Linear(64*7*10, 128)


# ----------------------------------------------------------------------------
# Kernel 1: conv1 (1->32, 5x5, pad 2) + bias + ReLU + 2x2 max-pool
# ----------------------------------------------------------------------------
def _stage1_kernel(x_ref, t1_ref, b1_ref, o_ref, xp_ref):
    # x_ref : (1, 28, 40)   one image (channel dim squeezed)
    # t1_ref: (220, 1280)   Toeplitz-expanded conv1 weights, cols = (w%2, w//2, c)
    # b1_ref: (1, 1280)     conv1 bias tiled to the same column layout
    # o_ref : (1, 16, 704)  pooled output, zero-padded for conv2  (== (16,22,32) flat)
    # xp_ref: (32, 44)      VMEM scratch: zero-padded input
    xp_ref[...] = jnp.zeros_like(xp_ref)
    xp_ref[2:2 + 28, 2:2 + 40] = x_ref[0]

    # in-kernel im2col over the 5 vertical taps, concatenated along K (lanes).
    x_cat = jnp.concatenate([xp_ref[di:di + 28, :] for di in range(5)], axis=1)   # (28, 220)

    # conv1 + bias + ReLU on the MXU; N=1280 is lane-dense.
    y = jnp.dot(x_cat, t1_ref[...], preferred_element_type=jnp.float32)           # (28, 1280)
    y = jnp.maximum(y + b1_ref[...], 0.0)

    # 2x2 max-pool.  Width pool == max of the even-w / odd-w 640-lane halves.
    yw = jnp.maximum(y[:, :640], y[:, 640:])                                       # (28, 640)
    # Height pool over row pairs.
    rows = [jnp.maximum(yw[2 * h:2 * h + 1, :], yw[2 * h + 1:2 * h + 2, :])
            for h in range(14)]
    pooled = jnp.concatenate(rows, axis=0)                                         # (14, 640)

    # Write the zero-padded (padding=1 for conv2) activation: rows 1..14, lanes 32..671.
    o_ref[...] = jnp.zeros_like(o_ref)
    o_ref[0, 1:15, 32:672] = pooled


def _stage1(x, t1, b1row):
    B = x.shape[0]
    return pl.pallas_call(
        _stage1_kernel,
        out_shape=jax.ShapeDtypeStruct((B, 16, 704), jnp.float32),
        grid=(B,),
        in_specs=[
            pl.BlockSpec((1, H_IN, W_IN), lambda b: (b, 0, 0)),
            pl.BlockSpec((220, 1280), lambda b: (0, 0)),
            pl.BlockSpec((1, 1280), lambda b: (0, 0)),
        ],
        out_specs=pl.BlockSpec((1, 16, 704), lambda b: (b, 0, 0)),
        scratch_shapes=[pltpu.VMEM((32, 44), jnp.float32)],
        compiler_params=pltpu.CompilerParams(
            dimension_semantics=("parallel",),
            vmem_limit_bytes=32 * 1024 * 1024),
    )(x, t1, b1row)


# ----------------------------------------------------------------------------
# Kernel 2: conv2 (32->64, 3x3, pad 1) + bias + ReLU + 2x2 max-pool
# ----------------------------------------------------------------------------
def _stage2_kernel(x_ref, w2_ref, b2_ref, o_ref):
    # x_ref : (1, 16, 22, 32)  zero-padded pooled conv1 activations (NHWC)
    # w2_ref: (288, 64)        conv2 weights, rows = (di, dj, cin)
    # b2_ref: (1, 64)
    # o_ref : (1, 7, 10, 64)
    conv_rows = []
    for h in range(14):
        patches = jnp.concatenate(
            [x_ref[0, h + di, dj:dj + 20, :] for di in range(3) for dj in range(3)],
            axis=1)                                                                # (20, 288)
        y = jnp.dot(patches, w2_ref[...], preferred_element_type=jnp.float32)      # (20, 64)
        conv_rows.append(jnp.maximum(y + b2_ref[...], 0.0))

    pooled = []
    for ho in range(7):
        m = jnp.maximum(conv_rows[2 * ho], conv_rows[2 * ho + 1])                  # (20, 64)
        wrows = [jnp.maximum(m[2 * w:2 * w + 1, :], m[2 * w + 1:2 * w + 2, :])
                 for w in range(10)]
        pooled.append(jnp.concatenate(wrows, axis=0))                              # (10, 64)
    o_ref[0] = jnp.stack(pooled, axis=0)                                           # (7, 10, 64)


def _stage2(xp2, w2cat, b2row):
    B = xp2.shape[0]
    return pl.pallas_call(
        _stage2_kernel,
        out_shape=jax.ShapeDtypeStruct((B, 7, 10, 64), jnp.float32),
        grid=(B,),
        in_specs=[
            pl.BlockSpec((1, 16, 22, 32), lambda b: (b, 0, 0, 0)),
            pl.BlockSpec((288, 64), lambda b: (0, 0)),
            pl.BlockSpec((1, 64), lambda b: (0, 0)),
        ],
        out_specs=pl.BlockSpec((1, 7, 10, 64), lambda b: (b, 0, 0, 0)),
        compiler_params=pltpu.CompilerParams(
            dimension_semantics=("parallel",),
            vmem_limit_bytes=32 * 1024 * 1024),
    )(xp2, w2cat, b2row)


# ----------------------------------------------------------------------------
# Kernel 3: fc1 (4480->128) + fc2 (128->20), fused; (B,128) stays in VMEM.
# ----------------------------------------------------------------------------
def _fc_kernel(x_ref, w3_ref, b3_ref, w4_ref, b4_ref, o_ref):
    h = jnp.dot(x_ref[...], w3_ref[...], preferred_element_type=jnp.float32) + b3_ref[...]
    # TODO(synk): nn.Dropout(0.6) is identity at inference (eval mode); no RNG applied.
    o_ref[...] = jnp.dot(h, w4_ref[...], preferred_element_type=jnp.float32) + b4_ref[...]


def _fc(xf, w3hwc, b3row, w4t, b4row):
    B = xf.shape[0]
    return pl.pallas_call(
        _fc_kernel,
        out_shape=jax.ShapeDtypeStruct((B, 20), jnp.float32),
        grid=(1,),
        in_specs=[
            pl.BlockSpec((B, 4480), lambda i: (0, 0)),
            pl.BlockSpec((4480, 128), lambda i: (0, 0)),
            pl.BlockSpec((1, 128), lambda i: (0, 0)),
            pl.BlockSpec((128, 20), lambda i: (0, 0)),
            pl.BlockSpec((1, 20), lambda i: (0, 0)),
        ],
        out_specs=pl.BlockSpec((B, 20), lambda i: (0, 0)),
        compiler_params=pltpu.CompilerParams(
            dimension_semantics=("arbitrary",),
            vmem_limit_bytes=32 * 1024 * 1024),
    )(xf, w3hwc, b3row, w4t, b4row)


# ----------------------------------------------------------------------------
# One-time weight preparation (hoisted out of the forward pass).
# ----------------------------------------------------------------------------
def prepare_params(params):
    w1 = np.asarray(params["w1"], np.float32)   # (32, 1, 5, 5)
    b1 = np.asarray(params["b1"], np.float32)
    w2 = np.asarray(params["w2"], np.float32)   # (64, 32, 3, 3)
    b2 = np.asarray(params["b2"], np.float32)
    w3 = np.asarray(params["w3"], np.float32)   # (128, 4480)
    b3 = np.asarray(params["b3"], np.float32)
    w4 = np.asarray(params["w4"], np.float32)   # (20, 128)
    b4 = np.asarray(params["b4"], np.float32)

    # conv1 as a Toeplitz-over-width matmul:
    #   K rows : di*44 + wp (5 vertical taps x 44 padded-width positions)
    #   N cols : (w%2)*640 + (w//2)*32 + c  (parity split -> 2x2 w-pool == halves max)
    t1 = np.zeros((5 * 44, 1280), np.float32)
    b1row = np.zeros((1, 1280), np.float32)
    for w in range(40):
        col = (w % 2) * 640 + (w // 2) * 32
        b1row[0, col:col + 32] = b1
        for di in range(5):
            for dj in range(5):
                t1[di * 44 + w + dj, col:col + 32] = w1[:, 0, di, dj]

    # conv2 weights in im2col order: rows = (di, dj, cin), cols = cout.
    w2cat = np.transpose(w2, (2, 3, 1, 0)).reshape(9 * 32, 64)

    # fc1 weights with rows permuted from PyTorch's NCHW-flatten order (c,h,w)
    # to the kernels' (h,w,c) order, so no activation transpose is needed.
    w3hwc = np.transpose(w3.T.reshape(64, 7, 10, 128), (1, 2, 0, 3)).reshape(4480, 128)

    return {
        "t1": jnp.asarray(t1),
        "b1row": jnp.asarray(b1row),
        "w2cat": jnp.asarray(w2cat),
        "b2row": jnp.asarray(b2.reshape(1, 64)),
        "w3hwc": jnp.asarray(w3hwc),
        "b3row": jnp.asarray(b3.reshape(1, 128)),
        "w4t": jnp.asarray(np.ascontiguousarray(w4.T)),
        "b4row": jnp.asarray(b4.reshape(1, 20)),
    }


# ----------------------------------------------------------------------------
# Forward pass (mirrors CNN.forward).  Only free row-major reshapes in XLA.
# ----------------------------------------------------------------------------
def cnn_forward(x_nchw, prep):
    B = x_nchw.shape[0]
    assert x_nchw.shape[1:] == (1, H_IN, W_IN)
    x = x_nchw.reshape(B, H_IN, W_IN)                         # C=1: free
    y1 = _stage1(x, prep["t1"], prep["b1row"])                # (B, 16, 704)
    xp2 = y1.reshape(B, 16, 22, 32)                           # minor-dim split: free
    y2 = _stage2(xp2, prep["w2cat"], prep["b2row"])           # (B, 7, 10, 64)
    xf = y2.reshape(B, 7 * 10 * 64)                           # minor-dim merge: free
    out = _fc(xf, prep["w3hwc"], prep["b3row"], prep["w4t"], prep["b4row"])  # (B, 20)
    return out[:, :10], out[:, 10:]


# ----------------------------------------------------------------------------
# Deterministic parameter init (PyTorch-style uniform(-1/sqrt(fan_in), +))
# ----------------------------------------------------------------------------
def _uniform(k, shape, fan_in):
    bound = 1.0 / (fan_in ** 0.5)
    return jax.random.uniform(k, shape, jnp.float32, -bound, bound)


def init_params(key):
    ks = jax.random.split(key, 8)
    return {
        "w1": _uniform(ks[0], (32, 1, 5, 5), 1 * 5 * 5),
        "b1": _uniform(ks[1], (32,), 1 * 5 * 5),
        "w2": _uniform(ks[2], (64, 32, 3, 3), 32 * 3 * 3),
        "b2": _uniform(ks[3], (64,), 32 * 3 * 3),
        "w3": _uniform(ks[4], (128, 64 * 7 * 10), 64 * 7 * 10),
        "b3": _uniform(ks[5], (128,), 64 * 7 * 10),
        "w4": _uniform(ks[6], (20, 128), 128),
        "b4": _uniform(ks[7], (20,), 128),
    }


# Plain-JAX reference (for a self-check of the layout plumbing).
def _reference_forward(x_nchw, params):
    hi = lax.Precision.HIGHEST
    y = lax.conv_general_dilated(x_nchw, params["w1"], (1, 1), ((2, 2), (2, 2)),
                                 dimension_numbers=("NCHW", "OIHW", "NCHW"), precision=hi)
    y = jnp.maximum(y + params["b1"][None, :, None, None], 0.0)
    y = lax.reduce_window(y, -jnp.inf, lax.max, (1, 1, 2, 2), (1, 1, 2, 2), "VALID")
    y = lax.conv_general_dilated(y, params["w2"], (1, 1), ((1, 1), (1, 1)),
                                 dimension_numbers=("NCHW", "OIHW", "NCHW"), precision=hi)
    y = jnp.maximum(y + params["b2"][None, :, None, None], 0.0)
    y = lax.reduce_window(y, -jnp.inf, lax.max, (1, 1, 2, 2), (1, 1, 2, 2), "VALID")
    y = y.reshape(y.shape[0], -1)
    y = jnp.dot(y, params["w3"].T, precision=hi) + params["b3"]
    y = jnp.dot(y, params["w4"].T, precision=hi) + params["b4"]
    return y[:, :10], y[:, 10:]


if __name__ == "__main__":
    key = jax.random.PRNGKey(0)
    pkey, xkey = jax.random.split(key)
    params = init_params(pkey)
    prep = prepare_params(params)

    # Input spatial size 28x40 is required by Linear(64*7*10, 128).
    x = jax.random.normal(xkey, (2, 1, H_IN, W_IN), jnp.float32)

    fwd = jax.jit(cnn_forward)
    first_digit, second_digit = fwd(x, prep)
    jax.block_until_ready((first_digit, second_digit))

    assert first_digit.shape == (2, 10) and second_digit.shape == (2, 10)
    assert first_digit.dtype == jnp.float32 and second_digit.dtype == jnp.float32

    # Numerical self-check against a plain-JAX/XLA reference.
    ref1, ref2 = jax.jit(_reference_forward)(x, params)
    np.testing.assert_allclose(np.asarray(first_digit), np.asarray(ref1), rtol=5e-3, atol=5e-3)
    np.testing.assert_allclose(np.asarray(second_digit), np.asarray(ref2), rtol=5e-3, atol=5e-3)

    print("KERNEL_OK")
</pallas_src>

<mosaic_0001>
module attributes {stable_mosaic.version = 11 : i64} {
  func.func @_stage1_kernel(%arg0: i32, %arg1: memref<1x28x40xf32, #tpu.memory_space<vmem>>, %arg2: memref<220x1280xf32, #tpu.memory_space<vmem>>, %arg3: memref<1x1280xf32, #tpu.memory_space<vmem>>, %arg4: memref<1x16x704xf32, #tpu.memory_space<vmem>>, %arg5: memref<32x44xf32, #tpu.memory_space<vmem>>) attributes {dimension_semantics = [#tpu.dimension_semantics<parallel>], iteration_bounds = array<i64: 2>, scalar_prefetch = 0 : i64, scratch_operands = 1 : i64, tpu.core_type = #tpu.core_type<tc>, window_params = [{transform_indices = @transform_0, window_bounds = array<i64: 1, 28, 40>}, {pipeline_mode = #tpu.pipeline_mode<synchronous>, transform_indices = @transform_1, window_bounds = array<i64: 220, 1280>}, {pipeline_mode = #tpu.pipeline_mode<synchronous>, transform_indices = @transform_2, window_bounds = array<i64: 1, 1280>}, {transform_indices = @transform_3, window_bounds = array<i64: 1, 16, 704>}]} {
    %cst = arith.constant 0.000000e+00 : f32
    %0 = vector.broadcast %cst : f32 to vector<32x44xf32>
    %c0 = arith.constant 0 : index
    %c0_0 = arith.constant 0 : index
    %1 = vector.load %arg5[%c0, %c0_0] : memref<32x44xf32, #tpu.memory_space<vmem>>, vector<32x44xf32>
    tpu.vector_store %arg5[%c0, %c0_0], %0 {strides = array<i32>} : memref<32x44xf32, #tpu.memory_space<vmem>>, vector<32x44xf32>,
    %c0_1 = arith.constant 0 : index
    %c0_2 = arith.constant 0 : index
    %c0_3 = arith.constant 0 : index
    %2 = vector.load %arg1[%c0_1, %c0_2, %c0_3] : memref<1x28x40xf32, #tpu.memory_space<vmem>>, vector<1x28x40xf32>
    %3 = vector.shape_cast %2 : vector<1x28x40xf32> to vector<28x40xf32>
    %c2 = arith.constant 2 : index
    %c2_4 = arith.constant 2 : index
    %4 = vector.load %arg5[%c2, %c2_4] : memref<32x44xf32, #tpu.memory_space<vmem>>, vector<28x40xf32>
    tpu.vector_store %arg5[%c2, %c2_4], %3 {strides = array<i32>} : memref<32x44xf32, #tpu.memory_space<vmem>>, vector<28x40xf32>,
    %c0_5 = arith.constant 0 : index
    %c0_6 = arith.constant 0 : index
    %5 = vector.load %arg5[%c0_5, %c0_6] : memref<32x44xf32, #tpu.memory_space<vmem>>, vector<28x44xf32>
    %c1 = arith.constant 1 : index
    %c0_7 = arith.constant 0 : index
    %6 = vector.load %arg5[%c1, %c0_7] : memref<32x44xf32, #tpu.memory_space<vmem>>, vector<28x44xf32>
    %c2_8 = arith.constant 2 : index
    %c0_9 = arith.constant 0 : index
    %7 = vector.load %arg5[%c2_8, %c0_9] : memref<32x44xf32, #tpu.memory_space<vmem>>, vector<28x44xf32>
    %c3 = arith.constant 3 : index
    %c0_10 = arith.constant 0 : index
    %8 = vector.load %arg5[%c3, %c0_10] : memref<32x44xf32, #tpu.memory_space<vmem>>, vector<28x44xf32>
    %c4 = arith.constant 4 : index
    %c0_11 = arith.constant 0 : index
    %9 = vector.load %arg5[%c4, %c0_11] : memref<32x44xf32, #tpu.memory_space<vmem>>, vector<28x44xf32>
    %10 = tpu.concatenate %5, %6, %7, %8, %9 in 1 : vector<28x44xf32>, vector<28x44xf32>, vector<28x44xf32>, vector<28x44xf32>, vector<28x44xf32> -> vector<28x220xf32>
    %c0_12 = arith.constant 0 : index
    %c0_13 = arith.constant 0 : index
    %11 = vector.load %arg2[%c0_12, %c0_13] : memref<220x1280xf32, #tpu.memory_space<vmem>>, vector<220x1280xf32>
    %cst_14 = arith.constant dense<0.000000e+00> : vector<28x1280xf32>
    %12 = tpu.matmul %10, %11, %cst_14 {dimension_numbers = #tpu.dot_dimension_numbers<[1], [0], [0], [1], [0, 0, 1, 1], [], []>} : vector<28x220xf32>, vector<220x1280xf32>, vector<28x1280xf32> -> vector<28x1280xf32>
    %c0_15 = arith.constant 0 : index
    %c0_16 = arith.constant 0 : index
    %13 = vector.load %arg3[%c0_15, %c0_16] : memref<1x1280xf32, #tpu.memory_space<vmem>>, vector<1x1280xf32>
    %14 = vector.broadcast %13 : vector<1x1280xf32> to vector<28x1280xf32>
    %15 = arith.addf %12, %14 : vector<28x1280xf32>
    %cst_17 = arith.constant 0.000000e+00 : f32
    %16 = vector.broadcast %cst_17 : f32 to vector<28x1280xf32>
    %17 = arith.maximumf %15, %16 : vector<28x1280xf32>
    %18 = vector.extract_strided_slice %17 {offsets = [0, 0], sizes = [28, 640], strides = [1, 1]} : vector<28x1280xf32> to vector<28x640xf32>
    %19 = vector.extract_strided_slice %17 {offsets = [0, 640], sizes = [28, 640], strides = [1, 1]} : vector<28x1280xf32> to vector<28x640xf32>
    %20 = arith.maximumf %18, %19 : vector<28x640xf32>
    %21 = vector.extract_strided_slice %20 {offsets = [0, 0], sizes = [1, 640], strides = [1, 1]} : vector<28x640xf32> to vector<1x640xf32>
    %22 = vector.extract_strided_slice %20 {offsets = [1, 0], sizes = [1, 640], strides = [1, 1]} : vector<28x640xf32> to vector<1x640xf32>
    %23 = arith.maximumf %21, %22 : vector<1x640xf32>
    %24 = vector.extract_strided_slice %20 {offsets = [2, 0], sizes = [1, 640], strides = [1, 1]} : vector<28x640xf32> to vector<1x640xf32>
    %25 = vector.extract_strided_slice %20 {offsets = [3, 0], sizes = [1, 640], strides = [1, 1]} : vector<28x640xf32> to vector<1x640xf32>
    %26 = arith.maximumf %24, %25 : vector<1x640xf32>
    %27 = vector.extract_strided_slice %20 {offsets = [4, 0], sizes = [1, 640], strides = [1, 1]} : vector<28x640xf32> to vector<1x640xf32>
    %28 = vector.extract_strided_slice %20 {offsets = [5, 0], sizes = [1, 640], strides = [1, 1]} : vector<28x640xf32> to vector<1x640xf32>
    %29 = arith.maximumf %27, %28 : vector<1x640xf32>
    %30 = vector.extract_strided_slice %20 {offsets = [6, 0], sizes = [1, 640], strides = [1, 1]} : vector<28x640xf32> to vector<1x640xf32>
    %31 = vector.extract_strided_slice %20 {offsets = [7, 0], sizes = [1, 640], strides = [1, 1]} : vector<28x640xf32> to vector<1x640xf32>
    %32 = arith.maximumf %30, %31 : vector<1x640xf32>
    %33 = vector.extract_strided_slice %20 {offsets = [8, 0], sizes = [1, 640], strides = [1, 1]} : vector<28x640xf32> to vector<1x640xf32>
    %34 = vector.extract_strided_slice %20 {offsets = [9, 0], sizes = [1, 640], strides = [1, 1]} : vector<28x640xf32> to vector<1x640xf32>
    %35 = arith.maximumf %33, %34 : vector<1x640xf32>
    %36 = vector.extract_strided_slice %20 {offsets = [10, 0], sizes = [1, 640], strides = [1, 1]} : vector<28x640xf32> to vector<1x640xf32>
    %37 = vector.extract_strided_slice %20 {offsets = [11, 0], sizes = [1, 640], strides = [1, 1]} : vector<28x640xf32> to vector<1x640xf32>
    %38 = arith.maximumf %36, %37 : vector<1x640xf32>
    %39 = vector.extract_strided_slice %20 {offsets = [12, 0], sizes = [1, 640], strides = [1, 1]} : vector<28x640xf32> to vector<1x640xf32>
    %40 = vector.extract_strided_slice %20 {offsets = [13, 0], sizes = [1, 640], strides = [1, 1]} : vector<28x640xf32> to vector<1x640xf32>
    %41 = arith.maximumf %39, %40 : vector<1x640xf32>
    %42 = vector.extract_strided_slice %20 {offsets = [14, 0], sizes = [1, 640], strides = [1, 1]} : vector<28x640xf32> to vector<1x640xf32>
    %43 = vector.extract_strided_slice %20 {offsets = [15, 0], sizes = [1, 640], strides = [1, 1]} : vector<28x640xf32> to vector<1x640xf32>
    %44 = arith.maximumf %42, %43 : vector<1x640xf32>
    %45 = vector.extract_strided_slice %20 {offsets = [16, 0], sizes = [1, 640], strides = [1, 1]} : vector<28x640xf32> to vector<1x640xf32>
    %46 = vector.extract_strided_slice %20 {offsets = [17, 0], sizes = [1, 640], strides = [1, 1]} : vector<28x640xf32> to vector<1x640xf32>
    %47 = arith.maximumf %45, %46 : vector<1x640xf32>
    %48 = vector.extract_strided_slice %20 {offsets = [18, 0], sizes = [1, 640], strides = [1, 1]} : vector<28x640xf32> to vector<1x640xf32>
    %49 = vector.extract_strided_slice %20 {offsets = [19, 0], sizes = [1, 640], strides = [1, 1]} : vector<28x640xf32> to vector<1x640xf32>
    %50 = arith.maximumf %48, %49 : vector<1x640xf32>
    %51 = vector.extract_strided_slice %20 {offsets = [20, 0], sizes = [1, 640], strides = [1, 1]} : vector<28x640xf32> to vector<1x640xf32>
    %52 = vector.extract_strided_slice %20 {offsets = [21, 0], sizes = [1, 640], strides = [1, 1]} : vector<28x640xf32> to vector<1x640xf32>
    %53 = arith.maximumf %51, %52 : vector<1x640xf32>
    %54 = vector.extract_strided_slice %20 {offsets = [22, 0], sizes = [1, 640], strides = [1, 1]} : vector<28x640xf32> to vector<1x640xf32>
    %55 = vector.extract_strided_slice %20 {offsets = [23, 0], sizes = [1, 640], strides = [1, 1]} : vector<28x640xf32> to vector<1x640xf32>
    %56 = arith.maximumf %54, %55 : vector<1x640xf32>
    %57 = vector.extract_strided_slice %20 {offsets = [24, 0], sizes = [1, 640], strides = [1, 1]} : vector<28x640xf32> to vector<1x640xf32>
    %58 = vector.extract_strided_slice %20 {offsets = [25, 0], sizes = [1, 640], strides = [1, 1]} : vector<28x640xf32> to vector<1x640xf32>
    %59 = arith.maximumf %57, %58 : vector<1x640xf32>
    %60 = vector.extract_strided_slice %20 {offsets = [26, 0], sizes = [1, 640], strides = [1, 1]} : vector<28x640xf32> to vector<1x640xf32>
    %61 = vector.extract_strided_slice %20 {offsets = [27, 0], sizes = [1, 640], strides = [1, 1]} : vector<28x640xf32> to vector<1x640xf32>
    %62 = arith.maximumf %60, %61 : vector<1x640xf32>
    %63 = tpu.concatenate %23, %26, %29, %32, %35, %38, %41, %44, %47, %50, %53, %56, %59, %62 in 0 : vector<1x640xf32>, vector<1x640xf32>, vector<1x640xf32>, vector<1x640xf32>, vector<1x640xf32>, vector<1x640xf32>, vector<1x640xf32>, vector<1x640xf32>, vector<1x640xf32>, vector<1x640xf32>, vector<1x640xf32>, vector<1x640xf32>, vector<1x640xf32>, vector<1x640xf32> -> vector<14x640xf32>
    %cst_18 = arith.constant 0.000000e+00 : f32
    %64 = vector.broadcast %cst_18 : f32 to vector<1x16x704xf32>
    %c0_19 = arith.constant 0 : index
    %c0_20 = arith.constant 0 : index
    %c0_21 = arith.constant 0 : index
    %65 = vector.load %arg4[%c0_19, %c0_20, %c0_21] : memref<1x16x704xf32, #tpu.memory_space<vmem>>, vector<1x16x704xf32>
    tpu.vector_store %arg4[%c0_19, %c0_20, %c0_21], %64 {strides = array<i32>} : memref<1x16x704xf32, #tpu.memory_space<vmem>>, vector<1x16x704xf32>,
    %c0_22 = arith.constant 0 : index
    %c1_23 = arith.constant 1 : index
    %c32 = arith.constant 32 : index
    %66 = vector.load %arg4[%c0_22, %c1_23, %c32] : memref<1x16x704xf32, #tpu.memory_space<vmem>>, vector<1x14x640xf32>
    %67 = vector.shape_cast %66 : vector<1x14x640xf32> to vector<14x640xf32>
    %68 = vector.shape_cast %63 : vector<14x640xf32> to vector<1x14x640xf32>
    tpu.vector_store %arg4[%c0_22, %c1_23, %c32], %68 {strides = array<i32>} : memref<1x16x704xf32, #tpu.memory_space<vmem>>, vector<1x14x640xf32>,
    return
  }
  func.func @transform_0(%arg0: i32) -> (i32, i32, i32) {
    %c0_i32 = arith.constant 0 : i32
    %c0_i32_0 = arith.constant 0 : i32
    %c0_i32_1 = arith.constant 0 : i32
    return %arg0, %c0_i32, %c0_i32_0 : i32, i32, i32
  }
  func.func @transform_1(%arg0: i32) -> (i32, i32) {
    %c0_i32 = arith.constant 0 : i32
    %c0_i32_0 = arith.constant 0 : i32
    %c0_i32_1 = arith.constant 0 : i32
    return %c0_i32, %c0_i32_0 : i32, i32
  }
  func.func @transform_2(%arg0: i32) -> (i32, i32) {
    %c0_i32 = arith.constant 0 : i32
    %c0_i32_0 = arith.constant 0 : i32
    %c0_i32_1 = arith.constant 0 : i32
    return %c0_i32, %c0_i32_0 : i32, i32
  }
  func.func @transform_3(%arg0: i32) -> (i32, i32, i32) {
    %c0_i32 = arith.constant 0 : i32
    %c0_i32_0 = arith.constant 0 : i32
    %c0_i32_1 = arith.constant 0 : i32
    return %arg0, %c0_i32, %c0_i32_0 : i32, i32, i32
  }
}

module attributes {stable_mosaic.version = 11 : i64} {
  func.func @_stage2_kernel(%arg0: i32, %arg1: memref<1x16x22x32xf32, #tpu.memory_space<vmem>>, %arg2: memref<288x64xf32, #tpu.memory_space<vmem>>, %arg3: memref<1x64xf32, #tpu.memory_space<vmem>>, %arg4: memref<1x7x10x64xf32, #tpu.memory_space<vmem>>) attributes {dimension_semantics = [#tpu.dimension_semantics<parallel>], iteration_bounds = array<i64: 2>, scalar_prefetch = 0 : i64, scratch_operands = 0 : i64, tpu.core_type = #tpu.core_type<tc>, window_params = [{transform_indices = @transform_0, window_bounds = array<i64: 1, 16, 22, 32>}, {pipeline_mode = #tpu.pipeline_mode<synchronous>, transform_indices = @transform_1, window_bounds = array<i64: 288, 64>}, {pipeline_mode = #tpu.pipeline_mode<synchronous>, transform_indices = @transform_2, window_bounds = array<i64: 1, 64>}, {transform_indices = @transform_3, window_bounds = array<i64: 1, 7, 10, 64>}]} {
    %c0 = arith.constant 0 : index
    %c0_0 = arith.constant 0 : index
    %c0_1 = arith.constant 0 : index
    %c0_2 = arith.constant 0 : index
    %0 = vector.load %arg1[%c0, %c0_0, %c0_1, %c0_2] : memref<1x16x22x32xf32, #tpu.memory_space<vmem>>, vector<1x1x20x32xf32>
    %1 = vector.shape_cast %0 : vector<1x1x20x32xf32> to vector<20x32xf32>
    %c0_3 = arith.constant 0 : index
    %c0_4 = arith.constant 0 : index
    %c1 = arith.constant 1 : index
    %c0_5 = arith.constant 0 : index
    %2 = vector.load %arg1[%c0_3, %c0_4, %c1, %c0_5] : memref<1x16x22x32xf32, #tpu.memory_space<vmem>>, vector<1x1x20x32xf32>
    %3 = vector.shape_cast %2 : vector<1x1x20x32xf32> to vector<20x32xf32>
    %c0_6 = arith.constant 0 : index
    %c0_7 = arith.constant 0 : index
    %c2 = arith.constant 2 : index
    %c0_8 = arith.constant 0 : index
    %4 = vector.load %arg1[%c0_6, %c0_7, %c2, %c0_8] : memref<1x16x22x32xf32, #tpu.memory_space<vmem>>, vector<1x1x20x32xf32>
    %5 = vector.shape_cast %4 : vector<1x1x20x32xf32> to vector<20x32xf32>
    %c0_9 = arith.constant 0 : index
    %c1_10 = arith.constant 1 : index
    %c0_11 = arith.constant 0 : index
    %c0_12 = arith.constant 0 : index
    %6 = vector.load %arg1[%c0_9, %c1_10, %c0_11, %c0_12] : memref<1x16x22x32xf32, #tpu.memory_space<vmem>>, vector<1x1x20x32xf32>
    %7 = vector.shape_cast %6 : vector<1x1x20x32xf32> to vector<20x32xf32>
    %c0_13 = arith.constant 0 : index
    %c1_14 = arith.constant 1 : index
    %c1_15 = arith.constant 1 : index
    %c0_16 = arith.constant 0 : index
    %8 = vector.load %arg1[%c0_13, %c1_14, %c1_15, %c0_16] : memref<1x16x22x32xf32, #tpu.memory_space<vmem>>, vector<1x1x20x32xf32>
    %9 = vector.shape_cast %8 : vector<1x1x20x32xf32> to vector<20x32xf32>
    %c0_17 = arith.constant 0 : index
    %c1_18 = arith.constant 1 : index
    %c2_19 = arith.constant 2 : index
    %c0_20 = arith.constant 0 : index
    %10 = vector.load %arg1[%c0_17, %c1_18, %c2_19, %c0_20] : memref<1x16x22x32xf32, #tpu.memory_space<vmem>>, vector<1x1x20x32xf32>
    %11 = vector.shape_cast %10 : vector<1x1x20x32xf32> to vector<20x32xf32>
    %c0_21 = arith.constant 0 : index
    %c2_22 = arith.constant 2 : index
    %c0_23 = arith.constant 0 : index
    %c0_24 = arith.constant 0 : index
    %12 = vector.load %arg1[%c0_21, %c2_22, %c0_23, %c0_24] : memref<1x16x22x32xf32, #tpu.memory_space<vmem>>, vector<1x1x20x32xf32>
    %13 = vector.shape_cast %12 : vector<1x1x20x32xf32> to vector<20x32xf32>
    %c0_25 = arith.constant 0 : index
    %c2_26 = arith.constant 2 : index
    %c1_27 = arith.constant 1 : index
    %c0_28 = arith.constant 0 : index
    %14 = vector.load %arg1[%c0_25, %c2_26, %c1_27, %c0_28] : memref<1x16x22x32xf32, #tpu.memory_space<vmem>>, vector<1x1x20x32xf32>
    %15 = vector.shape_cast %14 : vector<1x1x20x32xf32> to vector<20x32xf32>
    %c0_29 = arith.constant 0 : index
    %c2_30 = arith.constant 2 : index
    %c2_31 = arith.constant 2 : index
    %c0_32 = arith.constant 0 : index
    %16 = vector.load %arg1[%c0_29, %c2_30, %c2_31, %c0_32] : memref<1x16x22x32xf32, #tpu.memory_space<vmem>>, vector<1x1x20x32xf32>
    %17 = vector.shape_cast %16 : vector<1x1x20x32xf32> to vector<20x32xf32>
    %18 = tpu.concatenate %1, %3, %5, %7, %9, %11, %13, %15, %17 in 1 : vector<20x32xf32>, vector<20x32xf32>, vector<20x32xf32>, vector<20x32xf32>, vector<20x32xf32>, vector<20x32xf32>, vector<20x32xf32>, vector<20x32xf32>, vector<20x32xf32> -> vector<20x288xf32>
    %c0_33 = arith.constant 0 : index
    %c0_34 = arith.constant 0 : index
    %19 = vector.load %arg2[%c0_33, %c0_34] : memref<288x64xf32, #tpu.memory_space<vmem>>, vector<288x64xf32>
    %cst = arith.constant dense<0.000000e+00> : vector<20x64xf32>
    %20 = tpu.matmul %18, %19, %cst {dimension_numbers = #tpu.dot_dimension_numbers<[1], [0], [0], [1], [0, 0, 1, 1], [], []>} : vector<20x288xf32>, vector<288x64xf32>, vector<20x64xf32> -> vector<20x64xf32>
    %c0_35 = arith.constant 0 : index
    %c0_36 = arith.constant 0 : index
    %21 = vector.load %arg3[%c0_35, %c0_36] : memref<1x64xf32, #tpu.memory_space<vmem>>, vector<1x64xf32>
    %22 = vector.broadcast %21 : vector<1x64xf32> to vector<20x64xf32>
    %23 = arith.addf %20, %22 : vector<20x64xf32>
    %cst_37 = arith.constant 0.000000e+00 : f32
    %24 = vector.broadcast %cst_37 : f32 to vector<20x64xf32>
    %25 = arith.maximumf %23, %24 : vector<20x64xf32>
    %c0_38 = arith.constant 0 : index
    %c1_39 = arith.constant 1 : index
    %c0_40 = arith.constant 0 : index
    %c0_41 = arith.constant 0 : index
    %26 = vector.load %arg1[%c0_38, %c1_39, %c0_40, %c0_41] : memref<1x16x22x32xf32, #tpu.memory_space<vmem>>, vector<1x1x20x32xf32>
    %27 = vector.shape_cast %26 : vector<1x1x20x32xf32> to vector<20x32xf32>
    %c0_42 = arith.constant 0 : index
    %c1_43 = arith.constant 1 : index
    %c1_44 = arith.constant 1 : index
    %c0_45 = arith.constant 0 : index
    %28 = vector.load %arg1[%c0_42, %c1_43, %c1_44, %c0_45] : memref<1x16x22x32xf32, #tpu.memory_space<vmem>>, vector<1x1x20x32xf32>
    %29 = vector.shape_cast %28 : vector<1x1x20x32xf32> to vector<20x32xf32>
    %c0_46 = arith.constant 0 : index
    %c1_47 = arith.constant 1 : index
    %c2_48 = arith.constant 2 : index
    %c0_49 = arith.constant 0 : index
    %30 = vector.load %arg1[%c0_46, %c1_47, %c2_48, %c0_49] : memref<1x16x22x32xf32, #tpu.memory_space<vmem>>, vector<1x1x20x32xf32>
    %31 = vector.shape_cast %30 : vector<1x1x20x32xf32> to vector<20x32xf32>
    %c0_50 = arith.constant 0 : index
    %c2_51 = arith.constant 2 : index
    %c0_52 = arith.constant 0 : index
    %c0_53 = arith.constant 0 : index
    %32 = vector.load %arg1[%c0_50, %c2_51, %c0_52, %c0_53] : memref<1x16x22x32xf32, #tpu.memory_space<vmem>>, vector<1x1x20x32xf32>
    %33 = vector.shape_cast %32 : vector<1x1x20x32xf32> to vector<20x32xf32>
    %c0_54 = arith.constant 0 : index
    %c2_55 = arith.constant 2 : index
    %c1_56 = arith.constant 1 : index
    %c0_57 = arith.constant 0 : index
    %34 = vector.load %arg1[%c0_54, %c2_55, %c1_56, %c0_57] : memref<1x16x22x32xf32, #tpu.memory_space<vmem>>, vector<1x1x20x32xf32>
    %35 = vector.shape_cast %34 : vector<1x1x20x32xf32> to vector<20x32xf32>
    %c0_58 = arith.constant 0 : index
    %c2_59 = arith.constant 2 : index
    %c2_60 = arith.constant 2 : index
    %c0_61 = arith.constant 0 : index
    %36 = vector.load %arg1[%c0_58, %c2_59, %c2_60, %c0_61] : memref<1x16x22x32xf32, #tpu.memory_space<vmem>>, vector<1x1x20x32xf32>
    %37 = vector.shape_cast %36 : vector<1x1x20x32xf32> to vector<20x32xf32>
    %c0_62 = arith.constant 0 : index
    %c3 = arith.constant 3 : index
    %c0_63 = arith.constant 0 : index
    %c0_64 = arith.constant 0 : index
    %38 = vector.load %arg1[%c0_62, %c3, %c0_63, %c0_64] : memref<1x16x22x32xf32, #tpu.memory_space<vmem>>, vector<1x1x20x32xf32>
    %39 = vector.shape_cast %38 : vector<1x1x20x32xf32> to vector<20x32xf32>
    %c0_65 = arith.constant 0 : index
    %c3_66 = arith.constant 3 : index
    %c1_67 = arith.constant 1 : index
    %c0_68 = arith.constant 0 : index
    %40 = vector.load %arg1[%c0_65, %c3_66, %c1_67, %c0_68] : memref<1x16x22x32xf32, #tpu.memory_space<vmem>>, vector<1x1x20x32xf32>
    %41 = vector.shape_cast %40 : vector<1x1x20x32xf32> to vector<20x32xf32>
    %c0_69 = arith.constant 0 : index
    %c3_70 = arith.constant 3 : index
    %c2_71 = arith.constant 2 : index
    %c0_72 = arith.constant 0 : index
    %42 = vector.load %arg1[%c0_69, %c3_70, %c2_71, %c0_72] : memref<1x16x22x32xf32, #tpu.memory_space<vmem>>, vector<1x1x20x32xf32>
    %43 = vector.shape_cast %42 : vector<1x1x20x32xf32> to vector<20x32xf32>
    %44 = tpu.concatenate %27, %29, %31, %33, %35, %37, %39, %41, %43 in 1 : vector<20x32xf32>, vector<20x32xf32>, vector<20x32xf32>, vector<20x32xf32>, vector<20x32xf32>, vector<20x32xf32>, vector<20x32xf32>, vector<20x32xf32>, vector<20x32xf32> -> vector<20x288xf32>
    %c0_73 = arith.constant 0 : index
    %c0_74 = arith.constant 0 : index
    %45 = vector.load %arg2[%c0_73, %c0_74] : memref<288x64xf32, #tpu.memory_space<vmem>>, vector<288x64xf32>
    %cst_75 = arith.constant dense<0.000000e+00> : vector<20x64xf32>
    %46 = tpu.matmul %44, %45, %cst_75 {dimension_numbers = #tpu.dot_dimension_numbers<[1], [0], [0], [1], [0, 0, 1, 1], [], []>} : vector<20x288xf32>, vector<288x64xf32>, vector<20x64xf32> -> vector<20x64xf32>
    %c0_76 = arith.constant 0 : index
    %c0_77 = arith.constant 0 : index
    %47 = vector.load %arg3[%c0_76, %c0_77] : memref<1x64xf32, #tpu.memory_space<vmem>>, vector<1x64xf32>
    %48 = vector.broadcast %47 : vector<1x64xf32> to vector<20x64xf32>
    %49 = arith.addf %46, %48 : vector<20x64xf32>
    %cst_78 = arith.constant 0.000000e+00 : f32
    %50 = vector.broadcast %cst_78 : f32 to vector<20x64xf32>
    %51 = arith.maximumf %49, %50 : vector<20x64xf32>
    %c0_79 = arith.constant 0 : index
    %c2_80 = arith.constant 2 : index
    %c0_81 = arith.constant 0 : index
    %c0_82 = arith.constant 0 : index
    %52 = vector.load %arg1[%c0_79, %c2_80, %c0_81, %c0_82] : memref<1x16x22x32xf32, #tpu.memory_space<vmem>>, vector<1x1x20x32xf32>
    %53 = vector.shape_cast %52 : vector<1x1x20x32xf32> to vector<20x32xf32>
    %c0_83 = arith.constant 0 : index
    %c2_84 = arith.constant 2 : index
    %c1_85 = arith.constant 1 : index
    %c0_86 = arith.constant 0 : index
    %54 = vector.load %arg1[%c0_83, %c2_84, %c1_85, %c0_86] : memref<1x16x22x32xf32, #tpu.memory_space<vmem>>, vector<1x1x20x32xf32>
    %55 = vector.shape_cast %54 : vector<1x1x20x32xf32> to vector<20x32xf32>
    %c0_87 = arith.constant 0 : index
    %c2_88 = arith.constant 2 : index
    %c2_89 = arith.constant 2 : index
    %c0_90 = arith.constant 0 : index
    %56 = vector.load %arg1[%c0_87, %c2_88, %c2_89, %c0_90] : memref<1x16x22x32xf32, #tpu.memory_space<vmem>>, vector<1x1x20x32xf32>
    %57 = vector.shape_cast %56 : vector<1x1x20x32xf32> to vector<20x32xf32>
    %c0_91 = arith.constant 0 : index
    %c3_92 = arith.constant 3 : index
    %c0_93 = arith.constant 0 : index
    %c0_94 = arith.constant 0 : index
    %58 = vector.load %arg1[%c0_91, %c3_92, %c0_93, %c0_94] : memref<1x16x22x32xf32, #tpu.memory_space<vmem>>, vector<1x1x20x32xf32>
    %59 = vector.shape_cast %58 : vector<1x1x20x32xf32> to vector<20x32xf32>
    %c0_95 = arith.constant 0 : index
    %c3_96 = arith.constant 3 : index
    %c1_97 = arith.constant 1 : index
    %c0_98 = arith.constant 0 : index
    %60 = vector.load %arg1[%c0_95, %c3_96, %c1_97, %c0_98] : memref<1x16x22x32xf32, #tpu.memory_space<vmem>>, vector<1x1x20x32xf32>
    %61 = vector.shape_cast %60 : vector<1x1x20x32xf32> to vector<20x32xf32>
    %c0_99 = arith.constant 0 : index
    %c3_100 = arith.constant 3 : index
    %c2_101 = arith.constant 2 : index
    %c0_102 = arith.constant 0 : index
    %62 = vector.load %arg1[%c0_99, %c3_100, %c2_101, %c0_102] : memref<1x16x22x32xf32, #tpu.memory_space<vmem>>, vector<1x1x20x32xf32>
    %63 = vector.shape_cast %62 : vector<1x1x20x32xf32> to vector<20x32xf32>
    %c0_103 = arith.constant 0 : index
    %c4 = arith.constant 4 : index
    %c0_104 = arith.constant 0 : index
    %c0_105 = arith.constant 0 : index
    %64 = vector.load %arg1[%c0_103, %c4, %c0_104, %c0_105] : memref<1x16x22x32xf32, #tpu.memory_space<vmem>>, vector<1x1x20x32xf32>
    %65 = vector.shape_cast %64 : vector<1x1x20x32xf32> to vector<20x32xf32>
    %c0_106 = arith.constant 0 : index
    %c4_107 = arith.constant 4 : index
    %c1_108 = arith.constant 1 : index
    %c0_109 = arith.constant 0 : index
    %66 = vector.load %arg1[%c0_106, %c4_107, %c1_108, %c0_109] : memref<1x16x22x32xf32, #tpu.memory_space<vmem>>, vector<1x1x20x32xf32>
    %67 = vector.shape_cast %66 : vector<1x1x20x32xf32> to vector<20x32xf32>
    %c0_110 = arith.constant 0 : index
    %c4_111 = arith.constant 4 : index
    %c2_112 = arith.constant 2 : index
    %c0_113 = arith.constant 0 : index
    %68 = vector.load %arg1[%c0_110, %c4_111, %c2_112, %c0_113] : memref<1x16x22x32xf32, #tpu.memory_space<vmem>>, vector<1x1x20x32xf32>
    %69 = vector.shape_cast %68 : vector<1x1x20x32xf32> to vector<20x32xf32>
    %70 = tpu.concatenate %53, %55, %57, %59, %61, %63, %65, %67, %69 in 1 : vector<20x32xf32>, vector<20x32xf32>, vector<20x32xf32>, vector<20x32xf32>, vector<20x32xf32>, vector<20x32xf32>, vector<20x32xf32>, vector<20x32xf32>, vector<20x32xf32> -> vector<20x288xf32>
    %c0_114 = arith.constant 0 : index
    %c0_115 = arith.constant 0 : index
    %71 = vector.load %arg2[%c0_114, %c0_115] : memref<288x64xf32, #tpu.memory_space<vmem>>, vector<288x64xf32>
    %cst_116 = arith.constant dense<0.000000e+00> : vector<20x64xf32>
    %72 = tpu.matmul %70, %71, %cst_116 {dimension_numbers = #tpu.dot_dimension_numbers<[1], [0], [0], [1], [0, 0, 1, 1], [], []>} : vector<20x288xf32>, vector<288x64xf32>, vector<20x64xf32> -> vector<20x64xf32>
    %c0_117 = arith.constant 0 : index
    %c0_118 = arith.constant 0 : index
    %73 = vector.load %arg3[%c0_117, %c0_118] : memref<1x64xf32, #tpu.memory_space<vmem>>, vector<1x64xf32>
    %74 = vector.broadcast %73 : vector<1x64xf32> to vector<20x64xf32>
    %75 = arith.addf %72, %74 : vector<20x64xf32>
    %cst_119 = arith.constant 0.000000e+00 : f32
    %76 = vector.broadcast %cst_119 : f32 to vector<20x64xf32>
    %77 = arith.maximumf %75, %76 : vector<20x64xf32>
    %c0_120 = arith.constant 0 : index
    %c3_121 = arith.constant 3 : index
    %c0_122 = arith.constant 0 : index
    %c0_123 = arith.constant 0 : index
    %78 = vector.load %arg1[%c0_120, %c3_121, %c0_122, %c0_123] : memref<1x16x22x32xf32, #tpu.memory_space<vmem>>, vector<1x1x20x32xf32>
    %79 = vector.shape_cast %78 : vector<1x1x20x32xf32> to vector<20x32xf32>
    %c0_124 = arith.constant 0 : index
    %c3_125 = arith.constant 3 : index
    %c1_126 = arith.constant 1 : index
    %c0_127 = arith.constant 0 : index
    %80 = vector.load %arg1[%c0_124, %c3_125, %c1_126, %c0_127] : memref<1x16x22x32xf32, #tpu.memory_space<vmem>>, vector<1x1x20x32xf32>
    %81 = vector.shape_cast %80 : vector<1x1x20x32xf32> to vector<20x32xf32>
    %c0_128 = arith.constant 0 : index
    %c3_129 = arith.constant 3 : index
    %c2_130 = arith.constant 2 : index
    %c0_131 = arith.constant 0 : index
    %82 = vector.load %arg1[%c0_128, %c3_129, %c2_130, %c0_131] : memref<1x16x22x32xf32, #tpu.memory_space<vmem>>, vector<1x1x20x32xf32>
    %83 = vector.shape_cast %82 : vector<1x1x20x32xf32> to vector<20x32xf32>
    %c0_132 = arith.constant 0 : index
    %c4_133 = arith.constant 4 : index
    %c0_134 = arith.constant 0 : index
    %c0_135 = arith.constant 0 : index
    %84 = vector.load %arg1[%c0_132, %c4_133, %c0_134, %c0_135] : memref<1x16x22x32xf32, #tpu.memory_space<vmem>>, vector<1x1x20x32xf32>
    %85 = vector.shape_cast %84 : vector<1x1x20x32xf32> to vector<20x32xf32>
    %c0_136 = arith.constant 0 : index
    %c4_137 = arith.constant 4 : index
    %c1_138 = arith.constant 1 : index
    %c0_139 = arith.constant 0 : index
    %86 = vector.load %arg1[%c0_136, %c4_137, %c1_138, %c0_139] : memref<1x16x22x32xf32, #tpu.memory_space<vmem>>, vector<1x1x20x32xf32>
    %87 = vector.shape_cast %86 : vector<1x1x20x32xf32> to vector<20x32xf32>
    %c0_140 = arith.constant 0 : index
    %c4_141 = arith.constant 4 : index
    %c2_142 = arith.constant 2 : index
    %c0_143 = arith.constant 0 : index
    %88 = vector.load %arg1[%c0_140, %c4_141, %c2_142, %c0_143] : memref<1x16x22x32xf32, #tpu.memory_space<vmem>>, vector<1x1x20x32xf32>
    %89 = vector.shape_cast %88 : vector<1x1x20x32xf32> to vector<20x32xf32>
    %c0_144 = arith.constant 0 : index
    %c5 = arith.constant 5 : index
    %c0_145 = arith.constant 0 : index
    %c0_146 = arith.constant 0 : index
    %90 = vector.load %arg1[%c0_144, %c5, %c0_145, %c0_146] : memref<1x16x22x32xf32, #tpu.memory_space<vmem>>, vector<1x1x20x32xf32>
    %91 = vector.shape_cast %90 : vector<1x1x20x32xf32> to vector<20x32xf32>
    %c0_147 = arith.constant 0 : index
    %c5_148 = arith.constant 5 : index
    %c1_149 = arith.constant 1 : index
    %c0_150 = arith.constant 0 : index
    %92 = vector.load %arg1[%c0_147, %c5_148, %c1_149, %c0_150] : memref<1x16x22x32xf32, #tpu.memory_space<vmem>>, vector<1x1x20x32xf32>
    %93 = vector.shape_cast %92 : vector<1x1x20x32xf32> to vector<20x32xf32>
    %c0_151 = arith.constant 0 : index
    %c5_152 = arith.constant 5 : index
    %c2_153 = arith.constant 2 : index
    %c0_154 = arith.constant 0 : index
    %94 = vector.load %arg1[%c0_151, %c5_152, %c2_153, %c0_154] : memref<1x16x22x32xf32, #tpu.memory_space<vmem>>, vector<1x1x20x32xf32>
    %95 = vector.shape_cast %94 : vector<1x1x20x32xf32> to vector<20x32xf32>
    %96 = tpu.concatenate %79, %81, %83, %85, %87, %89, %91, %93, %95 in 1 : vector<20x32xf32>, vector<20x32xf32>, vector<20x32xf32>, vector<20x32xf32>, vector<20x32xf32>, vector<20x32xf32>, vector<20x32xf32>, vector<20x32xf32>, vector<20x32xf32> -> vector<20x288xf32>
    %c0_155 = arith.constant 0 : index
    %c0_156 = arith.constant 0 : index
    %97 = vector.load %arg2[%c0_155, %c0_156] : memref<288x64xf32, #tpu.memory_space<vmem>>, vector<288x64xf32>
    %cst_157 = arith.constant dense<0.000000e+00> : vector<20x64xf32>
    %98 = tpu.matmul %96, %97, %cst_157 {dimension_numbers = #tpu.dot_dimension_numbers<[1], [0], [0], [1], [0, 0, 1, 1], [], []>} : vector<20x288xf32>, vector<288x64xf32>, vector<20x64xf32> -> vector<20x64xf32>
    %c0_158 = arith.constant 0 : index
    %c0_159 = arith.constant 0 : index
    %99 = vector.load %arg3[%c0_158, %c0_159] : memref<1x64xf32, #tpu.memory_space<vmem>>, vector<1x64xf32>
    %100 = vector.broadcast %99 : vector<1x64xf32> to vector<20x64xf32>
    %101 = arith.addf %98, %100 : vector<20x64xf32>
    %cst_160 = arith.constant 0.000000e+00 : f32
    %102 = vector.broadcast %cst_160 : f32 to vector<20x64xf32>
    %103 = arith.maximumf %101, %102 : vector<20x64xf32>
    %c0_161 = arith.constant 0 : index
    %c4_162 = arith.constant 4 : index
    %c0_163 = arith.constant 0 : index
    %c0_164 = arith.constant 0 : index
    %104 = vector.load %arg1[%c0_161, %c4_162, %c0_163, %c0_164] : memref<1x16x22x32xf32, #tpu.memory_space<vmem>>, vector<1x1x20x32xf32>
    %105 = vector.shape_cast %104 : vector<1x1x20x32xf32> to vector<20x32xf32>
    %c0_165 = arith.constant 0 : index
    %c4_166 = arith.constant 4 : index
    %c1_167 = arith.constant 1 : index
    %c0_168 = arith.constant 0 : index
    %106 = vector.load %arg1[%c0_165, %c4_166, %c1_167, %c0_168] : memref<1x16x22x32xf32, #tpu.memory_space<vmem>>, vector<1x1x20x32xf32>
    %107 = vector.shape_cast %106 : vector<1x1x20x32xf32> to vector<20x32xf32>
    %c0_169 = arith.constant 0 : index
    %c4_170 = arith.constant 4 : index
    %c2_171 = arith.constant 2 : index
    %c0_172 = arith.constant 0 : index
    %108 = vector.load %arg1[%c0_169, %c4_170, %c2_171, %c0_172] : memref<1x16x22x32xf32, #tpu.memory_space<vmem>>, vector<1x1x20x32xf32>
    %109 = vector.shape_cast %108 : vector<1x1x20x32xf32> to vector<20x32xf32>
    %c0_173 = arith.constant 0 : index
    %c5_174 = arith.constant 5 : index
    %c0_175 = arith.constant 0 : index
    %c0_176 = arith.constant 0 : index
    %110 = vector.load %arg1[%c0_173, %c5_174, %c0_175, %c0_176] : memref<1x16x22x32xf32, #tpu.memory_space<vmem>>, vector<1x1x20x32xf32>
    %111 = vector.shape_cast %110 : vector<1x1x20x32xf32> to vector<20x32xf32>
    %c0_177 = arith.constant 0 : index
    %c5_178 = arith.constant 5 : index
    %c1_179 = arith.constant 1 : index
    %c0_180 = arith.constant 0 : index
    %112 = vector.load %arg1[%c0_177, %c5_178, %c1_179, %c0_180] : memref<1x16x22x32xf32, #tpu.memory_space<vmem>>, vector<1x1x20x32xf32>
    %113 = vector.shape_cast %112 : vector<1x1x20x32xf32> to vector<20x32xf32>
    %c0_181 = arith.constant 0 : index
    %c5_182 = arith.constant 5 : index
    %c2_183 = arith.constant 2 : index
    %c0_184 = arith.constant 0 : index
    %114 = vector.load %arg1[%c0_181, %c5_182, %c2_183, %c0_184] : memref<1x16x22x32xf32, #tpu.memory_space<vmem>>, vector<1x1x20x32xf32>
    %115 = vector.shape_cast %114 : vector<1x1x20x32xf32> to vector<20x32xf32>
    %c0_185 = arith.constant 0 : index
    %c6 = arith.constant 6 : index
    %c0_186 = arith.constant 0 : index
    %c0_187 = arith.constant 0 : index
    %116 = vector.load %arg1[%c0_185, %c6, %c0_186, %c0_187] : memref<1x16x22x32xf32, #tpu.memory_space<vmem>>, vector<1x1x20x32xf32>
    %117 = vector.shape_cast %116 : vector<1x1x20x32xf32> to vector<20x32xf32>
    %c0_188 = arith.constant 0 : index
    %c6_189 = arith.constant 6 : index
    %c1_190 = arith.constant 1 : index
    %c0_191 = arith.constant 0 : index
    %118 = vector.load %arg1[%c0_188, %c6_189, %c1_190, %c0_191] : memref<1x16x22x32xf32, #tpu.memory_space<vmem>>, vector<1x1x20x32xf32>
    %119 = vector.shape_cast %118 : vector<1x1x20x32xf32> to vector<20x32xf32>
    %c0_192 = arith.constant 0 : index
    %c6_193 = arith.constant 6 : index
    %c2_194 = arith.constant 2 : index
    %c0_195 = arith.constant 0 : index
    %120 = vector.load %arg1[%c0_192, %c6_193, %c2_194, %c0_195] : memref<1x16x22x32xf32, #tpu.memory_space<vmem>>, vector<1x1x20x32xf32>
    %121 = vector.shape_cast %120 : vector<1x1x20x32xf32> to vector<20x32xf32>
    %122 = tpu.concatenate %105, %107, %109, %111, %113, %115, %117, %119, %121 in 1 : vector<20x32xf32>, vector<20x32xf32>, vector<20x32xf32>, vector<20x32xf32>, vector<20x32xf32>, vector<20x32xf32>, vector<20x32xf32>, vector<20x32xf32>, vector<20x32xf32> -> vector<20x288xf32>
    %c0_196 = arith.constant 0 : index
    %c0_197 = arith.constant 0 : index
    %123 = vector.load %arg2[%c0_196, %c0_197] : memref<288x64xf32, #tpu.memory_space<vmem>>, vector<288x64xf32>
    %cst_198 = arith.constant dense<0.000000e+00> : vector<20x64xf32>
    %124 = tpu.matmul %122, %123, %cst_198 {dimension_numbers = #tpu.dot_dimension_numbers<[1], [0], [0], [1], [0, 0, 1, 1], [], []>} : vector<20x288xf32>, vector<288x64xf32>, vector<20x64xf32> -> vector<20x64xf32>
    %c0_199 = arith.constant 0 : index
    %c0_200 = arith.constant 0 : index
    %125 = vector.load %arg3[%c0_199, %c0_200] : memref<1x64xf32, #tpu.memory_space<vmem>>, vector<1x64xf32>
    %126 = vector.broadcast %125 : vector<1x64xf32> to vector<20x64xf32>
    %127 = arith.addf %124, %126 : vector<20x64xf32>
    %cst_201 = arith.constant 0.000000e+00 : f32
    %128 = vector.broadcast %cst_201 : f32 to vector<20x64xf32>
    %129 = arith.maximumf %127, %128 : vector<20x64xf32>
    %c0_202 = arith.constant 0 : index
    %c5_203 = arith.constant 5 : index
    %c0_204 = arith.constant 0 : index
    %c0_205 = arith.constant 0 : index
    %130 = vector.load %arg1[%c0_202, %c5_203, %c0_204, %c0_205] : memref<1x16x22x32xf32, #tpu.memory_space<vmem>>, vector<1x1x20x32xf32>
    %131 = vector.shape_cast %130 : vector<1x1x20x32xf32> to vector<20x32xf32>
    %c0_206 = arith.constant 0 : index
    %c5_207 = arith.constant 5 : index
    %c1_208 = arith.constant 1 : index
    %c0_209 = arith.constant 0 : index
    %132 = vector.load %arg1[%c0_206, %c5_207, %c1_208, %c0_209] : memref<1x16x22x32xf32, #tpu.memory_space<vmem>>, vector<1x1x20x32xf32>
    %133 = vector.shape_cast %132 : vector<1x1x20x32xf32> to vector<20x32xf32>
    %c0_210 = arith.constant 0 : index
    %c5_211 = arith.constant 5 : index
    %c2_212 = arith.constant 2 : index
    %c0_213 = arith.constant 0 : index
    %134 = vector.load %arg1[%c0_210, %c5_211, %c2_212, %c0_213] : memref<1x16x22x32xf32, #tpu.memory_space<vmem>>, vector<1x1x20x32xf32>
    %135 = vector.shape_cast %134 : vector<1x1x20x32xf32> to vector<20x32xf32>
    %c0_214 = arith.constant 0 : index
    %c6_215 = arith.constant 6 : index
    %c0_216 = arith.constant 0 : index
    %c0_217 = arith.constant 0 : index
    %136 = vector.load %arg1[%c0_214, %c6_215, %c0_216, %c0_217] : memref<1x16x22x32xf32, #tpu.memory_space<vmem>>, vector<1x1x20x32xf32>
    %137 = vector.shape_cast %136 : vector<1x1x20x32xf32> to vector<20x32xf32>
    %c0_218 = arith.constant 0 : index
    %c6_219 = arith.constant 6 : index
    %c1_220 = arith.constant 1 : index
    %c0_221 = arith.constant 0 : index
    %138 = vector.load %arg1[%c0_218, %c6_219, %c1_220, %c0_221] : memref<1x16x22x32xf32, #tpu.memory_space<vmem>>, vector<1x1x20x32xf32>
    %139 = vector.shape_cast %138 : vector<1x1x20x32xf32> to vector<20x32xf32>
    %c0_222 = arith.constant 0 : index
    %c6_223 = arith.constant 6 : index
    %c2_224 = arith.constant 2 : index
    %c0_225 = arith.constant 0 : index
    %140 = vector.load %arg1[%c0_222, %c6_223, %c2_224, %c0_225] : memref<1x16x22x32xf32, #tpu.memory_space<vmem>>, vector<1x1x20x32xf32>
    %141 = vector.shape_cast %140 : vector<1x1x20x32xf32> to vector<20x32xf32>
    %c0_226 = arith.constant 0 : index
    %c7 = arith.constant 7 : index
    %c0_227 = arith.constant 0 : index
    %c0_228 = arith.constant 0 : index
    %142 = vector.load %arg1[%c0_226, %c7, %c0_227, %c0_228] : memref<1x16x22x32xf32, #tpu.memory_space<vmem>>, vector<1x1x20x32xf32>
    %143 = vector.shape_cast %142 : vector<1x1x20x32xf32> to vector<20x32xf32>
    %c0_229 = arith.constant 0 : index
    %c7_230 = arith.constant 7 : index
    %c1_231 = arith.constant 1 : index
    %c0_232 = arith.constant 0 : index
    %144 = vector.load %arg1[%c0_229, %c7_230, %c1_231, %c0_232] : memref<1x16x22x32xf32, #tpu.memory_space<vmem>>, vector<1x1x20x32xf32>
    %145 = vector.shape_cast %144 : vector<1x1x20x32xf32> to vector<20x32xf32>
    %c0_233 = arith.constant 0 : index
    %c7_234 = arith.constant 7 : index
    %c2_235 = arith.constant 2 : index
    %c0_236 = arith.constant 0 : index
    %146 = vector.load %arg1[%c0_233, %c7_234, %c2_235, %c0_236] : memref<1x16x22x32xf32, #tpu.memory_space<vmem>>, vector<1x1x20x32xf32>
    %147 = vector.shape_cast %146 : vector<1x1x20x32xf32> to vector<20x32xf32>
    %148 = tpu.concatenate %131, %133, %135, %137, %139, %141, %143, %145, %147 in 1 : vector<20x32xf32>, vector<20x32xf32>, vector<20x32xf32>, vector<20x32xf32>, vector<20x32xf32>, vector<20x32xf32>, vector<20x32xf32>, vector<20x32xf32>, vector<20x32xf32> -> vector<20x288xf32>
    %c0_237 = arith.constant 0 : index
    %c0_238 = arith.constant 0 : index
    %149 = vector.load %arg2[%c0_237, %c0_238] : memref<288x64xf32, #tpu.memory_space<vmem>>, vector<288x64xf32>
    %cst_239 = arith.constant dense<0.000000e+00> : vector<20x64xf32>
    %150 = tpu.matmul %148, %149, %cst_239 {dimension_numbers = #tpu.dot_dimension_numbers<[1], [0], [0], [1], [0, 0, 1, 1], [], []>} : vector<20x288xf32>, vector<288x64xf32>, vector<20x64xf32> -> vector<20x64xf32>
    %c0_240 = arith.constant 0 : index
    %c0_241 = arith.constant 0 : index
    %151 = vector.load %arg3[%c0_240, %c0_241] : memref<1x64xf32, #tpu.memory_space<vmem>>, vector<1x64xf32>
    %152 = vector.broadcast %151 : vector<1x64xf32> to vector<20x64xf32>
    %153 = arith.addf %150, %152 : vector<20x64xf32>
    %cst_242 = arith.constant 0.000000e+00 : f32
    %154 = vector.broadcast %cst_242 : f32 to vector<20x64xf32>
    %155 = arith.maximumf %153, %154 : vector<20x64xf32>
    %c0_243 = arith.constant 0 : index
    %c6_244 = arith.constant 6 : index
    %c0_245 = arith.constant 0 : index
    %c0_246 = arith.constant 0 : index
    %156 = vector.load %arg1[%c0_243, %c6_244, %c0_245, %c0_246] : memref<1x16x22x32xf32, #tpu.memory_space<vmem>>, vector<1x1x20x32xf32>
    %157 = vector.shape_cast %156 : vector<1x1x20x32xf32> to vector<20x32xf32>
    %c0_247 = arith.constant 0 : index
    %c6_248 = arith.constant 6 : index
    %c1_249 = arith.constant 1 : index
    %c0_250 = arith.constant 0 : index
    %158 = vector.load %arg1[%c0_247, %c6_248, %c1_249, %c0_250] : memref<1x16x22x32xf32, #tpu.memory_space<vmem>>, vector<1x1x20x32xf32>
    %159 = vector.shape_cast %158 : vector<1x1x20x32xf32> to vector<20x32xf32>
    %c0_251 = arith.constant 0 : index
    %c6_252 = arith.constant 6 : index
    %c2_253 = arith.constant 2 : index
    %c0_254 = arith.constant 0 : index
    %160 = vector.load %arg1[%c0_251, %c6_252, %c2_253, %c0_254] : memref<1x16x22x32xf32, #tpu.memory_space<vmem>>, vector<1x1x20x32xf32>
    %161 = vector.shape_cast %160 : vector<1x1x20x32xf32> to vector<20x32xf32>
    %c0_255 = arith.constant 0 : index
    %c7_256 = arith.constant 7 : index
    %c0_257 = arith.constant 0 : index
    %c0_258 = arith.constant 0 : index
    %162 = vector.load %arg1[%c0_255, %c7_256, %c0_257, %c0_258] : memref<1x16x22x32xf32, #tpu.memory_space<vmem>>, vector<1x1x20x32xf32>
    %163 = vector.shape_cast %162 : vector<1x1x20x32xf32> to vector<20x32xf32>
    %c0_259 = arith.constant 0 : index
    %c7_260 = arith.constant 7 : index
    %c1_261 = arith.constant 1 : index
    %c0_262 = arith.constant 0 : index
    %164 = vector.load %arg1[%c0_259, %c7_260, %c1_261, %c0_262] : memref<1x16x22x32xf32, #tpu.memory_space<vmem>>, vector<1x1x20x32xf32>
    %165 = vector.shape_cast %164 : vector<1x1x20x32xf32> to vector<20x32xf32>
    %c0_263 = arith.constant 0 : index
    %c7_264 = arith.constant 7 : index
    %c2_265 = arith.constant 2 : index
    %c0_266 = arith.constant 0 : index
    %166 = vector.load %arg1[%c0_263, %c7_264, %c2_265, %c0_266] : memref<1x16x22x32xf32, #tpu.memory_space<vmem>>, vector<1x1x20x32xf32>
    %167 = vector.shape_cast %166 : vector<1x1x20x32xf32> to vector<20x32xf32>
    %c0_267 = arith.constant 0 : index
    %c8 = arith.constant 8 : index
    %c0_268 = arith.constant 0 : index
    %c0_269 = arith.constant 0 : index
    %168 = vector.load %arg1[%c0_267, %c8, %c0_268, %c0_269] : memref<1x16x22x32xf32, #tpu.memory_space<vmem>>, vector<1x1x20x32xf32>
    %169 = vector.shape_cast %168 : vector<1x1x20x32xf32> to vector<20x32xf32>
    %c0_270 = arith.constant 0 : index
    %c8_271 = arith.constant 8 : index
    %c1_272 = arith.constant 1 : index
    %c0_273 = arith.constant 0 : index
    %170 = vector.load %arg1[%c0_270, %c8_271, %c1_272, %c0_273] : memref<1x16x22x32xf32, #tpu.memory_space<vmem>>, vector<1x1x20x32xf32>
    %171 = vector.shape_cast %170 : vector<1x1x20x32xf32> to vector<20x32xf32>
    %c0_274 = arith.constant 0 : index
    %c8_275 = arith.constant 8 : index
    %c2_276 = arith.constant 2 : index
    %c0_277 = arith.constant 0 : index
    %172 = vector.load %arg1[%c0_274, %c8_275, %c2_276, %c0_277] : memref<1x16x22x32xf32, #tpu.memory_space<vmem>>, vector<1x1x20x32xf32>
    %173 = vector.shape_cast %172 : vector<1x1x20x32xf32> to vector<20x32xf32>
    %174 = tpu.concatenate %157, %159, %161, %163, %165, %167, %169, %171, %173 in 1 : vector<20x32xf32>, vector<20x32xf32>, vector<20x32xf32>, vector<20x32xf32>, vector<20x32xf32>, vector<20x32xf32>, vector<20x32xf32>, vector<20x32xf32>, vector<20x32xf32> -> vector<20x288xf32>
    %c0_278 = arith.constant 0 : index
    %c0_279 = arith.constant 0 : index
    %175 = vector.load %arg2[%c0_278, %c0_279] : memref<288x64xf32, #tpu.memory_space<vmem>>, vector<288x64xf32>
    %cst_280 = arith.constant dense<0.000000e+00> : vector<20x64xf32>
    %176 = tpu.matmul %174, %175, %cst_280 {dimension_numbers = #tpu.dot_dimension_numbers<[1], [0], [0], [1], [0, 0, 1, 1], [], []>} : vector<20x288xf32>, vector<288x64xf32>, vector<20x64xf32> -> vector<20x64xf32>
    %c0_281 = arith.constant 0 : index
    %c0_282 = arith.constant 0 : index
    %177 = vector.load %arg3[%c0_281, %c0_282] : memref<1x64xf32, #tpu.memory_space<vmem>>, vector<1x64xf32>
    %178 = vector.broadcast %177 : vector<1x64xf32> to vector<20x64xf32>
    %179 = arith.addf %176, %178 : vector<20x64xf32>
    %cst_283 = arith.constant 0.000000e+00 : f32
    %180 = vector.broadcast %cst_283 : f32 to vector<20x64xf32>
    %181 = arith.maximumf %179, %180 : vector<20x64xf32>
    %c0_284 = arith.constant 0 : index
    %c7_285 = arith.constant 7 : index
    %c0_286 = arith.constant 0 : index
    %c0_287 = arith.constant 0 : index
    %182 = vector.load %arg1[%c0_284, %c7_285, %c0_286, %c0_287] : memref<1x16x22x32xf32, #tpu.memory_space<vmem>>, vector<1x1x20x32xf32>
    %183 = vector.shape_cast %182 : vector<1x1x20x32xf32> to vector<20x32xf32>
    %c0_288 = arith.constant 0 : index
    %c7_289 = arith.constant 7 : index
    %c1_290 = arith.constant 1 : index
    %c0_291 = arith.constant 0 : index
    %184 = vector.load %arg1[%c0_288, %c7_289, %c1_290, %c0_291] : memref<1x16x22x32xf32, #tpu.memory_space<vmem>>, vector<1x1x20x32xf32>
    %185 = vector.shape_cast %184 : vector<1x1x20x32xf32> to vector<20x32xf32>
    %c0_292 = arith.constant 0 : index
    %c7_293 = arith.constant 7 : index
    %c2_294 = arith.constant 2 : index
    %c0_295 = arith.constant 0 : index
    %186 = vector.load %arg1[%c0_292, %c7_293, %c2_294, %c0_295] : memref<1x16x22x32xf32, #tpu.memory_space<vmem>>, vector<1x1x20x32xf32>
    %187 = vector.shape_cast %186 : vector<1x1x20x32xf32> to vector<20x32xf32>
    %c0_296 = arith.constant 0 : index
    %c8_297 = arith.constant 8 : index
    %c0_298 = arith.constant 0 : index
    %c0_299 = arith.constant 0 : index
    %188 = vector.load %arg1[%c0_296, %c8_297, %c0_298, %c0_299] : memref<1x16x22x32xf32, #tpu.memory_space<vmem>>, vector<1x1x20x32xf32>
    %189 = vector.shape_cast %188 : vector<1x1x20x32xf32> to vector<20x32xf32>
    %c0_300 = arith.constant 0 : index
    %c8_301 = arith.constant 8 : index
    %c1_302 = arith.constant 1 : index
    %c0_303 = arith.constant 0 : index
    %190 = vector.load %arg1[%c0_300, %c8_301, %c1_302, %c0_303] : memref<1x16x22x32xf32, #tpu.memory_space<vmem>>, vector<1x1x20x32xf32>
    %191 = vector.shape_cast %190 : vector<1x1x20x32xf32> to vector<20x32xf32>
    %c0_304 = arith.constant 0 : index
    %c8_305 = arith.constant 8 : index
    %c2_306 = arith.constant 2 : index
    %c0_307 = arith.constant 0 : index
    %192 = vector.load %arg1[%c0_304, %c8_305, %c2_306, %c0_307] : memref<1x16x22x32xf32, #tpu.memory_space<vmem>>, vector<1x1x20x32xf32>
    %193 = vector.shape_cast %192 : vector<1x1x20x32xf32> to vector<20x32xf32>
    %c0_308 = arith.constant 0 : index
    %c9 = arith.constant 9 : index
    %c0_309 = arith.constant 0 : index
    %c0_310 = arith.constant 0 : index
    %194 = vector.load %arg1[%c0_308, %c9, %c0_309, %c0_310] : memref<1x16x22x32xf32, #tpu.memory_space<vmem>>, vector<1x1x20x32xf32>
    %195 = vector.shape_cast %194 : vector<1x1x20x32xf32> to vector<20x32xf32>
    %c0_311 = arith.constant 0 : index
    %c9_312 = arith.constant 9 : index
    %c1_313 = arith.constant 1 : index
    %c0_314 = arith.constant 0 : index
    %196 = vector.load %arg1[%c0_311, %c9_312, %c1_313, %c0_314] : memref<1x16x22x32xf32, #tpu.memory_space<vmem>>, vector<1x1x20x32xf32>
    %197 = vector.shape_cast %196 : vector<1x1x20x32xf32> to vector<20x32xf32>
    %c0_315 = arith.constant 0 : index
    %c9_316 = arith.constant 9 : index
    %c2_317 = arith.constant 2 : index
    %c0_318 = arith.constant 0 : index
    %198 = vector.load %arg1[%c0_315, %c9_316, %c2_317, %c0_318] : memref<1x16x22x32xf32, #tpu.memory_space<vmem>>, vector<1x1x20x32xf32>
    %199 = vector.shape_cast %198 : vector<1x1x20x32xf32> to vector<20x32xf32>
    %200 = tpu.concatenate %183, %185, %187, %189, %191, %193, %195, %197, %199 in 1 : vector<20x32xf32>, vector<20x32xf32>, vector<20x32xf32>, vector<20x32xf32>, vector<20x32xf32>, vector<20x32xf32>, vector<20x32xf32>, vector<20x32xf32>, vector<20x32xf32> -> vector<20x288xf32>
    %c0_319 = arith.constant 0 : index
    %c0_320 = arith.constant 0 : index
    %201 = vector.load %arg2[%c0_319, %c0_320] : memref<288x64xf32, #tpu.memory_space<vmem>>, vector<288x64xf32>
    %cst_321 = arith.constant dense<0.000000e+00> : vector<20x64xf32>
    %202 = tpu.matmul %200, %201, %cst_321 {dimension_numbers = #tpu.dot_dimension_numbers<[1], [0], [0], [1], [0, 0, 1, 1], [], []>} : vector<20x288xf32>, vector<288x64xf32>, vector<20x64xf32> -> vector<20x64xf32>
    %c0_322 = arith.constant 0 : index
    %c0_323 = arith.constant 0 : index
    %203 = vector.load %arg3[%c0_322, %c0_323] : memref<1x64xf32, #tpu.memory_space<vmem>>, vector<1x64xf32>
    %204 = vector.broadcast %203 : vector<1x64xf32> to vector<20x64xf32>
    %205 = arith.addf %202, %204 : vector<20x64xf32>
    %cst_324 = arith.constant 0.000000e+00 : f32
    %206 = vector.broadcast %cst_324 : f32 to vector<20x64xf32>
    %207 = arith.maximumf %205, %206 : vector<20x64xf32>
    %c0_325 = arith.constant 0 : index
    %c8_326 = arith.constant 8 : index
    %c0_327 = arith.constant 0 : index
    %c0_328 = arith.constant 0 : index
    %208 = vector.load %arg1[%c0_325, %c8_326, %c0_327, %c0_328] : memref<1x16x22x32xf32, #tpu.memory_space<vmem>>, vector<1x1x20x32xf32>
    %209 = vector.shape_cast %208 : vector<1x1x20x32xf32> to vector<20x32xf32>
    %c0_329 = arith.constant 0 : index
    %c8_330 = arith.constant 8 : index
    %c1_331 = arith.constant 1 : index
    %c0_332 = arith.constant 0 : index
    %210 = vector.load %arg1[%c0_329, %c8_330, %c1_331, %c0_332] : memref<1x16x22x32xf32, #tpu.memory_space<vmem>>, vector<1x1x20x32xf32>
    %211 = vector.shape_cast %210 : vector<1x1x20x32xf32> to vector<20x32xf32>
    %c0_333 = arith.constant 0 : index
    %c8_334 = arith.constant 8 : index
    %c2_335 = arith.constant 2 : index
    %c0_336 = arith.constant 0 : index
    %212 = vector.load %arg1[%c0_333, %c8_334, %c2_335, %c0_336] : memref<1x16x22x32xf32, #tpu.memory_space<vmem>>, vector<1x1x20x32xf32>
    %213 = vector.shape_cast %212 : vector<1x1x20x32xf32> to vector<20x32xf32>
    %c0_337 = arith.constant 0 : index
    %c9_338 = arith.constant 9 : index
    %c0_339 = arith.constant 0 : index
    %c0_340 = arith.constant 0 : index
    %214 = vector.load %arg1[%c0_337, %c9_338, %c0_339, %c0_340] : memref<1x16x22x32xf32, #tpu.memory_space<vmem>>, vector<1x1x20x32xf32>
    %215 = vector.shape_cast %214 : vector<1x1x20x32xf32> to vector<20x32xf32>
    %c0_341 = arith.constant 0 : index
    %c9_342 = arith.constant 9 : index
    %c1_343 = arith.constant 1 : index
    %c0_344 = arith.constant 0 : index
    %216 = vector.load %arg1[%c0_341, %c9_342, %c1_343, %c0_344] : memref<1x16x22x32xf32, #tpu.memory_space<vmem>>, vector<1x1x20x32xf32>
    %217 = vector.shape_cast %216 : vector<1x1x20x32xf32> to vector<20x32xf32>
    %c0_345 = arith.constant 0 : index
    %c9_346 = arith.constant 9 : index
    %c2_347 = arith.constant 2 : index
    %c0_348 = arith.constant 0 : index
    %218 = vector.load %arg1[%c0_345, %c9_346, %c2_347, %c0_348] : memref<1x16x22x32xf32, #tpu.memory_space<vmem>>, vector<1x1x20x32xf32>
    %219 = vector.shape_cast %218 : vector<1x1x20x32xf32> to vector<20x32xf32>
    %c0_349 = arith.constant 0 : index
    %c10 = arith.constant 10 : index
    %c0_350 = arith.constant 0 : index
    %c0_351 = arith.constant 0 : index
    %220 = vector.load %arg1[%c0_349, %c10, %c0_350, %c0_351] : memref<1x16x22x32xf32, #tpu.memory_space<vmem>>, vector<1x1x20x32xf32>
    %221 = vector.shape_cast %220 : vector<1x1x20x32xf32> to vector<20x32xf32>
    %c0_352 = arith.constant 0 : index
    %c10_353 = arith.constant 10 : index
    %c1_354 = arith.constant 1 : index
    %c0_355 = arith.constant 0 : index
    %222 = vector.load %arg1[%c0_352, %c10_353, %c1_354, %c0_355] : memref<1x16x22x32xf32, #tpu.memory_space<vmem>>, vector<1x1x20x32xf32>
    %223 = vector.shape_cast %222 : vector<1x1x20x32xf32> to vector<20x32xf32>
    %c0_356 = arith.constant 0 : index
    %c10_357 = arith.constant 10 : index
    %c2_358 = arith.constant 2 : index
    %c0_359 = arith.constant 0 : index
    %224 = vector.load %arg1[%c0_356, %c10_357, %c2_358, %c0_359] : memref<1x16x22x32xf32, #tpu.memory_space<vmem>>, vector<1x1x20x32xf32>
    %225 = vector.shape_cast %224 : vector<1x1x20x32xf32> to vector<20x32xf32>
    %226 = tpu.concatenate %209, %211, %213, %215, %217, %219, %221, %223, %225 in 1 : vector<20x32xf32>, vector<20x32xf32>, vector<20x32xf32>, vector<20x32xf32>, vector<20x32xf32>, vector<20x32xf32>, vector<20x32xf32>, vector<20x32xf32>, vector<20x32xf32> -> vector<20x288xf32>
    %c0_360 = arith.constant 0 : index
    %c0_361 = arith.constant 0 : index
    %227 = vector.load %arg2[%c0_360, %c0_361] : memref<288x64xf32, #tpu.memory_space<vmem>>, vector<288x64xf32>
    %cst_362 = arith.constant dense<0.000000e+00> : vector<20x64xf32>
    %228 = tpu.matmul %226, %227, %cst_362 {dimension_numbers = #tpu.dot_dimension_numbers<[1], [0], [0], [1], [0, 0, 1, 1], [], []>} : vector<20x288xf32>, vector<288x64xf32>, vector<20x64xf32> -> vector<20x64xf32>
    %c0_363 = arith.constant 0 : index
    %c0_364 = arith.constant 0 : index
    %229 = vector.load %arg3[%c0_363, %c0_364] : memref<1x64xf32, #tpu.memory_space<vmem>>, vector<1x64xf32>
    %230 = vector.broadcast %229 : vector<1x64xf32> to vector<20x64xf32>
    %231 = arith.addf %228, %230 : vector<20x64xf32>
    %cst_365 = arith.constant 0.000000e+00 : f32
    %232 = vector.broadcast %cst_365 : f32 to vector<20x64xf32>
    %233 = arith.maximumf %231, %232 : vector<20x64xf32>
    %c0_366 = arith.constant 0 : index
    %c9_367 = arith.constant 9 : index
    %c0_368 = arith.constant 0 : index
    %c0_369 = arith.constant 0 : index
    %234 = vector.load %arg1[%c0_366, %c9_367, %c0_368, %c0_369] : memref<1x16x22x32xf32, #tpu.memory_space<vmem>>, vector<1x1x20x32xf32>
    %235 = vector.shape_cast %234 : vector<1x1x20x32xf32> to vector<20x32xf32>
    %c0_370 = arith.constant 0 : index
    %c9_371 = arith.constant 9 : index
    %c1_372 = arith.constant 1 : index
    %c0_373 = arith.constant 0 : index
    %236 = vector.load %arg1[%c0_370, %c9_371, %c1_372, %c0_373] : memref<1x16x22x32xf32, #tpu.memory_space<vmem>>, vector<1x1x20x32xf32>
    %237 = vector.shape_cast %236 : vector<1x1x20x32xf32> to vector<20x32xf32>
    %c0_374 = arith.constant 0 : index
    %c9_375 = arith.constant 9 : index
    %c2_376 = arith.constant 2 : index
    %c0_377 = arith.constant 0 : index
    %238 = vector.load %arg1[%c0_374, %c9_375, %c2_376, %c0_377] : memref<1x16x22x32xf32, #tpu.memory_space<vmem>>, vector<1x1x20x32xf32>
    %239 = vector.shape_cast %238 : vector<1x1x20x32xf32> to vector<20x32xf32>
    %c0_378 = arith.constant 0 : index
    %c10_379 = arith.constant 10 : index
    %c0_380 = arith.constant 0 : index
    %c0_381 = arith.constant 0 : index
    %240 = vector.load %arg1[%c0_378, %c10_379, %c0_380, %c0_381] : memref<1x16x22x32xf32, #tpu.memory_space<vmem>>, vector<1x1x20x32xf32>
    %241 = vector.shape_cast %240 : vector<1x1x20x32xf32> to vector<20x32xf32>
    %c0_382 = arith.constant 0 : index
    %c10_383 = arith.constant 10 : index
    %c1_384 = arith.constant 1 : index
    %c0_385 = arith.constant 0 : index
    %242 = vector.load %arg1[%c0_382, %c10_383, %c1_384, %c0_385] : memref<1x16x22x32xf32, #tpu.memory_space<vmem>>, vector<1x1x20x32xf32>
    %243 = vector.shape_cast %242 : vector<1x1x20x32xf32> to vector<20x32xf32>
    %c0_386 = arith.constant 0 : index
    %c10_387 = arith.constant 10 : index
    %c2_388 = arith.constant 2 : index
    %c0_389 = arith.constant 0 : index
    %244 = vector.load %arg1[%c0_386, %c10_387, %c2_388, %c0_389] : memref<1x16x22x32xf32, #tpu.memory_space<vmem>>, vector<1x1x20x32xf32>
    %245 = vector.shape_cast %244 : vector<1x1x20x32xf32> to vector<20x32xf32>
    %c0_390 = arith.constant 0 : index
    %c11 = arith.constant 11 : index
    %c0_391 = arith.constant 0 : index
    %c0_392 = arith.constant 0 : index
    %246 = vector.load %arg1[%c0_390, %c11, %c0_391, %c0_392] : memref<1x16x22x32xf32, #tpu.memory_space<vmem>>, vector<1x1x20x32xf32>
    %247 = vector.shape_cast %246 : vector<1x1x20x32xf32> to vector<20x32xf32>
    %c0_393 = arith.constant 0 : index
    %c11_394 = arith.constant 11 : index
    %c1_395 = arith.constant 1 : index
    %c0_396 = arith.constant 0 : index
    %248 = vector.load %arg1[%c0_393, %c11_394, %c1_395, %c0_396] : memref<1x16x22x32xf32, #tpu.memory_space<vmem>>, vector<1x1x20x32xf32>
    %249 = vector.shape_cast %248 : vector<1x1x20x32xf32> to vector<20x32xf32>
    %c0_397 = arith.constant 0 : index
    %c11_398 = arith.constant 11 : index
    %c2_399 = arith.constant 2 : index
    %c0_400 = arith.constant 0 : index
    %250 = vector.load %arg1[%c0_397, %c11_398, %c2_399, %c0_400] : memref<1x16x22x32xf32, #tpu.memory_space<vmem>>, vector<1x1x20x32xf32>
    %251 = vector.shape_cast %250 : vector<1x1x20x32xf32> to vector<20x32xf32>
    %252 = tpu.concatenate %235, %237, %239, %241, %243, %245, %247, %249, %251 in 1 : vector<20x32xf32>, vector<20x32xf32>, vector<20x32xf32>, vector<20x32xf32>, vector<20x32xf32>, vector<20x32xf32>, vector<20x32xf32>, vector<20x32xf32>, vector<20x32xf32> -> vector<20x288xf32>
    %c0_401 = arith.constant 0 : index
    %c0_402 = arith.constant 0 : index
    %253 = vector.load %arg2[%c0_401, %c0_402] : memref<288x64xf32, #tpu.memory_space<vmem>>, vector<288x64xf32>
    %cst_403 = arith.constant dense<0.000000e+00> : vector<20x64xf32>
    %254 = tpu.matmul %252, %253, %cst_403 {dimension_numbers = #tpu.dot_dimension_numbers<[1], [0], [0], [1], [0, 0, 1, 1], [], []>} : vector<20x288xf32>, vector<288x64xf32>, vector<20x64xf32> -> vector<20x64xf32>
    %c0_404 = arith.constant 0 : index
    %c0_405 = arith.constant 0 : index
    %255 = vector.load %arg3[%c0_404, %c0_405] : memref<1x64xf32, #tpu.memory_space<vmem>>, vector<1x64xf32>
    %256 = vector.broadcast %255 : vector<1x64xf32> to vector<20x64xf32>
    %257 = arith.addf %254, %256 : vector<20x64xf32>
    %cst_406 = arith.constant 0.000000e+00 : f32
    %258 = vector.broadcast %cst_406 : f32 to vector<20x64xf32>
    %259 = arith.maximumf %257, %258 : vector<20x64xf32>
    %c0_407 = arith.constant 0 : index
    %c10_408 = arith.constant 10 : index
    %c0_409 = arith.constant 0 : index
    %c0_410 = arith.constant 0 : index
    %260 = vector.load %arg1[%c0_407, %c10_408, %c0_409, %c0_410] : memref<1x16x22x32xf32, #tpu.memory_space<vmem>>, vector<1x1x20x32xf32>
    %261 = vector.shape_cast %260 : vector<1x1x20x32xf32> to vector<20x32xf32>
    %c0_411 = arith.constant 0 : index
    %c10_412 = arith.constant 10 : index
    %c1_413 = arith.constant 1 : index
    %c0_414 = arith.constant 0 : index
    %262 = vector.load %arg1[%c0_411, %c10_412, %c1_413, %c0_414] : memref<1x16x22x32xf32, #tpu.memory_space<vmem>>, vector<1x1x20x32xf32>
    %263 = vector.shape_cast %262 : vector<1x1x20x32xf32> to vector<20x32xf32>
    %c0_415 = arith.constant 0 : index
    %c10_416 = arith.constant 10 : index
    %c2_417 = arith.constant 2 : index
    %c0_418 = arith.constant 0 : index
    %264 = vector.load %arg1[%c0_415, %c10_416, %c2_417, %c0_418] : memref<1x16x22x32xf32, #tpu.memory_space<vmem>>, vector<1x1x20x32xf32>
    %265 = vector.shape_cast %264 : vector<1x1x20x32xf32> to vector<20x32xf32>
    %c0_419 = arith.constant 0 : index
    %c11_420 = arith.constant 11 : index
    %c0_421 = arith.constant 0 : index
    %c0_422 = arith.constant 0 : index
    %266 = vector.load %arg1[%c0_419, %c11_420, %c0_421, %c0_422] : memref<1x16x22x32xf32, #tpu.memory_space<vmem>>, vector<1x1x20x32xf32>
    %267 = vector.shape_cast %266 : vector<1x1x20x32xf32> to vector<20x32xf32>
    %c0_423 = arith.constant 0 : index
    %c11_424 = arith.constant 11 : index
    %c1_425 = arith.constant 1 : index
    %c0_426 = arith.constant 0 : index
    %268 = vector.load %arg1[%c0_423, %c11_424, %c1_425, %c0_426] : memref<1x16x22x32xf32, #tpu.memory_space<vmem>>, vector<1x1x20x32xf32>
    %269 = vector.shape_cast %268 : vector<1x1x20x32xf32> to vector<20x32xf32>
    %c0_427 = arith.constant 0 : index
    %c11_428 = arith.constant 11 : index
    %c2_429 = arith.constant 2 : index
    %c0_430 = arith.constant 0 : index
    %270 = vector.load %arg1[%c0_427, %c11_428, %c2_429, %c0_430] : memref<1x16x22x32xf32, #tpu.memory_space<vmem>>, vector<1x1x20x32xf32>
    %271 = vector.shape_cast %270 : vector<1x1x20x32xf32> to vector<20x32xf32>
    %c0_431 = arith.constant 0 : index
    %c12 = arith.constant 12 : index
    %c0_432 = arith.constant 0 : index
    %c0_433 = arith.constant 0 : index
    %272 = vector.load %arg1[%c0_431, %c12, %c0_432, %c0_433] : memref<1x16x22x32xf32, #tpu.memory_space<vmem>>, vector<1x1x20x32xf32>
    %273 = vector.shape_cast %272 : vector<1x1x20x32xf32> to vector<20x32xf32>
    %c0_434 = arith.constant 0 : index
    %c12_435 = arith.constant 12 : index
    %c1_436 = arith.constant 1 : index
    %c0_437 = arith.constant 0 : index
    %274 = vector.load %arg1[%c0_434, %c12_435, %c1_436, %c0_437] : memref<1x16x22x32xf32, #tpu.memory_space<vmem>>, vector<1x1x20x32xf32>
    %275 = vector.shape_cast %274 : vector<1x1x20x32xf32> to vector<20x32xf32>
    %c0_438 = arith.constant 0 : index
    %c12_439 = arith.constant 12 : index
    %c2_440 = arith.constant 2 : index
    %c0_441 = arith.constant 0 : index
    %276 = vector.load %arg1[%c0_438, %c12_439, %c2_440, %c0_441] : memref<1x16x22x32xf32, #tpu.memory_space<vmem>>, vector<1x1x20x32xf32>
    %277 = vector.shape_cast %276 : vector<1x1x20x32xf32> to vector<20x32xf32>
    %278 = tpu.concatenate %261, %263, %265, %267, %269, %271, %273, %275, %277 in 1 : vector<20x32xf32>, vector<20x32xf32>, vector<20x32xf32>, vector<20x32xf32>, vector<20x32xf32>, vector<20x32xf32>, vector<20x32xf32>, vector<20x32xf32>, vector<20x32xf32> -> vector<20x288xf32>
    %c0_442 = arith.constant 0 : index
    %c0_443 = arith.constant 0 : index
    %279 = vector.load %arg2[%c0_442, %c0_443] : memref<288x64xf32, #tpu.memory_space<vmem>>, vector<288x64xf32>
    %cst_444 = arith.constant dense<0.000000e+00> : vector<20x64xf32>
    %280 = tpu.matmul %278, %279, %cst_444 {dimension_numbers = #tpu.dot_dimension_numbers<[1], [0], [0], [1], [0, 0, 1, 1], [], []>} : vector<20x288xf32>, vector<288x64xf32>, vector<20x64xf32> -> vector<20x64xf32>
    %c0_445 = arith.constant 0 : index
    %c0_446 = arith.constant 0 : index
    %281 = vector.load %arg3[%c0_445, %c0_446] : memref<1x64xf32, #tpu.memory_space<vmem>>, vector<1x64xf32>
    %282 = vector.broadcast %281 : vector<1x64xf32> to vector<20x64xf32>
    %283 = arith.addf %280, %282 : vector<20x64xf32>
    %cst_447 = arith.constant 0.000000e+00 : f32
    %284 = vector.broadcast %cst_447 : f32 to vector<20x64xf32>
    %285 = arith.maximumf %283, %284 : vector<20x64xf32>
    %c0_448 = arith.constant 0 : index
    %c11_449 = arith.constant 11 : index
    %c0_450 = arith.constant 0 : index
    %c0_451 = arith.constant 0 : index
    %286 = vector.load %arg1[%c0_448, %c11_449, %c0_450, %c0_451] : memref<1x16x22x32xf32, #tpu.memory_space<vmem>>, vector<1x1x20x32xf32>
    %287 = vector.shape_cast %286 : vector<1x1x20x32xf32> to vector<20x32xf32>
    %c0_452 = arith.constant 0 : index
    %c11_453 = arith.constant 11 : index
    %c1_454 = arith.constant 1 : index
    %c0_455 = arith.constant 0 : index
    %288 = vector.load %arg1[%c0_452, %c11_453, %c1_454, %c0_455] : memref<1x16x22x32xf32, #tpu.memory_space<vmem>>, vector<1x1x20x32xf32>
    %289 = vector.shape_cast %288 : vector<1x1x20x32xf32> to vector<20x32xf32>
    %c0_456 = arith.constant 0 : index
    %c11_457 = arith.constant 11 : index
    %c2_458 = arith.constant 2 : index
    %c0_459 = arith.constant 0 : index
    %290 = vector.load %arg1[%c0_456, %c11_457, %c2_458, %c0_459] : memref<1x16x22x32xf32, #tpu.memory_space<vmem>>, vector<1x1x20x32xf32>
    %291 = vector.shape_cast %290 : vector<1x1x20x32xf32> to vector<20x32xf32>
    %c0_460 = arith.constant 0 : index
    %c12_461 = arith.constant 12 : index
    %c0_462 = arith.constant 0 : index
    %c0_463 = arith.constant 0 : index
    %292 = vector.load %arg1[%c0_460, %c12_461, %c0_462, %c0_463] : memref<1x16x22x32xf32, #tpu.memory_space<vmem>>, vector<1x1x20x32xf32>
    %293 = vector.shape_cast %292 : vector<1x1x20x32xf32> to vector<20x32xf32>
    %c0_464 = arith.constant 0 : index
    %c12_465 = arith.constant 12 : index
    %c1_466 = arith.constant 1 : index
    %c0_467 = arith.constant 0 : index
    %294 = vector.load %arg1[%c0_464, %c12_465, %c1_466, %c0_467] : memref<1x16x22x32xf32, #tpu.memory_space<vmem>>, vector<1x1x20x32xf32>
    %295 = vector.shape_cast %294 : vector<1x1x20x32xf32> to vector<20x32xf32>
    %c0_468 = arith.constant 0 : index
    %c12_469 = arith.constant 12 : index
    %c2_470 = arith.constant 2 : index
    %c0_471 = arith.constant 0 : index
    %296 = vector.load %arg1[%c0_468, %c12_469, %c2_470, %c0_471] : memref<1x16x22x32xf32, #tpu.memory_space<vmem>>, vector<1x1x20x32xf32>
    %297 = vector.shape_cast %296 : vector<1x1x20x32xf32> to vector<20x32xf32>
    %c0_472 = arith.constant 0 : index
    %c13 = arith.constant 13 : index
    %c0_473 = arith.constant 0 : index
    %c0_474 = arith.constant 0 : index
    %298 = vector.load %arg1[%c0_472, %c13, %c0_473, %c0_474] : memref<1x16x22x32xf32, #tpu.memory_space<vmem>>, vector<1x1x20x32xf32>
    %299 = vector.shape_cast %298 : vector<1x1x20x32xf32> to vector<20x32xf32>
    %c0_475 = arith.constant 0 : index
    %c13_476 = arith.constant 13 : index
    %c1_477 = arith.constant 1 : index
    %c0_478 = arith.constant 0 : index
    %300 = vector.load %arg1[%c0_475, %c13_476, %c1_477, %c0_478] : memref<1x16x22x32xf32, #tpu.memory_space<vmem>>, vector<1x1x20x32xf32>
    %301 = vector.shape_cast %300 : vector<1x1x20x32xf32> to vector<20x32xf32>
    %c0_479 = arith.constant 0 : index
    %c13_480 = arith.constant 13 : index
    %c2_481 = arith.constant 2 : index
    %c0_482 = arith.constant 0 : index
    %302 = vector.load %arg1[%c0_479, %c13_480, %c2_481, %c0_482] : memref<1x16x22x32xf32, #tpu.memory_space<vmem>>, vector<1x1x20x32xf32>
    %303 = vector.shape_cast %302 : vector<1x1x20x32xf32> to vector<20x32xf32>
    %304 = tpu.concatenate %287, %289, %291, %293, %295, %297, %299, %301, %303 in 1 : vector<20x32xf32>, vector<20x32xf32>, vector<20x32xf32>, vector<20x32xf32>, vector<20x32xf32>, vector<20x32xf32>, vector<20x32xf32>, vector<20x32xf32>, vector<20x32xf32> -> vector<20x288xf32>
    %c0_483 = arith.constant 0 : index
    %c0_484 = arith.constant 0 : index
    %305 = vector.load %arg2[%c0_483, %c0_484] : memref<288x64xf32, #tpu.memory_space<vmem>>, vector<288x64xf32>
    %cst_485 = arith.constant dense<0.000000e+00> : vector<20x64xf32>
    %306 = tpu.matmul %304, %305, %cst_485 {dimension_numbers = #tpu.dot_dimension_numbers<[1], [0], [0], [1], [0, 0, 1, 1], [], []>} : vector<20x288xf32>, vector<288x64xf32>, vector<20x64xf32> -> vector<20x64xf32>
    %c0_486 = arith.constant 0 : index
    %c0_487 = arith.constant 0 : index
    %307 = vector.load %arg3[%c0_486, %c0_487] : memref<1x64xf32, #tpu.memory_space<vmem>>, vector<1x64xf32>
    %308 = vector.broadcast %307 : vector<1x64xf32> to vector<20x64xf32>
    %309 = arith.addf %306, %308 : vector<20x64xf32>
    %cst_488 = arith.constant 0.000000e+00 : f32
    %310 = vector.broadcast %cst_488 : f32 to vector<20x64xf32>
    %311 = arith.maximumf %309, %310 : vector<20x64xf32>
    %c0_489 = arith.constant 0 : index
    %c12_490 = arith.constant 12 : index
    %c0_491 = arith.constant 0 : index
    %c0_492 = arith.constant 0 : index
    %312 = vector.load %arg1[%c0_489, %c12_490, %c0_491, %c0_492] : memref<1x16x22x32xf32, #tpu.memory_space<vmem>>, vector<1x1x20x32xf32>
    %313 = vector.shape_cast %312 : vector<1x1x20x32xf32> to vector<20x32xf32>
    %c0_493 = arith.constant 0 : index
    %c12_494 = arith.constant 12 : index
    %c1_495 = arith.constant 1 : index
    %c0_496 = arith.constant 0 : index
    %314 = vector.load %arg1[%c0_493, %c12_494, %c1_495, %c0_496] : memref<1x16x22x32xf32, #tpu.memory_space<vmem>>, vector<1x1x20x32xf32>
    %315 = vector.shape_cast %314 : vector<1x1x20x32xf32> to vector<20x32xf32>
    %c0_497 = arith.constant 0 : index
    %c12_498 = arith.constant 12 : index
    %c2_499 = arith.constant 2 : index
    %c0_500 = arith.constant 0 : index
    %316 = vector.load %arg1[%c0_497, %c12_498, %c2_499, %c0_500] : memref<1x16x22x32xf32, #tpu.memory_space<vmem>>, vector<1x1x20x32xf32>
    %317 = vector.shape_cast %316 : vector<1x1x20x32xf32> to vector<20x32xf32>
    %c0_501 = arith.constant 0 : index
    %c13_502 = arith.constant 13 : index
    %c0_503 = arith.constant 0 : index
    %c0_504 = arith.constant 0 : index
    %318 = vector.load %arg1[%c0_501, %c13_502, %c0_503, %c0_504] : memref<1x16x22x32xf32, #tpu.memory_space<vmem>>, vector<1x1x20x32xf32>
    %319 = vector.shape_cast %318 : vector<1x1x20x32xf32> to vector<20x32xf32>
    %c0_505 = arith.constant 0 : index
    %c13_506 = arith.constant 13 : index
    %c1_507 = arith.constant 1 : index
    %c0_508 = arith.constant 0 : index
    %320 = vector.load %arg1[%c0_505, %c13_506, %c1_507, %c0_508] : memref<1x16x22x32xf32, #tpu.memory_space<vmem>>, vector<1x1x20x32xf32>
    %321 = vector.shape_cast %320 : vector<1x1x20x32xf32> to vector<20x32xf32>
    %c0_509 = arith.constant 0 : index
    %c13_510 = arith.constant 13 : index
    %c2_511 = arith.constant 2 : index
    %c0_512 = arith.constant 0 : index
    %322 = vector.load %arg1[%c0_509, %c13_510, %c2_511, %c0_512] : memref<1x16x22x32xf32, #tpu.memory_space<vmem>>, vector<1x1x20x32xf32>
    %323 = vector.shape_cast %322 : vector<1x1x20x32xf32> to vector<20x32xf32>
    %c0_513 = arith.constant 0 : index
    %c14 = arith.constant 14 : index
    %c0_514 = arith.constant 0 : index
    %c0_515 = arith.constant 0 : index
    %324 = vector.load %arg1[%c0_513, %c14, %c0_514, %c0_515] : memref<1x16x22x32xf32, #tpu.memory_space<vmem>>, vector<1x1x20x32xf32>
    %325 = vector.shape_cast %324 : vector<1x1x20x32xf32> to vector<20x32xf32>
    %c0_516 = arith.constant 0 : index
    %c14_517 = arith.constant 14 : index
    %c1_518 = arith.constant 1 : index
    %c0_519 = arith.constant 0 : index
    %326 = vector.load %arg1[%c0_516, %c14_517, %c1_518, %c0_519] : memref<1x16x22x32xf32, #tpu.memory_space<vmem>>, vector<1x1x20x32xf32>
    %327 = vector.shape_cast %326 : vector<1x1x20x32xf32> to vector<20x32xf32>
    %c0_520 = arith.constant 0 : index
    %c14_521 = arith.constant 14 : index
    %c2_522 = arith.constant 2 : index
    %c0_523 = arith.constant 0 : index
    %328 = vector.load %arg1[%c0_520, %c14_521, %c2_522, %c0_523] : memref<1x16x22x32xf32, #tpu.memory_space<vmem>>, vector<1x1x20x32xf32>
    %329 = vector.shape_cast %328 : vector<1x1x20x32xf32> to vector<20x32xf32>
    %330 = tpu.concatenate %313, %315, %317, %319, %321, %323, %325, %327, %329 in 1 : vector<20x32xf32>, vector<20x32xf32>, vector<20x32xf32>, vector<20x32xf32>, vector<20x32xf32>, vector<20x32xf32>, vector<20x32xf32>, vector<20x32xf32>, vector<20x32xf32> -> vector<20x288xf32>
    %c0_524 = arith.constant 0 : index
    %c0_525 = arith.constant 0 : index
    %331 = vector.load %arg2[%c0_524, %c0_525] : memref<288x64xf32, #tpu.memory_space<vmem>>, vector<288x64xf32>
    %cst_526 = arith.constant dense<0.000000e+00> : vector<20x64xf32>
    %332 = tpu.matmul %330, %331, %cst_526 {dimension_numbers = #tpu.dot_dimension_numbers<[1], [0], [0], [1], [0, 0, 1, 1], [], []>} : vector<20x288xf32>, vector<288x64xf32>, vector<20x64xf32> -> vector<20x64xf32>
    %c0_527 = arith.constant 0 : index
    %c0_528 = arith.constant 0 : index
    %333 = vector.load %arg3[%c0_527, %c0_528] : memref<1x64xf32, #tpu.memory_space<vmem>>, vector<1x64xf32>
    %334 = vector.broadcast %333 : vector<1x64xf32> to vector<20x64xf32>
    %335 = arith.addf %332, %334 : vector<20x64xf32>
    %cst_529 = arith.constant 0.000000e+00 : f32
    %336 = vector.broadcast %cst_529 : f32 to vector<20x64xf32>
    %337 = arith.maximumf %335, %336 : vector<20x64xf32>
    %c0_530 = arith.constant 0 : index
    %c13_531 = arith.constant 13 : index
    %c0_532 = arith.constant 0 : index
    %c0_533 = arith.constant 0 : index
    %338 = vector.load %arg1[%c0_530, %c13_531, %c0_532, %c0_533] : memref<1x16x22x32xf32, #tpu.memory_space<vmem>>, vector<1x1x20x32xf32>
    %339 = vector.shape_cast %338 : vector<1x1x20x32xf32> to vector<20x32xf32>
    %c0_534 = arith.constant 0 : index
    %c13_535 = arith.constant 13 : index
    %c1_536 = arith.constant 1 : index
    %c0_537 = arith.constant 0 : index
    %340 = vector.load %arg1[%c0_534, %c13_535, %c1_536, %c0_537] : memref<1x16x22x32xf32, #tpu.memory_space<vmem>>, vector<1x1x20x32xf32>
    %341 = vector.shape_cast %340 : vector<1x1x20x32xf32> to vector<20x32xf32>
    %c0_538 = arith.constant 0 : index
    %c13_539 = arith.constant 13 : index
    %c2_540 = arith.constant 2 : index
    %c0_541 = arith.constant 0 : index
    %342 = vector.load %arg1[%c0_538, %c13_539, %c2_540, %c0_541] : memref<1x16x22x32xf32, #tpu.memory_space<vmem>>, vector<1x1x20x32xf32>
    %343 = vector.shape_cast %342 : vector<1x1x20x32xf32> to vector<20x32xf32>
    %c0_542 = arith.constant 0 : index
    %c14_543 = arith.constant 14 : index
    %c0_544 = arith.constant 0 : index
    %c0_545 = arith.constant 0 : index
    %344 = vector.load %arg1[%c0_542, %c14_543, %c0_544, %c0_545] : memref<1x16x22x32xf32, #tpu.memory_space<vmem>>, vector<1x1x20x32xf32>
    %345 = vector.shape_cast %344 : vector<1x1x20x32xf32> to vector<20x32xf32>
    %c0_546 = arith.constant 0 : index
    %c14_547 = arith.constant 14 : index
    %c1_548 = arith.constant 1 : index
    %c0_549 = arith.constant 0 : index
    %346 = vector.load %arg1[%c0_546, %c14_547, %c1_548, %c0_549] : memref<1x16x22x32xf32, #tpu.memory_space<vmem>>, vector<1x1x20x32xf32>
    %347 = vector.shape_cast %346 : vector<1x1x20x32xf32> to vector<20x32xf32>
    %c0_550 = arith.constant 0 : index
    %c14_551 = arith.constant 14 : index
    %c2_552 = arith.constant 2 : index
    %c0_553 = arith.constant 0 : index
    %348 = vector.load %arg1[%c0_550, %c14_551, %c2_552, %c0_553] : memref<1x16x22x32xf32, #tpu.memory_space<vmem>>, vector<1x1x20x32xf32>
    %349 = vector.shape_cast %348 : vector<1x1x20x32xf32> to vector<20x32xf32>
    %c0_554 = arith.constant 0 : index
    %c15 = arith.constant 15 : index
    %c0_555 = arith.constant 0 : index
    %c0_556 = arith.constant 0 : index
    %350 = vector.load %arg1[%c0_554, %c15, %c0_555, %c0_556] : memref<1x16x22x32xf32, #tpu.memory_space<vmem>>, vector<1x1x20x32xf32>
    %351 = vector.shape_cast %350 : vector<1x1x20x32xf32> to vector<20x32xf32>
    %c0_557 = arith.constant 0 : index
    %c15_558 = arith.constant 15 : index
    %c1_559 = arith.constant 1 : index
    %c0_560 = arith.constant 0 : index
    %352 = vector.load %arg1[%c0_557, %c15_558, %c1_559, %c0_560] : memref<1x16x22x32xf32, #tpu.memory_space<vmem>>, vector<1x1x20x32xf32>
    %353 = vector.shape_cast %352 : vector<1x1x20x32xf32> to vector<20x32xf32>
    %c0_561 = arith.constant 0 : index
    %c15_562 = arith.constant 15 : index
    %c2_563 = arith.constant 2 : index
    %c0_564 = arith.constant 0 : index
    %354 = vector.load %arg1[%c0_561, %c15_562, %c2_563, %c0_564] : memref<1x16x22x32xf32, #tpu.memory_space<vmem>>, vector<1x1x20x32xf32>
    %355 = vector.shape_cast %354 : vector<1x1x20x32xf32> to vector<20x32xf32>
    %356 = tpu.concatenate %339, %341, %343, %345, %347, %349, %351, %353, %355 in 1 : vector<20x32xf32>, vector<20x32xf32>, vector<20x32xf32>, vector<20x32xf32>, vector<20x32xf32>, vector<20x32xf32>, vector<20x32xf32>, vector<20x32xf32>, vector<20x32xf32> -> vector<20x288xf32>
    %c0_565 = arith.constant 0 : index
    %c0_566 = arith.constant 0 : index
    %357 = vector.load %arg2[%c0_565, %c0_566] : memref<288x64xf32, #tpu.memory_space<vmem>>, vector<288x64xf32>
    %cst_567 = arith.constant dense<0.000000e+00> : vector<20x64xf32>
    %358 = tpu.matmul %356, %357, %cst_567 {dimension_numbers = #tpu.dot_dimension_numbers<[1], [0], [0], [1], [0, 0, 1, 1], [], []>} : vector<20x288xf32>, vector<288x64xf32>, vector<20x64xf32> -> vector<20x64xf32>
    %c0_568 = arith.constant 0 : index
    %c0_569 = arith.constant 0 : index
    %359 = vector.load %arg3[%c0_568, %c0_569] : memref<1x64xf32, #tpu.memory_space<vmem>>, vector<1x64xf32>
    %360 = vector.broadcast %359 : vector<1x64xf32> to vector<20x64xf32>
    %361 = arith.addf %358, %360 : vector<20x64xf32>
    %cst_570 = arith.constant 0.000000e+00 : f32
    %362 = vector.broadcast %cst_570 : f32 to vector<20x64xf32>
    %363 = arith.maximumf %361, %362 : vector<20x64xf32>
    %364 = arith.maximumf %25, %51 : vector<20x64xf32>
    %365 = vector.extract_strided_slice %364 {offsets = [0, 0], sizes = [1, 64], strides = [1, 1]} : vector<20x64xf32> to vector<1x64xf32>
    %366 = vector.extract_strided_slice %364 {offsets = [1, 0], sizes = [1, 64], strides = [1, 1]} : vector<20x64xf32> to vector<1x64xf32>
    %367 = arith.maximumf %365, %366 : vector<1x64xf32>
    %368 = vector.extract_strided_slice %364 {offsets = [2, 0], sizes = [1, 64], strides = [1, 1]} : vector<20x64xf32> to vector<1x64xf32>
    %369 = vector.extract_strided_slice %364 {offsets = [3, 0], sizes = [1, 64], strides = [1, 1]} : vector<20x64xf32> to vector<1x64xf32>
    %370 = arith.maximumf %368, %369 : vector<1x64xf32>
    %371 = vector.extract_strided_slice %364 {offsets = [4, 0], sizes = [1, 64], strides = [1, 1]} : vector<20x64xf32> to vector<1x64xf32>
    %372 = vector.extract_strided_slice %364 {offsets = [5, 0], sizes = [1, 64], strides = [1, 1]} : vector<20x64xf32> to vector<1x64xf32>
    %373 = arith.maximumf %371, %372 : vector<1x64xf32>
    %374 = vector.extract_strided_slice %364 {offsets = [6, 0], sizes = [1, 64], strides = [1, 1]} : vector<20x64xf32> to vector<1x64xf32>
    %375 = vector.extract_strided_slice %364 {offsets = [7, 0], sizes = [1, 64], strides = [1, 1]} : vector<20x64xf32> to vector<1x64xf32>
    %376 = arith.maximumf %374, %375 : vector<1x64xf32>
    %377 = vector.extract_strided_slice %364 {offsets = [8, 0], sizes = [1, 64], strides = [1, 1]} : vector<20x64xf32> to vector<1x64xf32>
    %378 = vector.extract_strided_slice %364 {offsets = [9, 0], sizes = [1, 64], strides = [1, 1]} : vector<20x64xf32> to vector<1x64xf32>
    %379 = arith.maximumf %377, %378 : vector<1x64xf32>
    %380 = vector.extract_strided_slice %364 {offsets = [10, 0], sizes = [1, 64], strides = [1, 1]} : vector<20x64xf32> to vector<1x64xf32>
    %381 = vector.extract_strided_slice %364 {offsets = [11, 0], sizes = [1, 64], strides = [1, 1]} : vector<20x64xf32> to vector<1x64xf32>
    %382 = arith.maximumf %380, %381 : vector<1x64xf32>
    %383 = vector.extract_strided_slice %364 {offsets = [12, 0], sizes = [1, 64], strides = [1, 1]} : vector<20x64xf32> to vector<1x64xf32>
    %384 = vector.extract_strided_slice %364 {offsets = [13, 0], sizes = [1, 64], strides = [1, 1]} : vector<20x64xf32> to vector<1x64xf32>
    %385 = arith.maximumf %383, %384 : vector<1x64xf32>
    %386 = vector.extract_strided_slice %364 {offsets = [14, 0], sizes = [1, 64], strides = [1, 1]} : vector<20x64xf32> to vector<1x64xf32>
    %387 = vector.extract_strided_slice %364 {offsets = [15, 0], sizes = [1, 64], strides = [1, 1]} : vector<20x64xf32> to vector<1x64xf32>
    %388 = arith.maximumf %386, %387 : vector<1x64xf32>
    %389 = vector.extract_strided_slice %364 {offsets = [16, 0], sizes = [1, 64], strides = [1, 1]} : vector<20x64xf32> to vector<1x64xf32>
    %390 = vector.extract_strided_slice %364 {offsets = [17, 0], sizes = [1, 64], strides = [1, 1]} : vector<20x64xf32> to vector<1x64xf32>
    %391 = arith.maximumf %389, %390 : vector<1x64xf32>
    %392 = vector.extract_strided_slice %364 {offsets = [18, 0], sizes = [1, 64], strides = [1, 1]} : vector<20x64xf32> to vector<1x64xf32>
    %393 = vector.extract_strided_slice %364 {offsets = [19, 0], sizes = [1, 64], strides = [1, 1]} : vector<20x64xf32> to vector<1x64xf32>
    %394 = arith.maximumf %392, %393 : vector<1x64xf32>
    %395 = tpu.concatenate %367, %370, %373, %376, %379, %382, %385, %388, %391, %394 in 0 : vector<1x64xf32>, vector<1x64xf32>, vector<1x64xf32>, vector<1x64xf32>, vector<1x64xf32>, vector<1x64xf32>, vector<1x64xf32>, vector<1x64xf32>, vector<1x64xf32>, vector<1x64xf32> -> vector<10x64xf32>
    %396 = arith.maximumf %77, %103 : vector<20x64xf32>
    %397 = vector.extract_strided_slice %396 {offsets = [0, 0], sizes = [1, 64], strides = [1, 1]} : vector<20x64xf32> to vector<1x64xf32>
    %398 = vector.extract_strided_slice %396 {offsets = [1, 0], sizes = [1, 64], strides = [1, 1]} : vector<20x64xf32> to vector<1x64xf32>
    %399 = arith.maximumf %397, %398 : vector<1x64xf32>
    %400 = vector.extract_strided_slice %396 {offsets = [2, 0], sizes = [1, 64], strides = [1, 1]} : vector<20x64xf32> to vector<1x64xf32>
    %401 = vector.extract_strided_slice %396 {offsets = [3, 0], sizes = [1, 64], strides = [1, 1]} : vector<20x64xf32> to vector<1x64xf32>
    %402 = arith.maximumf %400, %401 : vector<1x64xf32>
    %403 = vector.extract_strided_slice %396 {offsets = [4, 0], sizes = [1, 64], strides = [1, 1]} : vector<20x64xf32> to vector<1x64xf32>
    %404 = vector.extract_strided_slice %396 {offsets = [5, 0], sizes = [1, 64], strides = [1, 1]} : vector<20x64xf32> to vector<1x64xf32>
    %405 = arith.maximumf %403, %404 : vector<1x64xf32>
    %406 = vector.extract_strided_slice %396 {offsets = [6, 0], sizes = [1, 64], strides = [1, 1]} : vector<20x64xf32> to vector<1x64xf32>
    %407 = vector.extract_strided_slice %396 {offsets = [7, 0], sizes = [1, 64], strides = [1, 1]} : vector<20x64xf32> to vector<1x64xf32>
    %408 = arith.maximumf %406, %407 : vector<1x64xf32>
    %409 = vector.extract_strided_slice %396 {offsets = [8, 0], sizes = [1, 64], strides = [1, 1]} : vector<20x64xf32> to vector<1x64xf32>
    %410 = vector.extract_strided_slice %396 {offsets = [9, 0], sizes = [1, 64], strides = [1, 1]} : vector<20x64xf32> to vector<1x64xf32>
    %411 = arith.maximumf %409, %410 : vector<1x64xf32>
    %412 = vector.extract_strided_slice %396 {offsets = [10, 0], sizes = [1, 64], strides = [1, 1]} : vector<20x64xf32> to vector<1x64xf32>
    %413 = vector.extract_strided_slice %396 {offsets = [11, 0], sizes = [1, 64], strides = [1, 1]} : vector<20x64xf32> to vector<1x64xf32>
    %414 = arith.maximumf %412, %413 : vector<1x64xf32>
    %415 = vector.extract_strided_slice %396 {offsets = [12, 0], sizes = [1, 64], strides = [1, 1]} : vector<20x64xf32> to vector<1x64xf32>
    %416 = vector.extract_strided_slice %396 {offsets = [13, 0], sizes = [1, 64], strides = [1, 1]} : vector<20x64xf32> to vector<1x64xf32>
    %417 = arith.maximumf %415, %416 : vector<1x64xf32>
    %418 = vector.extract_strided_slice %396 {offsets = [14, 0], sizes = [1, 64], strides = [1, 1]} : vector<20x64xf32> to vector<1x64xf32>
    %419 = vector.extract_strided_slice %396 {offsets = [15, 0], sizes = [1, 64], strides = [1, 1]} : vector<20x64xf32> to vector<1x64xf32>
    %420 = arith.maximumf %418, %419 : vector<1x64xf32>
    %421 = vector.extract_strided_slice %396 {offsets = [16, 0], sizes = [1, 64], strides = [1, 1]} : vector<20x64xf32> to vector<1x64xf32>
    %422 = vector.extract_strided_slice %396 {offsets = [17, 0], sizes = [1, 64], strides = [1, 1]} : vector<20x64xf32> to vector<1x64xf32>
    %423 = arith.maximumf %421, %422 : vector<1x64xf32>
    %424 = vector.extract_strided_slice %396 {offsets = [18, 0], sizes = [1, 64], strides = [1, 1]} : vector<20x64xf32> to vector<1x64xf32>
    %425 = vector.extract_strided_slice %396 {offsets = [19, 0], sizes = [1, 64], strides = [1, 1]} : vector<20x64xf32> to vector<1x64xf32>
    %426 = arith.maximumf %424, %425 : vector<1x64xf32>
    %427 = tpu.concatenate %399, %402, %405, %408, %411, %414, %417, %420, %423, %426 in 0 : vector<1x64xf32>, vector<1x64xf32>, vector<1x64xf32>, vector<1x64xf32>, vector<1x64xf32>, vector<1x64xf32>, vector<1x64xf32>, vector<1x64xf32>, vector<1x64xf32>, vector<1x64xf32> -> vector<10x64xf32>
    %428 = arith.maximumf %129, %155 : vector<20x64xf32>
    %429 = vector.extract_strided_slice %428 {offsets = [0, 0], sizes = [1, 64], strides = [1, 1]} : vector<20x64xf32> to vector<1x64xf32>
    %430 = vector.extract_strided_slice %428 {offsets = [1, 0], sizes = [1, 64], strides = [1, 1]} : vector<20x64xf32> to vector<1x64xf32>
    %431 = arith.maximumf %429, %430 : vector<1x64xf32>
    %432 = vector.extract_strided_slice %428 {offsets = [2, 0], sizes = [1, 64], strides = [1, 1]} : vector<20x64xf32> to vector<1x64xf32>
    %433 = vector.extract_strided_slice %428 {offsets = [3, 0], sizes = [1, 64], strides = [1, 1]} : vector<20x64xf32> to vector<1x64xf32>
    %434 = arith.maximumf %432, %433 : vector<1x64xf32>
    %435 = vector.extract_strided_slice %428 {offsets = [4, 0], sizes = [1, 64], strides = [1, 1]} : vector<20x64xf32> to vector<1x64xf32>
    %436 = vector.extract_strided_slice %428 {offsets = [5, 0], sizes = [1, 64], strides = [1, 1]} : vector<20x64xf32> to vector<1x64xf32>
    %437 = arith.maximumf %435, %436 : vector<1x64xf32>
    %438 = vector.extract_strided_slice %428 {offsets = [6, 0], sizes = [1, 64], strides = [1, 1]} : vector<20x64xf32> to vector<1x64xf32>
    %439 = vector.extract_strided_slice %428 {offsets = [7, 0], sizes = [1, 64], strides = [1, 1]} : vector<20x64xf32> to vector<1x64xf32>
    %440 = arith.maximumf %438, %439 : vector<1x64xf32>
    %441 = vector.extract_strided_slice %428 {offsets = [8, 0], sizes = [1, 64], strides = [1, 1]} : vector<20x64xf32> to vector<1x64xf32>
    %442 = vector.extract_strided_slice %428 {offsets = [9, 0], sizes = [1, 64], strides = [1, 1]} : vector<20x64xf32> to vector<1x64xf32>
    %443 = arith.maximumf %441, %442 : vector<1x64xf32>
    %444 = vector.extract_strided_slice %428 {offsets = [10, 0], sizes = [1, 64], strides = [1, 1]} : vector<20x64xf32> to vector<1x64xf32>
    %445 = vector.extract_strided_slice %428 {offsets = [11, 0], sizes = [1, 64], strides = [1, 1]} : vector<20x64xf32> to vector<1x64xf32>
    %446 = arith.maximumf %444, %445 : vector<1x64xf32>
    %447 = vector.extract_strided_slice %428 {offsets = [12, 0], sizes = [1, 64], strides = [1, 1]} : vector<20x64xf32> to vector<1x64xf32>
    %448 = vector.extract_strided_slice %428 {offsets = [13, 0], sizes = [1, 64], strides = [1, 1]} : vector<20x64xf32> to vector<1x64xf32>
    %449 = arith.maximumf %447, %448 : vector<1x64xf32>
    %450 = vector.extract_strided_slice %428 {offsets = [14, 0], sizes = [1, 64], strides = [1, 1]} : vector<20x64xf32> to vector<1x64xf32>
    %451 = vector.extract_strided_slice %428 {offsets = [15, 0], sizes = [1, 64], strides = [1, 1]} : vector<20x64xf32> to vector<1x64xf32>
    %452 = arith.maximumf %450, %451 : vector<1x64xf32>
    %453 = vector.extract_strided_slice %428 {offsets = [16, 0], sizes = [1, 64], strides = [1, 1]} : vector<20x64xf32> to vector<1x64xf32>
    %454 = vector.extract_strided_slice %428 {offsets = [17, 0], sizes = [1, 64], strides = [1, 1]} : vector<20x64xf32> to vector<1x64xf32>
    %455 = arith.maximumf %453, %454 : vector<1x64xf32>
    %456 = vector.extract_strided_slice %428 {offsets = [18, 0], sizes = [1, 64], strides = [1, 1]} : vector<20x64xf32> to vector<1x64xf32>
    %457 = vector.extract_strided_slice %428 {offsets = [19, 0], sizes = [1, 64], strides = [1, 1]} : vector<20x64xf32> to vector<1x64xf32>
    %458 = arith.maximumf %456, %457 : vector<1x64xf32>
    %459 = tpu.concatenate %431, %434, %437, %440, %443, %446, %449, %452, %455, %458 in 0 : vector<1x64xf32>, vector<1x64xf32>, vector<1x64xf32>, vector<1x64xf32>, vector<1x64xf32>, vector<1x64xf32>, vector<1x64xf32>, vector<1x64xf32>, vector<1x64xf32>, vector<1x64xf32> -> vector<10x64xf32>
    %460 = arith.maximumf %181, %207 : vector<20x64xf32>
    %461 = vector.extract_strided_slice %460 {offsets = [0, 0], sizes = [1, 64], strides = [1, 1]} : vector<20x64xf32> to vector<1x64xf32>
    %462 = vector.extract_strided_slice %460 {offsets = [1, 0], sizes = [1, 64], strides = [1, 1]} : vector<20x64xf32> to vector<1x64xf32>
    %463 = arith.maximumf %461, %462 : vector<1x64xf32>
    %464 = vector.extract_strided_slice %460 {offsets = [2, 0], sizes = [1, 64], strides = [1, 1]} : vector<20x64xf32> to vector<1x64xf32>
    %465 = vector.extract_strided_slice %460 {offsets = [3, 0], sizes = [1, 64], strides = [1, 1]} : vector<20x64xf32> to vector<1x64xf32>
    %466 = arith.maximumf %464, %465 : vector<1x64xf32>
    %467 = vector.extract_strided_slice %460 {offsets = [4, 0], sizes = [1, 64], strides = [1, 1]} : vector<20x64xf32> to vector<1x64xf32>
    %468 = vector.extract_strided_slice %460 {offsets = [5, 0], sizes = [1, 64], strides = [1, 1]} : vector<20x64xf32> to vector<1x64xf32>
    %469 = arith.maximumf %467, %468 : vector<1x64xf32>
    %470 = vector.extract_strided_slice %460 {offsets = [6, 0], sizes = [1, 64], strides = [1, 1]} : vector<20x64xf32> to vector<1x64xf32>
    %471 = vector.extract_strided_slice %460 {offsets = [7, 0], sizes = [1, 64], strides = [1, 1]} : vector<20x64xf32> to vector<1x64xf32>
    %472 = arith.maximumf %470, %471 : vector<1x64xf32>
    %473 = vector.extract_strided_slice %460 {offsets = [8, 0], sizes = [1, 64], strides = [1, 1]} : vector<20x64xf32> to vector<1x64xf32>
    %474 = vector.extract_strided_slice %460 {offsets = [9, 0], sizes = [1, 64], strides = [1, 1]} : vector<20x64xf32> to vector<1x64xf32>
    %475 = arith.maximumf %473, %474 : vector<1x64xf32>
    %476 = vector.extract_strided_slice %460 {offsets = [10, 0], sizes = [1, 64], strides = [1, 1]} : vector<20x64xf32> to vector<1x64xf32>
    %477 = vector.extract_strided_slice %460 {offsets = [11, 0], sizes = [1, 64], strides = [1, 1]} : vector<20x64xf32> to vector<1x64xf32>
    %478 = arith.maximumf %476, %477 : vector<1x64xf32>
    %479 = vector.extract_strided_slice %460 {offsets = [12, 0], sizes = [1, 64], strides = [1, 1]} : vector<20x64xf32> to vector<1x64xf32>
    %480 = vector.extract_strided_slice %460 {offsets = [13, 0], sizes = [1, 64], strides = [1, 1]} : vector<20x64xf32> to vector<1x64xf32>
    %481 = arith.maximumf %479, %480 : vector<1x64xf32>
    %482 = vector.extract_strided_slice %460 {offsets = [14, 0], sizes = [1, 64], strides = [1, 1]} : vector<20x64xf32> to vector<1x64xf32>
    %483 = vector.extract_strided_slice %460 {offsets = [15, 0], sizes = [1, 64], strides = [1, 1]} : vector<20x64xf32> to vector<1x64xf32>
    %484 = arith.maximumf %482, %483 : vector<1x64xf32>
    %485 = vector.extract_strided_slice %460 {offsets = [16, 0], sizes = [1, 64], strides = [1, 1]} : vector<20x64xf32> to vector<1x64xf32>
    %486 = vector.extract_strided_slice %460 {offsets = [17, 0], sizes = [1, 64], strides = [1, 1]} : vector<20x64xf32> to vector<1x64xf32>
    %487 = arith.maximumf %485, %486 : vector<1x64xf32>
    %488 = vector.extract_strided_slice %460 {offsets = [18, 0], sizes = [1, 64], strides = [1, 1]} : vector<20x64xf32> to vector<1x64xf32>
    %489 = vector.extract_strided_slice %460 {offsets = [19, 0], sizes = [1, 64], strides = [1, 1]} : vector<20x64xf32> to vector<1x64xf32>
    %490 = arith.maximumf %488, %489 : vector<1x64xf32>
    %491 = tpu.concatenate %463, %466, %469, %472, %475, %478, %481, %484, %487, %490 in 0 : vector<1x64xf32>, vector<1x64xf32>, vector<1x64xf32>, vector<1x64xf32>, vector<1x64xf32>, vector<1x64xf32>, vector<1x64xf32>, vector<1x64xf32>, vector<1x64xf32>, vector<1x64xf32> -> vector<10x64xf32>
    %492 = arith.maximumf %233, %259 : vector<20x64xf32>
    %493 = vector.extract_strided_slice %492 {offsets = [0, 0], sizes = [1, 64], strides = [1, 1]} : vector<20x64xf32> to vector<1x64xf32>
    %494 = vector.extract_strided_slice %492 {offsets = [1, 0], sizes = [1, 64], strides = [1, 1]} : vector<20x64xf32> to vector<1x64xf32>
    %495 = arith.maximumf %493, %494 : vector<1x64xf32>
    %496 = vector.extract_strided_slice %492 {offsets = [2, 0], sizes = [1, 64], strides = [1, 1]} : vector<20x64xf32> to vector<1x64xf32>
    %497 = vector.extract_strided_slice %492 {offsets = [3, 0], sizes = [1, 64], strides = [1, 1]} : vector<20x64xf32> to vector<1x64xf32>
    %498 = arith.maximumf %496, %497 : vector<1x64xf32>
    %499 = vector.extract_strided_slice %492 {offsets = [4, 0], sizes = [1, 64], strides = [1, 1]} : vector<20x64xf32> to vector<1x64xf32>
    %500 = vector.extract_strided_slice %492 {offsets = [5, 0], sizes = [1, 64], strides = [1, 1]} : vector<20x64xf32> to vector<1x64xf32>
    %501 = arith.maximumf %499, %500 : vector<1x64xf32>
    %502 = vector.extract_strided_slice %492 {offsets = [6, 0], sizes = [1, 64], strides = [1, 1]} : vector<20x64xf32> to vector<1x64xf32>
    %503 = vector.extract_strided_slice %492 {offsets = [7, 0], sizes = [1, 64], strides = [1, 1]} : vector<20x64xf32> to vector<1x64xf32>
    %504 = arith.maximumf %502, %503 : vector<1x64xf32>
    %505 = vector.extract_strided_slice %492 {offsets = [8, 0], sizes = [1, 64], strides = [1, 1]} : vector<20x64xf32> to vector<1x64xf32>
    %506 = vector.extract_strided_slice %492 {offsets = [9, 0], sizes = [1, 64], strides = [1, 1]} : vector<20x64xf32> to vector<1x64xf32>
    %507 = arith.maximumf %505, %506 : vector<1x64xf32>
    %508 = vector.extract_strided_slice %492 {offsets = [10, 0], sizes = [1, 64], strides = [1, 1]} : vector<20x64xf32> to vector<1x64xf32>
    %509 = vector.extract_strided_slice %492 {offsets = [11, 0], sizes = [1, 64], strides = [1, 1]} : vector<20x64xf32> to vector<1x64xf32>
    %510 = arith.maximumf %508, %509 : vector<1x64xf32>
    %511 = vector.extract_strided_slice %492 {offsets = [12, 0], sizes = [1, 64], strides = [1, 1]} : vector<20x64xf32> to vector<1x64xf32>
    %512 = vector.extract_strided_slice %492 {offsets = [13, 0], sizes = [1, 64], strides = [1, 1]} : vector<20x64xf32> to vector<1x64xf32>
    %513 = arith.maximumf %511, %512 : vector<1x64xf32>
    %514 = vector.extract_strided_slice %492 {offsets = [14, 0], sizes = [1, 64], strides = [1, 1]} : vector<20x64xf32> to vector<1x64xf32>
    %515 = vector.extract_strided_slice %492 {offsets = [15, 0], sizes = [1, 64], strides = [1, 1]} : vector<20x64xf32> to vector<1x64xf32>
    %516 = arith.maximumf %514, %515 : vector<1x64xf32>
    %517 = vector.extract_strided_slice %492 {offsets = [16, 0], sizes = [1, 64], strides = [1, 1]} : vector<20x64xf32> to vector<1x64xf32>
    %518 = vector.extract_strided_slice %492 {offsets = [17, 0], sizes = [1, 64], strides = [1, 1]} : vector<20x64xf32> to vector<1x64xf32>
    %519 = arith.maximumf %517, %518 : vector<1x64xf32>
    %520 = vector.extract_strided_slice %492 {offsets = [18, 0], sizes = [1, 64], strides = [1, 1]} : vector<20x64xf32> to vector<1x64xf32>
    %521 = vector.extract_strided_slice %492 {offsets = [19, 0], sizes = [1, 64], strides = [1, 1]} : vector<20x64xf32> to vector<1x64xf32>
    %522 = arith.maximumf %520, %521 : vector<1x64xf32>
    %523 = tpu.concatenate %495, %498, %501, %504, %507, %510, %513, %516, %519, %522 in 0 : vector<1x64xf32>, vector<1x64xf32>, vector<1x64xf32>, vector<1x64xf32>, vector<1x64xf32>, vector<1x64xf32>, vector<1x64xf32>, vector<1x64xf32>, vector<1x64xf32>, vector<1x64xf32> -> vector<10x64xf32>
    %524 = arith.maximumf %285, %311 : vector<20x64xf32>
    %525 = vector.extract_strided_slice %524 {offsets = [0, 0], sizes = [1, 64], strides = [1, 1]} : vector<20x64xf32> to vector<1x64xf32>
    %526 = vector.extract_strided_slice %524 {offsets = [1, 0], sizes = [1, 64], strides = [1, 1]} : vector<20x64xf32> to vector<1x64xf32>
    %527 = arith.maximumf %525, %526 : vector<1x64xf32>
    %528 = vector.extract_strided_slice %524 {offsets = [2, 0], sizes = [1, 64], strides = [1, 1]} : vector<20x64xf32> to vector<1x64xf32>
    %529 = vector.extract_strided_slice %524 {offsets = [3, 0], sizes = [1, 64], strides = [1, 1]} : vector<20x64xf32> to vector<1x64xf32>
    %530 = arith.maximumf %528, %529 : vector<1x64xf32>
    %531 = vector.extract_strided_slice %524 {offsets = [4, 0], sizes = [1, 64], strides = [1, 1]} : vector<20x64xf32> to vector<1x64xf32>
    %532 = vector.extract_strided_slice %524 {offsets = [5, 0], sizes = [1, 64], strides = [1, 1]} : vector<20x64xf32> to vector<1x64xf32>
    %533 = arith.maximumf %531, %532 : vector<1x64xf32>
    %534 = vector.extract_strided_slice %524 {offsets = [6, 0], sizes = [1, 64], strides = [1, 1]} : vector<20x64xf32> to vector<1x64xf32>
    %535 = vector.extract_strided_slice %524 {offsets = [7, 0], sizes = [1, 64], strides = [1, 1]} : vector<20x64xf32> to vector<1x64xf32>
    %536 = arith.maximumf %534, %535 : vector<1x64xf32>
    %537 = vector.extract_strided_slice %524 {offsets = [8, 0], sizes = [1, 64], strides = [1, 1]} : vector<20x64xf32> to vector<1x64xf32>
    %538 = vector.extract_strided_slice %524 {offsets = [9, 0], sizes = [1, 64], strides = [1, 1]} : vector<20x64xf32> to vector<1x64xf32>
    %539 = arith.maximumf %537, %538 : vector<1x64xf32>
    %540 = vector.extract_strided_slice %524 {offsets = [10, 0], sizes = [1, 64], strides = [1, 1]} : vector<20x64xf32> to vector<1x64xf32>
    %541 = vector.extract_strided_slice %524 {offsets = [11, 0], sizes = [1, 64], strides = [1, 1]} : vector<20x64xf32> to vector<1x64xf32>
    %542 = arith.maximumf %540, %541 : vector<1x64xf32>
    %543 = vector.extract_strided_slice %524 {offsets = [12, 0], sizes = [1, 64], strides = [1, 1]} : vector<20x64xf32> to vector<1x64xf32>
    %544 = vector.extract_strided_slice %524 {offsets = [13, 0], sizes = [1, 64], strides = [1, 1]} : vector<20x64xf32> to vector<1x64xf32>
    %545 = arith.maximumf %543, %544 : vector<1x64xf32>
    %546 = vector.extract_strided_slice %524 {offsets = [14, 0], sizes = [1, 64], strides = [1, 1]} : vector<20x64xf32> to vector<1x64xf32>
    %547 = vector.extract_strided_slice %524 {offsets = [15, 0], sizes = [1, 64], strides = [1, 1]} : vector<20x64xf32> to vector<1x64xf32>
    %548 = arith.maximumf %546, %547 : vector<1x64xf32>
    %549 = vector.extract_strided_slice %524 {offsets = [16, 0], sizes = [1, 64], strides = [1, 1]} : vector<20x64xf32> to vector<1x64xf32>
    %550 = vector.extract_strided_slice %524 {offsets = [17, 0], sizes = [1, 64], strides = [1, 1]} : vector<20x64xf32> to vector<1x64xf32>
    %551 = arith.maximumf %549, %550 : vector<1x64xf32>
    %552 = vector.extract_strided_slice %524 {offsets = [18, 0], sizes = [1, 64], strides = [1, 1]} : vector<20x64xf32> to vector<1x64xf32>
    %553 = vector.extract_strided_slice %524 {offsets = [19, 0], sizes = [1, 64], strides = [1, 1]} : vector<20x64xf32> to vector<1x64xf32>
    %554 = arith.maximumf %552, %553 : vector<1x64xf32>
    %555 = tpu.concatenate %527, %530, %533, %536, %539, %542, %545, %548, %551, %554 in 0 : vector<1x64xf32>, vector<1x64xf32>, vector<1x64xf32>, vector<1x64xf32>, vector<1x64xf32>, vector<1x64xf32>, vector<1x64xf32>, vector<1x64xf32>, vector<1x64xf32>, vector<1x64xf32> -> vector<10x64xf32>
    %556 = arith.maximumf %337, %363 : vector<20x64xf32>
    %557 = vector.extract_strided_slice %556 {offsets = [0, 0], sizes = [1, 64], strides = [1, 1]} : vector<20x64xf32> to vector<1x64xf32>
    %558 = vector.extract_strided_slice %556 {offsets = [1, 0], sizes = [1, 64], strides = [1, 1]} : vector<20x64xf32> to vector<1x64xf32>
    %559 = arith.maximumf %557, %558 : vector<1x64xf32>
    %560 = vector.extract_strided_slice %556 {offsets = [2, 0], sizes = [1, 64], strides = [1, 1]} : vector<20x64xf32> to vector<1x64xf32>
    %561 = vector.extract_strided_slice %556 {offsets = [3, 0], sizes = [1, 64], strides = [1, 1]} : vector<20x64xf32> to vector<1x64xf32>
    %562 = arith.maximumf %560, %561 : vector<1x64xf32>
    %563 = vector.extract_strided_slice %556 {offsets = [4, 0], sizes = [1, 64], strides = [1, 1]} : vector<20x64xf32> to vector<1x64xf32>
    %564 = vector.extract_strided_slice %556 {offsets = [5, 0], sizes = [1, 64], strides = [1, 1]} : vector<20x64xf32> to vector<1x64xf32>
    %565 = arith.maximumf %563, %564 : vector<1x64xf32>
    %566 = vector.extract_strided_slice %556 {offsets = [6, 0], sizes = [1, 64], strides = [1, 1]} : vector<20x64xf32> to vector<1x64xf32>
    %567 = vector.extract_strided_slice %556 {offsets = [7, 0], sizes = [1, 64], strides = [1, 1]} : vector<20x64xf32> to vector<1x64xf32>
    %568 = arith.maximumf %566, %567 : vector<1x64xf32>
    %569 = vector.extract_strided_slice %556 {offsets = [8, 0], sizes = [1, 64], strides = [1, 1]} : vector<20x64xf32> to vector<1x64xf32>
    %570 = vector.extract_strided_slice %556 {offsets = [9, 0], sizes = [1, 64], strides = [1, 1]} : vector<20x64xf32> to vector<1x64xf32>
    %571 = arith.maximumf %569, %570 : vector<1x64xf32>
    %572 = vector.extract_strided_slice %556 {offsets = [10, 0], sizes = [1, 64], strides = [1, 1]} : vector<20x64xf32> to vector<1x64xf32>
    %573 = vector.extract_strided_slice %556 {offsets = [11, 0], sizes = [1, 64], strides = [1, 1]} : vector<20x64xf32> to vector<1x64xf32>
    %574 = arith.maximumf %572, %573 : vector<1x64xf32>
    %575 = vector.extract_strided_slice %556 {offsets = [12, 0], sizes = [1, 64], strides = [1, 1]} : vector<20x64xf32> to vector<1x64xf32>
    %576 = vector.extract_strided_slice %556 {offsets = [13, 0], sizes = [1, 64], strides = [1, 1]} : vector<20x64xf32> to vector<1x64xf32>
    %577 = arith.maximumf %575, %576 : vector<1x64xf32>
    %578 = vector.extract_strided_slice %556 {offsets = [14, 0], sizes = [1, 64], strides = [1, 1]} : vector<20x64xf32> to vector<1x64xf32>
    %579 = vector.extract_strided_slice %556 {offsets = [15, 0], sizes = [1, 64], strides = [1, 1]} : vector<20x64xf32> to vector<1x64xf32>
    %580 = arith.maximumf %578, %579 : vector<1x64xf32>
    %581 = vector.extract_strided_slice %556 {offsets = [16, 0], sizes = [1, 64], strides = [1, 1]} : vector<20x64xf32> to vector<1x64xf32>
    %582 = vector.extract_strided_slice %556 {offsets = [17, 0], sizes = [1, 64], strides = [1, 1]} : vector<20x64xf32> to vector<1x64xf32>
    %583 = arith.maximumf %581, %582 : vector<1x64xf32>
    %584 = vector.extract_strided_slice %556 {offsets = [18, 0], sizes = [1, 64], strides = [1, 1]} : vector<20x64xf32> to vector<1x64xf32>
    %585 = vector.extract_strided_slice %556 {offsets = [19, 0], sizes = [1, 64], strides = [1, 1]} : vector<20x64xf32> to vector<1x64xf32>
    %586 = arith.maximumf %584, %585 : vector<1x64xf32>
    %587 = tpu.concatenate %559, %562, %565, %568, %571, %574, %577, %580, %583, %586 in 0 : vector<1x64xf32>, vector<1x64xf32>, vector<1x64xf32>, vector<1x64xf32>, vector<1x64xf32>, vector<1x64xf32>, vector<1x64xf32>, vector<1x64xf32>, vector<1x64xf32>, vector<1x64xf32> -> vector<10x64xf32>
    %588 = vector.shape_cast %395 : vector<10x64xf32> to vector<1x10x64xf32>
    %589 = vector.shape_cast %427 : vector<10x64xf32> to vector<1x10x64xf32>
    %590 = vector.shape_cast %459 : vector<10x64xf32> to vector<1x10x64xf32>
    %591 = vector.shape_cast %491 : vector<10x64xf32> to vector<1x10x64xf32>
    %592 = vector.shape_cast %523 : vector<10x64xf32> to vector<1x10x64xf32>
    %593 = vector.shape_cast %555 : vector<10x64xf32> to vector<1x10x64xf32>
    %594 = vector.shape_cast %587 : vector<10x64xf32> to vector<1x10x64xf32>
    %595 = tpu.concatenate %588, %589, %590, %591, %592, %593, %594 in 0 : vector<1x10x64xf32>, vector<1x10x64xf32>, vector<1x10x64xf32>, vector<1x10x64xf32>, vector<1x10x64xf32>, vector<1x10x64xf32>, vector<1x10x64xf32> -> vector<7x10x64xf32>
    %c0_571 = arith.constant 0 : index
    %c0_572 = arith.constant 0 : index
    %c0_573 = arith.constant 0 : index
    %c0_574 = arith.constant 0 : index
    %596 = vector.load %arg4[%c0_571, %c0_572, %c0_573, %c0_574] : memref<1x7x10x64xf32, #tpu.memory_space<vmem>>, vector<1x7x10x64xf32>
    %597 = vector.shape_cast %596 : vector<1x7x10x64xf32> to vector<7x10x64xf32>
    %598 = vector.shape_cast %595 : vector<7x10x64xf32> to vector<1x7x10x64xf32>
    tpu.vector_store %arg4[%c0_571, %c0_572, %c0_573, %c0_574], %598 {strides = array<i32>} : memref<1x7x10x64xf32, #tpu.memory_space<vmem>>, vector<1x7x10x64xf32>,
    return
  }
  func.func @transform_0(%arg0: i32) -> (i32, i32, i32, i32) {
    %c0_i32 = arith.constant 0 : i32
    %c0_i32_0 = arith.constant 0 : i32
    %c0_i32_1 = arith.constant 0 : i32
    %c0_i32_2 = arith.constant 0 : i32
    return %arg0, %c0_i32, %c0_i32_0, %c0_i32_1 : i32, i32, i32, i32
  }
  func.func @transform_1(%arg0: i32) -> (i32, i32) {
    %c0_i32 = arith.constant 0 : i32
    %c0_i32_0 = arith.constant 0 : i32
    %c0_i32_1 = arith.constant 0 : i32
    return %c0_i32, %c0_i32_0 : i32, i32
  }
  func.func @transform_2(%arg0: i32) -> (i32, i32) {
    %c0_i32 = arith.constant 0 : i32
    %c0_i32_0 = arith.constant 0 : i32
    %c0_i32_1 = arith.constant 0 : i32
    return %c0_i32, %c0_i32_0 : i32, i32
  }
  func.func @transform_3(%arg0: i32) -> (i32, i32, i32, i32) {
    %c0_i32 = arith.constant 0 : i32
    %c0_i32_0 = arith.constant 0 : i32
    %c0_i32_1 = arith.constant 0 : i32
    %c0_i32_2 = arith.constant 0 : i32
    return %arg0, %c0_i32, %c0_i32_0, %c0_i32_1 : i32, i32, i32, i32
  }
}

module attributes {stable_mosaic.version = 11 : i64} {
  func.func @_fc_kernel(%arg0: i32, %arg1: memref<2x4480xf32, #tpu.memory_space<vmem>>, %arg2: memref<4480x128xf32, #tpu.memory_space<vmem>>, %arg3: memref<1x128xf32, #tpu.memory_space<vmem>>, %arg4: memref<128x20xf32, #tpu.memory_space<vmem>>, %arg5: memref<1x20xf32, #tpu.memory_space<vmem>>, %arg6: memref<2x20xf32, #tpu.memory_space<vmem>>) attributes {dimension_semantics = [#tpu.dimension_semantics<arbitrary>], iteration_bounds = array<i64: 1>, scalar_prefetch = 0 : i64, scratch_operands = 0 : i64, tpu.core_type = #tpu.core_type<tc>, window_params = [{pipeline_mode = #tpu.pipeline_mode<synchronous>, transform_indices = @transform_0, window_bounds = array<i64: 2, 4480>}, {pipeline_mode = #tpu.pipeline_mode<synchronous>, transform_indices = @transform_1, window_bounds = array<i64: 4480, 128>}, {pipeline_mode = #tpu.pipeline_mode<synchronous>, transform_indices = @transform_2, window_bounds = array<i64: 1, 128>}, {pipeline_mode = #tpu.pipeline_mode<synchronous>, transform_indices = @transform_3, window_bounds = array<i64: 128, 20>}, {pipeline_mode = #tpu.pipeline_mode<synchronous>, transform_indices = @transform_4, window_bounds = array<i64: 1, 20>}, {pipeline_mode = #tpu.pipeline_mode<synchronous>, transform_indices = @transform_5, window_bounds = array<i64: 2, 20>}]} {
    %c0 = arith.constant 0 : index
    %c0_0 = arith.constant 0 : index
    %0 = vector.load %arg1[%c0, %c0_0] : memref<2x4480xf32, #tpu.memory_space<vmem>>, vector<2x4480xf32>
    %c0_1 = arith.constant 0 : index
    %c0_2 = arith.constant 0 : index
    %1 = vector.load %arg2[%c0_1, %c0_2] : memref<4480x128xf32, #tpu.memory_space<vmem>>, vector<4480x128xf32>
    %cst = arith.constant dense<0.000000e+00> : vector<2x128xf32>
    %2 = tpu.matmul %0, %1, %cst {dimension_numbers = #tpu.dot_dimension_numbers<[1], [0], [0], [1], [0, 0, 1, 1], [], []>} : vector<2x4480xf32>, vector<4480x128xf32>, vector<2x128xf32> -> vector<2x128xf32>
    %c0_3 = arith.constant 0 : index
    %c0_4 = arith.constant 0 : index
    %3 = vector.load %arg3[%c0_3, %c0_4] : memref<1x128xf32, #tpu.memory_space<vmem>>, vector<1x128xf32>
    %4 = vector.broadcast %3 : vector<1x128xf32> to vector<2x128xf32>
    %5 = arith.addf %2, %4 : vector<2x128xf32>
    %c0_5 = arith.constant 0 : index
    %c0_6 = arith.constant 0 : index
    %6 = vector.load %arg4[%c0_5, %c0_6] : memref<128x20xf32, #tpu.memory_space<vmem>>, vector<128x20xf32>
    %cst_7 = arith.constant dense<0.000000e+00> : vector<2x20xf32>
    %7 = tpu.matmul %5, %6, %cst_7 {dimension_numbers = #tpu.dot_dimension_numbers<[1], [0], [0], [1], [0, 0, 1, 1], [], []>} : vector<2x128xf32>, vector<128x20xf32>, vector<2x20xf32> -> vector<2x20xf32>
    %c0_8 = arith.constant 0 : index
    %c0_9 = arith.constant 0 : index
    %8 = vector.load %arg5[%c0_8, %c0_9] : memref<1x20xf32, #tpu.memory_space<vmem>>, vector<1x20xf32>
    %9 = vector.broadcast %8 : vector<1x20xf32> to vector<2x20xf32>
    %10 = arith.addf %7, %9 : vector<2x20xf32>
    %c0_10 = arith.constant 0 : index
    %c0_11 = arith.constant 0 : index
    %11 = vector.load %arg6[%c0_10, %c0_11] : memref<2x20xf32, #tpu.memory_space<vmem>>, vector<2x20xf32>
    tpu.vector_store %arg6[%c0_10, %c0_11], %10 {strides = array<i32>} : memref<2x20xf32, #tpu.memory_space<vmem>>, vector<2x20xf32>,
    return
  }
  func.func @transform_0(%arg0: i32) -> (i32, i32) {
    %c0_i32 = arith.constant 0 : i32
    %c0_i32_0 = arith.constant 0 : i32
    %c0_i32_1 = arith.constant 0 : i32
    return %c0_i32, %c0_i32_0 : i32, i32
  }
  func.func @transform_1(%arg0: i32) -> (i32, i32) {
    %c0_i32 = arith.constant 0 : i32
    %c0_i32_0 = arith.constant 0 : i32
    %c0_i32_1 = arith.constant 0 : i32
    return %c0_i32, %c0_i32_0 : i32, i32
  }
  func.func @transform_2(%arg0: i32) -> (i32, i32) {
    %c0_i32 = arith.constant 0 : i32
    %c0_i32_0 = arith.constant 0 : i32
    %c0_i32_1 = arith.constant 0 : i32
    return %c0_i32, %c0_i32_0 : i32, i32
  }
  func.func @transform_3(%arg0: i32) -> (i32, i32) {
    %c0_i32 = arith.constant 0 : i32
    %c0_i32_0 = arith.constant 0 : i32
    %c0_i32_1 = arith.constant 0 : i32
    return %c0_i32, %c0_i32_0 : i32, i32
  }
  func.func @transform_4(%arg0: i32) -> (i32, i32) {
    %c0_i32 = arith.constant 0 : i32
    %c0_i32_0 = arith.constant 0 : i32
    %c0_i32_1 = arith.constant 0 : i32
    return %c0_i32, %c0_i32_0 : i32, i32
  }
  func.func @transform_5(%arg0: i32) -> (i32, i32) {
    %c0_i32 = arith.constant 0 : i32
    %c0_i32_0 = arith.constant 0 : i32
    %c0_i32_1 = arith.constant 0 : i32
    return %c0_i32, %c0_i32_0 : i32, i32
  }
}

</mosaic_0001>

<llo_original>
// kernel: cnn_forward.3
$region0: #{cnn_forward.3}
  #allocation0 [shape = 'u32[]', space=smem, size = 0x4, offset = 0x4, fixed_abs, tag = 'smem constant byte address 0x4 - core index']
  #allocation1 [shape = 'u32[144,128]{1,0:T(1,128)}', space=vmem, size = 0x12000, scoped, tag = 'internal scratch']
  #allocation2 [shape = 'f32[32,44]{1,0:T(8,128)}', space=vmem, size = 0x4000, scoped, tag = 'scratch operand']
  %s0 = inlined_call_operand.vmem [shape: f32[2,28,40], index: 0, kind: input, shape index: {}]
  %s1 = inlined_call_operand.hbm [shape: f32[220,1280], index: 1, kind: input, shape index: {}]
  %s2 = inlined_call_operand.hbm [shape: f32[1,1280], index: 2, kind: input, shape index: {}]
  %s3 = inlined_call_operand.vmem [shape: f32[2,16,704], index: 3, kind: output, shape index: {}]
  %s4 = sld [smem:[#allocation0]]
  $region53: #{cnn_forward.3} parent=0
    _
  %s6 = ssub.s32 1, %s4
  %s7 = scalar_select 0, %s6, %s4
  $region1: #{cnn_forward.3} parent=0
    #allocation3 [shape = 'u8[1146880]{0}', space=vmem, size = 0x118000, scoped, tag = 'input window, operand 1, single buffered']
    #allocation4 [shape = 's32[2]{0}', space=sflag, size = 0x8, scoped, tag = 'scoped memory for cnn_forward.3']
    #allocation5 [shape = 'u8[5120]{0}', space=vmem, size = 0x1400, scoped, tag = 'input window, operand 2, single buffered']
    #allocation6 [shape = 's32[1]{0}', space=sflag, size = 0x4, scoped, tag = 'scoped memory for cnn_forward.3']
    %8 = vsyncpa [#allocation4], 0
    %9 = vsyncpa [#allocation6], 0
    loop: start=0, step=1, limit=4
    $region2: #{cnn_forward.3} parent=1 // loop_pre_header
      _
    $region3: #{cnn_forward.3} parent=1 // loop_header
      %s11 = sphi 0, %s15
      %p12 = scmp.ge.s32.totalorder %s11, 4
      %s21 = sphi 0, %s23
      %s24 = sphi 0, %s21
      %s25 = sphi 0, %s24
      %s41 = sphi 0, %s25
      %s45 = sphi 0, %s45
      %s47 = sphi 0, %s45
      %s48 = sphi 0, %s47
      %s62 = sphi 0, %s48
      %s66 = sphi 0, %s66
      %s68 = sphi 0, %s66
      %s69 = sphi 0, %s68
      %s83 = sphi 0, %s69
      %s89 = sphi 0, %s91
      %s92 = sphi 0, %s89
      %s93 = sphi 0, %s92
      %s109 = sphi 0, %s93
    $region4: #{cnn_forward.3} parent=1 // loop_header_branch
      %14 = sbr.rel (%p12) target = $region8
    $region5: #{cnn_forward.3} parent=1 // loop_body
      %s16 = ssub.s32 %s11, 1
      %s17 = ssub.s32 %s11, 2
      %s18 = sadd.s32 %s11, 1
      %s19 = ssub.s32 %s11, %s18
      %p20 = scmp.eq.s32.totalorder %s19, 0
      %s22 = sadd.s32 %s21, 1
      %s23 = scalar_select %p20, %s21, %s22
      %p26 = pneg %p20
      %p27 = scmp.eq.s32.totalorder %s11, 1
      %p28 = por %p26, %p27
      %p29 = scmp.ne.s32.totalorder %s21, %s24
      %p30 = scmp.eq.s32.totalorder %s11, 0
      %p31 = por %p29, %p30
      %p32 = scmp.ne.s32.totalorder %s21, %s24
      %p33 = scmp.eq.s32.totalorder %s16, 1
      %p34 = por %p32, %p33
      %p35 = scmp.ne.s32.totalorder %s24, %s25
      %p36 = scmp.eq.s32.totalorder %s16, 0
      %p37 = por %p35, %p36
      %p38 = scmp.ne.s32.totalorder %s24, %s25
      %p39 = scmp.eq.s32.totalorder %s17, 1
      %p40 = por %p38, %p39
      %p42 = scmp.ne.s32.totalorder %s25, %s41
      %p43 = scmp.eq.s32.totalorder %s17, 0
      %p44 = por %p42, %p43
      %s46 = sadd.s32 %s45, 1
      %p49 = scmp.eq.s32.totalorder %s11, 1
      %p50 = scmp.ne.s32.totalorder %s45, %s47
      %p51 = scmp.eq.s32.totalorder %s11, 0
      %p52 = por %p50, %p51
      %p53 = scmp.ne.s32.totalorder %s45, %s47
      %p54 = scmp.eq.s32.totalorder %s16, 1
      %p55 = por %p53, %p54
      %p56 = scmp.ne.s32.totalorder %s47, %s48
      %p57 = scmp.eq.s32.totalorder %s16, 0
      %p58 = por %p56, %p57
      %p59 = scmp.ne.s32.totalorder %s47, %s48
      %p60 = scmp.eq.s32.totalorder %s17, 1
      %p61 = por %p59, %p60
      %p63 = scmp.ne.s32.totalorder %s48, %s62
      %p64 = scmp.eq.s32.totalorder %s17, 0
      %p65 = por %p63, %p64
      %s67 = sadd.s32 %s66, 1
      %p70 = scmp.eq.s32.totalorder %s11, 1
      %p71 = scmp.ne.s32.totalorder %s66, %s68
      %p72 = scmp.eq.s32.totalorder %s11, 0
      %p73 = por %p71, %p72
      %p74 = scmp.ne.s32.totalorder %s66, %s68
      %p75 = scmp.eq.s32.totalorder %s16, 1
      %p76 = por %p74, %p75
      %p77 = scmp.ne.s32.totalorder %s68, %s69
      %p78 = scmp.eq.s32.totalorder %s16, 0
      %p79 = por %p77, %p78
      %p80 = scmp.ne.s32.totalorder %s68, %s69
      %p81 = scmp.eq.s32.totalorder %s17, 1
      %p82 = por %p80, %p81
      %p84 = scmp.ne.s32.totalorder %s69, %s83
      %p85 = scmp.eq.s32.totalorder %s17, 0
      %p86 = por %p84, %p85
      %s87 = ssub.s32 %s11, %s18
      %p88 = scmp.eq.s32.totalorder %s87, 0
      %s90 = sadd.s32 %s89, 1
      %s91 = scalar_select %p88, %s89, %s90
      %p94 = pneg %p88
      %p95 = scmp.eq.s32.totalorder %s11, 1
      %p96 = por %p94, %p95
      %p97 = scmp.ne.s32.totalorder %s89, %s92
      %p98 = scmp.eq.s32.totalorder %s11, 0
      %p99 = por %p97, %p98
      %p100 = scmp.ne.s32.totalorder %s89, %s92
      %p101 = scmp.eq.s32.totalorder %s16, 1
      %p102 = por %p100, %p101
      %p103 = scmp.ne.s32.totalorder %s92, %s93
      %p104 = scmp.eq.s32.totalorder %s16, 0
      %p105 = por %p103, %p104
      %p106 = scmp.ne.s32.totalorder %s92, %s93
      %p107 = scmp.eq.s32.totalorder %s17, 1
      %p108 = por %p106, %p107
      %p110 = scmp.ne.s32.totalorder %s93, %s109
      %p111 = scmp.eq.s32.totalorder %s17, 0
      %p112 = por %p110, %p111
      %p113 = scmp.le.s32.totalorder 1, %s11
      %p114 = scmp.lt.s32.totalorder %s11, 3
      %p115 = pnand %p113, %p114
      %p116 = pneg %p115
      // Predicated region
      $region9: #{cnn_forward.3} parent=5 // pred_check
        _
      $region10: #{cnn_forward.3} parent=5 // pred_check_branch
        %118 = sbr.rel (%p115) target = $region12
      $region11: #{cnn_forward.3} parent=5 // pred_region
        %s119 = ssub.s32 %s11, 1
        // Predicated region
        $region13: #{cnn_forward.3} parent=11 // pred_check
          %p120 = pneg %p58
        $region14: #{cnn_forward.3} parent=11 // pred_check_branch
          %122 = sbr.rel (%p120) target = $region16
        $region15: #{cnn_forward.3} parent=11 // pred_region
          %s124 = ssub.s32 35840, 35840
          %125 = vsyncadd [#allocation4], %s124
          %s126 = sshll.u32 [#allocation3], 4
          %s127 = int_to_ptr.vmem [resolvable:$true] %s126
          %132 = dma.hbm_to_vmem [thread:$0]  %s1, 35840, %s127, [#allocation4], 1280, 1280, 80
        $region16: #{cnn_forward.3} parent=11 // pred_fallthru
          _
        // Predicated region
        $region17: #{cnn_forward.3} parent=11 // pred_check
          %p133 = pneg %p79
        $region18: #{cnn_forward.3} parent=11 // pred_check_branch
          %135 = sbr.rel (%p133) target = $region20
        $region19: #{cnn_forward.3} parent=11 // pred_region
          %s137 = ssub.s32 160, 160
          %138 = vsyncadd [#allocation6], %s137
          %s140 = sshll.u32 [#allocation5], 4
          %s141 = int_to_ptr.vmem [resolvable:$true] %s140
          %143 = dma.hbm_to_vmem [thread:$0]  %s2, 160, %s141, [#allocation6]
        $region20: #{cnn_forward.3} parent=11 // pred_fallthru
          _
      $region12: #{cnn_forward.3} parent=5 // pred_fallthru
        _
      %p144 = scmp.lt.s32.totalorder %s11, 2
      // Predicated region
      $region21: #{cnn_forward.3} parent=5 // pred_check
        %p145 = pneg %p144
      $region22: #{cnn_forward.3} parent=5 // pred_check_branch
        %147 = sbr.rel (%p145) target = $region24
      $region23: #{cnn_forward.3} parent=5 // pred_region
        // Predicated region
        $region25: #{cnn_forward.3} parent=23 // pred_check
          %p148 = pneg %p31
        $region26: #{cnn_forward.3} parent=23 // pred_check_branch
          %150 = sbr.rel (%p148) target = $region28
        $region27: #{cnn_forward.3} parent=23 // pred_region
          %p151 = scmp.lt.s32.totalorder %s11, 1
          %s152 = scalar_select %p151, %s11, 1
          %s153 = smul.addr %s152, 4
          %s154 = smul.addr %s153, 8
          %s155 = scalar_lea.vmem %s0, %s154
        $region28: #{cnn_forward.3} parent=23 // pred_fallthru
          _
      $region24: #{cnn_forward.3} parent=5 // pred_fallthru
        _
      %p156 = scmp.le.s32.totalorder 1, %s11
      %p157 = scmp.lt.s32.totalorder %s11, 3
      %p158 = pnand %p156, %p157
      %p159 = pneg %p158
      // Predicated region
      $region29: #{cnn_forward.3} parent=5 // pred_check
        _
      $region30: #{cnn_forward.3} parent=5 // pred_check_branch
        %161 = sbr.rel (%p158) target = $region32
      $region31: #{cnn_forward.3} parent=5 // pred_region
        %s162 = ssub.s32 %s11, 1
        // Predicated region
        $region33: #{cnn_forward.3} parent=31 // pred_check
          %p163 = pneg %p58
        $region34: #{cnn_forward.3} parent=31 // pred_check_branch
          %165 = sbr.rel (%p163) target = $region36
        $region35: #{cnn_forward.3} parent=31 // pred_region
          %166 = dma.done [#allocation4], 35840
        $region36: #{cnn_forward.3} parent=31 // pred_fallthru
          _
        // Predicated region
        $region37: #{cnn_forward.3} parent=31 // pred_check
          %p167 = pneg %p79
        $region38: #{cnn_forward.3} parent=31 // pred_check_branch
          %169 = sbr.rel (%p167) target = $region40
        $region39: #{cnn_forward.3} parent=31 // pred_region
          %170 = dma.done [#allocation6], 160
        $region40: #{cnn_forward.3} parent=31 // pred_fallthru
          _
        %p171 = scmp.lt.s32.totalorder %s16, 1
        %s172 = scalar_select %p171, %s16, 1
        %s173 = smul.addr %s172, 4
        %s174 = smul.addr %s173, 8
        %s175 = scalar_lea.vmem %s0, %s174
        %p176 = pneg %p37
        %p177 = pneg %p34
        %p178 = pneg %p58
        %p179 = pneg %p55
        %p180 = pneg %p79
        %p181 = pneg %p76
        %p182 = pneg %p105
        %p183 = pneg %p102
        %p184 = scmp.lt.s32.totalorder %s16, 1
        %s185 = scalar_select %p184, %s16, 1
        %s186 = smul.addr %s185, 12
        %s187 = smul.addr %s186, 8
        %s188 = scalar_lea.vmem %s3, %s187
        %p189 = scmp.lt.s32.totalorder %s16, 1
        %s190 = scalar_select %p189, %s16, 1
        %s191 = smul.addr %s190, 4
        %s192 = smul.addr %s191, 8
        %s193 = scalar_lea.vmem %s0, %s192
        %p194 = scmp.lt.s32.totalorder %s16, 1
        %s195 = scalar_select %p194, %s16, 1
        %s196 = smul.addr %s195, 12
        %s197 = smul.addr %s196, 8
        %s198 = scalar_lea.vmem %s3, %s197
        %vm199 = vcmask 359424
        %200 = vst.msk [vmem:[#allocation2] sm:$0xff] %vm199, 0.0
        %201 = vst.msk [vmem:[#allocation2 + $0x8] sm:$0xff] %vm199, 0.0
        %202 = vst.msk [vmem:[#allocation2 + $0x10] sm:$0xff] %vm199, 0.0
        %203 = vst.msk [vmem:[#allocation2 + $0x18] sm:$0xff] %vm199, 0.0
        %v204 = vld [vmem:[%s193] sm:$0xff]
        %v205 = vld [vmem:[%s193 + $0x8] sm:$0xff]
        %v206 = vld [vmem:[%s193 + $0x10] sm:$0xff]
        %v207 = vld [vmem:[%s193 + $0x18] sm:$0xf]
        %212 = vrot.lane.b32.xlu0 %v204, 2
        %v213 = vpop.permute.xlu0 %212
        %214 = vrot.lane.b32.xlu0 %v205, 2
        %v215 = vpop.permute.xlu0 %214
        %216 = vrot.lane.b32.xlu0 %v206, 2
        %v217 = vpop.permute.xlu0 %216
        %218 = vrot.lane.b32.xlu0 %v207, 2
        %v219 = vpop.permute.xlu0 %218
        %vm224 = vcmask 343056
        %225 = vst.msk [vmem:[#allocation2 + $0x2] sm:$0xff] %vm224, %v213
        %226 = vst.msk [vmem:[#allocation2 + $0xa] sm:$0xff] %vm224, %v215
        %227 = vst.msk [vmem:[#allocation2 + $0x12] sm:$0xff] %vm224, %v217
        %vm228 = vcmask 338960
        %229 = vst.msk [vmem:[#allocation2 + $0x1a] sm:$0xf] %vm228, %v219
        %v230 = vld [vmem:[#allocation2] sm:$0xff]
        %v231 = vld [vmem:[#allocation2 + $0x8] sm:$0xff]
        %v232 = vld [vmem:[#allocation2 + $0x10] sm:$0xff]
        %v233 = vld [vmem:[#allocation2 + $0x18] sm:$0xf]
        %v234 = vld [vmem:[#allocation2 + $0x1] sm:$0xff]
        %v235 = vld [vmem:[#allocation2 + $0x9] sm:$0xff]
        %v236 = vld [vmem:[#allocation2 + $0x11] sm:$0xff]
        %v237 = vld [vmem:[#allocation2 + $0x19] sm:$0xf]
        %v238 = vld [vmem:[#allocation2 + $0x2] sm:$0xff]
        %v239 = vld [vmem:[#allocation2 + $0xa] sm:$0xff]
        %v240 = vld [vmem:[#allocation2 + $0x12] sm:$0xff]
        %v241 = vld [vmem:[#allocation2 + $0x1a] sm:$0xf]
        %v242 = vld [vmem:[#allocation2 + $0x3] sm:$0xff]
        %v243 = vld [vmem:[#allocation2 + $0xb] sm:$0xff]
        %v244 = vld [vmem:[#allocation2 + $0x13] sm:$0xff]
        %v245 = vld [vmem:[#allocation2 + $0x1b] sm:$0xf]
        %v246 = vld [vmem:[#allocation2 + $0x4] sm:$0xff]
        %v247 = vld [vmem:[#allocation2 + $0xc] sm:$0xff]
        %v248 = vld [vmem:[#allocation2 + $0x14] sm:$0xff]
        %v249 = vld [vmem:[#allocation2 + $0x1c] sm:$0xf]
        %254 = vrot.lane.b32.xlu0 %v234, 44
        %v255 = vpop.permute.xlu0 %254
        %256 = vrot.lane.b32.xlu0 %v235, 44
        %v257 = vpop.permute.xlu0 %256
        %258 = vrot.lane.b32.xlu0 %v236, 44
        %v259 = vpop.permute.xlu0 %258
        %260 = vrot.lane.b32.xlu0 %v237, 44
        %v261 = vpop.permute.xlu0 %260
        %270 = vrot.lane.b32.xlu0 %v238, 88
        %v271 = vpop.permute.xlu0 %270
        %272 = vrot.lane.b32.xlu0 %v239, 88
        %v273 = vpop.permute.xlu0 %272
        %274 = vrot.lane.b32.xlu0 %v240, 88
        %v275 = vpop.permute.xlu0 %274
        %276 = vrot.lane.b32.xlu0 %v241, 88
        %v277 = vpop.permute.xlu0 %276
        %286 = vrot.lane.b32.xlu0 %v242, 4
        %v287 = vpop.permute.xlu0 %286
        %288 = vrot.lane.b32.xlu0 %v243, 4
        %v289 = vpop.permute.xlu0 %288
        %290 = vrot.lane.b32.xlu0 %v244, 4
        %v291 = vpop.permute.xlu0 %290
        %292 = vrot.lane.b32.xlu0 %v245, 4
        %v293 = vpop.permute.xlu0 %292
        %302 = vrot.lane.b32.xlu0 %v246, 48
        %v303 = vpop.permute.xlu0 %302
        %304 = vrot.lane.b32.xlu0 %v247, 48
        %v305 = vpop.permute.xlu0 %304
        %306 = vrot.lane.b32.xlu0 %v248, 48
        %v307 = vpop.permute.xlu0 %306
        %308 = vrot.lane.b32.xlu0 %v249, 48
        %v309 = vpop.permute.xlu0 %308
        %v314 = vsel %vm199, %v230, %v255
        %v315 = vsel %vm199, %v231, %v257
        %v316 = vsel %vm199, %v232, %v259
        %v317 = vsel %vm199, %v233, %v261
        %vm318 = vcmask 719872
        %v319 = vsel %vm318, %v314, %v271
        %v320 = vsel %vm318, %v315, %v273
        %v321 = vsel %vm318, %v316, %v275
        %v322 = vsel %vm318, %v317, %v277
        %vm323 = vcmask 31744
        %v324 = vsel %vm323, %v271, %v287
        %v325 = vsel %vm323, %v273, %v289
        %v326 = vsel %vm323, %v275, %v291
        %v327 = vsel %vm323, %v277, %v293
        %vm328 = vcmask 392192
        %v329 = vsel %vm328, %v324, %v303
        %v330 = vsel %vm328, %v325, %v305
        %v331 = vsel %vm328, %v326, %v307
        %v332 = vsel %vm328, %v327, %v309
        %v333 = vld [vmem:[#allocation3] sm:$0xff]
        %v334 = vld [vmem:[#allocation3 + $0x8] sm:$0xff]
        %v335 = vld [vmem:[#allocation3 + $0x10] sm:$0xff]
        %v336 = vld [vmem:[#allocation3 + $0x18] sm:$0xff]
        %v337 = vld [vmem:[#allocation3 + $0x20] sm:$0xff]
        %v338 = vld [vmem:[#allocation3 + $0x28] sm:$0xff]
        %v339 = vld [vmem:[#allocation3 + $0x30] sm:$0xff]
        %v340 = vld [vmem:[#allocation3 + $0x38] sm:$0xff]
        %v341 = vld [vmem:[#allocation3 + $0x40] sm:$0xff]
        %v342 = vld [vmem:[#allocation3 + $0x48] sm:$0xff]
        %v343 = vld [vmem:[#allocation3 + $0x50] sm:$0xff]
        %v344 = vld [vmem:[#allocation3 + $0x58] sm:$0xff]
        %v345 = vld [vmem:[#allocation3 + $0x60] sm:$0xff]
        %v346 = vld [vmem:[#allocation3 + $0x68] sm:$0xff]
        %v347 = vld [vmem:[#allocation3 + $0x70] sm:$0xff]
        %v348 = vld [vmem:[#allocation3 + $0x78] sm:$0xff]
        %v349 = vld [vmem:[#allocation3 + $0x80] sm:$0xff]
        %v350 = vld [vmem:[#allocation3 + $0x88] sm:$0xff]
        %v351 = vld [vmem:[#allocation3 + $0x90] sm:$0xff]
        %v352 = vld [vmem:[#allocation3 + $0x98] sm:$0xff]
        %v353 = vld [vmem:[#allocation3 + $0xa0] sm:$0xff]
        %v354 = vld [vmem:[#allocation3 + $0xa8] sm:$0xff]
        %v355 = vld [vmem:[#allocation3 + $0xb0] sm:$0xff]
        %v356 = vld [vmem:[#allocation3 + $0xb8] sm:$0xff]
        %v357 = vld [vmem:[#allocation3 + $0xc0] sm:$0xff]
        %v358 = vld [vmem:[#allocation3 + $0xc8] sm:$0xff]
        %v359 = vld [vmem:[#allocation3 + $0xd0] sm:$0xff]
        %v360 = vld [vmem:[#allocation3 + $0xd8] sm:$0xff]
        %v361 = vld [vmem:[#allocation3 + $0xe0] sm:$0xff]
        %v362 = vld [vmem:[#allocation3 + $0xe8] sm:$0xff]
        %v363 = vld [vmem:[#allocation3 + $0xf0] sm:$0xff]
        %v364 = vld [vmem:[#allocation3 + $0xf8] sm:$0xff]
        %v365 = vld [vmem:[#allocation3 + $0x100] sm:$0xff]
        %v366 = vld [vmem:[#allocation3 + $0x108] sm:$0xff]
        %v367 = vld [vmem:[#allocation3 + $0x110] sm:$0xff]
        %v368 = vld [vmem:[#allocation3 + $0x118] sm:$0xff]
        %v369 = vld [vmem:[#allocation3 + $0x120] sm:$0xff]
        %v370 = vld [vmem:[#allocation3 + $0x128] sm:$0xff]
        %v371 = vld [vmem:[#allocation3 + $0x130] sm:$0xff]
        %v372 = vld [vmem:[#allocation3 + $0x138] sm:$0xff]
        %v373 = vld [vmem:[#allocation3 + $0x140] sm:$0xff]
        %v374 = vld [vmem:[#allocation3 + $0x148] sm:$0xff]
        %v375 = vld [vmem:[#allocation3 + $0x150] sm:$0xff]
        %v376 = vld [vmem:[#allocation3 + $0x158] sm:$0xff]
        %v377 = vld [vmem:[#allocation3 + $0x160] sm:$0xff]
        %v378 = vld [vmem:[#allocation3 + $0x168] sm:$0xff]
        %v379 = vld [vmem:[#allocation3 + $0x170] sm:$0xff]
        %v380 = vld [vmem:[#allocation3 + $0x178] sm:$0xff]
        %v381 = vld [vmem:[#allocation3 + $0x180] sm:$0xff]
        %v382 = vld [vmem:[#allocation3 + $0x188] sm:$0xff]
        %v383 = vld [vmem:[#allocation3 + $0x190] sm:$0xff]
        %v384 = vld [vmem:[#allocation3 + $0x198] sm:$0xff]
        %v385 = vld [vmem:[#allocation3 + $0x1a0] sm:$0xff]
        %v386 = vld [vmem:[#allocation3 + $0x1a8] sm:$0xff]
        %v387 = vld [vmem:[#allocation3 + $0x1b0] sm:$0xff]
        %v388 = vld [vmem:[#allocation3 + $0x1b8] sm:$0xff]
        %v389 = vld [vmem:[#allocation3 + $0x1c0] sm:$0xff]
        %v390 = vld [vmem:[#allocation3 + $0x1c8] sm:$0xff]
        %v391 = vld [vmem:[#allocation3 + $0x1d0] sm:$0xff]
        %v392 = vld [vmem:[#allocation3 + $0x1d8] sm:$0xff]
        %v393 = vld [vmem:[#allocation3 + $0x1e0] sm:$0xff]
        %v394 = vld [vmem:[#allocation3 + $0x1e8] sm:$0xff]
        %v395 = vld [vmem:[#allocation3 + $0x1f0] sm:$0xff]
        %v396 = vld [vmem:[#allocation3 + $0x1f8] sm:$0xff]
        %v397 = vld [vmem:[#allocation3 + $0x200] sm:$0xff]
        %v398 = vld [vmem:[#allocation3 + $0x208] sm:$0xff]
        %v399 = vld [vmem:[#allocation3 + $0x210] sm:$0xff]
        %v400 = vld [vmem:[#allocation3 + $0x218] sm:$0xff]
        %v401 = vld [vmem:[#allocation3 + $0x220] sm:$0xff]
        %v402 = vld [vmem:[#allocation3 + $0x228] sm:$0xff]
        %v403 = vld [vmem:[#allocation3 + $0x230] sm:$0xff]
        %v404 = vld [vmem:[#allocation3 + $0x238] sm:$0xff]
        %v405 = vld [vmem:[#allocation3 + $0x240] sm:$0xff]
        %v406 = vld [vmem:[#allocation3 + $0x248] sm:$0xff]
        %v407 = vld [vmem:[#allocation3 + $0x250] sm:$0xff]
        %v408 = vld [vmem:[#allocation3 + $0x258] sm:$0xff]
        %v409 = vld [vmem:[#allocation3 + $0x260] sm:$0xff]
        %v410 = vld [vmem:[#allocation3 + $0x268] sm:$0xff]
        %v411 = vld [vmem:[#allocation3 + $0x270] sm:$0xff]
        %v412 = vld [vmem:[#allocation3 + $0x278] sm:$0xff]
        %v413 = vld [vmem:[#allocation3 + $0x280] sm:$0xff]
        %v414 = vld [vmem:[#allocation3 + $0x288] sm:$0xff]
        %v415 = vld [vmem:[#allocation3 + $0x290] sm:$0xff]
        %v416 = vld [vmem:[#allocation3 + $0x298] sm:$0xff]
        %v417 = vld [vmem:[#allocation3 + $0x2a0] sm:$0xff]
        %v418 = vld [vmem:[#allocation3 + $0x2a8] sm:$0xff]
        %v419 = vld [vmem:[#allocation3 + $0x2b0] sm:$0xff]
        %v420 = vld [vmem:[#allocation3 + $0x2b8] sm:$0xff]
        %v421 = vld [vmem:[#allocation3 + $0x2c0] sm:$0xff]
        %v422 = vld [vmem:[#allocation3 + $0x2c8] sm:$0xff]
        %v423 = vld [vmem:[#allocation3 + $0x2d0] sm:$0xff]
        %v424 = vld [vmem:[#allocation3 + $0x2d8] sm:$0xff]
        %v425 = vld [vmem:[#allocation3 + $0x2e0] sm:$0xff]
        %v426 = vld [vmem:[#allocation3 + $0x2e8] sm:$0xff]
        %v427 = vld [vmem:[#allocation3 + $0x2f0] sm:$0xff]
        %v428 = vld [vmem:[#allocation3 + $0x2f8] sm:$0xff]
        %v429 = vld [vmem:[#allocation3 + $0x300] sm:$0xff]
        %v430 = vld [vmem:[#allocation3 + $0x308] sm:$0xff]
        %v431 = vld [vmem:[#allocation3 + $0x310] sm:$0xff]
        %v432 = vld [vmem:[#allocation3 + $0x318] sm:$0xff]
        %v433 = vld [vmem:[#allocation3 + $0x320] sm:$0xff]
        %v434 = vld [vmem:[#allocation3 + $0x328] sm:$0xff]
        %v435 = vld [vmem:[#allocation3 + $0x330] sm:$0xff]
        %v436 = vld [vmem:[#allocation3 + $0x338] sm:$0xff]
        %v437 = vld [vmem:[#allocation3 + $0x340] sm:$0xff]
        %v438 = vld [vmem:[#allocation3 + $0x348] sm:$0xff]
        %v439 = vld [vmem:[#allocation3 + $0x350] sm:$0xff]
        %v440 = vld [vmem:[#allocation3 + $0x358] sm:$0xff]
        %v441 = vld [vmem:[#allocation3 + $0x360] sm:$0xff]
        %v442 = vld [vmem:[#allocation3 + $0x368] sm:$0xff]
        %v443 = vld [vmem:[#allocation3 + $0x370] sm:$0xff]
        %v444 = vld [vmem:[#allocation3 + $0x378] sm:$0xff]
        %v445 = vld [vmem:[#allocation3 + $0x380] sm:$0xff]
        %v446 = vld [vmem:[#allocation3 + $0x388] sm:$0xff]
        %v447 = vld [vmem:[#allocation3 + $0x390] sm:$0xff]
        %v448 = vld [vmem:[#allocation3 + $0x398] sm:$0xff]
        %v449 = vld [vmem:[#allocation3 + $0x3a0] sm:$0xff]
        %v450 = vld [vmem:[#allocation3 + $0x3a8] sm:$0xff]
        %v451 = vld [vmem:[#allocation3 + $0x3b0] sm:$0xff]
        %v452 = vld [vmem:[#allocation3 + $0x3b8] sm:$0xff]
        %v453 = vld [vmem:[#allocation3 + $0x3c0] sm:$0xff]
        %v454 = vld [vmem:[#allocation3 + $0x3c8] sm:$0xff]
        %v455 = vld [vmem:[#allocation3 + $0x3d0] sm:$0xff]
        %v456 = vld [vmem:[#allocation3 + $0x3d8] sm:$0xff]
        %v457 = vld [vmem:[#allocation3 + $0x3e0] sm:$0xff]
        %v458 = vld [vmem:[#allocation3 + $0x3e8] sm:$0xff]
        %v459 = vld [vmem:[#allocation3 + $0x3f0] sm:$0xff]
        %v460 = vld [vmem:[#allocation3 + $0x3f8] sm:$0xff]
        %v461 = vld [vmem:[#allocation3 + $0x400] sm:$0xff]
        %v462 = vld [vmem:[#allocation3 + $0x408] sm:$0xff]
        %v463 = vld [vmem:[#allocation3 + $0x410] sm:$0xff]
        %v464 = vld [vmem:[#allocation3 + $0x418] sm:$0xff]
        %v465 = vld [vmem:[#allocation3 + $0x420] sm:$0xff]
        %v466 = vld [vmem:[#allocation3 + $0x428] sm:$0xff]
        %v467 = vld [vmem:[#allocation3 + $0x430] sm:$0xff]
        %v468 = vld [vmem:[#allocation3 + $0x438] sm:$0xff]
        %v469 = vld [vmem:[#allocation3 + $0x440] sm:$0xff]
        %v470 = vld [vmem:[#allocation3 + $0x448] sm:$0xff]
        %v471 = vld [vmem:[#allocation3 + $0x450] sm:$0xff]
        %v472 = vld [vmem:[#allocation3 + $0x458] sm:$0xff]
        %v473 = vld [vmem:[#allocation3 + $0x460] sm:$0xff]
        %v474 = vld [vmem:[#allocation3 + $0x468] sm:$0xff]
        %v475 = vld [vmem:[#allocation3 + $0x470] sm:$0xff]
        %v476 = vld [vmem:[#allocation3 + $0x478] sm:$0xff]
        %v477 = vld [vmem:[#allocation3 + $0x480] sm:$0xff]
        %v478 = vld [vmem:[#allocation3 + $0x488] sm:$0xff]
        %v479 = vld [vmem:[#allocation3 + $0x490] sm:$0xff]
        %v480 = vld [vmem:[#allocation3 + $0x498] sm:$0xff]
        %v481 = vld [vmem:[#allocation3 + $0x4a0] sm:$0xff]
        %v482 = vld [vmem:[#allocation3 + $0x4a8] sm:$0xff]
        %v483 = vld [vmem:[#allocation3 + $0x4b0] sm:$0xff]
        %v484 = vld [vmem:[#allocation3 + $0x4b8] sm:$0xff]
        %v485 = vld [vmem:[#allocation3 + $0x4c0] sm:$0xff]
        %v486 = vld [vmem:[#allocation3 + $0x4c8] sm:$0xff]
        %v487 = vld [vmem:[#allocation3 + $0x4d0] sm:$0xff]
        %v488 = vld [vmem:[#allocation3 + $0x4d8] sm:$0xff]
        %v489 = vld [vmem:[#allocation3 + $0x4e0] sm:$0xff]
        %v490 = vld [vmem:[#allocation3 + $0x4e8] sm:$0xff]
        %v491 = vld [vmem:[#allocation3 + $0x4f0] sm:$0xff]
        %v492 = vld [vmem:[#allocation3 + $0x4f8] sm:$0xff]
        %v493 = vld [vmem:[#allocation3 + $0x500] sm:$0xff]
        %v494 = vld [vmem:[#allocation3 + $0x508] sm:$0xff]
        %v495 = vld [vmem:[#allocation3 + $0x510] sm:$0xff]
        %v496 = vld [vmem:[#allocation3 + $0x518] sm:$0xff]
        %v497 = vld [vmem:[#allocation3 + $0x520] sm:$0xff]
        %v498 = vld [vmem:[#allocation3 + $0x528] sm:$0xff]
        %v499 = vld [vmem:[#allocation3 + $0x530] sm:$0xff]
        %v500 = vld [vmem:[#allocation3 + $0x538] sm:$0xff]
        %v501 = vld [vmem:[#allocation3 + $0x540] sm:$0xff]
        %v502 = vld [vmem:[#allocation3 + $0x548] sm:$0xff]
        %v503 = vld [vmem:[#allocation3 + $0x550] sm:$0xff]
        %v504 = vld [vmem:[#allocation3 + $0x558] sm:$0xff]
        %v505 = vld [vmem:[#allocation3 + $0x560] sm:$0xff]
        %v506 = vld [vmem:[#allocation3 + $0x568] sm:$0xff]
        %v507 = vld [vmem:[#allocation3 + $0x570] sm:$0xff]
        %v508 = vld [vmem:[#allocation3 + $0x578] sm:$0xff]
        %v509 = vld [vmem:[#allocation3 + $0x580] sm:$0xff]
        %v510 = vld [vmem:[#allocation3 + $0x588] sm:$0xff]
        %v511 = vld [vmem:[#allocation3 + $0x590] sm:$0xff]
        %v512 = vld [vmem:[#allocation3 + $0x598] sm:$0xff]
        %v513 = vld [vmem:[#allocation3 + $0x5a0] sm:$0xff]
        %v514 = vld [vmem:[#allocation3 + $0x5a8] sm:$0xff]
        %v515 = vld [vmem:[#allocation3 + $0x5b0] sm:$0xff]
        %v516 = vld [vmem:[#allocation3 + $0x5b8] sm:$0xff]
        %v517 = vld [vmem:[#allocation3 + $0x5c0] sm:$0xff]
        %v518 = vld [vmem:[#allocation3 + $0x5c8] sm:$0xff]
        %v519 = vld [vmem:[#allocation3 + $0x5d0] sm:$0xff]
        %v520 = vld [vmem:[#allocation3 + $0x5d8] sm:$0xff]
        %v521 = vld [vmem:[#allocation3 + $0x5e0] sm:$0xff]
        %v522 = vld [vmem:[#allocation3 + $0x5e8] sm:$0xff]
        %v523 = vld [vmem:[#allocation3 + $0x5f0] sm:$0xff]
        %v524 = vld [vmem:[#allocation3 + $0x5f8] sm:$0xff]
        %v525 = vld [vmem:[#allocation3 + $0x600] sm:$0xff]
        %v526 = vld [vmem:[#allocation3 + $0x608] sm:$0xff]
        %v527 = vld [vmem:[#allocation3 + $0x610] sm:$0xff]
        %v528 = vld [vmem:[#allocation3 + $0x618] sm:$0xff]
        %v529 = vld [vmem:[#allocation3 + $0x620] sm:$0xff]
        %v530 = vld [vmem:[#allocation3 + $0x628] sm:$0xff]
        %v531 = vld [vmem:[#allocation3 + $0x630] sm:$0xff]
        %v532 = vld [vmem:[#allocation3 + $0x638] sm:$0xff]
        %v533 = vld [vmem:[#allocation3 + $0x640] sm:$0xff]
        %v534 = vld [vmem:[#allocation3 + $0x648] sm:$0xff]
        %v535 = vld [vmem:[#allocation3 + $0x650] sm:$0xff]
        %v536 = vld [vmem:[#allocation3 + $0x658] sm:$0xff]
        %v537 = vld [vmem:[#allocation3 + $0x660] sm:$0xff]
        %v538 = vld [vmem:[#allocation3 + $0x668] sm:$0xff]
        %v539 = vld [vmem:[#allocation3 + $0x670] sm:$0xff]
        %v540 = vld [vmem:[#allocation3 + $0x678] sm:$0xff]
        %v541 = vld [vmem:[#allocation3 + $0x680] sm:$0xff]
        %v542 = vld [vmem:[#allocation3 + $0x688] sm:$0xff]
        %v543 = vld [vmem:[#allocation3 + $0x690] sm:$0xff]
        %v544 = vld [vmem:[#allocation3 + $0x698] sm:$0xff]
        %v545 = vld [vmem:[#allocation3 + $0x6a0] sm:$0xff]
        %v546 = vld [vmem:[#allocation3 + $0x6a8] sm:$0xff]
        %v547 = vld [vmem:[#allocation3 + $0x6b0] sm:$0xff]
        %v548 = vld [vmem:[#allocation3 + $0x6b8] sm:$0xff]
        %v549 = vld [vmem:[#allocation3 + $0x6c0] sm:$0xff]
        %v550 = vld [vmem:[#allocation3 + $0x6c8] sm:$0xff]
        %v551 = vld [vmem:[#allocation3 + $0x6d0] sm:$0xff]
        %v552 = vld [vmem:[#allocation3 + $0x6d8] sm:$0xff]
        %v553 = vld [vmem:[#allocation3 + $0x6e0] sm:$0xff]
        %v554 = vld [vmem:[#allocation3 + $0x6e8] sm:$0xff]
        %v555 = vld [vmem:[#allocation3 + $0x6f0] sm:$0xff]
        %v556 = vld [vmem:[#allocation3 + $0x6f8] sm:$0xff]
        %v557 = vld [vmem:[#allocation3 + $0x700] sm:$0xff]
        %v558 = vld [vmem:[#allocation3 + $0x708] sm:$0xff]
        %v559 = vld [vmem:[#allocation3 + $0x710] sm:$0xff]
        %v560 = vld [vmem:[#allocation3 + $0x718] sm:$0xff]
        %v561 = vld [vmem:[#allocation3 + $0x720] sm:$0xff]
        %v562 = vld [vmem:[#allocation3 + $0x728] sm:$0xff]
        %v563 = vld [vmem:[#allocation3 + $0x730] sm:$0xff]
        %v564 = vld [vmem:[#allocation3 + $0x738] sm:$0xff]
        %v565 = vld [vmem:[#allocation3 + $0x740] sm:$0xff]
        %v566 = vld [vmem:[#allocation3 + $0x748] sm:$0xff]
        %v567 = vld [vmem:[#allocation3 + $0x750] sm:$0xff]
        %v568 = vld [vmem:[#allocation3 + $0x758] sm:$0xff]
        %v569 = vld [vmem:[#allocation3 + $0x760] sm:$0xff]
        %v570 = vld [vmem:[#allocation3 + $0x768] sm:$0xff]
        %v571 = vld [vmem:[#allocation3 + $0x770] sm:$0xff]
        %v572 = vld [vmem:[#allocation3 + $0x778] sm:$0xff]
        %v573 = vld [vmem:[#allocation3 + $0x780] sm:$0xff]
        %v574 = vld [vmem:[#allocation3 + $0x788] sm:$0xff]
        %v575 = vld [vmem:[#allocation3 + $0x790] sm:$0xff]
        %v576 = vld [vmem:[#allocation3 + $0x798] sm:$0xff]
        %v577 = vld [vmem:[#allocation3 + $0x7a0] sm:$0xff]
        %v578 = vld [vmem:[#allocation3 + $0x7a8] sm:$0xff]
        %v579 = vld [vmem:[#allocation3 + $0x7b0] sm:$0xff]
        %v580 = vld [vmem:[#allocation3 + $0x7b8] sm:$0xff]
        %v581 = vld [vmem:[#allocation3 + $0x7c0] sm:$0xff]
        %v582 = vld [vmem:[#allocation3 + $0x7c8] sm:$0xff]
        %v583 = vld [vmem:[#allocation3 + $0x7d0] sm:$0xff]
        %v584 = vld [vmem:[#allocation3 + $0x7d8] sm:$0xff]
        %v585 = vld [vmem:[#allocation3 + $0x7e0] sm:$0xff]
        %v586 = vld [vmem:[#allocation3 + $0x7e8] sm:$0xff]
        %v587 = vld [vmem:[#allocation3 + $0x7f0] sm:$0xff]
        %v588 = vld [vmem:[#allocation3 + $0x7f8] sm:$0xff]
        %v589 = vld [vmem:[#allocation3 + $0x800] sm:$0xff]
        %v590 = vld [vmem:[#allocation3 + $0x808] sm:$0xff]
        %v591 = vld [vmem:[#allocation3 + $0x810] sm:$0xff]
        %v592 = vld [vmem:[#allocation3 + $0x818] sm:$0xff]
        %v593 = vld [vmem:[#allocation3 + $0x820] sm:$0xff]
        %v594 = vld [vmem:[#allocation3 + $0x828] sm:$0xff]
        %v595 = vld [vmem:[#allocation3 + $0x830] sm:$0xff]
        %v596 = vld [vmem:[#allocation3 + $0x838] sm:$0xff]
        %v597 = vld [vmem:[#allocation3 + $0x840] sm:$0xff]
        %v598 = vld [vmem:[#allocation3 + $0x848] sm:$0xff]
        %v599 = vld [vmem:[#allocation3 + $0x850] sm:$0xff]
        %v600 = vld [vmem:[#allocation3 + $0x858] sm:$0xff]
        %v601 = vld [vmem:[#allocation3 + $0x860] sm:$0xff]
        %v602 = vld [vmem:[#allocation3 + $0x868] sm:$0xff]
        %v603 = vld [vmem:[#allocation3 + $0x870] sm:$0xf]
        %v604 = vld [vmem:[#allocation3 + $0x878] sm:$0xf]
        %v605 = vld [vmem:[#allocation3 + $0x880] sm:$0xf]
        %v606 = vld [vmem:[#allocation3 + $0x888] sm:$0xf]
        %v607 = vld [vmem:[#allocation3 + $0x890] sm:$0xf]
        %v608 = vld [vmem:[#allocation3 + $0x898] sm:$0xf]
        %v609 = vld [vmem:[#allocation3 + $0x8a0] sm:$0xf]
        %v610 = vld [vmem:[#allocation3 + $0x8a8] sm:$0xf]
        %v611 = vld [vmem:[#allocation3 + $0x8b0] sm:$0xf]
        %v612 = vld [vmem:[#allocation3 + $0x8b8] sm:$0xf]
        %v613 = vld [vmem:[#allocation5] sm:$0xff]
        %v614 = vld [vmem:[#allocation5 + $0x8] sm:$0x3]
        %v617 = vlaneseq
        %v618 = vshrl.u32 %v617, 7
        %v619 = vsub.s32 0, %v618
        %v620 = vrot.slane %v613, %v619
        %v621 = vlaneseq
        %v622 = vshrl.u32 %v621, 7
        %v623 = vsub.s32 1, %v622
        %v624 = vrot.slane %v613, %v623
        %v625 = vlaneseq
        %v626 = vshrl.u32 %v625, 7
        %v627 = vsub.s32 2, %v626
        %v628 = vrot.slane %v613, %v627
        %v629 = vlaneseq
        %v630 = vshrl.u32 %v629, 7
        %v631 = vsub.s32 3, %v630
        %v632 = vrot.slane %v613, %v631
        %v633 = vlaneseq
        %v634 = vshrl.u32 %v633, 7
        %v635 = vsub.s32 4, %v634
        %v636 = vrot.slane %v613, %v635
        %v637 = vlaneseq
        %v638 = vshrl.u32 %v637, 7
        %v639 = vsub.s32 5, %v638
        %v640 = vrot.slane %v613, %v639
        %v641 = vlaneseq
        %v642 = vshrl.u32 %v641, 7
        %v643 = vsub.s32 6, %v642
        %v644 = vrot.slane %v613, %v643
        %v645 = vlaneseq
        %v646 = vshrl.u32 %v645, 7
        %v647 = vsub.s32 7, %v646
        %v648 = vrot.slane %v613, %v647
        %v649 = vlaneseq
        %v650 = vshrl.u32 %v649, 7
        %v651 = vsub.s32 0, %v650
        %v652 = vrot.slane %v614, %v651
        %v653 = vlaneseq
        %v654 = vshrl.u32 %v653, 7
        %v655 = vsub.s32 1, %v654
        %v656 = vrot.slane %v614, %v655
        %vm667 = vcmask 752640
        %v669 = vsel %vm667, %v329, 0
        %v672 = vsel %vm667, %v330, 0
        %v675 = vsel %vm667, %v331, 0
        %v678 = vsel %vm667, %v332, 0
        %vm680 = vcmask 1043456
        %v682 = vsel %vm680, %v603, 0
        %v685 = vsel %vm680, %v604, 0
        %v688 = vsel %vm680, %v605, 0
        %v691 = vsel %vm680, %v606, 0
        %v694 = vsel %vm680, %v607, 0
        %v697 = vsel %vm680, %v608, 0
        %v700 = vsel %vm680, %v609, 0
        %v703 = vsel %vm680, %v610, 0
        %v706 = vsel %vm680, %v611, 0
        %v709 = vsel %vm680, %v612, 0
        %711 = vmatprep.subr.mxu0 %v334
        %712 = vmatpush1.msra.mxu0 %v333
        %713 = vmatprep.subr.mxu0 %v344
        %714 = vmatpush1.msra.mxu0 %v343
        %715 = vmatprep.subr.mxu0 %v354
        %716 = vmatpush1.msra.mxu0 %v353
        %717 = vmatprep.subr.mxu0 %v364
        %718 = vmatpush1.msra.mxu0 %v363
        %719 = vmatprep.subr.mxu0 %v374
        %720 = vmatpush1.msra.mxu0 %v373
        %721 = vmatprep.subr.mxu0 %v384
        %722 = vmatpush1.msra.mxu0 %v383
        %723 = vmatprep.subr.mxu0 %v394
        %724 = vmatpush1.msra.mxu0 %v393
        %725 = vmatprep.subr.mxu0 %v404
        %726 = vmatpush1.msra.mxu0 %v403
        %727 = vmatprep.subr.mxu0 %v414
        %728 = vmatpush1.msra.mxu0 %v413
        %729 = vmatprep.subr.mxu0 %v424
        %730 = vmatpush1.msra.mxu0 %v423
        %731 = vmatprep.subr.mxu0 %v434
        %732 = vmatpush1.msra.mxu0 %v433
        %733 = vmatprep.subr.mxu0 %v444
        %734 = vmatpush1.msra.mxu0 %v443
        %735 = vmatprep.subr.mxu0 %v454
        %736 = vmatpush1.msra.mxu0 %v453
        %737 = vmatprep.subr.mxu0 %v464
        %738 = vmatpush1.msra.mxu0 %v463
        %739 = vmatprep.subr.mxu0 %v474
        %740 = vmatpush1.msra.mxu0 %v473
        %741 = vmatprep.subr.mxu0 %v484
        %742 = vmatpush1.msra.mxu0 %v483
        %743 = vmatprep.subr.mxu0 %v494
        %744 = vmatpush1.msra.mxu0 %v493
        %745 = vmatprep.subr.mxu0 %v504
        %746 = vmatpush1.msra.mxu0 %v503
        %747 = vmatprep.subr.mxu0 %v514
        %748 = vmatpush1.msra.mxu0 %v513
        %749 = vmatprep.subr.mxu0 %v524
        %750 = vmatpush1.msra.mxu0 %v523
        %751 = vmatprep.subr.mxu0 %v534
        %752 = vmatpush1.msra.mxu0 %v533
        %753 = vmatprep.subr.mxu0 %v544
        %754 = vmatpush1.msra.mxu0 %v543
        %755 = vmatprep.subr.mxu0 %v554
        %756 = vmatpush1.msra.mxu0 %v553
        %757 = vmatprep.subr.mxu0 %v564
        %758 = vmatpush1.msra.mxu0 %v563
        %759 = vmatprep.subr.mxu0 %v574
        %760 = vmatpush1.msra.mxu0 %v573
        %761 = vmatprep.subr.mxu0 %v584
        %762 = vmatpush1.msra.mxu0 %v583
        %763 = vmatprep.subr.mxu0 %v594
        %764 = vmatpush1.msra.mxu0 %v593
        %765 = vmatprep.subr.mxu0 %v685
        %766 = vmatpush1.msra.mxu0 %v682
        %767 = vmatprep.subr.mxu0 0.0
        %768 = vmatpush1.msra.mxu0 0.0
        %769 = vmatprep.subr.mxu0 0.0
        %770 = vmatpush1.msra.mxu0 0.0
        %771 = vmatprep.subr.mxu0 0.0
        %772 = vmatpush1.msra.mxu0 0.0
        %773 = vmatprep.subr.mxu0 0.0
        %774 = vmatpush1.msra.mxu0 0.0
        %775 = vmatprep.mubr.f32.mxu0 %v669
        %776 = vmatmul.mubr.f32.gmra.mrb[0].mxu0 %v319
        %v777 = vpop.f32.mrb[0].mxu0
        %v778 = vadd.f32 %v620, %v777
        %v779 = vpop.f32.mrb[0].mxu0
        %v780 = vadd.f32 %v624, %v779
        %781 = vmatprep.mubr.f32.mxu0 %v672
        %782 = vmatmul.mubr.f32.gmra.mrb[0].mxu0 %v320
        %v783 = vpop.f32.mrb[0].mxu0
        %v784 = vadd.f32 %v620, %v783
        %v785 = vpop.f32.mrb[0].mxu0
        %v786 = vadd.f32 %v624, %v785
        %787 = vmatprep.mubr.f32.mxu0 %v675
        %788 = vmatmul.mubr.f32.gmra.mrb[0].mxu0 %v321
        %v789 = vpop.f32.mrb[0].mxu0
        %v790 = vadd.f32 %v620, %v789
        %v791 = vpop.f32.mrb[0].mxu0
        %v792 = vadd.f32 %v624, %v791
        %793 = vmatprep.mubr.f32.mxu0 %v678
        %794 = vmatmul.mubr.f32.gmra.mrb[0].mxu0 %v322
        %v795 = vpop.f32.mrb[0].mxu0
        %v796 = vadd.f32 %v620, %v795
        %v797 = vpop.f32.mrb[0].mxu0
        %v798 = vadd.f32 %v624, %v797
        %799 = vdwg.mxu0
        %800 = vmatprep.subr.mxu0 %v336
        %801 = vmatpush1.msra.mxu0 %v335
        %802 = vmatprep.subr.mxu0 %v346
        %803 = vmatpush1.msra.mxu0 %v345
        %804 = vmatprep.subr.mxu0 %v356
        %805 = vmatpush1.msra.mxu0 %v355
        %806 = vmatprep.subr.mxu0 %v366
        %807 = vmatpush1.msra.mxu0 %v365
        %808 = vmatprep.subr.mxu0 %v376
        %809 = vmatpush1.msra.mxu0 %v375
        %810 = vmatprep.subr.mxu0 %v386
        %811 = vmatpush1.msra.mxu0 %v385
        %812 = vmatprep.subr.mxu0 %v396
        %813 = vmatpush1.msra.mxu0 %v395
        %814 = vmatprep.subr.mxu0 %v406
        %815 = vmatpush1.msra.mxu0 %v405
        %816 = vmatprep.subr.mxu0 %v416
        %817 = vmatpush1.msra.mxu0 %v415
        %818 = vmatprep.subr.mxu0 %v426
        %819 = vmatpush1.msra.mxu0 %v425
        %820 = vmatprep.subr.mxu0 %v436
        %821 = vmatpush1.msra.mxu0 %v435
        %822 = vmatprep.subr.mxu0 %v446
        %823 = vmatpush1.msra.mxu0 %v445
        %824 = vmatprep.subr.mxu0 %v456
        %825 = vmatpush1.msra.mxu0 %v455
        %826 = vmatprep.subr.mxu0 %v466
        %827 = vmatpush1.msra.mxu0 %v465
        %828 = vmatprep.subr.mxu0 %v476
        %829 = vmatpush1.msra.mxu0 %v475
        %830 = vmatprep.subr.mxu0 %v486
        %831 = vmatpush1.msra.mxu0 %v485
        %832 = vmatprep.subr.mxu0 %v496
        %833 = vmatpush1.msra.mxu0 %v495
        %834 = vmatprep.subr.mxu0 %v506
        %835 = vmatpush1.msra.mxu0 %v505
        %836 = vmatprep.subr.mxu0 %v516
        %837 = vmatpush1.msra.mxu0 %v515
        %838 = vmatprep.subr.mxu0 %v526
        %839 = vmatpush1.msra.mxu0 %v525
        %840 = vmatprep.subr.mxu0 %v536
        %841 = vmatpush1.msra.mxu0 %v535
        %842 = vmatprep.subr.mxu0 %v546
        %843 = vmatpush1.msra.mxu0 %v545
        %844 = vmatprep.subr.mxu0 %v556
        %845 = vmatpush1.msra.mxu0 %v555
        %846 = vmatprep.subr.mxu0 %v566
        %847 = vmatpush1.msra.mxu0 %v565
        %848 = vmatprep.subr.mxu0 %v576
        %849 = vmatpush1.msra.mxu0 %v575
        %850 = vmatprep.subr.mxu0 %v586
        %851 = vmatpush1.msra.mxu0 %v585
        %852 = vmatprep.subr.mxu0 %v596
        %853 = vmatpush1.msra.mxu0 %v595
        %854 = vmatprep.subr.mxu0 %v691
        %855 = vmatpush1.msra.mxu0 %v688
        %856 = vmatprep.subr.mxu0 0.0
        %857 = vmatpush1.msra.mxu0 0.0
        %858 = vmatprep.subr.mxu0 0.0
        %859 = vmatpush1.msra.mxu0 0.0
        %860 = vmatprep.subr.mxu0 0.0
        %861 = vmatpush1.msra.mxu0 0.0
        %862 = vmatprep.subr.mxu0 0.0
        %863 = vmatpush1.msra.mxu0 0.0
        %864 = vmatprep.mubr.f32.mxu0 %v669
        %865 = vmatmul.mubr.f32.gmra.mrb[0].mxu0 %v319
        %v866 = vpop.f32.mrb[0].mxu0
        %v867 = vadd.f32 %v628, %v866
        %v868 = vpop.f32.mrb[0].mxu0
        %v869 = vadd.f32 %v632, %v868
        %870 = vmatprep.mubr.f32.mxu0 %v672
        %871 = vmatmul.mubr.f32.gmra.mrb[0].mxu0 %v320
        %v872 = vpop.f32.mrb[0].mxu0
        %v873 = vadd.f32 %v628, %v872
        %v874 = vpop.f32.mrb[0].mxu0
        %v875 = vadd.f32 %v632, %v874
        %876 = vmatprep.mubr.f32.mxu0 %v675
        %877 = vmatmul.mubr.f32.gmra.mrb[0].mxu0 %v321
        %v878 = vpop.f32.mrb[0].mxu0
        %v879 = vadd.f32 %v628, %v878
        %v880 = vpop.f32.mrb[0].mxu0
        %v881 = vadd.f32 %v632, %v880
        %882 = vmatprep.mubr.f32.mxu0 %v678
        %883 = vmatmul.mubr.f32.gmra.mrb[0].mxu0 %v322
        %v884 = vpop.f32.mrb[0].mxu0
        %v885 = vadd.f32 %v628, %v884
        %v886 = vpop.f32.mrb[0].mxu0
        %v887 = vadd.f32 %v632, %v886
        %888 = vdwg.mxu0
        %889 = vmatprep.subr.mxu0 %v338
        %890 = vmatpush1.msra.mxu0 %v337
        %891 = vmatprep.subr.mxu0 %v348
        %892 = vmatpush1.msra.mxu0 %v347
        %893 = vmatprep.subr.mxu0 %v358
        %894 = vmatpush1.msra.mxu0 %v357
        %895 = vmatprep.subr.mxu0 %v368
        %896 = vmatpush1.msra.mxu0 %v367
        %897 = vmatprep.subr.mxu0 %v378
        %898 = vmatpush1.msra.mxu0 %v377
        %899 = vmatprep.subr.mxu0 %v388
        %900 = vmatpush1.msra.mxu0 %v387
        %901 = vmatprep.subr.mxu0 %v398
        %902 = vmatpush1.msra.mxu0 %v397
        %903 = vmatprep.subr.mxu0 %v408
        %904 = vmatpush1.msra.mxu0 %v407
        %905 = vmatprep.subr.mxu0 %v418
        %906 = vmatpush1.msra.mxu0 %v417
        %907 = vmatprep.subr.mxu0 %v428
        %908 = vmatpush1.msra.mxu0 %v427
        %909 = vmatprep.subr.mxu0 %v438
        %910 = vmatpush1.msra.mxu0 %v437
        %911 = vmatprep.subr.mxu0 %v448
        %912 = vmatpush1.msra.mxu0 %v447
        %913 = vmatprep.subr.mxu0 %v458
        %914 = vmatpush1.msra.mxu0 %v457
        %915 = vmatprep.subr.mxu0 %v468
        %916 = vmatpush1.msra.mxu0 %v467
        %917 = vmatprep.subr.mxu0 %v478
        %918 = vmatpush1.msra.mxu0 %v477
        %919 = vmatprep.subr.mxu0 %v488
        %920 = vmatpush1.msra.mxu0 %v487
        %921 = vmatprep.subr.mxu0 %v498
        %922 = vmatpush1.msra.mxu0 %v497
        %923 = vmatprep.subr.mxu0 %v508
        %924 = vmatpush1.msra.mxu0 %v507
        %925 = vmatprep.subr.mxu0 %v518
        %926 = vmatpush1.msra.mxu0 %v517
        %927 = vmatprep.subr.mxu0 %v528
        %928 = vmatpush1.msra.mxu0 %v527
        %929 = vmatprep.subr.mxu0 %v538
        %930 = vmatpush1.msra.mxu0 %v537
        %931 = vmatprep.subr.mxu0 %v548
        %932 = vmatpush1.msra.mxu0 %v547
        %933 = vmatprep.subr.mxu0 %v558
        %934 = vmatpush1.msra.mxu0 %v557
        %935 = vmatprep.subr.mxu0 %v568
        %936 = vmatpush1.msra.mxu0 %v567
        %937 = vmatprep.subr.mxu0 %v578
        %938 = vmatpush1.msra.mxu0 %v577
        %939 = vmatprep.subr.mxu0 %v588
        %940 = vmatpush1.msra.mxu0 %v587
        %941 = vmatprep.subr.mxu0 %v598
        %942 = vmatpush1.msra.mxu0 %v597
        %943 = vmatprep.subr.mxu0 %v697
        %944 = vmatpush1.msra.mxu0 %v694
        %945 = vmatprep.subr.mxu0 0.0
        %946 = vmatpush1.msra.mxu0 0.0
        %947 = vmatprep.subr.mxu0 0.0
        %948 = vmatpush1.msra.mxu0 0.0
        %949 = vmatprep.subr.mxu0 0.0
        %950 = vmatpush1.msra.mxu0 0.0
        %951 = vmatprep.subr.mxu0 0.0
        %952 = vmatpush1.msra.mxu0 0.0
        %953 = vmatprep.mubr.f32.mxu0 %v669
        %954 = vmatmul.mubr.f32.gmra.mrb[0].mxu0 %v319
        %v955 = vpop.f32.mrb[0].mxu0
        %v956 = vadd.f32 %v636, %v955
        %v957 = vpop.f32.mrb[0].mxu0
        %v958 = vadd.f32 %v640, %v957
        %959 = vmatprep.mubr.f32.mxu0 %v672
        %960 = vmatmul.mubr.f32.gmra.mrb[0].mxu0 %v320
        %v961 = vpop.f32.mrb[0].mxu0
        %v962 = vadd.f32 %v636, %v961
        %v963 = vpop.f32.mrb[0].mxu0
        %v964 = vadd.f32 %v640, %v963
        %965 = vmatprep.mubr.f32.mxu0 %v675
        %966 = vmatmul.mubr.f32.gmra.mrb[0].mxu0 %v321
        %v967 = vpop.f32.mrb[0].mxu0
        %v968 = vadd.f32 %v636, %v967
        %v969 = vpop.f32.mrb[0].mxu0
        %v970 = vadd.f32 %v640, %v969
        %971 = vmatprep.mubr.f32.mxu0 %v678
        %972 = vmatmul.mubr.f32.gmra.mrb[0].mxu0 %v322
        %v973 = vpop.f32.mrb[0].mxu0
        %v974 = vadd.f32 %v636, %v973
        %v975 = vpop.f32.mrb[0].mxu0
        %v976 = vadd.f32 %v640, %v975
        %977 = vdwg.mxu0
        %978 = vmatprep.subr.mxu0 %v340
        %979 = vmatpush1.msra.mxu0 %v339
        %980 = vmatprep.subr.mxu0 %v350
        %981 = vmatpush1.msra.mxu0 %v349
        %982 = vmatprep.subr.mxu0 %v360
        %983 = vmatpush1.msra.mxu0 %v359
        %984 = vmatprep.subr.mxu0 %v370
        %985 = vmatpush1.msra.mxu0 %v369
        %986 = vmatprep.subr.mxu0 %v380
        %987 = vmatpush1.msra.mxu0 %v379
        %988 = vmatprep.subr.mxu0 %v390
        %989 = vmatpush1.msra.mxu0 %v389
        %990 = vmatprep.subr.mxu0 %v400
        %991 = vmatpush1.msra.mxu0 %v399
        %992 = vmatprep.subr.mxu0 %v410
        %993 = vmatpush1.msra.mxu0 %v409
        %994 = vmatprep.subr.mxu0 %v420
        %995 = vmatpush1.msra.mxu0 %v419
        %996 = vmatprep.subr.mxu0 %v430
        %997 = vmatpush1.msra.mxu0 %v429
        %998 = vmatprep.subr.mxu0 %v440
        %999 = vmatpush1.msra.mxu0 %v439
        %1000 = vmatprep.subr.mxu0 %v450
        %1001 = vmatpush1.msra.mxu0 %v449
        %1002 = vmatprep.subr.mxu0 %v460
        %1003 = vmatpush1.msra.mxu0 %v459
        %1004 = vmatprep.subr.mxu0 %v470
        %1005 = vmatpush1.msra.mxu0 %v469
        %1006 = vmatprep.subr.mxu0 %v480
        %1007 = vmatpush1.msra.mxu0 %v479
        %1008 = vmatprep.subr.mxu0 %v490
        %1009 = vmatpush1.msra.mxu0 %v489
        %1010 = vmatprep.subr.mxu0 %v500
        %1011 = vmatpush1.msra.mxu0 %v499
        %1012 = vmatprep.subr.mxu0 %v510
        %1013 = vmatpush1.msra.mxu0 %v509
        %1014 = vmatprep.subr.mxu0 %v520
        %1015 = vmatpush1.msra.mxu0 %v519
        %1016 = vmatprep.subr.mxu0 %v530
        %1017 = vmatpush1.msra.mxu0 %v529
        %1018 = vmatprep.subr.mxu0 %v540
        %1019 = vmatpush1.msra.mxu0 %v539
        %1020 = vmatprep.subr.mxu0 %v550
        %1021 = vmatpush1.msra.mxu0 %v549
        %1022 = vmatprep.subr.mxu0 %v560
        %1023 = vmatpush1.msra.mxu0 %v559
        %1024 = vmatprep.subr.mxu0 %v570
        %1025 = vmatpush1.msra.mxu0 %v569
        %1026 = vmatprep.subr.mxu0 %v580
        %1027 = vmatpush1.msra.mxu0 %v579
        %1028 = vmatprep.subr.mxu0 %v590
        %1029 = vmatpush1.msra.mxu0 %v589
        %1030 = vmatprep.subr.mxu0 %v600
        %1031 = vmatpush1.msra.mxu0 %v599
        %1032 = vmatprep.subr.mxu0 %v703
        %1033 = vmatpush1.msra.mxu0 %v700
        %1034 = vmatprep.subr.mxu0 0.0
        %1035 = vmatpush1.msra.mxu0 0.0
        %1036 = vmatprep.subr.mxu0 0.0
        %1037 = vmatpush1.msra.mxu0 0.0
        %1038 = vmatprep.subr.mxu0 0.0
        %1039 = vmatpush1.msra.mxu0 0.0
        %1040 = vmatprep.subr.mxu0 0.0
        %1041 = vmatpush1.msra.mxu0 0.0
        %1042 = vmatprep.mubr.f32.mxu0 %v669
        %1043 = vmatmul.mubr.f32.gmra.mrb[0].mxu0 %v319
        %v1044 = vpop.f32.mrb[0].mxu0
        %v1045 = vadd.f32 %v644, %v1044
        %v1046 = vpop.f32.mrb[0].mxu0
        %v1047 = vadd.f32 %v648, %v1046
        %1048 = vmatprep.mubr.f32.mxu0 %v672
        %1049 = vmatmul.mubr.f32.gmra.mrb[0].mxu0 %v320
        %v1050 = vpop.f32.mrb[0].mxu0
        %v1051 = vadd.f32 %v644, %v1050
        %v1052 = vpop.f32.mrb[0].mxu0
        %v1053 = vadd.f32 %v648, %v1052
        %1054 = vmatprep.mubr.f32.mxu0 %v675
        %1055 = vmatmul.mubr.f32.gmra.mrb[0].mxu0 %v321
        %v1056 = vpop.f32.mrb[0].mxu0
        %v1057 = vadd.f32 %v644, %v1056
        %v1058 = vpop.f32.mrb[0].mxu0
        %v1059 = vadd.f32 %v648, %v1058
        %1060 = vmatprep.mubr.f32.mxu0 %v678
        %1061 = vmatmul.mubr.f32.gmra.mrb[0].mxu0 %v322
        %v1062 = vpop.f32.mrb[0].mxu0
        %v1063 = vadd.f32 %v644, %v1062
        %v1064 = vpop.f32.mrb[0].mxu0
        %v1065 = vadd.f32 %v648, %v1064
        %1066 = vdwg.mxu0
        %1067 = vmatprep.subr.mxu0 %v342
        %1068 = vmatpush1.msra.mxu0 %v341
        %1069 = vmatprep.subr.mxu0 %v352
        %1070 = vmatpush1.msra.mxu0 %v351
        %1071 = vmatprep.subr.mxu0 %v362
        %1072 = vmatpush1.msra.mxu0 %v361
        %1073 = vmatprep.subr.mxu0 %v372
        %1074 = vmatpush1.msra.mxu0 %v371
        %1075 = vmatprep.subr.mxu0 %v382
        %1076 = vmatpush1.msra.mxu0 %v381
        %1077 = vmatprep.subr.mxu0 %v392
        %1078 = vmatpush1.msra.mxu0 %v391
        %1079 = vmatprep.subr.mxu0 %v402
        %1080 = vmatpush1.msra.mxu0 %v401
        %1081 = vmatprep.subr.mxu0 %v412
        %1082 = vmatpush1.msra.mxu0 %v411
        %1083 = vmatprep.subr.mxu0 %v422
        %1084 = vmatpush1.msra.mxu0 %v421
        %1085 = vmatprep.subr.mxu0 %v432
        %1086 = vmatpush1.msra.mxu0 %v431
        %1087 = vmatprep.subr.mxu0 %v442
        %1088 = vmatpush1.msra.mxu0 %v441
        %1089 = vmatprep.subr.mxu0 %v452
        %1090 = vmatpush1.msra.mxu0 %v451
        %1091 = vmatprep.subr.mxu0 %v462
        %1092 = vmatpush1.msra.mxu0 %v461
        %1093 = vmatprep.subr.mxu0 %v472
        %1094 = vmatpush1.msra.mxu0 %v471
        %1095 = vmatprep.subr.mxu0 %v482
        %1096 = vmatpush1.msra.mxu0 %v481
        %1097 = vmatprep.subr.mxu0 %v492
        %1098 = vmatpush1.msra.mxu0 %v491
        %1099 = vmatprep.subr.mxu0 %v502
        %1100 = vmatpush1.msra.mxu0 %v501
        %1101 = vmatprep.subr.mxu0 %v512
        %1102 = vmatpush1.msra.mxu0 %v511
        %1103 = vmatprep.subr.mxu0 %v522
        %1104 = vmatpush1.msra.mxu0 %v521
        %1105 = vmatprep.subr.mxu0 %v532
        %1106 = vmatpush1.msra.mxu0 %v531
        %1107 = vmatprep.subr.mxu0 %v542
        %1108 = vmatpush1.msra.mxu0 %v541
        %1109 = vmatprep.subr.mxu0 %v552
        %1110 = vmatpush1.msra.mxu0 %v551
        %1111 = vmatprep.subr.mxu0 %v562
        %1112 = vmatpush1.msra.mxu0 %v561
        %1113 = vmatprep.subr.mxu0 %v572
        %1114 = vmatpush1.msra.mxu0 %v571
        %1115 = vmatprep.subr.mxu0 %v582
        %1116 = vmatpush1.msra.mxu0 %v581
        %1117 = vmatprep.subr.mxu0 %v592
        %1118 = vmatpush1.msra.mxu0 %v591
        %1119 = vmatprep.subr.mxu0 %v602
        %1120 = vmatpush1.msra.mxu0 %v601
        %1121 = vmatprep.subr.mxu0 %v709
        %1122 = vmatpush1.msra.mxu0 %v706
        %1123 = vmatprep.subr.mxu0 0.0
        %1124 = vmatpush1.msra.mxu0 0.0
        %1125 = vmatprep.subr.mxu0 0.0
        %1126 = vmatpush1.msra.mxu0 0.0
        %1127 = vmatprep.subr.mxu0 0.0
        %1128 = vmatpush1.msra.mxu0 0.0
        %1129 = vmatprep.subr.mxu0 0.0
        %1130 = vmatpush1.msra.mxu0 0.0
        %1131 = vmatprep.mubr.f32.mxu0 %v669
        %1132 = vmatmul.mubr.f32.gmra.mrb[0].mxu0 %v319
        %v1133 = vpop.f32.mrb[0].mxu0
        %v1134 = vadd.f32 %v652, %v1133
        %v1135 = vpop.f32.mrb[0].mxu0
        %v1136 = vadd.f32 %v656, %v1135
        %1137 = vmatprep.mubr.f32.mxu0 %v672
        %1138 = vmatmul.mubr.f32.gmra.mrb[0].mxu0 %v320
        %v1139 = vpop.f32.mrb[0].mxu0
        %v1140 = vadd.f32 %v652, %v1139
        %v1141 = vpop.f32.mrb[0].mxu0
        %v1142 = vadd.f32 %v656, %v1141
        %1143 = vmatprep.mubr.f32.mxu0 %v675
        %1144 = vmatmul.mubr.f32.gmra.mrb[0].mxu0 %v321
        %v1145 = vpop.f32.mrb[0].mxu0
        %v1146 = vadd.f32 %v652, %v1145
        %v1147 = vpop.f32.mrb[0].mxu0
        %v1148 = vadd.f32 %v656, %v1147
        %1149 = vmatprep.mubr.f32.mxu0 %v678
        %1150 = vmatmul.mubr.f32.gmra.mrb[0].mxu0 %v322
        %v1151 = vpop.f32.mrb[0].mxu0
        %v1152 = vadd.f32 %v652, %v1151
        %v1153 = vpop.f32.mrb[0].mxu0
        %v1154 = vadd.f32 %v656, %v1153
        %1155 = vdwg.mxu0
        %v1156 = vmax.f32 %v778, 0.0
        %v1157 = vmax.f32 %v780, 0.0
        %v1158 = vmax.f32 %v867, 0.0
        %v1159 = vmax.f32 %v869, 0.0
        %v1160 = vmax.f32 %v956, 0.0
        %v1161 = vmax.f32 %v958, 0.0
        %v1162 = vmax.f32 %v1045, 0.0
        %v1163 = vmax.f32 %v1047, 0.0
        %v1164 = vmax.f32 %v1134, 0.0
        %v1165 = vmax.f32 %v1136, 0.0
        %v1166 = vmax.f32 %v784, 0.0
        %v1167 = vmax.f32 %v786, 0.0
        %v1168 = vmax.f32 %v873, 0.0
        %v1169 = vmax.f32 %v875, 0.0
        %v1170 = vmax.f32 %v962, 0.0
        %v1171 = vmax.f32 %v964, 0.0
        %v1172 = vmax.f32 %v1051, 0.0
        %v1173 = vmax.f32 %v1053, 0.0
        %v1174 = vmax.f32 %v1140, 0.0
        %v1175 = vmax.f32 %v1142, 0.0
        %v1176 = vmax.f32 %v790, 0.0
        %v1177 = vmax.f32 %v792, 0.0
        %v1178 = vmax.f32 %v879, 0.0
        %v1179 = vmax.f32 %v881, 0.0
        %v1180 = vmax.f32 %v968, 0.0
        %v1181 = vmax.f32 %v970, 0.0
        %v1182 = vmax.f32 %v1057, 0.0
        %v1183 = vmax.f32 %v1059, 0.0
        %v1184 = vmax.f32 %v1146, 0.0
        %v1185 = vmax.f32 %v1148, 0.0
        %v1186 = vmax.f32 %v796, 0.0
        %v1187 = vmax.f32 %v798, 0.0
        %v1188 = vmax.f32 %v885, 0.0
        %v1189 = vmax.f32 %v887, 0.0
        %v1190 = vmax.f32 %v974, 0.0
        %v1191 = vmax.f32 %v976, 0.0
        %v1192 = vmax.f32 %v1063, 0.0
        %v1193 = vmax.f32 %v1065, 0.0
        %v1194 = vmax.f32 %v1152, 0.0
        %v1195 = vmax.f32 %v1154, 0.0
        %v1196 = vmax.f32 %v1156, %v1161
        %v1197 = vmax.f32 %v1157, %v1162
        %v1198 = vmax.f32 %v1158, %v1163
        %v1199 = vmax.f32 %v1159, %v1164
        %v1200 = vmax.f32 %v1160, %v1165
        %v1201 = vmax.f32 %v1166, %v1171
        %v1202 = vmax.f32 %v1167, %v1172
        %v1203 = vmax.f32 %v1168, %v1173
        %v1204 = vmax.f32 %v1169, %v1174
        %v1205 = vmax.f32 %v1170, %v1175
        %v1206 = vmax.f32 %v1176, %v1181
        %v1207 = vmax.f32 %v1177, %v1182
        %v1208 = vmax.f32 %v1178, %v1183
        %v1209 = vmax.f32 %v1179, %v1184
        %v1210 = vmax.f32 %v1180, %v1185
        %v1211 = vmax.f32 %v1186, %v1191
        %v1212 = vmax.f32 %v1187, %v1192
        %v1213 = vmax.f32 %v1188, %v1193
        %v1214 = vmax.f32 %v1189, %v1194
        %v1215 = vmax.f32 %v1190, %v1195
        %v1221 = vrot.slane %v1196, 1
        %v1222 = vrot.slane %v1197, 1
        %v1223 = vrot.slane %v1198, 1
        %v1224 = vrot.slane %v1199, 1
        %v1225 = vrot.slane %v1200, 1
        %v1231 = vmax.f32 %v1196, %v1221
        %v1232 = vmax.f32 %v1197, %v1222
        %v1233 = vmax.f32 %v1198, %v1223
        %v1234 = vmax.f32 %v1199, %v1224
        %v1235 = vmax.f32 %v1200, %v1225
        %v1241 = vrot.slane %v1201, 1
        %v1242 = vrot.slane %v1202, 1
        %v1243 = vrot.slane %v1203, 1
        %v1244 = vrot.slane %v1204, 1
        %v1245 = vrot.slane %v1205, 1
        %v1251 = vmax.f32 %v1201, %v1241
        %v1252 = vmax.f32 %v1202, %v1242
        %v1253 = vmax.f32 %v1203, %v1243
        %v1254 = vmax.f32 %v1204, %v1244
        %v1255 = vmax.f32 %v1205, %v1245
        %v1261 = vrot.slane %v1206, 1
        %v1262 = vrot.slane %v1207, 1
        %v1263 = vrot.slane %v1208, 1
        %v1264 = vrot.slane %v1209, 1
        %v1265 = vrot.slane %v1210, 1
        %v1271 = vmax.f32 %v1206, %v1261
        %v1272 = vmax.f32 %v1207, %v1262
        %v1273 = vmax.f32 %v1208, %v1263
        %v1274 = vmax.f32 %v1209, %v1264
        %v1275 = vmax.f32 %v1210, %v1265
        %v1281 = vrot.slane %v1211, 1
        %v1282 = vrot.slane %v1212, 1
        %v1283 = vrot.slane %v1213, 1
        %v1284 = vrot.slane %v1214, 1
        %v1285 = vrot.slane %v1215, 1
        %v1291 = vmax.f32 %v1211, %v1281
        %v1292 = vmax.f32 %v1212, %v1282
        %v1293 = vmax.f32 %v1213, %v1283
        %v1294 = vmax.f32 %v1214, %v1284
        %v1295 = vmax.f32 %v1215, %v1285
        %v1301 = vrot.slane %v1231, 1
        %v1302 = vrot.slane %v1232, 1
        %v1303 = vrot.slane %v1233, 1
        %v1304 = vrot.slane %v1234, 1
        %v1305 = vrot.slane %v1235, 1
        %v1311 = vrot.slane %v1231, 2
        %v1312 = vrot.slane %v1232, 2
        %v1313 = vrot.slane %v1233, 2
        %v1314 = vrot.slane %v1234, 2
        %v1315 = vrot.slane %v1235, 2
        %v1321 = vrot.slane %v1231, 3
        %v1322 = vrot.slane %v1232, 3
        %v1323 = vrot.slane %v1233, 3
        %v1324 = vrot.slane %v1234, 3
        %v1325 = vrot.slane %v1235, 3
        %v1336 = vrot.slane %v1251, 4
        %v1337 = vrot.slane %v1252, 4
        %v1338 = vrot.slane %v1253, 4
        %v1339 = vrot.slane %v1254, 4
        %v1340 = vrot.slane %v1255, 4
        %v1346 = vrot.slane %v1251, 5
        %v1347 = vrot.slane %v1252, 5
        %v1348 = vrot.slane %v1253, 5
        %v1349 = vrot.slane %v1254, 5
        %v1350 = vrot.slane %v1255, 5
        %v1356 = vrot.slane %v1251, 6
        %v1357 = vrot.slane %v1252, 6
        %v1358 = vrot.slane %v1253, 6
        %v1359 = vrot.slane %v1254, 6
        %v1360 = vrot.slane %v1255, 6
        %v1366 = vrot.slane %v1251, 7
        %v1367 = vrot.slane %v1252, 7
        %v1368 = vrot.slane %v1253, 7
        %v1369 = vrot.slane %v1254, 7
        %v1370 = vrot.slane %v1255, 7
        %v1381 = vrot.slane %v1271, 1
        %v1382 = vrot.slane %v1272, 1
        %v1383 = vrot.slane %v1273, 1
        %v1384 = vrot.slane %v1274, 1
        %v1385 = vrot.slane %v1275, 1
        %v1391 = vrot.slane %v1271, 2
        %v1392 = vrot.slane %v1272, 2
        %v1393 = vrot.slane %v1273, 2
        %v1394 = vrot.slane %v1274, 2
        %v1395 = vrot.slane %v1275, 2
        %v1401 = vrot.slane %v1271, 3
        %v1402 = vrot.slane %v1272, 3
        %v1403 = vrot.slane %v1273, 3
        %v1404 = vrot.slane %v1274, 3
        %v1405 = vrot.slane %v1275, 3
        %v1416 = vrot.slane %v1291, 4
        %v1417 = vrot.slane %v1292, 4
        %v1418 = vrot.slane %v1293, 4
        %v1419 = vrot.slane %v1294, 4
        %v1420 = vrot.slane %v1295, 4
        %v1426 = vrot.slane %v1291, 5
        %v1427 = vrot.slane %v1292, 5
        %v1428 = vrot.slane %v1293, 5
        %v1429 = vrot.slane %v1294, 5
        %v1430 = vrot.slane %v1295, 5
        %vm1436 = vcmask 1040384
        %v1437 = vsel %vm1436, %v1231, %v1301
        %v1438 = vsel %vm1436, %v1232, %v1302
        %v1439 = vsel %vm1436, %v1233, %v1303
        %v1440 = vsel %vm1436, %v1234, %v1304
        %v1441 = vsel %vm1436, %v1235, %v1305
        %vm1442 = vcmask 1041408
        %v1443 = vsel %vm1442, %v1437, %v1311
        %v1444 = vsel %vm1442, %v1438, %v1312
        %v1445 = vsel %vm1442, %v1439, %v1313
        %v1446 = vsel %vm1442, %v1440, %v1314
        %v1447 = vsel %vm1442, %v1441, %v1315
        %vm1448 = vcmask 1042432
        %v1449 = vsel %vm1448, %v1443, %v1321
        %v1450 = vsel %vm1448, %v1444, %v1322
        %v1451 = vsel %vm1448, %v1445, %v1323
        %v1452 = vsel %vm1448, %v1446, %v1324
        %v1453 = vsel %vm1448, %v1447, %v1325
        %v1454 = vsel %vm680, %v1449, %v1336
        %v1455 = vsel %vm680, %v1450, %v1337
        %v1456 = vsel %vm680, %v1451, %v1338
        %v1457 = vsel %vm680, %v1452, %v1339
        %v1458 = vsel %vm680, %v1453, %v1340
        %vm1459 = vcmask 1044480
        %v1460 = vsel %vm1459, %v1454, %v1346
        %v1461 = vsel %vm1459, %v1455, %v1347
        %v1462 = vsel %vm1459, %v1456, %v1348
        %v1463 = vsel %vm1459, %v1457, %v1349
        %v1464 = vsel %vm1459, %v1458, %v1350
        %vm1465 = vcmask 1045504
        %v1466 = vsel %vm1465, %v1460, %v1356
        %v1467 = vsel %vm1465, %v1461, %v1357
        %v1468 = vsel %vm1465, %v1462, %v1358
        %v1469 = vsel %vm1465, %v1463, %v1359
        %v1470 = vsel %vm1465, %v1464, %v1360
        %vm1471 = vcmask 1046528
        %v1472 = vsel %vm1471, %v1466, %v1366
        %v1473 = vsel %vm1471, %v1467, %v1367
        %v1474 = vsel %vm1471, %v1468, %v1368
        %v1475 = vsel %vm1471, %v1469, %v1369
        %v1476 = vsel %vm1471, %v1470, %v1370
        %v1477 = vsel %vm1436, %v1271, %v1381
        %v1478 = vsel %vm1436, %v1272, %v1382
        %v1479 = vsel %vm1436, %v1273, %v1383
        %v1480 = vsel %vm1436, %v1274, %v1384
        %v1481 = vsel %vm1436, %v1275, %v1385
        %v1482 = vsel %vm1442, %v1477, %v1391
        %v1483 = vsel %vm1442, %v1478, %v1392
        %v1484 = vsel %vm1442, %v1479, %v1393
        %v1485 = vsel %vm1442, %v1480, %v1394
        %v1486 = vsel %vm1442, %v1481, %v1395
        %v1487 = vsel %vm1448, %v1482, %v1401
        %v1488 = vsel %vm1448, %v1483, %v1402
        %v1489 = vsel %vm1448, %v1484, %v1403
        %v1490 = vsel %vm1448, %v1485, %v1404
        %v1491 = vsel %vm1448, %v1486, %v1405
        %v1492 = vsel %vm680, %v1487, %v1416
        %v1493 = vsel %vm680, %v1488, %v1417
        %v1494 = vsel %vm680, %v1489, %v1418
        %v1495 = vsel %vm680, %v1490, %v1419
        %v1496 = vsel %vm680, %v1491, %v1420
        %v1497 = vsel %vm1459, %v1492, %v1426
        %v1498 = vsel %vm1459, %v1493, %v1427
        %v1499 = vsel %vm1459, %v1494, %v1428
        %v1500 = vsel %vm1459, %v1495, %v1429
        %v1501 = vsel %vm1459, %v1496, %v1430
        %1502 = vst [vmem:[%s198] sm:$0xff] 0.0
        %1503 = vst [vmem:[%s198 + $0x8] sm:$0xff] 0.0
        %1504 = vst [vmem:[%s198 + $0x10] sm:$0xff] 0.0
        %1505 = vst [vmem:[%s198 + $0x18] sm:$0xff] 0.0
        %1506 = vst [vmem:[%s198 + $0x20] sm:$0xff] 0.0
        %vm1507 = vcmask 523264
        %1508 = vst.msk [vmem:[%s198 + $0x28] sm:$0xff] %vm1507, 0.0
        %1509 = vst [vmem:[%s198 + $0x30] sm:$0xff] 0.0
        %1510 = vst [vmem:[%s198 + $0x38] sm:$0xff] 0.0
        %1511 = vst [vmem:[%s198 + $0x40] sm:$0xff] 0.0
        %1512 = vst [vmem:[%s198 + $0x48] sm:$0xff] 0.0
        %1513 = vst [vmem:[%s198 + $0x50] sm:$0xff] 0.0
        %1514 = vst.msk [vmem:[%s198 + $0x58] sm:$0xff] %vm1507, 0.0
        %v1525 = vrot.slane %v1472, 7
        %v1526 = vrot.slane %v1473, 7
        %v1527 = vrot.slane %v1474, 7
        %v1528 = vrot.slane %v1475, 7
        %v1529 = vrot.slane %v1476, 7
        %v1530 = vrot.slane %v1497, 7
        %v1531 = vsel %vm1436, %v1525, %v1530
        %v1532 = vrot.slane %v1498, 7
        %v1533 = vsel %vm1436, %v1526, %v1532
        %v1534 = vrot.slane %v1499, 7
        %v1535 = vsel %vm1436, %v1527, %v1534
        %v1536 = vrot.slane %v1500, 7
        %v1537 = vsel %vm1436, %v1528, %v1536
        %v1538 = vrot.slane %v1501, 7
        %v1539 = vsel %vm1436, %v1529, %v1538
        %1540 = vrot.lane.b32.xlu0 %v1525, 32
        %v1541 = vpop.permute.xlu0 %1540
        %1542 = vrot.lane.b32.xlu0 %v1526, 32
        %v1543 = vpop.permute.xlu0 %1542
        %1544 = vrot.lane.b32.xlu0 %v1527, 32
        %v1545 = vpop.permute.xlu0 %1544
        %1546 = vrot.lane.b32.xlu0 %v1528, 32
        %v1547 = vpop.permute.xlu0 %1546
        %1548 = vrot.lane.b32.xlu0 %v1529, 32
        %v1549 = vpop.permute.xlu0 %1548
        %1550 = vrot.lane.b32.xlu0 %v1531, 32
        %v1551 = vpop.permute.xlu0 %1550
        %1552 = vrot.lane.b32.xlu0 %v1533, 32
        %v1553 = vpop.permute.xlu0 %1552
        %1554 = vrot.lane.b32.xlu0 %v1535, 32
        %v1555 = vpop.permute.xlu0 %1554
        %1556 = vrot.lane.b32.xlu0 %v1537, 32
        %v1557 = vpop.permute.xlu0 %1556
        %1558 = vrot.lane.b32.xlu0 %v1539, 32
        %v1559 = vpop.permute.xlu0 %1558
        %vm1560 = vcmask 261120
        %v1561 = vsel %vm1560, %v1541, %v1543
        %v1562 = vsel %vm1560, %v1543, %v1545
        %v1563 = vsel %vm1560, %v1545, %v1547
        %v1564 = vsel %vm1560, %v1547, %v1549
        %v1565 = vsel %vm1560, %v1551, %v1553
        %v1566 = vsel %vm1560, %v1553, %v1555
        %v1567 = vsel %vm1560, %v1555, %v1557
        %v1568 = vsel %vm1560, %v1557, %v1559
        %vm1581 = vcmask 1047809
        %1582 = vst.msk [vmem:[%s198] sm:$0xfe] %vm1581, %v1541
        %1583 = vst [vmem:[%s198 + $0x8] sm:$0xfe] %v1561
        %1584 = vst [vmem:[%s198 + $0x10] sm:$0xfe] %v1562
        %1585 = vst [vmem:[%s198 + $0x18] sm:$0xfe] %v1563
        %1586 = vst [vmem:[%s198 + $0x20] sm:$0xfe] %v1564
        %vm1587 = vcmask 261121
        %1588 = vst.msk [vmem:[%s198 + $0x28] sm:$0xfe] %vm1587, %v1549
        %vm1589 = vcmask 1046784
        %1590 = vst.msk [vmem:[%s198 + $0x30] sm:$0x7f] %vm1589, %v1551
        %1591 = vst [vmem:[%s198 + $0x38] sm:$0x7f] %v1565
        %1592 = vst [vmem:[%s198 + $0x40] sm:$0x7f] %v1566
        %1593 = vst [vmem:[%s198 + $0x48] sm:$0x7f] %v1567
        %1594 = vst [vmem:[%s198 + $0x50] sm:$0x7f] %v1568
        %vm1595 = vcmask 260096
        %1596 = vst.msk [vmem:[%s198 + $0x58] sm:$0x7f] %vm1595, %v1559
        %p1597 = scmp.lt.s32.totalorder %s16, 1
        %s1598 = scalar_select %p1597, %s16, 1
        %s1599 = smul.addr %s1598, 12
        %s1600 = smul.addr %s1599, 8
        %s1601 = scalar_lea.vmem %s3, %s1600
        // Predicated region
        $region41: #{cnn_forward.3} parent=31 // pred_check
          %p1602 = pneg %p102
        $region42: #{cnn_forward.3} parent=31 // pred_check_branch
          %1604 = sbr.rel (%p1602) target = $region44
        $region43: #{cnn_forward.3} parent=31 // pred_region
          _
        $region44: #{cnn_forward.3} parent=31 // pred_fallthru
          _
      $region32: #{cnn_forward.3} parent=5 // pred_fallthru
        _
      %p1605 = scmp.le.s32.totalorder 2, %s11
      // Predicated region
      $region45: #{cnn_forward.3} parent=5 // pred_check
        %p1606 = pneg %p1605
      $region46: #{cnn_forward.3} parent=5 // pred_check_branch
        %1608 = sbr.rel (%p1606) target = $region48
      $region47: #{cnn_forward.3} parent=5 // pred_region
        %s1609 = ssub.s32 %s11, 2
        // Predicated region
        $region49: #{cnn_forward.3} parent=47 // pred_check
          %p1610 = pneg %p108
        $region50: #{cnn_forward.3} parent=47 // pred_check_branch
          %1612 = sbr.rel (%p1610) target = $region52
        $region51: #{cnn_forward.3} parent=47 // pred_region
          %p1613 = scmp.lt.s32.totalorder %s17, 1
          %s1614 = scalar_select %p1613, %s17, 1
          %s1615 = smul.addr %s1614, 12
          %s1616 = smul.addr %s1615, 8
          %s1617 = scalar_lea.vmem %s3, %s1616
        $region52: #{cnn_forward.3} parent=47 // pred_fallthru
          _
      $region48: #{cnn_forward.3} parent=5 // pred_fallthru
        _
    $region6: #{cnn_forward.3} parent=1 // loop_footer
      %s15 = sadd.s32 1, %s11
    $region7: #{cnn_forward.3} parent=1 // loop_footer_branch
      %10 = sbr.rel target = $region3
    $region8: #{cnn_forward.3} parent=1 // loop_exit
      _
    %1618 = vsyncpa [#allocation4], 1
    %s1619 = scalar_lea.sflag [#allocation4], 1
    %1620 = vsyncpa %s1619, 1
    %1621 = vsyncpa [#allocation6], 1

// kernel: cnn_forward.5
$region0: #{cnn_forward.5}
  #allocation0 [shape = 'u32[]', space=smem, size = 0x4, offset = 0x4, fixed_abs, tag = 'smem constant byte address 0x4 - core index']
  #allocation1 [shape = 'u32[144,128]{1,0:T(1,128)}', space=vmem, size = 0x12000, scoped, tag = 'internal scratch']
  %s0 = inlined_call_operand.vmem [shape: f32[2,4480], index: 0, kind: input, shape index: {}]
  %s1 = inlined_call_operand.vmem [shape: f32[4480,128], index: 1, kind: input, shape index: {}]
  %s2 = inlined_call_operand.vmem [shape: f32[1,128], index: 2, kind: input, shape index: {}]
  %s3 = inlined_call_operand.vmem [shape: f32[128,20], index: 3, kind: input, shape index: {}]
  %s4 = inlined_call_operand.vmem [shape: f32[1,20], index: 4, kind: input, shape index: {}]
  %s5 = inlined_call_operand.vmem [shape: f32[2,20], index: 5, kind: output, shape index: {}]
  %s6 = sld [smem:[#allocation0]]
  $region30: #{cnn_forward.5} parent=0
    _
  %s8 = ssub.s32 1, %s6
  %s9 = scalar_select 0, %s8, %s6
  // Predicated region
  $region2: #{cnn_forward.5} parent=0 // pred_check
    _
  $region3: #{cnn_forward.5} parent=0 // pred_check_branch
    %11 = sbr.rel (0) target = $region5
  $region4: #{cnn_forward.5} parent=0 // pred_region
    _
  $region5: #{cnn_forward.5} parent=0 // pred_fallthru
    _
  // Predicated region
  $region6: #{cnn_forward.5} parent=0 // pred_check
    _
  $region7: #{cnn_forward.5} parent=0 // pred_check_branch
    %13 = sbr.rel (0) target = $region9
  $region8: #{cnn_forward.5} parent=0 // pred_region
    _
  $region9: #{cnn_forward.5} parent=0 // pred_fallthru
    _
  // Predicated region
  $region10: #{cnn_forward.5} parent=0 // pred_check
    _
  $region11: #{cnn_forward.5} parent=0 // pred_check_branch
    %15 = sbr.rel (0) target = $region13
  $region12: #{cnn_forward.5} parent=0 // pred_region
    _
  $region13: #{cnn_forward.5} parent=0 // pred_fallthru
    _
  // Predicated region
  $region14: #{cnn_forward.5} parent=0 // pred_check
    _
  $region15: #{cnn_forward.5} parent=0 // pred_check_branch
    %17 = sbr.rel (0) target = $region17
  $region16: #{cnn_forward.5} parent=0 // pred_region
    _
  $region17: #{cnn_forward.5} parent=0 // pred_fallthru
    _
  // Predicated region
  $region18: #{cnn_forward.5} parent=0 // pred_check
    _
  $region19: #{cnn_forward.5} parent=0 // pred_check_branch
    %19 = sbr.rel (0) target = $region21
  $region20: #{cnn_forward.5} parent=0 // pred_region
    _
  $region21: #{cnn_forward.5} parent=0 // pred_fallthru
    _
  %v20 = vld [vmem:[%s0] sm:$0xff]
  %v21 = vld [vmem:[%s0 + $0x8] sm:$0xff]
  %v22 = vld [vmem:[%s0 + $0x10] sm:$0xff]
  %v23 = vld [vmem:[%s0 + $0x18] sm:$0xff]
  %v24 = vld [vmem:[%s0 + $0x20] sm:$0xff]
  %v25 = vld [vmem:[%s0 + $0x28] sm:$0xff]
  %v26 = vld [vmem:[%s0 + $0x30] sm:$0xff]
  %v27 = vld [vmem:[%s0 + $0x38] sm:$0xff]
  %v28 = vld [vmem:[%s0 + $0x40] sm:$0x3f]
  %v29 = vld [vmem:[%s1] sm:$0xff]
  %v30 = vld [vmem:[%s1 + $0x8] sm:$0xff]
  %v31 = vld [vmem:[%s1 + $0x10] sm:$0xff]
  %v32 = vld [vmem:[%s1 + $0x18] sm:$0xff]
  %v33 = vld [vmem:[%s1 + $0x20] sm:$0xff]
  %v34 = vld [vmem:[%s1 + $0x28] sm:$0xff]
  %v35 = vld [vmem:[%s1 + $0x30] sm:$0xff]
  %v36 = vld [vmem:[%s1 + $0x38] sm:$0xff]
  %v37 = vld [vmem:[%s1 + $0x40] sm:$0xff]
  %v38 = vld [vmem:[%s1 + $0x48] sm:$0xff]
  %v39 = vld [vmem:[%s1 + $0x50] sm:$0xff]
  %v40 = vld [vmem:[%s1 + $0x58] sm:$0xff]
  %v41 = vld [vmem:[%s1 + $0x60] sm:$0xff]
  %v42 = vld [vmem:[%s1 + $0x68] sm:$0xff]
  %v43 = vld [vmem:[%s1 + $0x70] sm:$0xff]
  %v44 = vld [vmem:[%s1 + $0x78] sm:$0xff]
  %v45 = vld [vmem:[%s1 + $0x80] sm:$0xff]
  %v46 = vld [vmem:[%s1 + $0x88] sm:$0xff]
  %v47 = vld [vmem:[%s1 + $0x90] sm:$0xff]
  %v48 = vld [vmem:[%s1 + $0x98] sm:$0xff]
  %v49 = vld [vmem:[%s1 + $0xa0] sm:$0xff]
  %v50 = vld [vmem:[%s1 + $0xa8] sm:$0xff]
  %v51 = vld [vmem:[%s1 + $0xb0] sm:$0xff]
  %v52 = vld [vmem:[%s1 + $0xb8] sm:$0xff]
  %v53 = vld [vmem:[%s1 + $0xc0] sm:$0xff]
  %v54 = vld [vmem:[%s1 + $0xc8] sm:$0xff]
  %v55 = vld [vmem:[%s1 + $0xd0] sm:$0xff]
  %v56 = vld [vmem:[%s1 + $0xd8] sm:$0xff]
  %v57 = vld [vmem:[%s1 + $0xe0] sm:$0xff]
  %v58 = vld [vmem:[%s1 + $0xe8] sm:$0xff]
  %v59 = vld [vmem:[%s1 + $0xf0] sm:$0xff]
  %v60 = vld [vmem:[%s1 + $0xf8] sm:$0xff]
  %v61 = vld [vmem:[%s1 + $0x100] sm:$0xff]
  %v62 = vld [vmem:[%s1 + $0x108] sm:$0xff]
  %v63 = vld [vmem:[%s1 + $0x110] sm:$0xff]
  %v64 = vld [vmem:[%s1 + $0x118] sm:$0xff]
  %v65 = vld [vmem:[%s1 + $0x120] sm:$0xff]
  %v66 = vld [vmem:[%s1 + $0x128] sm:$0xff]
  %v67 = vld [vmem:[%s1 + $0x130] sm:$0xff]
  %v68 = vld [vmem:[%s1 + $0x138] sm:$0xff]
  %v69 = vld [vmem:[%s1 + $0x140] sm:$0xff]
  %v70 = vld [vmem:[%s1 + $0x148] sm:$0xff]
  %v71 = vld [vmem:[%s1 + $0x150] sm:$0xff]
  %v72 = vld [vmem:[%s1 + $0x158] sm:$0xff]
  %v73 = vld [vmem:[%s1 + $0x160] sm:$0xff]
  %v74 = vld [vmem:[%s1 + $0x168] sm:$0xff]
  %v75 = vld [vmem:[%s1 + $0x170] sm:$0xff]
  %v76 = vld [vmem:[%s1 + $0x178] sm:$0xff]
  %v77 = vld [vmem:[%s1 + $0x180] sm:$0xff]
  %v78 = vld [vmem:[%s1 + $0x188] sm:$0xff]
  %v79 = vld [vmem:[%s1 + $0x190] sm:$0xff]
  %v80 = vld [vmem:[%s1 + $0x198] sm:$0xff]
  %v81 = vld [vmem:[%s1 + $0x1a0] sm:$0xff]
  %v82 = vld [vmem:[%s1 + $0x1a8] sm:$0xff]
  %v83 = vld [vmem:[%s1 + $0x1b0] sm:$0xff]
  %v84 = vld [vmem:[%s1 + $0x1b8] sm:$0xff]
  %v85 = vld [vmem:[%s1 + $0x1c0] sm:$0xff]
  %v86 = vld [vmem:[%s1 + $0x1c8] sm:$0xff]
  %v87 = vld [vmem:[%s1 + $0x1d0] sm:$0xff]
  %v88 = vld [vmem:[%s1 + $0x1d8] sm:$0xff]
  %v89 = vld [vmem:[%s1 + $0x1e0] sm:$0xff]
  %v90 = vld [vmem:[%s1 + $0x1e8] sm:$0xff]
  %v91 = vld [vmem:[%s1 + $0x1f0] sm:$0xff]
  %v92 = vld [vmem:[%s1 + $0x1f8] sm:$0xff]
  %v93 = vld [vmem:[%s1 + $0x200] sm:$0xff]
  %v94 = vld [vmem:[%s1 + $0x208] sm:$0xff]
  %v95 = vld [vmem:[%s1 + $0x210] sm:$0xff]
  %v96 = vld [vmem:[%s1 + $0x218] sm:$0xff]
  %v97 = vld [vmem:[%s1 + $0x220] sm:$0xff]
  %v98 = vld [vmem:[%s1 + $0x228] sm:$0xff]
  %v99 = vld [vmem:[%s1 + $0x230] sm:$0xff]
  %v100 = vld [vmem:[%s1 + $0x238] sm:$0xff]
  %v101 = vld [vmem:[%s1 + $0x240] sm:$0xff]
  %v102 = vld [vmem:[%s1 + $0x248] sm:$0xff]
  %v103 = vld [vmem:[%s1 + $0x250] sm:$0xff]
  %v104 = vld [vmem:[%s1 + $0x258] sm:$0xff]
  %v105 = vld [vmem:[%s1 + $0x260] sm:$0xff]
  %v106 = vld [vmem:[%s1 + $0x268] sm:$0xff]
  %v107 = vld [vmem:[%s1 + $0x270] sm:$0xff]
  %v108 = vld [vmem:[%s1 + $0x278] sm:$0xff]
  %v109 = vld [vmem:[%s1 + $0x280] sm:$0xff]
  %v110 = vld [vmem:[%s1 + $0x288] sm:$0xff]
  %v111 = vld [vmem:[%s1 + $0x290] sm:$0xff]
  %v112 = vld [vmem:[%s1 + $0x298] sm:$0xff]
  %v113 = vld [vmem:[%s1 + $0x2a0] sm:$0xff]
  %v114 = vld [vmem:[%s1 + $0x2a8] sm:$0xff]
  %v115 = vld [vmem:[%s1 + $0x2b0] sm:$0xff]
  %v116 = vld [vmem:[%s1 + $0x2b8] sm:$0xff]
  %v117 = vld [vmem:[%s1 + $0x2c0] sm:$0xff]
  %v118 = vld [vmem:[%s1 + $0x2c8] sm:$0xff]
  %v119 = vld [vmem:[%s1 + $0x2d0] sm:$0xff]
  %v120 = vld [vmem:[%s1 + $0x2d8] sm:$0xff]
  %v121 = vld [vmem:[%s1 + $0x2e0] sm:$0xff]
  %v122 = vld [vmem:[%s1 + $0x2e8] sm:$0xff]
  %v123 = vld [vmem:[%s1 + $0x2f0] sm:$0xff]
  %v124 = vld [vmem:[%s1 + $0x2f8] sm:$0xff]
  %v125 = vld [vmem:[%s1 + $0x300] sm:$0xff]
  %v126 = vld [vmem:[%s1 + $0x308] sm:$0xff]
  %v127 = vld [vmem:[%s1 + $0x310] sm:$0xff]
  %v128 = vld [vmem:[%s1 + $0x318] sm:$0xff]
  %v129 = vld [vmem:[%s1 + $0x320] sm:$0xff]
  %v130 = vld [vmem:[%s1 + $0x328] sm:$0xff]
  %v131 = vld [vmem:[%s1 + $0x330] sm:$0xff]
  %v132 = vld [vmem:[%s1 + $0x338] sm:$0xff]
  %v133 = vld [vmem:[%s1 + $0x340] sm:$0xff]
  %v134 = vld [vmem:[%s1 + $0x348] sm:$0xff]
  %v135 = vld [vmem:[%s1 + $0x350] sm:$0xff]
  %v136 = vld [vmem:[%s1 + $0x358] sm:$0xff]
  %v137 = vld [vmem:[%s1 + $0x360] sm:$0xff]
  %v138 = vld [vmem:[%s1 + $0x368] sm:$0xff]
  %v139 = vld [vmem:[%s1 + $0x370] sm:$0xff]
  %v140 = vld [vmem:[%s1 + $0x378] sm:$0xff]
  %v141 = vld [vmem:[%s1 + $0x380] sm:$0xff]
  %v142 = vld [vmem:[%s1 + $0x388] sm:$0xff]
  %v143 = vld [vmem:[%s1 + $0x390] sm:$0xff]
  %v144 = vld [vmem:[%s1 + $0x398] sm:$0xff]
  %v145 = vld [vmem:[%s1 + $0x3a0] sm:$0xff]
  %v146 = vld [vmem:[%s1 + $0x3a8] sm:$0xff]
  %v147 = vld [vmem:[%s1 + $0x3b0] sm:$0xff]
  %v148 = vld [vmem:[%s1 + $0x3b8] sm:$0xff]
  %v149 = vld [vmem:[%s1 + $0x3c0] sm:$0xff]
  %v150 = vld [vmem:[%s1 + $0x3c8] sm:$0xff]
  %v151 = vld [vmem:[%s1 + $0x3d0] sm:$0xff]
  %v152 = vld [vmem:[%s1 + $0x3d8] sm:$0xff]
  %v153 = vld [vmem:[%s1 + $0x3e0] sm:$0xff]
  %v154 = vld [vmem:[%s1 + $0x3e8] sm:$0xff]
  %v155 = vld [vmem:[%s1 + $0x3f0] sm:$0xff]
  %v156 = vld [vmem:[%s1 + $0x3f8] sm:$0xff]
  %v157 = vld [vmem:[%s1 + $0x400] sm:$0xff]
  %v158 = vld [vmem:[%s1 + $0x408] sm:$0xff]
  %v159 = vld [vmem:[%s1 + $0x410] sm:$0xff]
  %v160 = vld [vmem:[%s1 + $0x418] sm:$0xff]
  %v161 = vld [vmem:[%s1 + $0x420] sm:$0xff]
  %v162 = vld [vmem:[%s1 + $0x428] sm:$0xff]
  %v163 = vld [vmem:[%s1 + $0x430] sm:$0xff]
  %v164 = vld [vmem:[%s1 + $0x438] sm:$0xff]
  %v165 = vld [vmem:[%s1 + $0x440] sm:$0xff]
  %v166 = vld [vmem:[%s1 + $0x448] sm:$0xff]
  %v167 = vld [vmem:[%s1 + $0x450] sm:$0xff]
  %v168 = vld [vmem:[%s1 + $0x458] sm:$0xff]
  %v169 = vld [vmem:[%s1 + $0x460] sm:$0xff]
  %v170 = vld [vmem:[%s1 + $0x468] sm:$0xff]
  %v171 = vld [vmem:[%s1 + $0x470] sm:$0xff]
  %v172 = vld [vmem:[%s1 + $0x478] sm:$0xff]
  %v173 = vld [vmem:[%s1 + $0x480] sm:$0xff]
  %v174 = vld [vmem:[%s1 + $0x488] sm:$0xff]
  %v175 = vld [vmem:[%s1 + $0x490] sm:$0xff]
  %v176 = vld [vmem:[%s1 + $0x498] sm:$0xff]
  %v177 = vld [vmem:[%s1 + $0x4a0] sm:$0xff]
  %v178 = vld [vmem:[%s1 + $0x4a8] sm:$0xff]
  %v179 = vld [vmem:[%s1 + $0x4b0] sm:$0xff]
  %v180 = vld [vmem:[%s1 + $0x4b8] sm:$0xff]
  %v181 = vld [vmem:[%s1 + $0x4c0] sm:$0xff]
  %v182 = vld [vmem:[%s1 + $0x4c8] sm:$0xff]
  %v183 = vld [vmem:[%s1 + $0x4d0] sm:$0xff]
  %v184 = vld [vmem:[%s1 + $0x4d8] sm:$0xff]
  %v185 = vld [vmem:[%s1 + $0x4e0] sm:$0xff]
  %v186 = vld [vmem:[%s1 + $0x4e8] sm:$0xff]
  %v187 = vld [vmem:[%s1 + $0x4f0] sm:$0xff]
  %v188 = vld [vmem:[%s1 + $0x4f8] sm:$0xff]
  %v189 = vld [vmem:[%s1 + $0x500] sm:$0xff]
  %v190 = vld [vmem:[%s1 + $0x508] sm:$0xff]
  %v191 = vld [vmem:[%s1 + $0x510] sm:$0xff]
  %v192 = vld [vmem:[%s1 + $0x518] sm:$0xff]
  %v193 = vld [vmem:[%s1 + $0x520] sm:$0xff]
  %v194 = vld [vmem:[%s1 + $0x528] sm:$0xff]
  %v195 = vld [vmem:[%s1 + $0x530] sm:$0xff]
  %v196 = vld [vmem:[%s1 + $0x538] sm:$0xff]
  %v197 = vld [vmem:[%s1 + $0x540] sm:$0xff]
  %v198 = vld [vmem:[%s1 + $0x548] sm:$0xff]
  %v199 = vld [vmem:[%s1 + $0x550] sm:$0xff]
  %v200 = vld [vmem:[%s1 + $0x558] sm:$0xff]
  %v201 = vld [vmem:[%s1 + $0x560] sm:$0xff]
  %v202 = vld [vmem:[%s1 + $0x568] sm:$0xff]
  %v203 = vld [vmem:[%s1 + $0x570] sm:$0xff]
  %v204 = vld [vmem:[%s1 + $0x578] sm:$0xff]
  %v205 = vld [vmem:[%s1 + $0x580] sm:$0xff]
  %v206 = vld [vmem:[%s1 + $0x588] sm:$0xff]
  %v207 = vld [vmem:[%s1 + $0x590] sm:$0xff]
  %v208 = vld [vmem:[%s1 + $0x598] sm:$0xff]
  %v209 = vld [vmem:[%s1 + $0x5a0] sm:$0xff]
  %v210 = vld [vmem:[%s1 + $0x5a8] sm:$0xff]
  %v211 = vld [vmem:[%s1 + $0x5b0] sm:$0xff]
  %v212 = vld [vmem:[%s1 + $0x5b8] sm:$0xff]
  %v213 = vld [vmem:[%s1 + $0x5c0] sm:$0xff]
  %v214 = vld [vmem:[%s1 + $0x5c8] sm:$0xff]
  %v215 = vld [vmem:[%s1 + $0x5d0] sm:$0xff]
  %v216 = vld [vmem:[%s1 + $0x5d8] sm:$0xff]
  %v217 = vld [vmem:[%s1 + $0x5e0] sm:$0xff]
  %v218 = vld [vmem:[%s1 + $0x5e8] sm:$0xff]
  %v219 = vld [vmem:[%s1 + $0x5f0] sm:$0xff]
  %v220 = vld [vmem:[%s1 + $0x5f8] sm:$0xff]
  %v221 = vld [vmem:[%s1 + $0x600] sm:$0xff]
  %v222 = vld [vmem:[%s1 + $0x608] sm:$0xff]
  %v223 = vld [vmem:[%s1 + $0x610] sm:$0xff]
  %v224 = vld [vmem:[%s1 + $0x618] sm:$0xff]
  %v225 = vld [vmem:[%s1 + $0x620] sm:$0xff]
  %v226 = vld [vmem:[%s1 + $0x628] sm:$0xff]
  %v227 = vld [vmem:[%s1 + $0x630] sm:$0xff]
  %v228 = vld [vmem:[%s1 + $0x638] sm:$0xff]
  %v229 = vld [vmem:[%s1 + $0x640] sm:$0xff]
  %v230 = vld [vmem:[%s1 + $0x648] sm:$0xff]
  %v231 = vld [vmem:[%s1 + $0x650] sm:$0xff]
  %v232 = vld [vmem:[%s1 + $0x658] sm:$0xff]
  %v233 = vld [vmem:[%s1 + $0x660] sm:$0xff]
  %v234 = vld [vmem:[%s1 + $0x668] sm:$0xff]
  %v235 = vld [vmem:[%s1 + $0x670] sm:$0xff]
  %v236 = vld [vmem:[%s1 + $0x678] sm:$0xff]
  %v237 = vld [vmem:[%s1 + $0x680] sm:$0xff]
  %v238 = vld [vmem:[%s1 + $0x688] sm:$0xff]
  %v239 = vld [vmem:[%s1 + $0x690] sm:$0xff]
  %v240 = vld [vmem:[%s1 + $0x698] sm:$0xff]
  %v241 = vld [vmem:[%s1 + $0x6a0] sm:$0xff]
  %v242 = vld [vmem:[%s1 + $0x6a8] sm:$0xff]
  %v243 = vld [vmem:[%s1 + $0x6b0] sm:$0xff]
  %v244 = vld [vmem:[%s1 + $0x6b8] sm:$0xff]
  %v245 = vld [vmem:[%s1 + $0x6c0] sm:$0xff]
  %v246 = vld [vmem:[%s1 + $0x6c8] sm:$0xff]
  %v247 = vld [vmem:[%s1 + $0x6d0] sm:$0xff]
  %v248 = vld [vmem:[%s1 + $0x6d8] sm:$0xff]
  %v249 = vld [vmem:[%s1 + $0x6e0] sm:$0xff]
  %v250 = vld [vmem:[%s1 + $0x6e8] sm:$0xff]
  %v251 = vld [vmem:[%s1 + $0x6f0] sm:$0xff]
  %v252 = vld [vmem:[%s1 + $0x6f8] sm:$0xff]
  %v253 = vld [vmem:[%s1 + $0x700] sm:$0xff]
  %v254 = vld [vmem:[%s1 + $0x708] sm:$0xff]
  %v255 = vld [vmem:[%s1 + $0x710] sm:$0xff]
  %v256 = vld [vmem:[%s1 + $0x718] sm:$0xff]
  %v257 = vld [vmem:[%s1 + $0x720] sm:$0xff]
  %v258 = vld [vmem:[%s1 + $0x728] sm:$0xff]
  %v259 = vld [vmem:[%s1 + $0x730] sm:$0xff]
  %v260 = vld [vmem:[%s1 + $0x738] sm:$0xff]
  %v261 = vld [vmem:[%s1 + $0x740] sm:$0xff]
  %v262 = vld [vmem:[%s1 + $0x748] sm:$0xff]
  %v263 = vld [vmem:[%s1 + $0x750] sm:$0xff]
  %v264 = vld [vmem:[%s1 + $0x758] sm:$0xff]
  %v265 = vld [vmem:[%s1 + $0x760] sm:$0xff]
  %v266 = vld [vmem:[%s1 + $0x768] sm:$0xff]
  %v267 = vld [vmem:[%s1 + $0x770] sm:$0xff]
  %v268 = vld [vmem:[%s1 + $0x778] sm:$0xff]
  %v269 = vld [vmem:[%s1 + $0x780] sm:$0xff]
  %v270 = vld [vmem:[%s1 + $0x788] sm:$0xff]
  %v271 = vld [vmem:[%s1 + $0x790] sm:$0xff]
  %v272 = vld [vmem:[%s1 + $0x798] sm:$0xff]
  %v273 = vld [vmem:[%s1 + $0x7a0] sm:$0xff]
  %v274 = vld [vmem:[%s1 + $0x7a8] sm:$0xff]
  %v275 = vld [vmem:[%s1 + $0x7b0] sm:$0xff]
  %v276 = vld [vmem:[%s1 + $0x7b8] sm:$0xff]
  %v277 = vld [vmem:[%s1 + $0x7c0] sm:$0xff]
  %v278 = vld [vmem:[%s1 + $0x7c8] sm:$0xff]
  %v279 = vld [vmem:[%s1 + $0x7d0] sm:$0xff]
  %v280 = vld [vmem:[%s1 + $0x7d8] sm:$0xff]
  %v281 = vld [vmem:[%s1 + $0x7e0] sm:$0xff]
  %v282 = vld [vmem:[%s1 + $0x7e8] sm:$0xff]
  %v283 = vld [vmem:[%s1 + $0x7f0] sm:$0xff]
  %v284 = vld [vmem:[%s1 + $0x7f8] sm:$0xff]
  %v285 = vld [vmem:[%s1 + $0x800] sm:$0xff]
  %v286 = vld [vmem:[%s1 + $0x808] sm:$0xff]
  %v287 = vld [vmem:[%s1 + $0x810] sm:$0xff]
  %v288 = vld [vmem:[%s1 + $0x818] sm:$0xff]
  %v289 = vld [vmem:[%s1 + $0x820] sm:$0xff]
  %v290 = vld [vmem:[%s1 + $0x828] sm:$0xff]
  %v291 = vld [vmem:[%s1 + $0x830] sm:$0xff]
  %v292 = vld [vmem:[%s1 + $0x838] sm:$0xff]
  %v293 = vld [vmem:[%s1 + $0x840] sm:$0xff]
  %v294 = vld [vmem:[%s1 + $0x848] sm:$0xff]
  %v295 = vld [vmem:[%s1 + $0x850] sm:$0xff]
  %v296 = vld [vmem:[%s1 + $0x858] sm:$0xff]
  %v297 = vld [vmem:[%s1 + $0x860] sm:$0xff]
  %v298 = vld [vmem:[%s1 + $0x868] sm:$0xff]
  %v299 = vld [vmem:[%s1 + $0x870] sm:$0xff]
  %v300 = vld [vmem:[%s1 + $0x878] sm:$0xff]
  %v301 = vld [vmem:[%s1 + $0x880] sm:$0xff]
  %v302 = vld [vmem:[%s1 + $0x888] sm:$0xff]
  %v303 = vld [vmem:[%s1 + $0x890] sm:$0xff]
  %v304 = vld [vmem:[%s1 + $0x898] sm:$0xff]
  %v305 = vld [vmem:[%s1 + $0x8a0] sm:$0xff]
  %v306 = vld [vmem:[%s1 + $0x8a8] sm:$0xff]
  %v307 = vld [vmem:[%s1 + $0x8b0] sm:$0xff]
  %v308 = vld [vmem:[%s1 + $0x8b8] sm:$0xff]
  %v309 = vld [vmem:[%s1 + $0x8c0] sm:$0xff]
  %v310 = vld [vmem:[%s1 + $0x8c8] sm:$0xff]
  %v311 = vld [vmem:[%s1 + $0x8d0] sm:$0xff]
  %v312 = vld [vmem:[%s1 + $0x8d8] sm:$0xff]
  %v313 = vld [vmem:[%s1 + $0x8e0] sm:$0xff]
  %v314 = vld [vmem:[%s1 + $0x8e8] sm:$0xff]
  %v315 = vld [vmem:[%s1 + $0x8f0] sm:$0xff]
  %v316 = vld [vmem:[%s1 + $0x8f8] sm:$0xff]
  %v317 = vld [vmem:[%s1 + $0x900] sm:$0xff]
  %v318 = vld [vmem:[%s1 + $0x908] sm:$0xff]
  %v319 = vld [vmem:[%s1 + $0x910] sm:$0xff]
  %v320 = vld [vmem:[%s1 + $0x918] sm:$0xff]
  %v321 = vld [vmem:[%s1 + $0x920] sm:$0xff]
  %v322 = vld [vmem:[%s1 + $0x928] sm:$0xff]
  %v323 = vld [vmem:[%s1 + $0x930] sm:$0xff]
  %v324 = vld [vmem:[%s1 + $0x938] sm:$0xff]
  %v325 = vld [vmem:[%s1 + $0x940] sm:$0xff]
  %v326 = vld [vmem:[%s1 + $0x948] sm:$0xff]
  %v327 = vld [vmem:[%s1 + $0x950] sm:$0xff]
  %v328 = vld [vmem:[%s1 + $0x958] sm:$0xff]
  %v329 = vld [vmem:[%s1 + $0x960] sm:$0xff]
  %v330 = vld [vmem:[%s1 + $0x968] sm:$0xff]
  %v331 = vld [vmem:[%s1 + $0x970] sm:$0xff]
  %v332 = vld [vmem:[%s1 + $0x978] sm:$0xff]
  %v333 = vld [vmem:[%s1 + $0x980] sm:$0xff]
  %v334 = vld [vmem:[%s1 + $0x988] sm:$0xff]
  %v335 = vld [vmem:[%s1 + $0x990] sm:$0xff]
  %v336 = vld [vmem:[%s1 + $0x998] sm:$0xff]
  %v337 = vld [vmem:[%s1 + $0x9a0] sm:$0xff]
  %v338 = vld [vmem:[%s1 + $0x9a8] sm:$0xff]
  %v339 = vld [vmem:[%s1 + $0x9b0] sm:$0xff]
  %v340 = vld [vmem:[%s1 + $0x9b8] sm:$0xff]
  %v341 = vld [vmem:[%s1 + $0x9c0] sm:$0xff]
  %v342 = vld [vmem:[%s1 + $0x9c8] sm:$0xff]
  %v343 = vld [vmem:[%s1 + $0x9d0] sm:$0xff]
  %v344 = vld [vmem:[%s1 + $0x9d8] sm:$0xff]
  %v345 = vld [vmem:[%s1 + $0x9e0] sm:$0xff]
  %v346 = vld [vmem:[%s1 + $0x9e8] sm:$0xff]
  %v347 = vld [vmem:[%s1 + $0x9f0] sm:$0xff]
  %v348 = vld [vmem:[%s1 + $0x9f8] sm:$0xff]
  %v349 = vld [vmem:[%s1 + $0xa00] sm:$0xff]
  %v350 = vld [vmem:[%s1 + $0xa08] sm:$0xff]
  %v351 = vld [vmem:[%s1 + $0xa10] sm:$0xff]
  %v352 = vld [vmem:[%s1 + $0xa18] sm:$0xff]
  %v353 = vld [vmem:[%s1 + $0xa20] sm:$0xff]
  %v354 = vld [vmem:[%s1 + $0xa28] sm:$0xff]
  %v355 = vld [vmem:[%s1 + $0xa30] sm:$0xff]
  %v356 = vld [vmem:[%s1 + $0xa38] sm:$0xff]
  %v357 = vld [vmem:[%s1 + $0xa40] sm:$0xff]
  %v358 = vld [vmem:[%s1 + $0xa48] sm:$0xff]
  %v359 = vld [vmem:[%s1 + $0xa50] sm:$0xff]
  %v360 = vld [vmem:[%s1 + $0xa58] sm:$0xff]
  %v361 = vld [vmem:[%s1 + $0xa60] sm:$0xff]
  %v362 = vld [vmem:[%s1 + $0xa68] sm:$0xff]
  %v363 = vld [vmem:[%s1 + $0xa70] sm:$0xff]
  %v364 = vld [vmem:[%s1 + $0xa78] sm:$0xff]
  %v365 = vld [vmem:[%s1 + $0xa80] sm:$0xff]
  %v366 = vld [vmem:[%s1 + $0xa88] sm:$0xff]
  %v367 = vld [vmem:[%s1 + $0xa90] sm:$0xff]
  %v368 = vld [vmem:[%s1 + $0xa98] sm:$0xff]
  %v369 = vld [vmem:[%s1 + $0xaa0] sm:$0xff]
  %v370 = vld [vmem:[%s1 + $0xaa8] sm:$0xff]
  %v371 = vld [vmem:[%s1 + $0xab0] sm:$0xff]
  %v372 = vld [vmem:[%s1 + $0xab8] sm:$0xff]
  %v373 = vld [vmem:[%s1 + $0xac0] sm:$0xff]
  %v374 = vld [vmem:[%s1 + $0xac8] sm:$0xff]
  %v375 = vld [vmem:[%s1 + $0xad0] sm:$0xff]
  %v376 = vld [vmem:[%s1 + $0xad8] sm:$0xff]
  %v377 = vld [vmem:[%s1 + $0xae0] sm:$0xff]
  %v378 = vld [vmem:[%s1 + $0xae8] sm:$0xff]
  %v379 = vld [vmem:[%s1 + $0xaf0] sm:$0xff]
  %v380 = vld [vmem:[%s1 + $0xaf8] sm:$0xff]
  %v381 = vld [vmem:[%s1 + $0xb00] sm:$0xff]
  %v382 = vld [vmem:[%s1 + $0xb08] sm:$0xff]
  %v383 = vld [vmem:[%s1 + $0xb10] sm:$0xff]
  %v384 = vld [vmem:[%s1 + $0xb18] sm:$0xff]
  %v385 = vld [vmem:[%s1 + $0xb20] sm:$0xff]
  %v386 = vld [vmem:[%s1 + $0xb28] sm:$0xff]
  %v387 = vld [vmem:[%s1 + $0xb30] sm:$0xff]
  %v388 = vld [vmem:[%s1 + $0xb38] sm:$0xff]
  %v389 = vld [vmem:[%s1 + $0xb40] sm:$0xff]
  %v390 = vld [vmem:[%s1 + $0xb48] sm:$0xff]
  %v391 = vld [vmem:[%s1 + $0xb50] sm:$0xff]
  %v392 = vld [vmem:[%s1 + $0xb58] sm:$0xff]
  %v393 = vld [vmem:[%s1 + $0xb60] sm:$0xff]
  %v394 = vld [vmem:[%s1 + $0xb68] sm:$0xff]
  %v395 = vld [vmem:[%s1 + $0xb70] sm:$0xff]
  %v396 = vld [vmem:[%s1 + $0xb78] sm:$0xff]
  %v397 = vld [vmem:[%s1 + $0xb80] sm:$0xff]
  %v398 = vld [vmem:[%s1 + $0xb88] sm:$0xff]
  %v399 = vld [vmem:[%s1 + $0xb90] sm:$0xff]
  %v400 = vld [vmem:[%s1 + $0xb98] sm:$0xff]
  %v401 = vld [vmem:[%s1 + $0xba0] sm:$0xff]
  %v402 = vld [vmem:[%s1 + $0xba8] sm:$0xff]
  %v403 = vld [vmem:[%s1 + $0xbb0] sm:$0xff]
  %v404 = vld [vmem:[%s1 + $0xbb8] sm:$0xff]
  %v405 = vld [vmem:[%s1 + $0xbc0] sm:$0xff]
  %v406 = vld [vmem:[%s1 + $0xbc8] sm:$0xff]
  %v407 = vld [vmem:[%s1 + $0xbd0] sm:$0xff]
  %v408 = vld [vmem:[%s1 + $0xbd8] sm:$0xff]
  %v409 = vld [vmem:[%s1 + $0xbe0] sm:$0xff]
  %v410 = vld [vmem:[%s1 + $0xbe8] sm:$0xff]
  %v411 = vld [vmem:[%s1 + $0xbf0] sm:$0xff]
  %v412 = vld [vmem:[%s1 + $0xbf8] sm:$0xff]
  %v413 = vld [vmem:[%s1 + $0xc00] sm:$0xff]
  %v414 = vld [vmem:[%s1 + $0xc08] sm:$0xff]
  %v415 = vld [vmem:[%s1 + $0xc10] sm:$0xff]
  %v416 = vld [vmem:[%s1 + $0xc18] sm:$0xff]
  %v417 = vld [vmem:[%s1 + $0xc20] sm:$0xff]
  %v418 = vld [vmem:[%s1 + $0xc28] sm:$0xff]
  %v419 = vld [vmem:[%s1 + $0xc30] sm:$0xff]
  %v420 = vld [vmem:[%s1 + $0xc38] sm:$0xff]
  %v421 = vld [vmem:[%s1 + $0xc40] sm:$0xff]
  %v422 = vld [vmem:[%s1 + $0xc48] sm:$0xff]
  %v423 = vld [vmem:[%s1 + $0xc50] sm:$0xff]
  %v424 = vld [vmem:[%s1 + $0xc58] sm:$0xff]
  %v425 = vld [vmem:[%s1 + $0xc60] sm:$0xff]
  %v426 = vld [vmem:[%s1 + $0xc68] sm:$0xff]
  %v427 = vld [vmem:[%s1 + $0xc70] sm:$0xff]
  %v428 = vld [vmem:[%s1 + $0xc78] sm:$0xff]
  %v429 = vld [vmem:[%s1 + $0xc80] sm:$0xff]
  %v430 = vld [vmem:[%s1 + $0xc88] sm:$0xff]
  %v431 = vld [vmem:[%s1 + $0xc90] sm:$0xff]
  %v432 = vld [vmem:[%s1 + $0xc98] sm:$0xff]
  %v433 = vld [vmem:[%s1 + $0xca0] sm:$0xff]
  %v434 = vld [vmem:[%s1 + $0xca8] sm:$0xff]
  %v435 = vld [vmem:[%s1 + $0xcb0] sm:$0xff]
  %v436 = vld [vmem:[%s1 + $0xcb8] sm:$0xff]
  %v437 = vld [vmem:[%s1 + $0xcc0] sm:$0xff]
  %v438 = vld [vmem:[%s1 + $0xcc8] sm:$0xff]
  %v439 = vld [vmem:[%s1 + $0xcd0] sm:$0xff]
  %v440 = vld [vmem:[%s1 + $0xcd8] sm:$0xff]
  %v441 = vld [vmem:[%s1 + $0xce0] sm:$0xff]
  %v442 = vld [vmem:[%s1 + $0xce8] sm:$0xff]
  %v443 = vld [vmem:[%s1 + $0xcf0] sm:$0xff]
  %v444 = vld [vmem:[%s1 + $0xcf8] sm:$0xff]
  %v445 = vld [vmem:[%s1 + $0xd00] sm:$0xff]
  %v446 = vld [vmem:[%s1 + $0xd08] sm:$0xff]
  %v447 = vld [vmem:[%s1 + $0xd10] sm:$0xff]
  %v448 = vld [vmem:[%s1 + $0xd18] sm:$0xff]
  %v449 = vld [vmem:[%s1 + $0xd20] sm:$0xff]
  %v450 = vld [vmem:[%s1 + $0xd28] sm:$0xff]
  %v451 = vld [vmem:[%s1 + $0xd30] sm:$0xff]
  %v452 = vld [vmem:[%s1 + $0xd38] sm:$0xff]
  %v453 = vld [vmem:[%s1 + $0xd40] sm:$0xff]
  %v454 = vld [vmem:[%s1 + $0xd48] sm:$0xff]
  %v455 = vld [vmem:[%s1 + $0xd50] sm:$0xff]
  %v456 = vld [vmem:[%s1 + $0xd58] sm:$0xff]
  %v457 = vld [vmem:[%s1 + $0xd60] sm:$0xff]
  %v458 = vld [vmem:[%s1 + $0xd68] sm:$0xff]
  %v459 = vld [vmem:[%s1 + $0xd70] sm:$0xff]
  %v460 = vld [vmem:[%s1 + $0xd78] sm:$0xff]
  %v461 = vld [vmem:[%s1 + $0xd80] sm:$0xff]
  %v462 = vld [vmem:[%s1 + $0xd88] sm:$0xff]
  %v463 = vld [vmem:[%s1 + $0xd90] sm:$0xff]
  %v464 = vld [vmem:[%s1 + $0xd98] sm:$0xff]
  %v465 = vld [vmem:[%s1 + $0xda0] sm:$0xff]
  %v466 = vld [vmem:[%s1 + $0xda8] sm:$0xff]
  %v467 = vld [vmem:[%s1 + $0xdb0] sm:$0xff]
  %v468 = vld [vmem:[%s1 + $0xdb8] sm:$0xff]
  %v469 = vld [vmem:[%s1 + $0xdc0] sm:$0xff]
  %v470 = vld [vmem:[%s1 + $0xdc8] sm:$0xff]
  %v471 = vld [vmem:[%s1 + $0xdd0] sm:$0xff]
  %v472 = vld [vmem:[%s1 + $0xdd8] sm:$0xff]
  %v473 = vld [vmem:[%s1 + $0xde0] sm:$0xff]
  %v474 = vld [vmem:[%s1 + $0xde8] sm:$0xff]
  %v475 = vld [vmem:[%s1 + $0xdf0] sm:$0xff]
  %v476 = vld [vmem:[%s1 + $0xdf8] sm:$0xff]
  %v477 = vld [vmem:[%s1 + $0xe00] sm:$0xff]
  %v478 = vld [vmem:[%s1 + $0xe08] sm:$0xff]
  %v479 = vld [vmem:[%s1 + $0xe10] sm:$0xff]
  %v480 = vld [vmem:[%s1 + $0xe18] sm:$0xff]
  %v481 = vld [vmem:[%s1 + $0xe20] sm:$0xff]
  %v482 = vld [vmem:[%s1 + $0xe28] sm:$0xff]
  %v483 = vld [vmem:[%s1 + $0xe30] sm:$0xff]
  %v484 = vld [vmem:[%s1 + $0xe38] sm:$0xff]
  %v485 = vld [vmem:[%s1 + $0xe40] sm:$0xff]
  %v486 = vld [vmem:[%s1 + $0xe48] sm:$0xff]
  %v487 = vld [vmem:[%s1 + $0xe50] sm:$0xff]
  %v488 = vld [vmem:[%s1 + $0xe58] sm:$0xff]
  %v489 = vld [vmem:[%s1 + $0xe60] sm:$0xff]
  %v490 = vld [vmem:[%s1 + $0xe68] sm:$0xff]
  %v491 = vld [vmem:[%s1 + $0xe70] sm:$0xff]
  %v492 = vld [vmem:[%s1 + $0xe78] sm:$0xff]
  %v493 = vld [vmem:[%s1 + $0xe80] sm:$0xff]
  %v494 = vld [vmem:[%s1 + $0xe88] sm:$0xff]
  %v495 = vld [vmem:[%s1 + $0xe90] sm:$0xff]
  %v496 = vld [vmem:[%s1 + $0xe98] sm:$0xff]
  %v497 = vld [vmem:[%s1 + $0xea0] sm:$0xff]
  %v498 = vld [vmem:[%s1 + $0xea8] sm:$0xff]
  %v499 = vld [vmem:[%s1 + $0xeb0] sm:$0xff]
  %v500 = vld [vmem:[%s1 + $0xeb8] sm:$0xff]
  %v501 = vld [vmem:[%s1 + $0xec0] sm:$0xff]
  %v502 = vld [vmem:[%s1 + $0xec8] sm:$0xff]
  %v503 = vld [vmem:[%s1 + $0xed0] sm:$0xff]
  %v504 = vld [vmem:[%s1 + $0xed8] sm:$0xff]
  %v505 = vld [vmem:[%s1 + $0xee0] sm:$0xff]
  %v506 = vld [vmem:[%s1 + $0xee8] sm:$0xff]
  %v507 = vld [vmem:[%s1 + $0xef0] sm:$0xff]
  %v508 = vld [vmem:[%s1 + $0xef8] sm:$0xff]
  %v509 = vld [vmem:[%s1 + $0xf00] sm:$0xff]
  %v510 = vld [vmem:[%s1 + $0xf08] sm:$0xff]
  %v511 = vld [vmem:[%s1 + $0xf10] sm:$0xff]
  %v512 = vld [vmem:[%s1 + $0xf18] sm:$0xff]
  %v513 = vld [vmem:[%s1 + $0xf20] sm:$0xff]
  %v514 = vld [vmem:[%s1 + $0xf28] sm:$0xff]
  %v515 = vld [vmem:[%s1 + $0xf30] sm:$0xff]
  %v516 = vld [vmem:[%s1 + $0xf38] sm:$0xff]
  %v517 = vld [vmem:[%s1 + $0xf40] sm:$0xff]
  %v518 = vld [vmem:[%s1 + $0xf48] sm:$0xff]
  %v519 = vld [vmem:[%s1 + $0xf50] sm:$0xff]
  %v520 = vld [vmem:[%s1 + $0xf58] sm:$0xff]
  %v521 = vld [vmem:[%s1 + $0xf60] sm:$0xff]
  %v522 = vld [vmem:[%s1 + $0xf68] sm:$0xff]
  %v523 = vld [vmem:[%s1 + $0xf70] sm:$0xff]
  %v524 = vld [vmem:[%s1 + $0xf78] sm:$0xff]
  %v525 = vld [vmem:[%s1 + $0xf80] sm:$0xff]
  %v526 = vld [vmem:[%s1 + $0xf88] sm:$0xff]
  %v527 = vld [vmem:[%s1 + $0xf90] sm:$0xff]
  %v528 = vld [vmem:[%s1 + $0xf98] sm:$0xff]
  %v529 = vld [vmem:[%s1 + $0xfa0] sm:$0xff]
  %v530 = vld [vmem:[%s1 + $0xfa8] sm:$0xff]
  %v531 = vld [vmem:[%s1 + $0xfb0] sm:$0xff]
  %v532 = vld [vmem:[%s1 + $0xfb8] sm:$0xff]
  %v533 = vld [vmem:[%s1 + $0xfc0] sm:$0xff]
  %v534 = vld [vmem:[%s1 + $0xfc8] sm:$0xff]
  %v535 = vld [vmem:[%s1 + $0xfd0] sm:$0xff]
  %v536 = vld [vmem:[%s1 + $0xfd8] sm:$0xff]
  %v537 = vld [vmem:[%s1 + $0xfe0] sm:$0xff]
  %v538 = vld [vmem:[%s1 + $0xfe8] sm:$0xff]
  %v539 = vld [vmem:[%s1 + $0xff0] sm:$0xff]
  %v540 = vld [vmem:[%s1 + $0xff8] sm:$0xff]
  %v541 = vld [vmem:[%s1 + $0x1000] sm:$0xff]
  %v542 = vld [vmem:[%s1 + $0x1008] sm:$0xff]
  %v543 = vld [vmem:[%s1 + $0x1010] sm:$0xff]
  %v544 = vld [vmem:[%s1 + $0x1018] sm:$0xff]
  %v545 = vld [vmem:[%s1 + $0x1020] sm:$0xff]
  %v546 = vld [vmem:[%s1 + $0x1028] sm:$0xff]
  %v547 = vld [vmem:[%s1 + $0x1030] sm:$0xff]
  %v548 = vld [vmem:[%s1 + $0x1038] sm:$0xff]
  %v549 = vld [vmem:[%s1 + $0x1040] sm:$0xff]
  %v550 = vld [vmem:[%s1 + $0x1048] sm:$0xff]
  %v551 = vld [vmem:[%s1 + $0x1050] sm:$0xff]
  %v552 = vld [vmem:[%s1 + $0x1058] sm:$0xff]
  %v553 = vld [vmem:[%s1 + $0x1060] sm:$0xff]
  %v554 = vld [vmem:[%s1 + $0x1068] sm:$0xff]
  %v555 = vld [vmem:[%s1 + $0x1070] sm:$0xff]
  %v556 = vld [vmem:[%s1 + $0x1078] sm:$0xff]
  %v557 = vld [vmem:[%s1 + $0x1080] sm:$0xff]
  %v558 = vld [vmem:[%s1 + $0x1088] sm:$0xff]
  %v559 = vld [vmem:[%s1 + $0x1090] sm:$0xff]
  %v560 = vld [vmem:[%s1 + $0x1098] sm:$0xff]
  %v561 = vld [vmem:[%s1 + $0x10a0] sm:$0xff]
  %v562 = vld [vmem:[%s1 + $0x10a8] sm:$0xff]
  %v563 = vld [vmem:[%s1 + $0x10b0] sm:$0xff]
  %v564 = vld [vmem:[%s1 + $0x10b8] sm:$0xff]
  %v565 = vld [vmem:[%s1 + $0x10c0] sm:$0xff]
  %v566 = vld [vmem:[%s1 + $0x10c8] sm:$0xff]
  %v567 = vld [vmem:[%s1 + $0x10d0] sm:$0xff]
  %v568 = vld [vmem:[%s1 + $0x10d8] sm:$0xff]
  %v569 = vld [vmem:[%s1 + $0x10e0] sm:$0xff]
  %v570 = vld [vmem:[%s1 + $0x10e8] sm:$0xff]
  %v571 = vld [vmem:[%s1 + $0x10f0] sm:$0xff]
  %v572 = vld [vmem:[%s1 + $0x10f8] sm:$0xff]
  %v573 = vld [vmem:[%s1 + $0x1100] sm:$0xff]
  %v574 = vld [vmem:[%s1 + $0x1108] sm:$0xff]
  %v575 = vld [vmem:[%s1 + $0x1110] sm:$0xff]
  %v576 = vld [vmem:[%s1 + $0x1118] sm:$0xff]
  %v577 = vld [vmem:[%s1 + $0x1120] sm:$0xff]
  %v578 = vld [vmem:[%s1 + $0x1128] sm:$0xff]
  %v579 = vld [vmem:[%s1 + $0x1130] sm:$0xff]
  %v580 = vld [vmem:[%s1 + $0x1138] sm:$0xff]
  %v581 = vld [vmem:[%s1 + $0x1140] sm:$0xff]
  %v582 = vld [vmem:[%s1 + $0x1148] sm:$0xff]
  %v583 = vld [vmem:[%s1 + $0x1150] sm:$0xff]
  %v584 = vld [vmem:[%s1 + $0x1158] sm:$0xff]
  %v585 = vld [vmem:[%s1 + $0x1160] sm:$0xff]
  %v586 = vld [vmem:[%s1 + $0x1168] sm:$0xff]
  %v587 = vld [vmem:[%s1 + $0x1170] sm:$0xff]
  %v588 = vld [vmem:[%s1 + $0x1178] sm:$0xff]
  %v589 = vld [vmem:[%s2] sm:$0x1]
  %v591 = vlaneseq
  %v592 = vshrl.u32 %v591, 7
  %v593 = vsub.s32 0, %v592
  %v594 = vrot.slane %v589, %v593
  %v605 = vcombine.high %v20, %v20
  %v607 = vunpack.c.l.s4 1983009808
  %v608 = vunpack.c.0.s8 %v607
  %v609 = vlaneseq
  %v610 = vshrl.u32 %v609, 7
  %v611 = vsub.s32 %v608, %v610
  %v612 = vrot.slane %v20, %v611
  %v614 = vunpack.c.l.s4 1983009808
  %v615 = vunpack.c.0.s8 %v614
  %v616 = vlaneseq
  %v617 = vshrl.u32 %v616, 7
  %v618 = vsub.s32 %v615, %v617
  %v619 = vrot.slane %v605, %v618
  %v620 = vcombine.high %v612, %v612
  %v621 = vcombine.high %v619, %v619
  %v622 = vcombine.high %v21, %v21
  %v624 = vunpack.c.l.s4 1983009808
  %v625 = vunpack.c.0.s8 %v624
  %v626 = vlaneseq
  %v627 = vshrl.u32 %v626, 7
  %v628 = vsub.s32 %v625, %v627
  %v629 = vrot.slane %v21, %v628
  %v631 = vunpack.c.l.s4 1983009808
  %v632 = vunpack.c.0.s8 %v631
  %v633 = vlaneseq
  %v634 = vshrl.u32 %v633, 7
  %v635 = vsub.s32 %v632, %v634
  %v636 = vrot.slane %v622, %v635
  %v637 = vcombine.high %v629, %v629
  %v638 = vcombine.high %v636, %v636
  %v639 = vcombine.high %v22, %v22
  %v641 = vunpack.c.l.s4 1983009808
  %v642 = vunpack.c.0.s8 %v641
  %v643 = vlaneseq
  %v644 = vshrl.u32 %v643, 7
  %v645 = vsub.s32 %v642, %v644
  %v646 = vrot.slane %v22, %v645
  %v648 = vunpack.c.l.s4 1983009808
  %v649 = vunpack.c.0.s8 %v648
  %v650 = vlaneseq
  %v651 = vshrl.u32 %v650, 7
  %v652 = vsub.s32 %v649, %v651
  %v653 = vrot.slane %v639, %v652
  %v654 = vcombine.high %v646, %v646
  %v655 = vcombine.high %v653, %v653
  %v656 = vcombine.high %v23, %v23
  %v658 = vunpack.c.l.s4 1983009808
  %v659 = vunpack.c.0.s8 %v658
  %v660 = vlaneseq
  %v661 = vshrl.u32 %v660, 7
  %v662 = vsub.s32 %v659, %v661
  %v663 = vrot.slane %v23, %v662
  %v665 = vunpack.c.l.s4 1983009808
  %v666 = vunpack.c.0.s8 %v665
  %v667 = vlaneseq
  %v668 = vshrl.u32 %v667, 7
  %v669 = vsub.s32 %v666, %v668
  %v670 = vrot.slane %v656, %v669
  %v671 = vcombine.high %v663, %v663
  %v672 = vcombine.high %v670, %v670
  %v673 = vcombine.high %v24, %v24
  %v675 = vunpack.c.l.s4 1983009808
  %v676 = vunpack.c.0.s8 %v675
  %v677 = vlaneseq
  %v678 = vshrl.u32 %v677, 7
  %v679 = vsub.s32 %v676, %v678
  %v680 = vrot.slane %v24, %v679
  %v682 = vunpack.c.l.s4 1983009808
  %v683 = vunpack.c.0.s8 %v682
  %v684 = vlaneseq
  %v685 = vshrl.u32 %v684, 7
  %v686 = vsub.s32 %v683, %v685
  %v687 = vrot.slane %v673, %v686
  %v688 = vcombine.high %v680, %v680
  %v689 = vcombine.high %v687, %v687
  %v690 = vcombine.high %v25, %v25
  %v692 = vunpack.c.l.s4 1983009808
  %v693 = vunpack.c.0.s8 %v692
  %v694 = vlaneseq
  %v695 = vshrl.u32 %v694, 7
  %v696 = vsub.s32 %v693, %v695
  %v697 = vrot.slane %v25, %v696
  %v699 = vunpack.c.l.s4 1983009808
  %v700 = vunpack.c.0.s8 %v699
  %v701 = vlaneseq
  %v702 = vshrl.u32 %v701, 7
  %v703 = vsub.s32 %v700, %v702
  %v704 = vrot.slane %v690, %v703
  %v705 = vcombine.high %v697, %v697
  %v706 = vcombine.high %v704, %v704
  %v707 = vcombine.high %v26, %v26
  %v709 = vunpack.c.l.s4 1983009808
  %v710 = vunpack.c.0.s8 %v709
  %v711 = vlaneseq
  %v712 = vshrl.u32 %v711, 7
  %v713 = vsub.s32 %v710, %v712
  %v714 = vrot.slane %v26, %v713
  %v716 = vunpack.c.l.s4 1983009808
  %v717 = vunpack.c.0.s8 %v716
  %v718 = vlaneseq
  %v719 = vshrl.u32 %v718, 7
  %v720 = vsub.s32 %v717, %v719
  %v721 = vrot.slane %v707, %v720
  %v722 = vcombine.high %v714, %v714
  %v723 = vcombine.high %v721, %v721
  %v724 = vcombine.high %v27, %v27
  %v726 = vunpack.c.l.s4 1983009808
  %v727 = vunpack.c.0.s8 %v726
  %v728 = vlaneseq
  %v729 = vshrl.u32 %v728, 7
  %v730 = vsub.s32 %v727, %v729
  %v731 = vrot.slane %v27, %v730
  %v733 = vunpack.c.l.s4 1983009808
  %v734 = vunpack.c.0.s8 %v733
  %v735 = vlaneseq
  %v736 = vshrl.u32 %v735, 7
  %v737 = vsub.s32 %v734, %v736
  %v738 = vrot.slane %v724, %v737
  %v739 = vcombine.high %v731, %v731
  %v740 = vcombine.high %v738, %v738
  %v741 = vcombine.high %v28, %v28
  %v743 = vunpack.c.l.s4 1983009808
  %v744 = vunpack.c.0.s8 %v743
  %v745 = vlaneseq
  %v746 = vshrl.u32 %v745, 7
  %v747 = vsub.s32 %v744, %v746
  %v748 = vrot.slane %v28, %v747
  %v750 = vunpack.c.l.s4 1983009808
  %v751 = vunpack.c.0.s8 %v750
  %v752 = vlaneseq
  %v753 = vshrl.u32 %v752, 7
  %v754 = vsub.s32 %v751, %v753
  %v755 = vrot.slane %v741, %v754
  %v756 = vcombine.high %v748, %v748
  %792 = vmatprep.subr.mxu0 0.0
  %793 = vmatpush1.msra.mxu0 %v29
  %794 = vmatprep.subr.mxu0 0.0
  %795 = vmatpush1.msra.mxu0 %v30
  %796 = vmatprep.subr.mxu0 0.0
  %797 = vmatpush1.msra.mxu0 %v31
  %798 = vmatprep.subr.mxu0 0.0
  %799 = vmatpush1.msra.mxu0 %v32
  %800 = vmatprep.subr.mxu0 0.0
  %801 = vmatpush1.msra.mxu0 %v33
  %802 = vmatprep.subr.mxu0 0.0
  %803 = vmatpush1.msra.mxu0 %v34
  %804 = vmatprep.subr.mxu0 0.0
  %805 = vmatpush1.msra.mxu0 %v35
  %806 = vmatprep.subr.mxu0 0.0
  %807 = vmatpush1.msra.mxu0 %v36
  %808 = vmatprep.subr.mxu0 0.0
  %809 = vmatpush1.msra.mxu0 %v37
  %810 = vmatprep.subr.mxu0 0.0
  %811 = vmatpush1.msra.mxu0 %v38
  %812 = vmatprep.subr.mxu0 0.0
  %813 = vmatpush1.msra.mxu0 %v39
  %814 = vmatprep.subr.mxu0 0.0
  %815 = vmatpush1.msra.mxu0 %v40
  %816 = vmatprep.subr.mxu0 0.0
  %817 = vmatpush1.msra.mxu0 %v41
  %818 = vmatprep.subr.mxu0 0.0
  %819 = vmatpush1.msra.mxu0 %v42
  %820 = vmatprep.subr.mxu0 0.0
  %821 = vmatpush1.msra.mxu0 %v43
  %822 = vmatprep.subr.mxu0 0.0
  %823 = vmatpush1.msra.mxu0 %v44
  %824 = vmatprep.subr.mxu0 0.0
  %825 = vmatpush1.msra.mxu0 %v45
  %826 = vmatprep.subr.mxu0 0.0
  %827 = vmatpush1.msra.mxu0 %v46
  %828 = vmatprep.subr.mxu0 0.0
  %829 = vmatpush1.msra.mxu0 %v47
  %830 = vmatprep.subr.mxu0 0.0
  %831 = vmatpush1.msra.mxu0 %v48
  %832 = vmatprep.subr.mxu0 0.0
  %833 = vmatpush1.msra.mxu0 %v49
  %834 = vmatprep.subr.mxu0 0.0
  %835 = vmatpush1.msra.mxu0 %v50
  %836 = vmatprep.subr.mxu0 0.0
  %837 = vmatpush1.msra.mxu0 %v51
  %838 = vmatprep.subr.mxu0 0.0
  %839 = vmatpush1.msra.mxu0 %v52
  %840 = vmatprep.subr.mxu0 0.0
  %841 = vmatpush1.msra.mxu0 %v53
  %842 = vmatprep.subr.mxu0 0.0
  %843 = vmatpush1.msra.mxu0 %v54
  %844 = vmatprep.subr.mxu0 0.0
  %845 = vmatpush1.msra.mxu0 %v55
  %846 = vmatprep.subr.mxu0 0.0
  %847 = vmatpush1.msra.mxu0 %v56
  %848 = vmatprep.subr.mxu0 0.0
  %849 = vmatpush1.msra.mxu0 %v57
  %850 = vmatprep.subr.mxu0 0.0
  %851 = vmatpush1.msra.mxu0 %v58
  %852 = vmatprep.subr.mxu0 0.0
  %853 = vmatpush1.msra.mxu0 %v59
  %854 = vmatprep.subr.mxu0 0.0
  %855 = vmatpush1.msra.mxu0 %v60
  %856 = vmatprep.mubr.f32.mxu0 %v620
  %857 = vmatmul.mubr.f32.gmra.mrb[0].mxu0 %v612
  %v858 = vpop.f32.mrb[0].mxu0
  %v859 = vadd.f32 %v594, %v858
  %v860 = vpop.f32.mrb[0].mxu0
  %861 = vdwg.mxu0
  %862 = vmatprep.subr.mxu0 0.0
  %863 = vmatpush1.msra.mxu0 %v61
  %864 = vmatprep.subr.mxu0 0.0
  %865 = vmatpush1.msra.mxu0 %v62
  %866 = vmatprep.subr.mxu0 0.0
  %867 = vmatpush1.msra.mxu0 %v63
  %868 = vmatprep.subr.mxu0 0.0
  %869 = vmatpush1.msra.mxu0 %v64
  %870 = vmatprep.subr.mxu0 0.0
  %871 = vmatpush1.msra.mxu0 %v65
  %872 = vmatprep.subr.mxu0 0.0
  %873 = vmatpush1.msra.mxu0 %v66
  %874 = vmatprep.subr.mxu0 0.0
  %875 = vmatpush1.msra.mxu0 %v67
  %876 = vmatprep.subr.mxu0 0.0
  %877 = vmatpush1.msra.mxu0 %v68
  %878 = vmatprep.subr.mxu0 0.0
  %879 = vmatpush1.msra.mxu0 %v69
  %880 = vmatprep.subr.mxu0 0.0
  %881 = vmatpush1.msra.mxu0 %v70
  %882 = vmatprep.subr.mxu0 0.0
  %883 = vmatpush1.msra.mxu0 %v71
  %884 = vmatprep.subr.mxu0 0.0
  %885 = vmatpush1.msra.mxu0 %v72
  %886 = vmatprep.subr.mxu0 0.0
  %887 = vmatpush1.msra.mxu0 %v73
  %888 = vmatprep.subr.mxu0 0.0
  %889 = vmatpush1.msra.mxu0 %v74
  %890 = vmatprep.subr.mxu0 0.0
  %891 = vmatpush1.msra.mxu0 %v75
  %892 = vmatprep.subr.mxu0 0.0
  %893 = vmatpush1.msra.mxu0 %v76
  %894 = vmatprep.subr.mxu0 0.0
  %895 = vmatpush1.msra.mxu0 %v77
  %896 = vmatprep.subr.mxu0 0.0
  %897 = vmatpush1.msra.mxu0 %v78
  %898 = vmatprep.subr.mxu0 0.0
  %899 = vmatpush1.msra.mxu0 %v79
  %900 = vmatprep.subr.mxu0 0.0
  %901 = vmatpush1.msra.mxu0 %v80
  %902 = vmatprep.subr.mxu0 0.0
  %903 = vmatpush1.msra.mxu0 %v81
  %904 = vmatprep.subr.mxu0 0.0
  %905 = vmatpush1.msra.mxu0 %v82
  %906 = vmatprep.subr.mxu0 0.0
  %907 = vmatpush1.msra.mxu0 %v83
  %908 = vmatprep.subr.mxu0 0.0
  %909 = vmatpush1.msra.mxu0 %v84
  %910 = vmatprep.subr.mxu0 0.0
  %911 = vmatpush1.msra.mxu0 %v85
  %912 = vmatprep.subr.mxu0 0.0
  %913 = vmatpush1.msra.mxu0 %v86
  %914 = vmatprep.subr.mxu0 0.0
  %915 = vmatpush1.msra.mxu0 %v87
  %916 = vmatprep.subr.mxu0 0.0
  %917 = vmatpush1.msra.mxu0 %v88
  %918 = vmatprep.subr.mxu0 0.0
  %919 = vmatpush1.msra.mxu0 %v89
  %920 = vmatprep.subr.mxu0 0.0
  %921 = vmatpush1.msra.mxu0 %v90
  %922 = vmatprep.subr.mxu0 0.0
  %923 = vmatpush1.msra.mxu0 %v91
  %924 = vmatprep.subr.mxu0 0.0
  %925 = vmatpush1.msra.mxu0 %v92
  %926 = vmatprep.mubr.f32.mxu0 %v621
  %927 = vmatmul.mubr.f32.gmra.mrb[0].mxu0 %v619
  %v928 = vpop.f32.mrb[0].mxu0
  %v929 = vadd.f32 %v859, %v928
  %v930 = vpop.f32.mrb[0].mxu0
  %931 = vdwg.mxu0
  %932 = vmatprep.subr.mxu0 0.0
  %933 = vmatpush1.msra.mxu0 %v93
  %934 = vmatprep.subr.mxu0 0.0
  %935 = vmatpush1.msra.mxu0 %v94
  %936 = vmatprep.subr.mxu0 0.0
  %937 = vmatpush1.msra.mxu0 %v95
  %938 = vmatprep.subr.mxu0 0.0
  %939 = vmatpush1.msra.mxu0 %v96
  %940 = vmatprep.subr.mxu0 0.0
  %941 = vmatpush1.msra.mxu0 %v97
  %942 = vmatprep.subr.mxu0 0.0
  %943 = vmatpush1.msra.mxu0 %v98
  %944 = vmatprep.subr.mxu0 0.0
  %945 = vmatpush1.msra.mxu0 %v99
  %946 = vmatprep.subr.mxu0 0.0
  %947 = vmatpush1.msra.mxu0 %v100
  %948 = vmatprep.subr.mxu0 0.0
  %949 = vmatpush1.msra.mxu0 %v101
  %950 = vmatprep.subr.mxu0 0.0
  %951 = vmatpush1.msra.mxu0 %v102
  %952 = vmatprep.subr.mxu0 0.0
  %953 = vmatpush1.msra.mxu0 %v103
  %954 = vmatprep.subr.mxu0 0.0
  %955 = vmatpush1.msra.mxu0 %v104
  %956 = vmatprep.subr.mxu0 0.0
  %957 = vmatpush1.msra.mxu0 %v105
  %958 = vmatprep.subr.mxu0 0.0
  %959 = vmatpush1.msra.mxu0 %v106
  %960 = vmatprep.subr.mxu0 0.0
  %961 = vmatpush1.msra.mxu0 %v107
  %962 = vmatprep.subr.mxu0 0.0
  %963 = vmatpush1.msra.mxu0 %v108
  %964 = vmatprep.subr.mxu0 0.0
  %965 = vmatpush1.msra.mxu0 %v109
  %966 = vmatprep.subr.mxu0 0.0
  %967 = vmatpush1.msra.mxu0 %v110
  %968 = vmatprep.subr.mxu0 0.0
  %969 = vmatpush1.msra.mxu0 %v111
  %970 = vmatprep.subr.mxu0 0.0
  %971 = vmatpush1.msra.mxu0 %v112
  %972 = vmatprep.subr.mxu0 0.0
  %973 = vmatpush1.msra.mxu0 %v113
  %974 = vmatprep.subr.mxu0 0.0
  %975 = vmatpush1.msra.mxu0 %v114
  %976 = vmatprep.subr.mxu0 0.0
  %977 = vmatpush1.msra.mxu0 %v115
  %978 = vmatprep.subr.mxu0 0.0
  %979 = vmatpush1.msra.mxu0 %v116
  %980 = vmatprep.subr.mxu0 0.0
  %981 = vmatpush1.msra.mxu0 %v117
  %982 = vmatprep.subr.mxu0 0.0
  %983 = vmatpush1.msra.mxu0 %v118
  %984 = vmatprep.subr.mxu0 0.0
  %985 = vmatpush1.msra.mxu0 %v119
  %986 = vmatprep.subr.mxu0 0.0
  %987 = vmatpush1.msra.mxu0 %v120
  %988 = vmatprep.subr.mxu0 0.0
  %989 = vmatpush1.msra.mxu0 %v121
  %990 = vmatprep.subr.mxu0 0.0
  %991 = vmatpush1.msra.mxu0 %v122
  %992 = vmatprep.subr.mxu0 0.0
  %993 = vmatpush1.msra.mxu0 %v123
  %994 = vmatprep.subr.mxu0 0.0
  %995 = vmatpush1.msra.mxu0 %v124
  %996 = vmatprep.mubr.f32.mxu0 %v637
  %997 = vmatmul.mubr.f32.gmra.mrb[0].mxu0 %v629
  %v998 = vpop.f32.mrb[0].mxu0
  %v999 = vadd.f32 %v929, %v998
  %v1000 = vpop.f32.mrb[0].mxu0
  %1001 = vdwg.mxu0
  %1002 = vmatprep.subr.mxu0 0.0
  %1003 = vmatpush1.msra.mxu0 %v125
  %1004 = vmatprep.subr.mxu0 0.0
  %1005 = vmatpush1.msra.mxu0 %v126
  %1006 = vmatprep.subr.mxu0 0.0
  %1007 = vmatpush1.msra.mxu0 %v127
  %1008 = vmatprep.subr.mxu0 0.0
  %1009 = vmatpush1.msra.mxu0 %v128
  %1010 = vmatprep.subr.mxu0 0.0
  %1011 = vmatpush1.msra.mxu0 %v129
  %1012 = vmatprep.subr.mxu0 0.0
  %1013 = vmatpush1.msra.mxu0 %v130
  %1014 = vmatprep.subr.mxu0 0.0
  %1015 = vmatpush1.msra.mxu0 %v131
  %1016 = vmatprep.subr.mxu0 0.0
  %1017 = vmatpush1.msra.mxu0 %v132
  %1018 = vmatprep.subr.mxu0 0.0
  %1019 = vmatpush1.msra.mxu0 %v133
  %1020 = vmatprep.subr.mxu0 0.0
  %1021 = vmatpush1.msra.mxu0 %v134
  %1022 = vmatprep.subr.mxu0 0.0
  %1023 = vmatpush1.msra.mxu0 %v135
  %1024 = vmatprep.subr.mxu0 0.0
  %1025 = vmatpush1.msra.mxu0 %v136
  %1026 = vmatprep.subr.mxu0 0.0
  %1027 = vmatpush1.msra.mxu0 %v137
  %1028 = vmatprep.subr.mxu0 0.0
  %1029 = vmatpush1.msra.mxu0 %v138
  %1030 = vmatprep.subr.mxu0 0.0
  %1031 = vmatpush1.msra.mxu0 %v139
  %1032 = vmatprep.subr.mxu0 0.0
  %1033 = vmatpush1.msra.mxu0 %v140
  %1034 = vmatprep.subr.mxu0 0.0
  %1035 = vmatpush1.msra.mxu0 %v141
  %1036 = vmatprep.subr.mxu0 0.0
  %1037 = vmatpush1.msra.mxu0 %v142
  %1038 = vmatprep.subr.mxu0 0.0
  %1039 = vmatpush1.msra.mxu0 %v143
  %1040 = vmatprep.subr.mxu0 0.0
  %1041 = vmatpush1.msra.mxu0 %v144
  %1042 = vmatprep.subr.mxu0 0.0
  %1043 = vmatpush1.msra.mxu0 %v145
  %1044 = vmatprep.subr.mxu0 0.0
  %1045 = vmatpush1.msra.mxu0 %v146
  %1046 = vmatprep.subr.mxu0 0.0
  %1047 = vmatpush1.msra.mxu0 %v147
  %1048 = vmatprep.subr.mxu0 0.0
  %1049 = vmatpush1.msra.mxu0 %v148
  %1050 = vmatprep.subr.mxu0 0.0
  %1051 = vmatpush1.msra.mxu0 %v149
  %1052 = vmatprep.subr.mxu0 0.0
  %1053 = vmatpush1.msra.mxu0 %v150
  %1054 = vmatprep.subr.mxu0 0.0
  %1055 = vmatpush1.msra.mxu0 %v151
  %1056 = vmatprep.subr.mxu0 0.0
  %1057 = vmatpush1.msra.mxu0 %v152
  %1058 = vmatprep.subr.mxu0 0.0
  %1059 = vmatpush1.msra.mxu0 %v153
  %1060 = vmatprep.subr.mxu0 0.0
  %1061 = vmatpush1.msra.mxu0 %v154
  %1062 = vmatprep.subr.mxu0 0.0
  %1063 = vmatpush1.msra.mxu0 %v155
  %1064 = vmatprep.subr.mxu0 0.0
  %1065 = vmatpush1.msra.mxu0 %v156
  %1066 = vmatprep.mubr.f32.mxu0 %v638
  %1067 = vmatmul.mubr.f32.gmra.mrb[0].mxu0 %v636
  %v1068 = vpop.f32.mrb[0].mxu0
  %v1069 = vadd.f32 %v999, %v1068
  %v1070 = vpop.f32.mrb[0].mxu0
  %1071 = vdwg.mxu0
  %1072 = vmatprep.subr.mxu0 0.0
  %1073 = vmatpush1.msra.mxu0 %v157
  %1074 = vmatprep.subr.mxu0 0.0
  %1075 = vmatpush1.msra.mxu0 %v158
  %1076 = vmatprep.subr.mxu0 0.0
  %1077 = vmatpush1.msra.mxu0 %v159
  %1078 = vmatprep.subr.mxu0 0.0
  %1079 = vmatpush1.msra.mxu0 %v160
  %1080 = vmatprep.subr.mxu0 0.0
  %1081 = vmatpush1.msra.mxu0 %v161
  %1082 = vmatprep.subr.mxu0 0.0
  %1083 = vmatpush1.msra.mxu0 %v162
  %1084 = vmatprep.subr.mxu0 0.0
  %1085 = vmatpush1.msra.mxu0 %v163
  %1086 = vmatprep.subr.mxu0 0.0
  %1087 = vmatpush1.msra.mxu0 %v164
  %1088 = vmatprep.subr.mxu0 0.0
  %1089 = vmatpush1.msra.mxu0 %v165
  %1090 = vmatprep.subr.mxu0 0.0
  %1091 = vmatpush1.msra.mxu0 %v166
  %1092 = vmatprep.subr.mxu0 0.0
  %1093 = vmatpush1.msra.mxu0 %v167
  %1094 = vmatprep.subr.mxu0 0.0
  %1095 = vmatpush1.msra.mxu0 %v168
  %1096 = vmatprep.subr.mxu0 0.0
  %1097 = vmatpush1.msra.mxu0 %v169
  %1098 = vmatprep.subr.mxu0 0.0
  %1099 = vmatpush1.msra.mxu0 %v170
  %1100 = vmatprep.subr.mxu0 0.0
  %1101 = vmatpush1.msra.mxu0 %v171
  %1102 = vmatprep.subr.mxu0 0.0
  %1103 = vmatpush1.msra.mxu0 %v172
  %1104 = vmatprep.subr.mxu0 0.0
  %1105 = vmatpush1.msra.mxu0 %v173
  %1106 = vmatprep.subr.mxu0 0.0
  %1107 = vmatpush1.msra.mxu0 %v174
  %1108 = vmatprep.subr.mxu0 0.0
  %1109 = vmatpush1.msra.mxu0 %v175
  %1110 = vmatprep.subr.mxu0 0.0
  %1111 = vmatpush1.msra.mxu0 %v176
  %1112 = vmatprep.subr.mxu0 0.0
  %1113 = vmatpush1.msra.mxu0 %v177
  %1114 = vmatprep.subr.mxu0 0.0
  %1115 = vmatpush1.msra.mxu0 %v178
  %1116 = vmatprep.subr.mxu0 0.0
  %1117 = vmatpush1.msra.mxu0 %v179
  %1118 = vmatprep.subr.mxu0 0.0
  %1119 = vmatpush1.msra.mxu0 %v180
  %1120 = vmatprep.subr.mxu0 0.0
  %1121 = vmatpush1.msra.mxu0 %v181
  %1122 = vmatprep.subr.mxu0 0.0
  %1123 = vmatpush1.msra.mxu0 %v182
  %1124 = vmatprep.subr.mxu0 0.0
  %1125 = vmatpush1.msra.mxu0 %v183
  %1126 = vmatprep.subr.mxu0 0.0
  %1127 = vmatpush1.msra.mxu0 %v184
  %1128 = vmatprep.subr.mxu0 0.0
  %1129 = vmatpush1.msra.mxu0 %v185
  %1130 = vmatprep.subr.mxu0 0.0
  %1131 = vmatpush1.msra.mxu0 %v186
  %1132 = vmatprep.subr.mxu0 0.0
  %1133 = vmatpush1.msra.mxu0 %v187
  %1134 = vmatprep.subr.mxu0 0.0
  %1135 = vmatpush1.msra.mxu0 %v188
  %1136 = vmatprep.mubr.f32.mxu0 %v654
  %1137 = vmatmul.mubr.f32.gmra.mrb[0].mxu0 %v646
  %v1138 = vpop.f32.mrb[0].mxu0
  %v1139 = vadd.f32 %v1069, %v1138
  %v1140 = vpop.f32.mrb[0].mxu0
  %1141 = vdwg.mxu0
  %1142 = vmatprep.subr.mxu0 0.0
  %1143 = vmatpush1.msra.mxu0 %v189
  %1144 = vmatprep.subr.mxu0 0.0
  %1145 = vmatpush1.msra.mxu0 %v190
  %1146 = vmatprep.subr.mxu0 0.0
  %1147 = vmatpush1.msra.mxu0 %v191
  %1148 = vmatprep.subr.mxu0 0.0
  %1149 = vmatpush1.msra.mxu0 %v192
  %1150 = vmatprep.subr.mxu0 0.0
  %1151 = vmatpush1.msra.mxu0 %v193
  %1152 = vmatprep.subr.mxu0 0.0
  %1153 = vmatpush1.msra.mxu0 %v194
  %1154 = vmatprep.subr.mxu0 0.0
  %1155 = vmatpush1.msra.mxu0 %v195
  %1156 = vmatprep.subr.mxu0 0.0
  %1157 = vmatpush1.msra.mxu0 %v196
  %1158 = vmatprep.subr.mxu0 0.0
  %1159 = vmatpush1.msra.mxu0 %v197
  %1160 = vmatprep.subr.mxu0 0.0
  %1161 = vmatpush1.msra.mxu0 %v198
  %1162 = vmatprep.subr.mxu0 0.0
  %1163 = vmatpush1.msra.mxu0 %v199
  %1164 = vmatprep.subr.mxu0 0.0
  %1165 = vmatpush1.msra.mxu0 %v200
  %1166 = vmatprep.subr.mxu0 0.0
  %1167 = vmatpush1.msra.mxu0 %v201
  %1168 = vmatprep.subr.mxu0 0.0
  %1169 = vmatpush1.msra.mxu0 %v202
  %1170 = vmatprep.subr.mxu0 0.0
  %1171 = vmatpush1.msra.mxu0 %v203
  %1172 = vmatprep.subr.mxu0 0.0
  %1173 = vmatpush1.msra.mxu0 %v204
  %1174 = vmatprep.subr.mxu0 0.0
  %1175 = vmatpush1.msra.mxu0 %v205
  %1176 = vmatprep.subr.mxu0 0.0
  %1177 = vmatpush1.msra.mxu0 %v206
  %1178 = vmatprep.subr.mxu0 0.0
  %1179 = vmatpush1.msra.mxu0 %v207
  %1180 = vmatprep.subr.mxu0 0.0
  %1181 = vmatpush1.msra.mxu0 %v208
  %1182 = vmatprep.subr.mxu0 0.0
  %1183 = vmatpush1.msra.mxu0 %v209
  %1184 = vmatprep.subr.mxu0 0.0
  %1185 = vmatpush1.msra.mxu0 %v210
  %1186 = vmatprep.subr.mxu0 0.0
  %1187 = vmatpush1.msra.mxu0 %v211
  %1188 = vmatprep.subr.mxu0 0.0
  %1189 = vmatpush1.msra.mxu0 %v212
  %1190 = vmatprep.subr.mxu0 0.0
  %1191 = vmatpush1.msra.mxu0 %v213
  %1192 = vmatprep.subr.mxu0 0.0
  %1193 = vmatpush1.msra.mxu0 %v214
  %1194 = vmatprep.subr.mxu0 0.0
  %1195 = vmatpush1.msra.mxu0 %v215
  %1196 = vmatprep.subr.mxu0 0.0
  %1197 = vmatpush1.msra.mxu0 %v216
  %1198 = vmatprep.subr.mxu0 0.0
  %1199 = vmatpush1.msra.mxu0 %v217
  %1200 = vmatprep.subr.mxu0 0.0
  %1201 = vmatpush1.msra.mxu0 %v218
  %1202 = vmatprep.subr.mxu0 0.0
  %1203 = vmatpush1.msra.mxu0 %v219
  %1204 = vmatprep.subr.mxu0 0.0
  %1205 = vmatpush1.msra.mxu0 %v220
  %1206 = vmatprep.mubr.f32.mxu0 %v655
  %1207 = vmatmul.mubr.f32.gmra.mrb[0].mxu0 %v653
  %v1208 = vpop.f32.mrb[0].mxu0
  %v1209 = vadd.f32 %v1139, %v1208
  %v1210 = vpop.f32.mrb[0].mxu0
  %1211 = vdwg.mxu0
  %1212 = vmatprep.subr.mxu0 0.0
  %1213 = vmatpush1.msra.mxu0 %v221
  %1214 = vmatprep.subr.mxu0 0.0
  %1215 = vmatpush1.msra.mxu0 %v222
  %1216 = vmatprep.subr.mxu0 0.0
  %1217 = vmatpush1.msra.mxu0 %v223
  %1218 = vmatprep.subr.mxu0 0.0
  %1219 = vmatpush1.msra.mxu0 %v224
  %1220 = vmatprep.subr.mxu0 0.0
  %1221 = vmatpush1.msra.mxu0 %v225
  %1222 = vmatprep.subr.mxu0 0.0
  %1223 = vmatpush1.msra.mxu0 %v226
  %1224 = vmatprep.subr.mxu0 0.0
  %1225 = vmatpush1.msra.mxu0 %v227
  %1226 = vmatprep.subr.mxu0 0.0
  %1227 = vmatpush1.msra.mxu0 %v228
  %1228 = vmatprep.subr.mxu0 0.0
  %1229 = vmatpush1.msra.mxu0 %v229
  %1230 = vmatprep.subr.mxu0 0.0
  %1231 = vmatpush1.msra.mxu0 %v230
  %1232 = vmatprep.subr.mxu0 0.0
  %1233 = vmatpush1.msra.mxu0 %v231
  %1234 = vmatprep.subr.mxu0 0.0
  %1235 = vmatpush1.msra.mxu0 %v232
  %1236 = vmatprep.subr.mxu0 0.0
  %1237 = vmatpush1.msra.mxu0 %v233
  %1238 = vmatprep.subr.mxu0 0.0
  %1239 = vmatpush1.msra.mxu0 %v234
  %1240 = vmatprep.subr.mxu0 0.0
  %1241 = vmatpush1.msra.mxu0 %v235
  %1242 = vmatprep.subr.mxu0 0.0
  %1243 = vmatpush1.msra.mxu0 %v236
  %1244 = vmatprep.subr.mxu0 0.0
  %1245 = vmatpush1.msra.mxu0 %v237
  %1246 = vmatprep.subr.mxu0 0.0
  %1247 = vmatpush1.msra.mxu0 %v238
  %1248 = vmatprep.subr.mxu0 0.0
  %1249 = vmatpush1.msra.mxu0 %v239
  %1250 = vmatprep.subr.mxu0 0.0
  %1251 = vmatpush1.msra.mxu0 %v240
  %1252 = vmatprep.subr.mxu0 0.0
  %1253 = vmatpush1.msra.mxu0 %v241
  %1254 = vmatprep.subr.mxu0 0.0
  %1255 = vmatpush1.msra.mxu0 %v242
  %1256 = vmatprep.subr.mxu0 0.0
  %1257 = vmatpush1.msra.mxu0 %v243
  %1258 = vmatprep.subr.mxu0 0.0
  %1259 = vmatpush1.msra.mxu0 %v244
  %1260 = vmatprep.subr.mxu0 0.0
  %1261 = vmatpush1.msra.mxu0 %v245
  %1262 = vmatprep.subr.mxu0 0.0
  %1263 = vmatpush1.msra.mxu0 %v246
  %1264 = vmatprep.subr.mxu0 0.0
  %1265 = vmatpush1.msra.mxu0 %v247
  %1266 = vmatprep.subr.mxu0 0.0
  %1267 = vmatpush1.msra.mxu0 %v248
  %1268 = vmatprep.subr.mxu0 0.0
  %1269 = vmatpush1.msra.mxu0 %v249
  %1270 = vmatprep.subr.mxu0 0.0
  %1271 = vmatpush1.msra.mxu0 %v250
  %1272 = vmatprep.subr.mxu0 0.0
  %1273 = vmatpush1.msra.mxu0 %v251
  %1274 = vmatprep.subr.mxu0 0.0
  %1275 = vmatpush1.msra.mxu0 %v252
  %1276 = vmatprep.mubr.f32.mxu0 %v671
  %1277 = vmatmul.mubr.f32.gmra.mrb[0].mxu0 %v663
  %v1278 = vpop.f32.mrb[0].mxu0
  %v1279 = vadd.f32 %v1209, %v1278
  %v1280 = vpop.f32.mrb[0].mxu0
  %1281 = vdwg.mxu0
  %1282 = vmatprep.subr.mxu0 0.0
  %1283 = vmatpush1.msra.mxu0 %v253
  %1284 = vmatprep.subr.mxu0 0.0
  %1285 = vmatpush1.msra.mxu0 %v254
  %1286 = vmatprep.subr.mxu0 0.0
  %1287 = vmatpush1.msra.mxu0 %v255
  %1288 = vmatprep.subr.mxu0 0.0
  %1289 = vmatpush1.msra.mxu0 %v256
  %1290 = vmatprep.subr.mxu0 0.0
  %1291 = vmatpush1.msra.mxu0 %v257
  %1292 = vmatprep.subr.mxu0 0.0
  %1293 = vmatpush1.msra.mxu0 %v258
  %1294 = vmatprep.subr.mxu0 0.0
  %1295 = vmatpush1.msra.mxu0 %v259
  %1296 = vmatprep.subr.mxu0 0.0
  %1297 = vmatpush1.msra.mxu0 %v260
  %1298 = vmatprep.subr.mxu0 0.0
  %1299 = vmatpush1.msra.mxu0 %v261
  %1300 = vmatprep.subr.mxu0 0.0
  %1301 = vmatpush1.msra.mxu0 %v262
  %1302 = vmatprep.subr.mxu0 0.0
  %1303 = vmatpush1.msra.mxu0 %v263
  %1304 = vmatprep.subr.mxu0 0.0
  %1305 = vmatpush1.msra.mxu0 %v264
  %1306 = vmatprep.subr.mxu0 0.0
  %1307 = vmatpush1.msra.mxu0 %v265
  %1308 = vmatprep.subr.mxu0 0.0
  %1309 = vmatpush1.msra.mxu0 %v266
  %1310 = vmatprep.subr.mxu0 0.0
  %1311 = vmatpush1.msra.mxu0 %v267
  %1312 = vmatprep.subr.mxu0 0.0
  %1313 = vmatpush1.msra.mxu0 %v268
  %1314 = vmatprep.subr.mxu0 0.0
  %1315 = vmatpush1.msra.mxu0 %v269
  %1316 = vmatprep.subr.mxu0 0.0
  %1317 = vmatpush1.msra.mxu0 %v270
  %1318 = vmatprep.subr.mxu0 0.0
  %1319 = vmatpush1.msra.mxu0 %v271
  %1320 = vmatprep.subr.mxu0 0.0
  %1321 = vmatpush1.msra.mxu0 %v272
  %1322 = vmatprep.subr.mxu0 0.0
  %1323 = vmatpush1.msra.mxu0 %v273
  %1324 = vmatprep.subr.mxu0 0.0
  %1325 = vmatpush1.msra.mxu0 %v274
  %1326 = vmatprep.subr.mxu0 0.0
  %1327 = vmatpush1.msra.mxu0 %v275
  %1328 = vmatprep.subr.mxu0 0.0
  %1329 = vmatpush1.msra.mxu0 %v276
  %1330 = vmatprep.subr.mxu0 0.0
  %1331 = vmatpush1.msra.mxu0 %v277
  %1332 = vmatprep.subr.mxu0 0.0
  %1333 = vmatpush1.msra.mxu0 %v278
  %1334 = vmatprep.subr.mxu0 0.0
  %1335 = vmatpush1.msra.mxu0 %v279
  %1336 = vmatprep.subr.mxu0 0.0
  %1337 = vmatpush1.msra.mxu0 %v280
  %1338 = vmatprep.subr.mxu0 0.0
  %1339 = vmatpush1.msra.mxu0 %v281
  %1340 = vmatprep.subr.mxu0 0.0
  %1341 = vmatpush1.msra.mxu0 %v282
  %1342 = vmatprep.subr.mxu0 0.0
  %1343 = vmatpush1.msra.mxu0 %v283
  %1344 = vmatprep.subr.mxu0 0.0
  %1345 = vmatpush1.msra.mxu0 %v284
  %1346 = vmatprep.mubr.f32.mxu0 %v672
  %1347 = vmatmul.mubr.f32.gmra.mrb[0].mxu0 %v670
  %v1348 = vpop.f32.mrb[0].mxu0
  %v1349 = vadd.f32 %v1279, %v1348
  %v1350 = vpop.f32.mrb[0].mxu0
  %1351 = vdwg.mxu0
  %1352 = vmatprep.subr.mxu0 0.0
  %1353 = vmatpush1.msra.mxu0 %v285
  %1354 = vmatprep.subr.mxu0 0.0
  %1355 = vmatpush1.msra.mxu0 %v286
  %1356 = vmatprep.subr.mxu0 0.0
  %1357 = vmatpush1.msra.mxu0 %v287
  %1358 = vmatprep.subr.mxu0 0.0
  %1359 = vmatpush1.msra.mxu0 %v288
  %1360 = vmatprep.subr.mxu0 0.0
  %1361 = vmatpush1.msra.mxu0 %v289
  %1362 = vmatprep.subr.mxu0 0.0
  %1363 = vmatpush1.msra.mxu0 %v290
  %1364 = vmatprep.subr.mxu0 0.0
  %1365 = vmatpush1.msra.mxu0 %v291
  %1366 = vmatprep.subr.mxu0 0.0
  %1367 = vmatpush1.msra.mxu0 %v292
  %1368 = vmatprep.subr.mxu0 0.0
  %1369 = vmatpush1.msra.mxu0 %v293
  %1370 = vmatprep.subr.mxu0 0.0
  %1371 = vmatpush1.msra.mxu0 %v294
  %1372 = vmatprep.subr.mxu0 0.0
  %1373 = vmatpush1.msra.mxu0 %v295
  %1374 = vmatprep.subr.mxu0 0.0
  %1375 = vmatpush1.msra.mxu0 %v296
  %1376 = vmatprep.subr.mxu0 0.0
  %1377 = vmatpush1.msra.mxu0 %v297
  %1378 = vmatprep.subr.mxu0 0.0
  %1379 = vmatpush1.msra.mxu0 %v298
  %1380 = vmatprep.subr.mxu0 0.0
  %1381 = vmatpush1.msra.mxu0 %v299
  %1382 = vmatprep.subr.mxu0 0.0
  %1383 = vmatpush1.msra.mxu0 %v300
  %1384 = vmatprep.subr.mxu0 0.0
  %1385 = vmatpush1.msra.mxu0 %v301
  %1386 = vmatprep.subr.mxu0 0.0
  %1387 = vmatpush1.msra.mxu0 %v302
  %1388 = vmatprep.subr.mxu0 0.0
  %1389 = vmatpush1.msra.mxu0 %v303
  %1390 = vmatprep.subr.mxu0 0.0
  %1391 = vmatpush1.msra.mxu0 %v304
  %1392 = vmatprep.subr.mxu0 0.0
  %1393 = vmatpush1.msra.mxu0 %v305
  %1394 = vmatprep.subr.mxu0 0.0
  %1395 = vmatpush1.msra.mxu0 %v306
  %1396 = vmatprep.subr.mxu0 0.0
  %1397 = vmatpush1.msra.mxu0 %v307
  %1398 = vmatprep.subr.mxu0 0.0
  %1399 = vmatpush1.msra.mxu0 %v308
  %1400 = vmatprep.subr.mxu0 0.0
  %1401 = vmatpush1.msra.mxu0 %v309
  %1402 = vmatprep.subr.mxu0 0.0
  %1403 = vmatpush1.msra.mxu0 %v310
  %1404 = vmatprep.subr.mxu0 0.0
  %1405 = vmatpush1.msra.mxu0 %v311
  %1406 = vmatprep.subr.mxu0 0.0
  %1407 = vmatpush1.msra.mxu0 %v312
  %1408 = vmatprep.subr.mxu0 0.0
  %1409 = vmatpush1.msra.mxu0 %v313
  %1410 = vmatprep.subr.mxu0 0.0
  %1411 = vmatpush1.msra.mxu0 %v314
  %1412 = vmatprep.subr.mxu0 0.0
  %1413 = vmatpush1.msra.mxu0 %v315
  %1414 = vmatprep.subr.mxu0 0.0
  %1415 = vmatpush1.msra.mxu0 %v316
  %1416 = vmatprep.mubr.f32.mxu0 %v688
  %1417 = vmatmul.mubr.f32.gmra.mrb[0].mxu0 %v680
  %v1418 = vpop.f32.mrb[0].mxu0
  %v1419 = vadd.f32 %v1349, %v1418
  %v1420 = vpop.f32.mrb[0].mxu0
  %1421 = vdwg.mxu0
  %1422 = vmatprep.subr.mxu0 0.0
  %1423 = vmatpush1.msra.mxu0 %v317
  %1424 = vmatprep.subr.mxu0 0.0
  %1425 = vmatpush1.msra.mxu0 %v318
  %1426 = vmatprep.subr.mxu0 0.0
  %1427 = vmatpush1.msra.mxu0 %v319
  %1428 = vmatprep.subr.mxu0 0.0
  %1429 = vmatpush1.msra.mxu0 %v320
  %1430 = vmatprep.subr.mxu0 0.0
  %1431 = vmatpush1.msra.mxu0 %v321
  %1432 = vmatprep.subr.mxu0 0.0
  %1433 = vmatpush1.msra.mxu0 %v322
  %1434 = vmatprep.subr.mxu0 0.0
  %1435 = vmatpush1.msra.mxu0 %v323
  %1436 = vmatprep.subr.mxu0 0.0
  %1437 = vmatpush1.msra.mxu0 %v324
  %1438 = vmatprep.subr.mxu0 0.0
  %1439 = vmatpush1.msra.mxu0 %v325
  %1440 = vmatprep.subr.mxu0 0.0
  %1441 = vmatpush1.msra.mxu0 %v326
  %1442 = vmatprep.subr.mxu0 0.0
  %1443 = vmatpush1.msra.mxu0 %v327
  %1444 = vmatprep.subr.mxu0 0.0
  %1445 = vmatpush1.msra.mxu0 %v328
  %1446 = vmatprep.subr.mxu0 0.0
  %1447 = vmatpush1.msra.mxu0 %v329
  %1448 = vmatprep.subr.mxu0 0.0
  %1449 = vmatpush1.msra.mxu0 %v330
  %1450 = vmatprep.subr.mxu0 0.0
  %1451 = vmatpush1.msra.mxu0 %v331
  %1452 = vmatprep.subr.mxu0 0.0
  %1453 = vmatpush1.msra.mxu0 %v332
  %1454 = vmatprep.subr.mxu0 0.0
  %1455 = vmatpush1.msra.mxu0 %v333
  %1456 = vmatprep.subr.mxu0 0.0
  %1457 = vmatpush1.msra.mxu0 %v334
  %1458 = vmatprep.subr.mxu0 0.0
  %1459 = vmatpush1.msra.mxu0 %v335
  %1460 = vmatprep.subr.mxu0 0.0
  %1461 = vmatpush1.msra.mxu0 %v336
  %1462 = vmatprep.subr.mxu0 0.0
  %1463 = vmatpush1.msra.mxu0 %v337
  %1464 = vmatprep.subr.mxu0 0.0
  %1465 = vmatpush1.msra.mxu0 %v338
  %1466 = vmatprep.subr.mxu0 0.0
  %1467 = vmatpush1.msra.mxu0 %v339
  %1468 = vmatprep.subr.mxu0 0.0
  %1469 = vmatpush1.msra.mxu0 %v340
  %1470 = vmatprep.subr.mxu0 0.0
  %1471 = vmatpush1.msra.mxu0 %v341
  %1472 = vmatprep.subr.mxu0 0.0
  %1473 = vmatpush1.msra.mxu0 %v342
  %1474 = vmatprep.subr.mxu0 0.0
  %1475 = vmatpush1.msra.mxu0 %v343
  %1476 = vmatprep.subr.mxu0 0.0
  %1477 = vmatpush1.msra.mxu0 %v344
  %1478 = vmatprep.subr.mxu0 0.0
  %1479 = vmatpush1.msra.mxu0 %v345
  %1480 = vmatprep.subr.mxu0 0.0
  %1481 = vmatpush1.msra.mxu0 %v346
  %1482 = vmatprep.subr.mxu0 0.0
  %1483 = vmatpush1.msra.mxu0 %v347
  %1484 = vmatprep.subr.mxu0 0.0
  %1485 = vmatpush1.msra.mxu0 %v348
  %1486 = vmatprep.mubr.f32.mxu0 %v689
  %1487 = vmatmul.mubr.f32.gmra.mrb[0].mxu0 %v687
  %v1488 = vpop.f32.mrb[0].mxu0
  %v1489 = vadd.f32 %v1419, %v1488
  %v1490 = vpop.f32.mrb[0].mxu0
  %1491 = vdwg.mxu0
  %1492 = vmatprep.subr.mxu0 0.0
  %1493 = vmatpush1.msra.mxu0 %v349
  %1494 = vmatprep.subr.mxu0 0.0
  %1495 = vmatpush1.msra.mxu0 %v350
  %1496 = vmatprep.subr.mxu0 0.0
  %1497 = vmatpush1.msra.mxu0 %v351
  %1498 = vmatprep.subr.mxu0 0.0
  %1499 = vmatpush1.msra.mxu0 %v352
  %1500 = vmatprep.subr.mxu0 0.0
  %1501 = vmatpush1.msra.mxu0 %v353
  %1502 = vmatprep.subr.mxu0 0.0
  %1503 = vmatpush1.msra.mxu0 %v354
  %1504 = vmatprep.subr.mxu0 0.0
  %1505 = vmatpush1.msra.mxu0 %v355
  %1506 = vmatprep.subr.mxu0 0.0
  %1507 = vmatpush1.msra.mxu0 %v356
  %1508 = vmatprep.subr.mxu0 0.0
  %1509 = vmatpush1.msra.mxu0 %v357
  %1510 = vmatprep.subr.mxu0 0.0
  %1511 = vmatpush1.msra.mxu0 %v358
  %1512 = vmatprep.subr.mxu0 0.0
  %1513 = vmatpush1.msra.mxu0 %v359
  %1514 = vmatprep.subr.mxu0 0.0
  %1515 = vmatpush1.msra.mxu0 %v360
  %1516 = vmatprep.subr.mxu0 0.0
  %1517 = vmatpush1.msra.mxu0 %v361
  %1518 = vmatprep.subr.mxu0 0.0
  %1519 = vmatpush1.msra.mxu0 %v362
  %1520 = vmatprep.subr.mxu0 0.0
  %1521 = vmatpush1.msra.mxu0 %v363
  %1522 = vmatprep.subr.mxu0 0.0
  %1523 = vmatpush1.msra.mxu0 %v364
  %1524 = vmatprep.subr.mxu0 0.0
  %1525 = vmatpush1.msra.mxu0 %v365
  %1526 = vmatprep.subr.mxu0 0.0
  %1527 = vmatpush1.msra.mxu0 %v366
  %1528 = vmatprep.subr.mxu0 0.0
  %1529 = vmatpush1.msra.mxu0 %v367
  %1530 = vmatprep.subr.mxu0 0.0
  %1531 = vmatpush1.msra.mxu0 %v368
  %1532 = vmatprep.subr.mxu0 0.0
  %1533 = vmatpush1.msra.mxu0 %v369
  %1534 = vmatprep.subr.mxu0 0.0
  %1535 = vmatpush1.msra.mxu0 %v370
  %1536 = vmatprep.subr.mxu0 0.0
  %1537 = vmatpush1.msra.mxu0 %v371
  %1538 = vmatprep.subr.mxu0 0.0
  %1539 = vmatpush1.msra.mxu0 %v372
  %1540 = vmatprep.subr.mxu0 0.0
  %1541 = vmatpush1.msra.mxu0 %v373
  %1542 = vmatprep.subr.mxu0 0.0
  %1543 = vmatpush1.msra.mxu0 %v374
  %1544 = vmatprep.subr.mxu0 0.0
  %1545 = vmatpush1.msra.mxu0 %v375
  %1546 = vmatprep.subr.mxu0 0.0
  %1547 = vmatpush1.msra.mxu0 %v376
  %1548 = vmatprep.subr.mxu0 0.0
  %1549 = vmatpush1.msra.mxu0 %v377
  %1550 = vmatprep.subr.mxu0 0.0
  %1551 = vmatpush1.msra.mxu0 %v378
  %1552 = vmatprep.subr.mxu0 0.0
  %1553 = vmatpush1.msra.mxu0 %v379
  %1554 = vmatprep.subr.mxu0 0.0
  %1555 = vmatpush1.msra.mxu0 %v380
  %1556 = vmatprep.mubr.f32.mxu0 %v705
  %1557 = vmatmul.mubr.f32.gmra.mrb[0].mxu0 %v697
  %v1558 = vpop.f32.mrb[0].mxu0
  %v1559 = vadd.f32 %v1489, %v1558
  %v1560 = vpop.f32.mrb[0].mxu0
  %1561 = vdwg.mxu0
  %1562 = vmatprep.subr.mxu0 0.0
  %1563 = vmatpush1.msra.mxu0 %v381
  %1564 = vmatprep.subr.mxu0 0.0
  %1565 = vmatpush1.msra.mxu0 %v382
  %1566 = vmatprep.subr.mxu0 0.0
  %1567 = vmatpush1.msra.mxu0 %v383
  %1568 = vmatprep.subr.mxu0 0.0
  %1569 = vmatpush1.msra.mxu0 %v384
  %1570 = vmatprep.subr.mxu0 0.0
  %1571 = vmatpush1.msra.mxu0 %v385
  %1572 = vmatprep.subr.mxu0 0.0
  %1573 = vmatpush1.msra.mxu0 %v386
  %1574 = vmatprep.subr.mxu0 0.0
  %1575 = vmatpush1.msra.mxu0 %v387
  %1576 = vmatprep.subr.mxu0 0.0
  %1577 = vmatpush1.msra.mxu0 %v388
  %1578 = vmatprep.subr.mxu0 0.0
  %1579 = vmatpush1.msra.mxu0 %v389
  %1580 = vmatprep.subr.mxu0 0.0
  %1581 = vmatpush1.msra.mxu0 %v390
  %1582 = vmatprep.subr.mxu0 0.0
  %1583 = vmatpush1.msra.mxu0 %v391
  %1584 = vmatprep.subr.mxu0 0.0
  %1585 = vmatpush1.msra.mxu0 %v392
  %1586 = vmatprep.subr.mxu0 0.0
  %1587 = vmatpush1.msra.mxu0 %v393
  %1588 = vmatprep.subr.mxu0 0.0
  %1589 = vmatpush1.msra.mxu0 %v394
  %1590 = vmatprep.subr.mxu0 0.0
  %1591 = vmatpush1.msra.mxu0 %v395
  %1592 = vmatprep.subr.mxu0 0.0
  %1593 = vmatpush1.msra.mxu0 %v396
  %1594 = vmatprep.subr.mxu0 0.0
  %1595 = vmatpush1.msra.mxu0 %v397
  %1596 = vmatprep.subr.mxu0 0.0
  %1597 = vmatpush1.msra.mxu0 %v398
  %1598 = vmatprep.subr.mxu0 0.0
  %1599 = vmatpush1.msra.mxu0 %v399
  %1600 = vmatprep.subr.mxu0 0.0
  %1601 = vmatpush1.msra.mxu0 %v400
  %1602 = vmatprep.subr.mxu0 0.0
  %1603 = vmatpush1.msra.mxu0 %v401
  %1604 = vmatprep.subr.mxu0 0.0
  %1605 = vmatpush1.msra.mxu0 %v402
  %1606 = vmatprep.subr.mxu0 0.0
  %1607 = vmatpush1.msra.mxu0 %v403
  %1608 = vmatprep.subr.mxu0 0.0
  %1609 = vmatpush1.msra.mxu0 %v404
  %1610 = vmatprep.subr.mxu0 0.0
  %1611 = vmatpush1.msra.mxu0 %v405
  %1612 = vmatprep.subr.mxu0 0.0
  %1613 = vmatpush1.msra.mxu0 %v406
  %1614 = vmatprep.subr.mxu0 0.0
  %1615 = vmatpush1.msra.mxu0 %v407
  %1616 = vmatprep.subr.mxu0 0.0
  %1617 = vmatpush1.msra.mxu0 %v408
  %1618 = vmatprep.subr.mxu0 0.0
  %1619 = vmatpush1.msra.mxu0 %v409
  %1620 = vmatprep.subr.mxu0 0.0
  %1621 = vmatpush1.msra.mxu0 %v410
  %1622 = vmatprep.subr.mxu0 0.0
  %1623 = vmatpush1.msra.mxu0 %v411
  %1624 = vmatprep.subr.mxu0 0.0
  %1625 = vmatpush1.msra.mxu0 %v412
  %1626 = vmatprep.mubr.f32.mxu0 %v706
  %1627 = vmatmul.mubr.f32.gmra.mrb[0].mxu0 %v704
  %v1628 = vpop.f32.mrb[0].mxu0
  %v1629 = vadd.f32 %v1559, %v1628
  %v1630 = vpop.f32.mrb[0].mxu0
  %1631 = vdwg.mxu0
  %1632 = vmatprep.subr.mxu0 0.0
  %1633 = vmatpush1.msra.mxu0 %v413
  %1634 = vmatprep.subr.mxu0 0.0
  %1635 = vmatpush1.msra.mxu0 %v414
  %1636 = vmatprep.subr.mxu0 0.0
  %1637 = vmatpush1.msra.mxu0 %v415
  %1638 = vmatprep.subr.mxu0 0.0
  %1639 = vmatpush1.msra.mxu0 %v416
  %1640 = vmatprep.subr.mxu0 0.0
  %1641 = vmatpush1.msra.mxu0 %v417
  %1642 = vmatprep.subr.mxu0 0.0
  %1643 = vmatpush1.msra.mxu0 %v418
  %1644 = vmatprep.subr.mxu0 0.0
  %1645 = vmatpush1.msra.mxu0 %v419
  %1646 = vmatprep.subr.mxu0 0.0
  %1647 = vmatpush1.msra.mxu0 %v420
  %1648 = vmatprep.subr.mxu0 0.0
  %1649 = vmatpush1.msra.mxu0 %v421
  %1650 = vmatprep.subr.mxu0 0.0
  %1651 = vmatpush1.msra.mxu0 %v422
  %1652 = vmatprep.subr.mxu0 0.0
  %1653 = vmatpush1.msra.mxu0 %v423
  %1654 = vmatprep.subr.mxu0 0.0
  %1655 = vmatpush1.msra.mxu0 %v424
  %1656 = vmatprep.subr.mxu0 0.0
  %1657 = vmatpush1.msra.mxu0 %v425
  %1658 = vmatprep.subr.mxu0 0.0
  %1659 = vmatpush1.msra.mxu0 %v426
  %1660 = vmatprep.subr.mxu0 0.0
  %1661 = vmatpush1.msra.mxu0 %v427
  %1662 = vmatprep.subr.mxu0 0.0
  %1663 = vmatpush1.msra.mxu0 %v428
  %1664 = vmatprep.subr.mxu0 0.0
  %1665 = vmatpush1.msra.mxu0 %v429
  %1666 = vmatprep.subr.mxu0 0.0
  %1667 = vmatpush1.msra.mxu0 %v430
  %1668 = vmatprep.subr.mxu0 0.0
  %1669 = vmatpush1.msra.mxu0 %v431
  %1670 = vmatprep.subr.mxu0 0.0
  %1671 = vmatpush1.msra.mxu0 %v432
  %1672 = vmatprep.subr.mxu0 0.0
  %1673 = vmatpush1.msra.mxu0 %v433
  %1674 = vmatprep.subr.mxu0 0.0
  %1675 = vmatpush1.msra.mxu0 %v434
  %1676 = vmatprep.subr.mxu0 0.0
  %1677 = vmatpush1.msra.mxu0 %v435
  %1678 = vmatprep.subr.mxu0 0.0
  %1679 = vmatpush1.msra.mxu0 %v436
  %1680 = vmatprep.subr.mxu0 0.0
  %1681 = vmatpush1.msra.mxu0 %v437
  %1682 = vmatprep.subr.mxu0 0.0
  %1683 = vmatpush1.msra.mxu0 %v438
  %1684 = vmatprep.subr.mxu0 0.0
  %1685 = vmatpush1.msra.mxu0 %v439
  %1686 = vmatprep.subr.mxu0 0.0
  %1687 = vmatpush1.msra.mxu0 %v440
  %1688 = vmatprep.subr.mxu0 0.0
  %1689 = vmatpush1.msra.mxu0 %v441
  %1690 = vmatprep.subr.mxu0 0.0
  %1691 = vmatpush1.msra.mxu0 %v442
  %1692 = vmatprep.subr.mxu0 0.0
  %1693 = vmatpush1.msra.mxu0 %v443
  %1694 = vmatprep.subr.mxu0 0.0
  %1695 = vmatpush1.msra.mxu0 %v444
  %1696 = vmatprep.mubr.f32.mxu0 %v722
  %1697 = vmatmul.mubr.f32.gmra.mrb[0].mxu0 %v714
  %v1698 = vpop.f32.mrb[0].mxu0
  %v1699 = vadd.f32 %v1629, %v1698
  %v1700 = vpop.f32.mrb[0].mxu0
  %1701 = vdwg.mxu0
  %1702 = vmatprep.subr.mxu0 0.0
  %1703 = vmatpush1.msra.mxu0 %v445
  %1704 = vmatprep.subr.mxu0 0.0
  %1705 = vmatpush1.msra.mxu0 %v446
  %1706 = vmatprep.subr.mxu0 0.0
  %1707 = vmatpush1.msra.mxu0 %v447
  %1708 = vmatprep.subr.mxu0 0.0
  %1709 = vmatpush1.msra.mxu0 %v448
  %1710 = vmatprep.subr.mxu0 0.0
  %1711 = vmatpush1.msra.mxu0 %v449
  %1712 = vmatprep.subr.mxu0 0.0
  %1713 = vmatpush1.msra.mxu0 %v450
  %1714 = vmatprep.subr.mxu0 0.0
  %1715 = vmatpush1.msra.mxu0 %v451
  %1716 = vmatprep.subr.mxu0 0.0
  %1717 = vmatpush1.msra.mxu0 %v452
  %1718 = vmatprep.subr.mxu0 0.0
  %1719 = vmatpush1.msra.mxu0 %v453
  %1720 = vmatprep.subr.mxu0 0.0
  %1721 = vmatpush1.msra.mxu0 %v454
  %1722 = vmatprep.subr.mxu0 0.0
  %1723 = vmatpush1.msra.mxu0 %v455
  %1724 = vmatprep.subr.mxu0 0.0
  %1725 = vmatpush1.msra.mxu0 %v456
  %1726 = vmatprep.subr.mxu0 0.0
  %1727 = vmatpush1.msra.mxu0 %v457
  %1728 = vmatprep.subr.mxu0 0.0
  %1729 = vmatpush1.msra.mxu0 %v458
  %1730 = vmatprep.subr.mxu0 0.0
  %1731 = vmatpush1.msra.mxu0 %v459
  %1732 = vmatprep.subr.mxu0 0.0
  %1733 = vmatpush1.msra.mxu0 %v460
  %1734 = vmatprep.subr.mxu0 0.0
  %1735 = vmatpush1.msra.mxu0 %v461
  %1736 = vmatprep.subr.mxu0 0.0
  %1737 = vmatpush1.msra.mxu0 %v462
  %1738 = vmatprep.subr.mxu0 0.0
  %1739 = vmatpush1.msra.mxu0 %v463
  %1740 = vmatprep.subr.mxu0 0.0
  %1741 = vmatpush1.msra.mxu0 %v464
  %1742 = vmatprep.subr.mxu0 0.0
  %1743 = vmatpush1.msra.mxu0 %v465
  %1744 = vmatprep.subr.mxu0 0.0
  %1745 = vmatpush1.msra.mxu0 %v466
  %1746 = vmatprep.subr.mxu0 0.0
  %1747 = vmatpush1.msra.mxu0 %v467
  %1748 = vmatprep.subr.mxu0 0.0
  %1749 = vmatpush1.msra.mxu0 %v468
  %1750 = vmatprep.subr.mxu0 0.0
  %1751 = vmatpush1.msra.mxu0 %v469
  %1752 = vmatprep.subr.mxu0 0.0
  %1753 = vmatpush1.msra.mxu0 %v470
  %1754 = vmatprep.subr.mxu0 0.0
  %1755 = vmatpush1.msra.mxu0 %v471
  %1756 = vmatprep.subr.mxu0 0.0
  %1757 = vmatpush1.msra.mxu0 %v472
  %1758 = vmatprep.subr.mxu0 0.0
  %1759 = vmatpush1.msra.mxu0 %v473
  %1760 = vmatprep.subr.mxu0 0.0
  %1761 = vmatpush1.msra.mxu0 %v474
  %1762 = vmatprep.subr.mxu0 0.0
  %1763 = vmatpush1.msra.mxu0 %v475
  %1764 = vmatprep.subr.mxu0 0.0
  %1765 = vmatpush1.msra.mxu0 %v476
  %1766 = vmatprep.mubr.f32.mxu0 %v723
  %1767 = vmatmul.mubr.f32.gmra.mrb[0].mxu0 %v721
  %v1768 = vpop.f32.mrb[0].mxu0
  %v1769 = vadd.f32 %v1699, %v1768
  %v1770 = vpop.f32.mrb[0].mxu0
  %1771 = vdwg.mxu0
  %1772 = vmatprep.subr.mxu0 0.0
  %1773 = vmatpush1.msra.mxu0 %v477
  %1774 = vmatprep.subr.mxu0 0.0
  %1775 = vmatpush1.msra.mxu0 %v478
  %1776 = vmatprep.subr.mxu0 0.0
  %1777 = vmatpush1.msra.mxu0 %v479
  %1778 = vmatprep.subr.mxu0 0.0
  %1779 = vmatpush1.msra.mxu0 %v480
  %1780 = vmatprep.subr.mxu0 0.0
  %1781 = vmatpush1.msra.mxu0 %v481
  %1782 = vmatprep.subr.mxu0 0.0
  %1783 = vmatpush1.msra.mxu0 %v482
  %1784 = vmatprep.subr.mxu0 0.0
  %1785 = vmatpush1.msra.mxu0 %v483
  %1786 = vmatprep.subr.mxu0 0.0
  %1787 = vmatpush1.msra.mxu0 %v484
  %1788 = vmatprep.subr.mxu0 0.0
  %1789 = vmatpush1.msra.mxu0 %v485
  %1790 = vmatprep.subr.mxu0 0.0
  %1791 = vmatpush1.msra.mxu0 %v486
  %1792 = vmatprep.subr.mxu0 0.0
  %1793 = vmatpush1.msra.mxu0 %v487
  %1794 = vmatprep.subr.mxu0 0.0
  %1795 = vmatpush1.msra.mxu0 %v488
  %1796 = vmatprep.subr.mxu0 0.0
  %1797 = vmatpush1.msra.mxu0 %v489
  %1798 = vmatprep.subr.mxu0 0.0
  %1799 = vmatpush1.msra.mxu0 %v490
  %1800 = vmatprep.subr.mxu0 0.0
  %1801 = vmatpush1.msra.mxu0 %v491
  %1802 = vmatprep.subr.mxu0 0.0
  %1803 = vmatpush1.msra.mxu0 %v492
  %1804 = vmatprep.subr.mxu0 0.0
  %1805 = vmatpush1.msra.mxu0 %v493
  %1806 = vmatprep.subr.mxu0 0.0
  %1807 = vmatpush1.msra.mxu0 %v494
  %1808 = vmatprep.subr.mxu0 0.0
  %1809 = vmatpush1.msra.mxu0 %v495
  %1810 = vmatprep.subr.mxu0 0.0
  %1811 = vmatpush1.msra.mxu0 %v496
  %1812 = vmatprep.subr.mxu0 0.0
  %1813 = vmatpush1.msra.mxu0 %v497
  %1814 = vmatprep.subr.mxu0 0.0
  %1815 = vmatpush1.msra.mxu0 %v498
  %1816 = vmatprep.subr.mxu0 0.0
  %1817 = vmatpush1.msra.mxu0 %v499
  %1818 = vmatprep.subr.mxu0 0.0
  %1819 = vmatpush1.msra.mxu0 %v500
  %1820 = vmatprep.subr.mxu0 0.0
  %1821 = vmatpush1.msra.mxu0 %v501
  %1822 = vmatprep.subr.mxu0 0.0
  %1823 = vmatpush1.msra.mxu0 %v502
  %1824 = vmatprep.subr.mxu0 0.0
  %1825 = vmatpush1.msra.mxu0 %v503
  %1826 = vmatprep.subr.mxu0 0.0
  %1827 = vmatpush1.msra.mxu0 %v504
  %1828 = vmatprep.subr.mxu0 0.0
  %1829 = vmatpush1.msra.mxu0 %v505
  %1830 = vmatprep.subr.mxu0 0.0
  %1831 = vmatpush1.msra.mxu0 %v506
  %1832 = vmatprep.subr.mxu0 0.0
  %1833 = vmatpush1.msra.mxu0 %v507
  %1834 = vmatprep.subr.mxu0 0.0
  %1835 = vmatpush1.msra.mxu0 %v508
  %1836 = vmatprep.mubr.f32.mxu0 %v739
  %1837 = vmatmul.mubr.f32.gmra.mrb[0].mxu0 %v731
  %v1838 = vpop.f32.mrb[0].mxu0
  %v1839 = vadd.f32 %v1769, %v1838
  %v1840 = vpop.f32.mrb[0].mxu0
  %1841 = vdwg.mxu0
  %1842 = vmatprep.subr.mxu0 0.0
  %1843 = vmatpush1.msra.mxu0 %v509
  %1844 = vmatprep.subr.mxu0 0.0
  %1845 = vmatpush1.msra.mxu0 %v510
  %1846 = vmatprep.subr.mxu0 0.0
  %1847 = vmatpush1.msra.mxu0 %v511
  %1848 = vmatprep.subr.mxu0 0.0
  %1849 = vmatpush1.msra.mxu0 %v512
  %1850 = vmatprep.subr.mxu0 0.0
  %1851 = vmatpush1.msra.mxu0 %v513
  %1852 = vmatprep.subr.mxu0 0.0
  %1853 = vmatpush1.msra.mxu0 %v514
  %1854 = vmatprep.subr.mxu0 0.0
  %1855 = vmatpush1.msra.mxu0 %v515
  %1856 = vmatprep.subr.mxu0 0.0
  %1857 = vmatpush1.msra.mxu0 %v516
  %1858 = vmatprep.subr.mxu0 0.0
  %1859 = vmatpush1.msra.mxu0 %v517
  %1860 = vmatprep.subr.mxu0 0.0
  %1861 = vmatpush1.msra.mxu0 %v518
  %1862 = vmatprep.subr.mxu0 0.0
  %1863 = vmatpush1.msra.mxu0 %v519
  %1864 = vmatprep.subr.mxu0 0.0
  %1865 = vmatpush1.msra.mxu0 %v520
  %1866 = vmatprep.subr.mxu0 0.0
  %1867 = vmatpush1.msra.mxu0 %v521
  %1868 = vmatprep.subr.mxu0 0.0
  %1869 = vmatpush1.msra.mxu0 %v522
  %1870 = vmatprep.subr.mxu0 0.0
  %1871 = vmatpush1.msra.mxu0 %v523
  %1872 = vmatprep.subr.mxu0 0.0
  %1873 = vmatpush1.msra.mxu0 %v524
  %1874 = vmatprep.subr.mxu0 0.0
  %1875 = vmatpush1.msra.mxu0 %v525
  %1876 = vmatprep.subr.mxu0 0.0
  %1877 = vmatpush1.msra.mxu0 %v526
  %1878 = vmatprep.subr.mxu0 0.0
  %1879 = vmatpush1.msra.mxu0 %v527
  %1880 = vmatprep.subr.mxu0 0.0
  %1881 = vmatpush1.msra.mxu0 %v528
  %1882 = vmatprep.subr.mxu0 0.0
  %1883 = vmatpush1.msra.mxu0 %v529
  %1884 = vmatprep.subr.mxu0 0.0
  %1885 = vmatpush1.msra.mxu0 %v530
  %1886 = vmatprep.subr.mxu0 0.0
  %1887 = vmatpush1.msra.mxu0 %v531
  %1888 = vmatprep.subr.mxu0 0.0
  %1889 = vmatpush1.msra.mxu0 %v532
  %1890 = vmatprep.subr.mxu0 0.0
  %1891 = vmatpush1.msra.mxu0 %v533
  %1892 = vmatprep.subr.mxu0 0.0
  %1893 = vmatpush1.msra.mxu0 %v534
  %1894 = vmatprep.subr.mxu0 0.0
  %1895 = vmatpush1.msra.mxu0 %v535
  %1896 = vmatprep.subr.mxu0 0.0
  %1897 = vmatpush1.msra.mxu0 %v536
  %1898 = vmatprep.subr.mxu0 0.0
  %1899 = vmatpush1.msra.mxu0 %v537
  %1900 = vmatprep.subr.mxu0 0.0
  %1901 = vmatpush1.msra.mxu0 %v538
  %1902 = vmatprep.subr.mxu0 0.0
  %1903 = vmatpush1.msra.mxu0 %v539
  %1904 = vmatprep.subr.mxu0 0.0
  %1905 = vmatpush1.msra.mxu0 %v540
  %1906 = vmatprep.mubr.f32.mxu0 %v740
  %1907 = vmatmul.mubr.f32.gmra.mrb[0].mxu0 %v738
  %v1908 = vpop.f32.mrb[0].mxu0
  %v1909 = vadd.f32 %v1839, %v1908
  %v1910 = vpop.f32.mrb[0].mxu0
  %1911 = vdwg.mxu0
  %1912 = vmatprep.subr.mxu0 0.0
  %1913 = vmatpush1.msra.mxu0 %v541
  %1914 = vmatprep.subr.mxu0 0.0
  %1915 = vmatpush1.msra.mxu0 %v542
  %1916 = vmatprep.subr.mxu0 0.0
  %1917 = vmatpush1.msra.mxu0 %v543
  %1918 = vmatprep.subr.mxu0 0.0
  %1919 = vmatpush1.msra.mxu0 %v544
  %1920 = vmatprep.subr.mxu0 0.0
  %1921 = vmatpush1.msra.mxu0 %v545
  %1922 = vmatprep.subr.mxu0 0.0
  %1923 = vmatpush1.msra.mxu0 %v546
  %1924 = vmatprep.subr.mxu0 0.0
  %1925 = vmatpush1.msra.mxu0 %v547
  %1926 = vmatprep.subr.mxu0 0.0
  %1927 = vmatpush1.msra.mxu0 %v548
  %1928 = vmatprep.subr.mxu0 0.0
  %1929 = vmatpush1.msra.mxu0 %v549
  %1930 = vmatprep.subr.mxu0 0.0
  %1931 = vmatpush1.msra.mxu0 %v550
  %1932 = vmatprep.subr.mxu0 0.0
  %1933 = vmatpush1.msra.mxu0 %v551
  %1934 = vmatprep.subr.mxu0 0.0
  %1935 = vmatpush1.msra.mxu0 %v552
  %1936 = vmatprep.subr.mxu0 0.0
  %1937 = vmatpush1.msra.mxu0 %v553
  %1938 = vmatprep.subr.mxu0 0.0
  %1939 = vmatpush1.msra.mxu0 %v554
  %1940 = vmatprep.subr.mxu0 0.0
  %1941 = vmatpush1.msra.mxu0 %v555
  %1942 = vmatprep.subr.mxu0 0.0
  %1943 = vmatpush1.msra.mxu0 %v556
  %1944 = vmatprep.subr.mxu0 0.0
  %1945 = vmatpush1.msra.mxu0 %v557
  %1946 = vmatprep.subr.mxu0 0.0
  %1947 = vmatpush1.msra.mxu0 %v558
  %1948 = vmatprep.subr.mxu0 0.0
  %1949 = vmatpush1.msra.mxu0 %v559
  %1950 = vmatprep.subr.mxu0 0.0
  %1951 = vmatpush1.msra.mxu0 %v560
  %1952 = vmatprep.subr.mxu0 0.0
  %1953 = vmatpush1.msra.mxu0 %v561
  %1954 = vmatprep.subr.mxu0 0.0
  %1955 = vmatpush1.msra.mxu0 %v562
  %1956 = vmatprep.subr.mxu0 0.0
  %1957 = vmatpush1.msra.mxu0 %v563
  %1958 = vmatprep.subr.mxu0 0.0
  %1959 = vmatpush1.msra.mxu0 %v564
  %1960 = vmatprep.subr.mxu0 0.0
  %1961 = vmatpush1.msra.mxu0 %v565
  %1962 = vmatprep.subr.mxu0 0.0
  %1963 = vmatpush1.msra.mxu0 %v566
  %1964 = vmatprep.subr.mxu0 0.0
  %1965 = vmatpush1.msra.mxu0 %v567
  %1966 = vmatprep.subr.mxu0 0.0
  %1967 = vmatpush1.msra.mxu0 %v568
  %1968 = vmatprep.subr.mxu0 0.0
  %1969 = vmatpush1.msra.mxu0 %v569
  %1970 = vmatprep.subr.mxu0 0.0
  %1971 = vmatpush1.msra.mxu0 %v570
  %1972 = vmatprep.subr.mxu0 0.0
  %1973 = vmatpush1.msra.mxu0 %v571
  %1974 = vmatprep.subr.mxu0 0.0
  %1975 = vmatpush1.msra.mxu0 %v572
  %1976 = vmatprep.mubr.f32.mxu0 %v756
  %1977 = vmatmul.mubr.f32.gmra.mrb[0].mxu0 %v748
  %v1978 = vpop.f32.mrb[0].mxu0
  %v1979 = vadd.f32 %v1909, %v1978
  %v1980 = vpop.f32.mrb[0].mxu0
  %1981 = vdwg.mxu0
  %1982 = vmatprep.subr.mxu0 0.0
  %1983 = vmatpush1.msra.mxu0 %v573
  %1984 = vmatprep.subr.mxu0 0.0
  %1985 = vmatpush1.msra.mxu0 %v574
  %1986 = vmatprep.subr.mxu0 0.0
  %1987 = vmatpush1.msra.mxu0 %v575
  %1988 = vmatprep.subr.mxu0 0.0
  %1989 = vmatpush1.msra.mxu0 %v576
  %1990 = vmatprep.subr.mxu0 0.0
  %1991 = vmatpush1.msra.mxu0 %v577
  %1992 = vmatprep.subr.mxu0 0.0
  %1993 = vmatpush1.msra.mxu0 %v578
  %1994 = vmatprep.subr.mxu0 0.0
  %1995 = vmatpush1.msra.mxu0 %v579
  %1996 = vmatprep.subr.mxu0 0.0
  %1997 = vmatpush1.msra.mxu0 %v580
  %1998 = vmatprep.subr.mxu0 0.0
  %1999 = vmatpush1.msra.mxu0 %v581
  %2000 = vmatprep.subr.mxu0 0.0
  %2001 = vmatpush1.msra.mxu0 %v582
  %2002 = vmatprep.subr.mxu0 0.0
  %2003 = vmatpush1.msra.mxu0 %v583
  %2004 = vmatprep.subr.mxu0 0.0
  %2005 = vmatpush1.msra.mxu0 %v584
  %2006 = vmatprep.subr.mxu0 0.0
  %2007 = vmatpush1.msra.mxu0 %v585
  %2008 = vmatprep.subr.mxu0 0.0
  %2009 = vmatpush1.msra.mxu0 %v586
  %2010 = vmatprep.subr.mxu0 0.0
  %2011 = vmatpush1.msra.mxu0 %v587
  %2012 = vmatprep.subr.mxu0 0.0
  %2013 = vmatpush1.msra.mxu0 %v588
  %2014 = vmatprep.subr.mxu0 0.0
  %2015 = vmatpush1.msra.mxu0 0.0
  %2016 = vmatprep.subr.mxu0 0.0
  %2017 = vmatpush1.msra.mxu0 0.0
  %2018 = vmatprep.subr.mxu0 0.0
  %2019 = vmatpush1.msra.mxu0 0.0
  %2020 = vmatprep.subr.mxu0 0.0
  %2021 = vmatpush1.msra.mxu0 0.0
  %2022 = vmatprep.subr.mxu0 0.0
  %2023 = vmatpush1.msra.mxu0 0.0
  %2024 = vmatprep.subr.mxu0 0.0
  %2025 = vmatpush1.msra.mxu0 0.0
  %2026 = vmatprep.subr.mxu0 0.0
  %2027 = vmatpush1.msra.mxu0 0.0
  %2028 = vmatprep.subr.mxu0 0.0
  %2029 = vmatpush1.msra.mxu0 0.0
  %2030 = vmatprep.subr.mxu0 0.0
  %2031 = vmatpush1.msra.mxu0 0.0
  %2032 = vmatprep.subr.mxu0 0.0
  %2033 = vmatpush1.msra.mxu0 0.0
  %2034 = vmatprep.subr.mxu0 0.0
  %2035 = vmatpush1.msra.mxu0 0.0
  %2036 = vmatprep.subr.mxu0 0.0
  %2037 = vmatpush1.msra.mxu0 0.0
  %2038 = vmatprep.subr.mxu0 0.0
  %2039 = vmatpush1.msra.mxu0 0.0
  %2040 = vmatprep.subr.mxu0 0.0
  %2041 = vmatpush1.msra.mxu0 0.0
  %2042 = vmatprep.subr.mxu0 0.0
  %2043 = vmatpush1.msra.mxu0 0.0
  %2044 = vmatprep.subr.mxu0 0.0
  %2045 = vmatpush1.msra.mxu0 0.0
  %2046 = vmatprep.mubr.f32.mxu0 0.0
  %2047 = vmatmul.mubr.f32.gmra.mrb[0].mxu0 %v755
  %v2048 = vpop.f32.mrb[0].mxu0
  %v2049 = vadd.f32 %v1979, %v2048
  %v2050 = vpop.f32.mrb[0].mxu0
  %2051 = vdwg.mxu0
  %v2052 = vld [vmem:[%s3] sm:$0xff]
  %v2053 = vld [vmem:[%s3 + $0x8] sm:$0xff]
  %v2054 = vld [vmem:[%s3 + $0x10] sm:$0xff]
  %v2055 = vld [vmem:[%s3 + $0x18] sm:$0xff]
  %v2056 = vld [vmem:[%s3 + $0x20] sm:$0xff]
  %v2057 = vld [vmem:[%s3 + $0x28] sm:$0xff]
  %v2058 = vld [vmem:[%s3 + $0x30] sm:$0xff]
  %v2059 = vld [vmem:[%s3 + $0x38] sm:$0xff]
  %v2060 = vld [vmem:[%s3 + $0x40] sm:$0xff]
  %v2061 = vld [vmem:[%s3 + $0x48] sm:$0xff]
  %v2062 = vld [vmem:[%s3 + $0x50] sm:$0xff]
  %v2063 = vld [vmem:[%s3 + $0x58] sm:$0xff]
  %v2064 = vld [vmem:[%s3 + $0x60] sm:$0xff]
  %v2065 = vld [vmem:[%s3 + $0x68] sm:$0xff]
  %v2066 = vld [vmem:[%s3 + $0x70] sm:$0xff]
  %v2067 = vld [vmem:[%s3 + $0x78] sm:$0xff]
  %v2068 = vld [vmem:[%s4] sm:$0x1]
  %v2070 = vlaneseq
  %v2071 = vshrl.u32 %v2070, 7
  %v2072 = vsub.s32 0, %v2071
  %v2073 = vrot.slane %v2068, %v2072
  %2075 = vmatprep.subr.mxu0 0.0
  %2076 = vmatpush1.msra.mxu0 %v2052
  %2077 = vmatprep.subr.mxu0 0.0
  %2078 = vmatpush1.msra.mxu0 %v2053
  %2079 = vmatprep.subr.mxu0 0.0
  %2080 = vmatpush1.msra.mxu0 %v2054
  %2081 = vmatprep.subr.mxu0 0.0
  %2082 = vmatpush1.msra.mxu0 %v2055
  %2083 = vmatprep.subr.mxu0 0.0
  %2084 = vmatpush1.msra.mxu0 %v2056
  %2085 = vmatprep.subr.mxu0 0.0
  %2086 = vmatpush1.msra.mxu0 %v2057
  %2087 = vmatprep.subr.mxu0 0.0
  %2088 = vmatpush1.msra.mxu0 %v2058
  %2089 = vmatprep.subr.mxu0 0.0
  %2090 = vmatpush1.msra.mxu0 %v2059
  %2091 = vmatprep.subr.mxu0 0.0
  %2092 = vmatpush1.msra.mxu0 %v2060
  %2093 = vmatprep.subr.mxu0 0.0
  %2094 = vmatpush1.msra.mxu0 %v2061
  %2095 = vmatprep.subr.mxu0 0.0
  %2096 = vmatpush1.msra.mxu0 %v2062
  %2097 = vmatprep.subr.mxu0 0.0
  %2098 = vmatpush1.msra.mxu0 %v2063
  %2099 = vmatprep.subr.mxu0 0.0
  %2100 = vmatpush1.msra.mxu0 %v2064
  %2101 = vmatprep.subr.mxu0 0.0
  %2102 = vmatpush1.msra.mxu0 %v2065
  %2103 = vmatprep.subr.mxu0 0.0
  %2104 = vmatpush1.msra.mxu0 %v2066
  %2105 = vmatprep.subr.mxu0 0.0
  %2106 = vmatpush1.msra.mxu0 %v2067
  %2107 = vmatprep.subr.mxu0 0.0
  %2108 = vmatpush1.msra.mxu0 0.0
  %2109 = vmatprep.subr.mxu0 0.0
  %2110 = vmatpush1.msra.mxu0 0.0
  %2111 = vmatprep.subr.mxu0 0.0
  %2112 = vmatpush1.msra.mxu0 0.0
  %2113 = vmatprep.subr.mxu0 0.0
  %2114 = vmatpush1.msra.mxu0 0.0
  %2115 = vmatprep.subr.mxu0 0.0
  %2116 = vmatpush1.msra.mxu0 0.0
  %2117 = vmatprep.subr.mxu0 0.0
  %2118 = vmatpush1.msra.mxu0 0.0
  %2119 = vmatprep.subr.mxu0 0.0
  %2120 = vmatpush1.msra.mxu0 0.0
  %2121 = vmatprep.subr.mxu0 0.0
  %2122 = vmatpush1.msra.mxu0 0.0
  %2123 = vmatprep.subr.mxu0 0.0
  %2124 = vmatpush1.msra.mxu0 0.0
  %2125 = vmatprep.subr.mxu0 0.0
  %2126 = vmatpush1.msra.mxu0 0.0
  %2127 = vmatprep.subr.mxu0 0.0
  %2128 = vmatpush1.msra.mxu0 0.0
  %2129 = vmatprep.subr.mxu0 0.0
  %2130 = vmatpush1.msra.mxu0 0.0
  %2131 = vmatprep.subr.mxu0 0.0
  %2132 = vmatpush1.msra.mxu0 0.0
  %2133 = vmatprep.subr.mxu0 0.0
  %2134 = vmatpush1.msra.mxu0 0.0
  %2135 = vmatprep.subr.mxu0 0.0
  %2136 = vmatpush1.msra.mxu0 0.0
  %2137 = vmatprep.subr.mxu0 0.0
  %2138 = vmatpush1.msra.mxu0 0.0
  %2139 = vmatprep.mubr.f32.mxu0 0.0
  %2140 = vmatmul.mubr.f32.gmra.mrb[0].mxu0 %v2049
  %v2141 = vpop.f32.mrb[0].mxu0
  %v2142 = vadd.f32 %v2073, %v2141
  %v2143 = vpop.f32.mrb[0].mxu0
  %2144 = vdwg.mxu0
  %vm2145 = vcmask 156672
  %2146 = vst.msk [vmem:[%s5] sm:$0x3] %vm2145, %v2142
  // Predicated region
  $region22: #{cnn_forward.5} parent=0 // pred_check
    _
  $region23: #{cnn_forward.5} parent=0 // pred_check_branch
    %2148 = sbr.rel (0) target = $region25
  $region24: #{cnn_forward.5} parent=0 // pred_region
    _
  $region25: #{cnn_forward.5} parent=0 // pred_fallthru
    _
  // Predicated region
  $region26: #{cnn_forward.5} parent=0 // pred_check
    _
  $region27: #{cnn_forward.5} parent=0 // pred_check_branch
    %2150 = sbr.rel (0) target = $region29
  $region28: #{cnn_forward.5} parent=0 // pred_region
    _
  $region29: #{cnn_forward.5} parent=0 // pred_fallthru
    _

// kernel: cnn_forward.4
$region0: #{cnn_forward.4}
  #allocation0 [shape = 'u32[]', space=smem, size = 0x4, offset = 0x4, fixed_abs, tag = 'smem constant byte address 0x4 - core index']
  #allocation1 [shape = 'u32[144,128]{1,0:T(1,128)}', space=vmem, size = 0x12000, scoped, tag = 'internal scratch']
  %s0 = inlined_call_operand.vmem [shape: f32[2,16,22,32], index: 0, kind: input, shape index: {}]
  %s1 = inlined_call_operand.vmem [shape: f32[288,64], index: 1, kind: input, shape index: {}]
  %s2 = inlined_call_operand.hbm [shape: f32[1,64], index: 2, kind: input, shape index: {}]
  %s3 = inlined_call_operand.vmem [shape: f32[2,7,10,64], index: 3, kind: output, shape index: {}]
  %s4 = sld [smem:[#allocation0]]
  $region49: #{cnn_forward.4} parent=0
    _
  %s6 = ssub.s32 1, %s4
  %s7 = scalar_select 0, %s6, %s4
  $region1: #{cnn_forward.4} parent=0
    #allocation2 [shape = 'u8[512]{0}', space=vmem, size = 0x400, scoped, tag = 'input window, operand 2, single buffered']
    #allocation3 [shape = 's32[2]{0}', space=sflag, size = 0x8, scoped, tag = 'scoped memory for cnn_forward.4']
    %8 = vsyncpa [#allocation3], 0
    loop: start=0, step=1, limit=4
    $region2: #{cnn_forward.4} parent=1 // loop_pre_header
      _
    $region3: #{cnn_forward.4} parent=1 // loop_header
      %s10 = sphi 0, %s14
      %p11 = scmp.ge.s32.totalorder %s10, 4
      %s20 = sphi 0, %s22
      %s23 = sphi 0, %s20
      %s24 = sphi 0, %s23
      %s40 = sphi 0, %s24
      %s44 = sphi 0, %s44
      %s46 = sphi 0, %s44
      %s47 = sphi 0, %s46
      %s61 = sphi 0, %s47
      %s65 = sphi 0, %s65
      %s67 = sphi 0, %s65
      %s68 = sphi 0, %s67
      %s82 = sphi 0, %s68
      %s88 = sphi 0, %s90
      %s91 = sphi 0, %s88
      %s92 = sphi 0, %s91
      %s108 = sphi 0, %s92
    $region4: #{cnn_forward.4} parent=1 // loop_header_branch
      %13 = sbr.rel (%p11) target = $region8
    $region5: #{cnn_forward.4} parent=1 // loop_body
      %s15 = ssub.s32 %s10, 1
      %s16 = ssub.s32 %s10, 2
      %s17 = sadd.s32 %s10, 1
      %s18 = ssub.s32 %s10, %s17
      %p19 = scmp.eq.s32.totalorder %s18, 0
      %s21 = sadd.s32 %s20, 1
      %s22 = scalar_select %p19, %s20, %s21
      %p25 = pneg %p19
      %p26 = scmp.eq.s32.totalorder %s10, 1
      %p27 = por %p25, %p26
      %p28 = scmp.ne.s32.totalorder %s20, %s23
      %p29 = scmp.eq.s32.totalorder %s10, 0
      %p30 = por %p28, %p29
      %p31 = scmp.ne.s32.totalorder %s20, %s23
      %p32 = scmp.eq.s32.totalorder %s15, 1
      %p33 = por %p31, %p32
      %p34 = scmp.ne.s32.totalorder %s23, %s24
      %p35 = scmp.eq.s32.totalorder %s15, 0
      %p36 = por %p34, %p35
      %p37 = scmp.ne.s32.totalorder %s23, %s24
      %p38 = scmp.eq.s32.totalorder %s16, 1
      %p39 = por %p37, %p38
      %p41 = scmp.ne.s32.totalorder %s24, %s40
      %p42 = scmp.eq.s32.totalorder %s16, 0
      %p43 = por %p41, %p42
      %s45 = sadd.s32 %s44, 1
      %p48 = scmp.eq.s32.totalorder %s10, 1
      %p49 = scmp.ne.s32.totalorder %s44, %s46
      %p50 = scmp.eq.s32.totalorder %s10, 0
      %p51 = por %p49, %p50
      %p52 = scmp.ne.s32.totalorder %s44, %s46
      %p53 = scmp.eq.s32.totalorder %s15, 1
      %p54 = por %p52, %p53
      %p55 = scmp.ne.s32.totalorder %s46, %s47
      %p56 = scmp.eq.s32.totalorder %s15, 0
      %p57 = por %p55, %p56
      %p58 = scmp.ne.s32.totalorder %s46, %s47
      %p59 = scmp.eq.s32.totalorder %s16, 1
      %p60 = por %p58, %p59
      %p62 = scmp.ne.s32.totalorder %s47, %s61
      %p63 = scmp.eq.s32.totalorder %s16, 0
      %p64 = por %p62, %p63
      %s66 = sadd.s32 %s65, 1
      %p69 = scmp.eq.s32.totalorder %s10, 1
      %p70 = scmp.ne.s32.totalorder %s65, %s67
      %p71 = scmp.eq.s32.totalorder %s10, 0
      %p72 = por %p70, %p71
      %p73 = scmp.ne.s32.totalorder %s65, %s67
      %p74 = scmp.eq.s32.totalorder %s15, 1
      %p75 = por %p73, %p74
      %p76 = scmp.ne.s32.totalorder %s67, %s68
      %p77 = scmp.eq.s32.totalorder %s15, 0
      %p78 = por %p76, %p77
      %p79 = scmp.ne.s32.totalorder %s67, %s68
      %p80 = scmp.eq.s32.totalorder %s16, 1
      %p81 = por %p79, %p80
      %p83 = scmp.ne.s32.totalorder %s68, %s82
      %p84 = scmp.eq.s32.totalorder %s16, 0
      %p85 = por %p83, %p84
      %s86 = ssub.s32 %s10, %s17
      %p87 = scmp.eq.s32.totalorder %s86, 0
      %s89 = sadd.s32 %s88, 1
      %s90 = scalar_select %p87, %s88, %s89
      %p93 = pneg %p87
      %p94 = scmp.eq.s32.totalorder %s10, 1
      %p95 = por %p93, %p94
      %p96 = scmp.ne.s32.totalorder %s88, %s91
      %p97 = scmp.eq.s32.totalorder %s10, 0
      %p98 = por %p96, %p97
      %p99 = scmp.ne.s32.totalorder %s88, %s91
      %p100 = scmp.eq.s32.totalorder %s15, 1
      %p101 = por %p99, %p100
      %p102 = scmp.ne.s32.totalorder %s91, %s92
      %p103 = scmp.eq.s32.totalorder %s15, 0
      %p104 = por %p102, %p103
      %p105 = scmp.ne.s32.totalorder %s91, %s92
      %p106 = scmp.eq.s32.totalorder %s16, 1
      %p107 = por %p105, %p106
      %p109 = scmp.ne.s32.totalorder %s92, %s108
      %p110 = scmp.eq.s32.totalorder %s16, 0
      %p111 = por %p109, %p110
      %p112 = scmp.le.s32.totalorder 1, %s10
      %p113 = scmp.lt.s32.totalorder %s10, 3
      %p114 = pnand %p112, %p113
      %p115 = pneg %p114
      // Predicated region
      $region9: #{cnn_forward.4} parent=5 // pred_check
        _
      $region10: #{cnn_forward.4} parent=5 // pred_check_branch
        %117 = sbr.rel (%p114) target = $region12
      $region11: #{cnn_forward.4} parent=5 // pred_region
        %s118 = ssub.s32 %s10, 1
        // Predicated region
        $region13: #{cnn_forward.4} parent=11 // pred_check
          %p119 = pneg %p57
        $region14: #{cnn_forward.4} parent=11 // pred_check_branch
          %121 = sbr.rel (%p119) target = $region16
        $region15: #{cnn_forward.4} parent=11 // pred_region
          _
        $region16: #{cnn_forward.4} parent=11 // pred_fallthru
          _
        // Predicated region
        $region17: #{cnn_forward.4} parent=11 // pred_check
          %p122 = pneg %p78
        $region18: #{cnn_forward.4} parent=11 // pred_check_branch
          %124 = sbr.rel (%p122) target = $region20
        $region19: #{cnn_forward.4} parent=11 // pred_region
          %s126 = ssub.s32 16, 16
          %127 = vsyncadd [#allocation3], %s126
          %s129 = sshll.u32 [#allocation2], 4
          %s130 = int_to_ptr.vmem [resolvable:$true] %s129
          %132 = dma.hbm_to_vmem [thread:$0]  %s2, 16, %s130, [#allocation3]
        $region20: #{cnn_forward.4} parent=11 // pred_fallthru
          _
      $region12: #{cnn_forward.4} parent=5 // pred_fallthru
        _
      %p133 = scmp.lt.s32.totalorder %s10, 2
      // Predicated region
      $region21: #{cnn_forward.4} parent=5 // pred_check
        %p134 = pneg %p133
      $region22: #{cnn_forward.4} parent=5 // pred_check_branch
        %136 = sbr.rel (%p134) target = $region24
      $region23: #{cnn_forward.4} parent=5 // pred_region
        // Predicated region
        $region25: #{cnn_forward.4} parent=23 // pred_check
          %p137 = pneg %p30
        $region26: #{cnn_forward.4} parent=23 // pred_check_branch
          %139 = sbr.rel (%p137) target = $region28
        $region27: #{cnn_forward.4} parent=23 // pred_region
          %p140 = scmp.lt.s32.totalorder %s10, 1
          %s141 = scalar_select %p140, %s10, 1
          %s142 = smul.addr %s141, 48
          %s143 = smul.addr %s142, 8
          %s144 = scalar_lea.vmem %s0, %s143
        $region28: #{cnn_forward.4} parent=23 // pred_fallthru
          _
      $region24: #{cnn_forward.4} parent=5 // pred_fallthru
        _
      %p145 = scmp.le.s32.totalorder 1, %s10
      %p146 = scmp.lt.s32.totalorder %s10, 3
      %p147 = pnand %p145, %p146
      %p148 = pneg %p147
      // Predicated region
      $region29: #{cnn_forward.4} parent=5 // pred_check
        _
      $region30: #{cnn_forward.4} parent=5 // pred_check_branch
        %150 = sbr.rel (%p147) target = $region32
      $region31: #{cnn_forward.4} parent=5 // pred_region
        %s151 = ssub.s32 %s10, 1
        // Predicated region
        $region33: #{cnn_forward.4} parent=31 // pred_check
          %p152 = pneg %p78
        $region34: #{cnn_forward.4} parent=31 // pred_check_branch
          %154 = sbr.rel (%p152) target = $region36
        $region35: #{cnn_forward.4} parent=31 // pred_region
          %155 = dma.done [#allocation3], 16
        $region36: #{cnn_forward.4} parent=31 // pred_fallthru
          _
        %p156 = scmp.lt.s32.totalorder %s15, 1
        %s157 = scalar_select %p156, %s15, 1
        %s158 = smul.addr %s157, 48
        %s159 = smul.addr %s158, 8
        %s160 = scalar_lea.vmem %s0, %s159
        %p161 = pneg %p36
        %p162 = pneg %p33
        %p163 = pneg %p57
        %p164 = pneg %p54
        %p165 = pneg %p78
        %p166 = pneg %p75
        %p167 = pneg %p104
        %p168 = pneg %p101
        %p169 = scmp.lt.s32.totalorder %s15, 1
        %s170 = scalar_select %p169, %s15, 1
        %s171 = smul.addr %s170, 14
        %s172 = smul.addr %s171, 8
        %s173 = scalar_lea.vmem %s3, %s172
        %p174 = scmp.lt.s32.totalorder %s15, 1
        %s175 = scalar_select %p174, %s15, 1
        %s176 = smul.addr %s175, 48
        %s177 = smul.addr %s176, 8
        %s178 = scalar_lea.vmem %s0, %s177
        %p179 = scmp.lt.s32.totalorder %s15, 1
        %s180 = scalar_select %p179, %s15, 1
        %s181 = smul.addr %s180, 14
        %s182 = smul.addr %s181, 8
        %s183 = scalar_lea.vmem %s3, %s182
        %v184 = vld [vmem:[%s178] sm:$0xff]
        %v185 = vld [vmem:[%s178 + $0x8] sm:$0xff]
        %v186 = vld [vmem:[%s178 + $0x10] sm:$0xf]
        %v187 = vld [vmem:[%s178 + $0x1] sm:$0xff]
        %v188 = vld [vmem:[%s178 + $0x9] sm:$0xff]
        %v189 = vld [vmem:[%s178 + $0x11] sm:$0xf]
        %v190 = vld [vmem:[%s178 + $0x2] sm:$0xff]
        %v191 = vld [vmem:[%s178 + $0xa] sm:$0xff]
        %v192 = vld [vmem:[%s178 + $0x12] sm:$0xf]
        %s193 = scalar_lea.vmem %s178, 24
        %v194 = vld [vmem:[%s193] sm:$0xff]
        %v195 = vld [vmem:[%s193 + $0x8] sm:$0xff]
        %v196 = vld [vmem:[%s193 + $0x10] sm:$0xf]
        %v197 = vld [vmem:[%s193 + $0x1] sm:$0xff]
        %v198 = vld [vmem:[%s193 + $0x9] sm:$0xff]
        %v199 = vld [vmem:[%s193 + $0x11] sm:$0xf]
        %v200 = vld [vmem:[%s193 + $0x2] sm:$0xff]
        %v201 = vld [vmem:[%s193 + $0xa] sm:$0xff]
        %v202 = vld [vmem:[%s193 + $0x12] sm:$0xf]
        %s203 = scalar_lea.vmem %s178, 48
        %v204 = vld [vmem:[%s203] sm:$0xff]
        %v205 = vld [vmem:[%s203 + $0x8] sm:$0xff]
        %v206 = vld [vmem:[%s203 + $0x10] sm:$0xf]
        %v207 = vld [vmem:[%s203 + $0x1] sm:$0xff]
        %v208 = vld [vmem:[%s203 + $0x9] sm:$0xff]
        %v209 = vld [vmem:[%s203 + $0x11] sm:$0xf]
        %v210 = vld [vmem:[%s203 + $0x2] sm:$0xff]
        %v211 = vld [vmem:[%s203 + $0xa] sm:$0xff]
        %v212 = vld [vmem:[%s203 + $0x12] sm:$0xf]
        %216 = vrot.lane.b32.xlu0 %v187, 32
        %v217 = vpop.permute.xlu0 %216
        %218 = vrot.lane.b32.xlu0 %v188, 32
        %v219 = vpop.permute.xlu0 %218
        %220 = vrot.lane.b32.xlu0 %v189, 32
        %v221 = vpop.permute.xlu0 %220
        %228 = vrot.lane.b32.xlu0 %v190, 64
        %v229 = vpop.permute.xlu0 %228
        %230 = vrot.lane.b32.xlu0 %v191, 64
        %v231 = vpop.permute.xlu0 %230
        %232 = vrot.lane.b32.xlu0 %v192, 64
        %v233 = vpop.permute.xlu0 %232
        %240 = vrot.lane.b32.xlu0 %v194, 96
        %v241 = vpop.permute.xlu0 %240
        %242 = vrot.lane.b32.xlu0 %v195, 96
        %v243 = vpop.permute.xlu0 %242
        %244 = vrot.lane.b32.xlu0 %v196, 96
        %v245 = vpop.permute.xlu0 %244
        %252 = vrot.lane.b32.xlu0 %v200, 32
        %v253 = vpop.permute.xlu0 %252
        %254 = vrot.lane.b32.xlu0 %v201, 32
        %v255 = vpop.permute.xlu0 %254
        %256 = vrot.lane.b32.xlu0 %v202, 32
        %v257 = vpop.permute.xlu0 %256
        %264 = vrot.lane.b32.xlu0 %v204, 64
        %v265 = vpop.permute.xlu0 %264
        %266 = vrot.lane.b32.xlu0 %v205, 64
        %v267 = vpop.permute.xlu0 %266
        %268 = vrot.lane.b32.xlu0 %v206, 64
        %v269 = vpop.permute.xlu0 %268
        %276 = vrot.lane.b32.xlu0 %v207, 96
        %v277 = vpop.permute.xlu0 %276
        %278 = vrot.lane.b32.xlu0 %v208, 96
        %v279 = vpop.permute.xlu0 %278
        %280 = vrot.lane.b32.xlu0 %v209, 96
        %v281 = vpop.permute.xlu0 %280
        %vm285 = vcmask 261120
        %v286 = vsel %vm285, %v184, %v217
        %v287 = vsel %vm285, %v185, %v219
        %v288 = vsel %vm285, %v186, %v221
        %vm289 = vcmask 523264
        %v290 = vsel %vm289, %v286, %v229
        %v291 = vsel %vm289, %v287, %v231
        %v292 = vsel %vm289, %v288, %v233
        %vm293 = vcmask 785408
        %v294 = vsel %vm293, %v290, %v241
        %v295 = vsel %vm293, %v291, %v243
        %v296 = vsel %vm293, %v292, %v245
        %v297 = vsel %vm285, %v197, %v253
        %v298 = vsel %vm285, %v198, %v255
        %v299 = vsel %vm285, %v199, %v257
        %v300 = vsel %vm289, %v297, %v265
        %v301 = vsel %vm289, %v298, %v267
        %v302 = vsel %vm289, %v299, %v269
        %v303 = vsel %vm293, %v300, %v277
        %v304 = vsel %vm293, %v301, %v279
        %v305 = vsel %vm293, %v302, %v281
        %v306 = vld [vmem:[%s1] sm:$0xff]
        %v307 = vld [vmem:[%s1 + $0x8] sm:$0xff]
        %v308 = vld [vmem:[%s1 + $0x10] sm:$0xff]
        %v309 = vld [vmem:[%s1 + $0x18] sm:$0xff]
        %v310 = vld [vmem:[%s1 + $0x20] sm:$0xff]
        %v311 = vld [vmem:[%s1 + $0x28] sm:$0xff]
        %v312 = vld [vmem:[%s1 + $0x30] sm:$0xff]
        %v313 = vld [vmem:[%s1 + $0x38] sm:$0xff]
        %v314 = vld [vmem:[%s1 + $0x40] sm:$0xff]
        %v315 = vld [vmem:[%s1 + $0x48] sm:$0xff]
        %v316 = vld [vmem:[%s1 + $0x50] sm:$0xff]
        %v317 = vld [vmem:[%s1 + $0x58] sm:$0xff]
        %v318 = vld [vmem:[%s1 + $0x60] sm:$0xff]
        %v319 = vld [vmem:[%s1 + $0x68] sm:$0xff]
        %v320 = vld [vmem:[%s1 + $0x70] sm:$0xff]
        %v321 = vld [vmem:[%s1 + $0x78] sm:$0xff]
        %v322 = vld [vmem:[%s1 + $0x80] sm:$0xff]
        %v323 = vld [vmem:[%s1 + $0x88] sm:$0xff]
        %v324 = vld [vmem:[%s1 + $0x90] sm:$0xff]
        %v325 = vld [vmem:[%s1 + $0x98] sm:$0xff]
        %v326 = vld [vmem:[%s1 + $0xa0] sm:$0xff]
        %v327 = vld [vmem:[%s1 + $0xa8] sm:$0xff]
        %v328 = vld [vmem:[%s1 + $0xb0] sm:$0xff]
        %v329 = vld [vmem:[%s1 + $0xb8] sm:$0xff]
        %v330 = vld [vmem:[%s1 + $0xc0] sm:$0xff]
        %v331 = vld [vmem:[%s1 + $0xc8] sm:$0xff]
        %v332 = vld [vmem:[%s1 + $0xd0] sm:$0xff]
        %v333 = vld [vmem:[%s1 + $0xd8] sm:$0xff]
        %v334 = vld [vmem:[%s1 + $0xe0] sm:$0xff]
        %v335 = vld [vmem:[%s1 + $0xe8] sm:$0xff]
        %v336 = vld [vmem:[%s1 + $0xf0] sm:$0xff]
        %v337 = vld [vmem:[%s1 + $0xf8] sm:$0xff]
        %v338 = vld [vmem:[%s1 + $0x100] sm:$0xff]
        %v339 = vld [vmem:[%s1 + $0x108] sm:$0xff]
        %v340 = vld [vmem:[%s1 + $0x110] sm:$0xff]
        %v341 = vld [vmem:[%s1 + $0x118] sm:$0xff]
        %v342 = vld [vmem:[#allocation2] sm:$0x1]
        %v344 = vlaneseq
        %v345 = vshrl.u32 %v344, 7
        %v346 = vsub.s32 0, %v345
        %v347 = vrot.slane %v342, %v346
        %v350 = vsel %vm285, %v210, 0
        %v353 = vsel %vm285, %v211, 0
        %v356 = vsel %vm285, %v212, 0
        %358 = vmatprep.subr.mxu0 0.0
        %359 = vmatpush1.msra.mxu0 %v306
        %360 = vmatprep.subr.mxu0 0.0
        %361 = vmatpush1.msra.mxu0 %v307
        %362 = vmatprep.subr.mxu0 0.0
        %363 = vmatpush1.msra.mxu0 %v308
        %364 = vmatprep.subr.mxu0 0.0
        %365 = vmatpush1.msra.mxu0 %v309
        %366 = vmatprep.subr.mxu0 0.0
        %367 = vmatpush1.msra.mxu0 %v310
        %368 = vmatprep.subr.mxu0 0.0
        %369 = vmatpush1.msra.mxu0 %v311
        %370 = vmatprep.subr.mxu0 0.0
        %371 = vmatpush1.msra.mxu0 %v312
        %372 = vmatprep.subr.mxu0 0.0
        %373 = vmatpush1.msra.mxu0 %v313
        %374 = vmatprep.subr.mxu0 0.0
        %375 = vmatpush1.msra.mxu0 %v314
        %376 = vmatprep.subr.mxu0 0.0
        %377 = vmatpush1.msra.mxu0 %v315
        %378 = vmatprep.subr.mxu0 0.0
        %379 = vmatpush1.msra.mxu0 %v316
        %380 = vmatprep.subr.mxu0 0.0
        %381 = vmatpush1.msra.mxu0 %v317
        %382 = vmatprep.subr.mxu0 0.0
        %383 = vmatpush1.msra.mxu0 %v318
        %384 = vmatprep.subr.mxu0 0.0
        %385 = vmatpush1.msra.mxu0 %v319
        %386 = vmatprep.subr.mxu0 0.0
        %387 = vmatpush1.msra.mxu0 %v320
        %388 = vmatprep.subr.mxu0 0.0
        %389 = vmatpush1.msra.mxu0 %v321
        %390 = vmatprep.subr.mxu0 0.0
        %391 = vmatpush1.msra.mxu0 %v322
        %392 = vmatprep.subr.mxu0 0.0
        %393 = vmatpush1.msra.mxu0 %v323
        %394 = vmatprep.subr.mxu0 0.0
        %395 = vmatpush1.msra.mxu0 %v324
        %396 = vmatprep.subr.mxu0 0.0
        %397 = vmatpush1.msra.mxu0 %v325
        %398 = vmatprep.subr.mxu0 0.0
        %399 = vmatpush1.msra.mxu0 %v326
        %400 = vmatprep.subr.mxu0 0.0
        %401 = vmatpush1.msra.mxu0 %v327
        %402 = vmatprep.subr.mxu0 0.0
        %403 = vmatpush1.msra.mxu0 %v328
        %404 = vmatprep.subr.mxu0 0.0
        %405 = vmatpush1.msra.mxu0 %v329
        %406 = vmatprep.subr.mxu0 0.0
        %407 = vmatpush1.msra.mxu0 %v330
        %408 = vmatprep.subr.mxu0 0.0
        %409 = vmatpush1.msra.mxu0 %v331
        %410 = vmatprep.subr.mxu0 0.0
        %411 = vmatpush1.msra.mxu0 %v332
        %412 = vmatprep.subr.mxu0 0.0
        %413 = vmatpush1.msra.mxu0 %v333
        %414 = vmatprep.subr.mxu0 0.0
        %415 = vmatpush1.msra.mxu0 %v334
        %416 = vmatprep.subr.mxu0 0.0
        %417 = vmatpush1.msra.mxu0 %v335
        %418 = vmatprep.subr.mxu0 0.0
        %419 = vmatpush1.msra.mxu0 %v336
        %420 = vmatprep.subr.mxu0 0.0
        %421 = vmatpush1.msra.mxu0 %v337
        %422 = vmatprep.mubr.f32.mxu0 %v303
        %423 = vmatmul.mubr.f32.gmra.mrb[0].mxu0 %v294
        %v424 = vpop.f32.mrb[0].mxu0
        %v425 = vadd.f32 %v347, %v424
        %v426 = vpop.f32.mrb[0].mxu0
        %427 = vmatprep.mubr.f32.mxu0 %v304
        %428 = vmatmul.mubr.f32.gmra.mrb[0].mxu0 %v295
        %v429 = vpop.f32.mrb[0].mxu0
        %v430 = vadd.f32 %v347, %v429
        %v431 = vpop.f32.mrb[0].mxu0
        %432 = vmatprep.mubr.f32.mxu0 %v305
        %433 = vmatmul.mubr.f32.gmra.mrb[0].mxu0 %v296
        %v434 = vpop.f32.mrb[0].mxu0
        %v435 = vadd.f32 %v347, %v434
        %v436 = vpop.f32.mrb[0].mxu0
        %437 = vdwg.mxu0
        %438 = vmatprep.subr.mxu0 0.0
        %439 = vmatpush1.msra.mxu0 %v338
        %440 = vmatprep.subr.mxu0 0.0
        %441 = vmatpush1.msra.mxu0 %v339
        %442 = vmatprep.subr.mxu0 0.0
        %443 = vmatpush1.msra.mxu0 %v340
        %444 = vmatprep.subr.mxu0 0.0
        %445 = vmatpush1.msra.mxu0 %v341
        %446 = vmatprep.subr.mxu0 0.0
        %447 = vmatpush1.msra.mxu0 0.0
        %448 = vmatprep.subr.mxu0 0.0
        %449 = vmatpush1.msra.mxu0 0.0
        %450 = vmatprep.subr.mxu0 0.0
        %451 = vmatpush1.msra.mxu0 0.0
        %452 = vmatprep.subr.mxu0 0.0
        %453 = vmatpush1.msra.mxu0 0.0
        %454 = vmatprep.subr.mxu0 0.0
        %455 = vmatpush1.msra.mxu0 0.0
        %456 = vmatprep.subr.mxu0 0.0
        %457 = vmatpush1.msra.mxu0 0.0
        %458 = vmatprep.subr.mxu0 0.0
        %459 = vmatpush1.msra.mxu0 0.0
        %460 = vmatprep.subr.mxu0 0.0
        %461 = vmatpush1.msra.mxu0 0.0
        %462 = vmatprep.subr.mxu0 0.0
        %463 = vmatpush1.msra.mxu0 0.0
        %464 = vmatprep.subr.mxu0 0.0
        %465 = vmatpush1.msra.mxu0 0.0
        %466 = vmatprep.subr.mxu0 0.0
        %467 = vmatpush1.msra.mxu0 0.0
        %468 = vmatprep.subr.mxu0 0.0
        %469 = vmatpush1.msra.mxu0 0.0
        %470 = vmatprep.subr.mxu0 0.0
        %471 = vmatpush1.msra.mxu0 0.0
        %472 = vmatprep.subr.mxu0 0.0
        %473 = vmatpush1.msra.mxu0 0.0
        %474 = vmatprep.subr.mxu0 0.0
        %475 = vmatpush1.msra.mxu0 0.0
        %476 = vmatprep.subr.mxu0 0.0
        %477 = vmatpush1.msra.mxu0 0.0
        %478 = vmatprep.subr.mxu0 0.0
        %479 = vmatpush1.msra.mxu0 0.0
        %480 = vmatprep.subr.mxu0 0.0
        %481 = vmatpush1.msra.mxu0 0.0
        %482 = vmatprep.subr.mxu0 0.0
        %483 = vmatpush1.msra.mxu0 0.0
        %484 = vmatprep.subr.mxu0 0.0
        %485 = vmatpush1.msra.mxu0 0.0
        %486 = vmatprep.subr.mxu0 0.0
        %487 = vmatpush1.msra.mxu0 0.0
        %488 = vmatprep.subr.mxu0 0.0
        %489 = vmatpush1.msra.mxu0 0.0
        %490 = vmatprep.subr.mxu0 0.0
        %491 = vmatpush1.msra.mxu0 0.0
        %492 = vmatprep.subr.mxu0 0.0
        %493 = vmatpush1.msra.mxu0 0.0
        %494 = vmatprep.subr.mxu0 0.0
        %495 = vmatpush1.msra.mxu0 0.0
        %496 = vmatprep.subr.mxu0 0.0
        %497 = vmatpush1.msra.mxu0 0.0
        %498 = vmatprep.subr.mxu0 0.0
        %499 = vmatpush1.msra.mxu0 0.0
        %500 = vmatprep.subr.mxu0 0.0
        %501 = vmatpush1.msra.mxu0 0.0
        %502 = vmatprep.mubr.f32.mxu0 0.0
        %503 = vmatmul.mubr.f32.gmra.mrb[0].mxu0 %v350
        %v504 = vpop.f32.mrb[0].mxu0
        %v505 = vadd.f32 %v425, %v504
        %v506 = vpop.f32.mrb[0].mxu0
        %507 = vmatprep.mubr.f32.mxu0 0.0
        %508 = vmatmul.mubr.f32.gmra.mrb[0].mxu0 %v353
        %v509 = vpop.f32.mrb[0].mxu0
        %v510 = vadd.f32 %v430, %v509
        %v511 = vpop.f32.mrb[0].mxu0
        %512 = vmatprep.mubr.f32.mxu0 0.0
        %513 = vmatmul.mubr.f32.gmra.mrb[0].mxu0 %v356
        %v514 = vpop.f32.mrb[0].mxu0
        %v515 = vadd.f32 %v435, %v514
        %v516 = vpop.f32.mrb[0].mxu0
        %517 = vdwg.mxu0
        %v518 = vmax.f32 %v505, 0.0
        %v519 = vmax.f32 %v510, 0.0
        %v520 = vmax.f32 %v515, 0.0
        %s521 = scalar_lea.vmem %s178, 72
        %v522 = vld [vmem:[%s521] sm:$0xff]
        %v523 = vld [vmem:[%s521 + $0x8] sm:$0xff]
        %v524 = vld [vmem:[%s521 + $0x10] sm:$0xf]
        %v525 = vld [vmem:[%s521 + $0x1] sm:$0xff]
        %v526 = vld [vmem:[%s521 + $0x9] sm:$0xff]
        %v527 = vld [vmem:[%s521 + $0x11] sm:$0xf]
        %v528 = vld [vmem:[%s521 + $0x2] sm:$0xff]
        %v529 = vld [vmem:[%s521 + $0xa] sm:$0xff]
        %v530 = vld [vmem:[%s521 + $0x12] sm:$0xf]
        %534 = vrot.lane.b32.xlu0 %v197, 32
        %v535 = vpop.permute.xlu0 %534
        %536 = vrot.lane.b32.xlu0 %v198, 32
        %v537 = vpop.permute.xlu0 %536
        %538 = vrot.lane.b32.xlu0 %v199, 32
        %v539 = vpop.permute.xlu0 %538
        %543 = vrot.lane.b32.xlu0 %v200, 64
        %v544 = vpop.permute.xlu0 %543
        %545 = vrot.lane.b32.xlu0 %v201, 64
        %v546 = vpop.permute.xlu0 %545
        %547 = vrot.lane.b32.xlu0 %v202, 64
        %v548 = vpop.permute.xlu0 %547
        %552 = vrot.lane.b32.xlu0 %v204, 96
        %v553 = vpop.permute.xlu0 %552
        %554 = vrot.lane.b32.xlu0 %v205, 96
        %v555 = vpop.permute.xlu0 %554
        %556 = vrot.lane.b32.xlu0 %v206, 96
        %v557 = vpop.permute.xlu0 %556
        %561 = vrot.lane.b32.xlu0 %v210, 32
        %v562 = vpop.permute.xlu0 %561
        %563 = vrot.lane.b32.xlu0 %v211, 32
        %v564 = vpop.permute.xlu0 %563
        %565 = vrot.lane.b32.xlu0 %v212, 32
        %v566 = vpop.permute.xlu0 %565
        %573 = vrot.lane.b32.xlu0 %v522, 64
        %v574 = vpop.permute.xlu0 %573
        %575 = vrot.lane.b32.xlu0 %v523, 64
        %v576 = vpop.permute.xlu0 %575
        %577 = vrot.lane.b32.xlu0 %v524, 64
        %v578 = vpop.permute.xlu0 %577
        %585 = vrot.lane.b32.xlu0 %v525, 96
        %v586 = vpop.permute.xlu0 %585
        %587 = vrot.lane.b32.xlu0 %v526, 96
        %v588 = vpop.permute.xlu0 %587
        %589 = vrot.lane.b32.xlu0 %v527, 96
        %v590 = vpop.permute.xlu0 %589
        %v594 = vsel %vm285, %v194, %v535
        %v595 = vsel %vm285, %v195, %v537
        %v596 = vsel %vm285, %v196, %v539
        %v597 = vsel %vm289, %v594, %v544
        %v598 = vsel %vm289, %v595, %v546
        %v599 = vsel %vm289, %v596, %v548
        %v600 = vsel %vm293, %v597, %v553
        %v601 = vsel %vm293, %v598, %v555
        %v602 = vsel %vm293, %v599, %v557
        %v603 = vsel %vm285, %v207, %v562
        %v604 = vsel %vm285, %v208, %v564
        %v605 = vsel %vm285, %v209, %v566
        %v606 = vsel %vm289, %v603, %v574
        %v607 = vsel %vm289, %v604, %v576
        %v608 = vsel %vm289, %v605, %v578
        %v609 = vsel %vm293, %v606, %v586
        %v610 = vsel %vm293, %v607, %v588
        %v611 = vsel %vm293, %v608, %v590
        %v613 = vsel %vm285, %v528, 0
        %v616 = vsel %vm285, %v529, 0
        %v619 = vsel %vm285, %v530, 0
        %621 = vmatprep.subr.mxu0 0.0
        %622 = vmatpush1.msra.mxu0 %v306
        %623 = vmatprep.subr.mxu0 0.0
        %624 = vmatpush1.msra.mxu0 %v307
        %625 = vmatprep.subr.mxu0 0.0
        %626 = vmatpush1.msra.mxu0 %v308
        %627 = vmatprep.subr.mxu0 0.0
        %628 = vmatpush1.msra.mxu0 %v309
        %629 = vmatprep.subr.mxu0 0.0
        %630 = vmatpush1.msra.mxu0 %v310
        %631 = vmatprep.subr.mxu0 0.0
        %632 = vmatpush1.msra.mxu0 %v311
        %633 = vmatprep.subr.mxu0 0.0
        %634 = vmatpush1.msra.mxu0 %v312
        %635 = vmatprep.subr.mxu0 0.0
        %636 = vmatpush1.msra.mxu0 %v313
        %637 = vmatprep.subr.mxu0 0.0
        %638 = vmatpush1.msra.mxu0 %v314
        %639 = vmatprep.subr.mxu0 0.0
        %640 = vmatpush1.msra.mxu0 %v315
        %641 = vmatprep.subr.mxu0 0.0
        %642 = vmatpush1.msra.mxu0 %v316
        %643 = vmatprep.subr.mxu0 0.0
        %644 = vmatpush1.msra.mxu0 %v317
        %645 = vmatprep.subr.mxu0 0.0
        %646 = vmatpush1.msra.mxu0 %v318
        %647 = vmatprep.subr.mxu0 0.0
        %648 = vmatpush1.msra.mxu0 %v319
        %649 = vmatprep.subr.mxu0 0.0
        %650 = vmatpush1.msra.mxu0 %v320
        %651 = vmatprep.subr.mxu0 0.0
        %652 = vmatpush1.msra.mxu0 %v321
        %653 = vmatprep.subr.mxu0 0.0
        %654 = vmatpush1.msra.mxu0 %v322
        %655 = vmatprep.subr.mxu0 0.0
        %656 = vmatpush1.msra.mxu0 %v323
        %657 = vmatprep.subr.mxu0 0.0
        %658 = vmatpush1.msra.mxu0 %v324
        %659 = vmatprep.subr.mxu0 0.0
        %660 = vmatpush1.msra.mxu0 %v325
        %661 = vmatprep.subr.mxu0 0.0
        %662 = vmatpush1.msra.mxu0 %v326
        %663 = vmatprep.subr.mxu0 0.0
        %664 = vmatpush1.msra.mxu0 %v327
        %665 = vmatprep.subr.mxu0 0.0
        %666 = vmatpush1.msra.mxu0 %v328
        %667 = vmatprep.subr.mxu0 0.0
        %668 = vmatpush1.msra.mxu0 %v329
        %669 = vmatprep.subr.mxu0 0.0
        %670 = vmatpush1.msra.mxu0 %v330
        %671 = vmatprep.subr.mxu0 0.0
        %672 = vmatpush1.msra.mxu0 %v331
        %673 = vmatprep.subr.mxu0 0.0
        %674 = vmatpush1.msra.mxu0 %v332
        %675 = vmatprep.subr.mxu0 0.0
        %676 = vmatpush1.msra.mxu0 %v333
        %677 = vmatprep.subr.mxu0 0.0
        %678 = vmatpush1.msra.mxu0 %v334
        %679 = vmatprep.subr.mxu0 0.0
        %680 = vmatpush1.msra.mxu0 %v335
        %681 = vmatprep.subr.mxu0 0.0
        %682 = vmatpush1.msra.mxu0 %v336
        %683 = vmatprep.subr.mxu0 0.0
        %684 = vmatpush1.msra.mxu0 %v337
        %685 = vmatprep.mubr.f32.mxu0 %v609
        %686 = vmatmul.mubr.f32.gmra.mrb[0].mxu0 %v600
        %v687 = vpop.f32.mrb[0].mxu0
        %v688 = vadd.f32 %v347, %v687
        %v689 = vpop.f32.mrb[0].mxu0
        %690 = vmatprep.mubr.f32.mxu0 %v610
        %691 = vmatmul.mubr.f32.gmra.mrb[0].mxu0 %v601
        %v692 = vpop.f32.mrb[0].mxu0
        %v693 = vadd.f32 %v347, %v692
        %v694 = vpop.f32.mrb[0].mxu0
        %695 = vmatprep.mubr.f32.mxu0 %v611
        %696 = vmatmul.mubr.f32.gmra.mrb[0].mxu0 %v602
        %v697 = vpop.f32.mrb[0].mxu0
        %v698 = vadd.f32 %v347, %v697
        %v699 = vpop.f32.mrb[0].mxu0
        %700 = vdwg.mxu0
        %701 = vmatprep.subr.mxu0 0.0
        %702 = vmatpush1.msra.mxu0 %v338
        %703 = vmatprep.subr.mxu0 0.0
        %704 = vmatpush1.msra.mxu0 %v339
        %705 = vmatprep.subr.mxu0 0.0
        %706 = vmatpush1.msra.mxu0 %v340
        %707 = vmatprep.subr.mxu0 0.0
        %708 = vmatpush1.msra.mxu0 %v341
        %709 = vmatprep.subr.mxu0 0.0
        %710 = vmatpush1.msra.mxu0 0.0
        %711 = vmatprep.subr.mxu0 0.0
        %712 = vmatpush1.msra.mxu0 0.0
        %713 = vmatprep.subr.mxu0 0.0
        %714 = vmatpush1.msra.mxu0 0.0
        %715 = vmatprep.subr.mxu0 0.0
        %716 = vmatpush1.msra.mxu0 0.0
        %717 = vmatprep.subr.mxu0 0.0
        %718 = vmatpush1.msra.mxu0 0.0
        %719 = vmatprep.subr.mxu0 0.0
        %720 = vmatpush1.msra.mxu0 0.0
        %721 = vmatprep.subr.mxu0 0.0
        %722 = vmatpush1.msra.mxu0 0.0
        %723 = vmatprep.subr.mxu0 0.0
        %724 = vmatpush1.msra.mxu0 0.0
        %725 = vmatprep.subr.mxu0 0.0
        %726 = vmatpush1.msra.mxu0 0.0
        %727 = vmatprep.subr.mxu0 0.0
        %728 = vmatpush1.msra.mxu0 0.0
        %729 = vmatprep.subr.mxu0 0.0
        %730 = vmatpush1.msra.mxu0 0.0
        %731 = vmatprep.subr.mxu0 0.0
        %732 = vmatpush1.msra.mxu0 0.0
        %733 = vmatprep.subr.mxu0 0.0
        %734 = vmatpush1.msra.mxu0 0.0
        %735 = vmatprep.subr.mxu0 0.0
        %736 = vmatpush1.msra.mxu0 0.0
        %737 = vmatprep.subr.mxu0 0.0
        %738 = vmatpush1.msra.mxu0 0.0
        %739 = vmatprep.subr.mxu0 0.0
        %740 = vmatpush1.msra.mxu0 0.0
        %741 = vmatprep.subr.mxu0 0.0
        %742 = vmatpush1.msra.mxu0 0.0
        %743 = vmatprep.subr.mxu0 0.0
        %744 = vmatpush1.msra.mxu0 0.0
        %745 = vmatprep.subr.mxu0 0.0
        %746 = vmatpush1.msra.mxu0 0.0
        %747 = vmatprep.subr.mxu0 0.0
        %748 = vmatpush1.msra.mxu0 0.0
        %749 = vmatprep.subr.mxu0 0.0
        %750 = vmatpush1.msra.mxu0 0.0
        %751 = vmatprep.subr.mxu0 0.0
        %752 = vmatpush1.msra.mxu0 0.0
        %753 = vmatprep.subr.mxu0 0.0
        %754 = vmatpush1.msra.mxu0 0.0
        %755 = vmatprep.subr.mxu0 0.0
        %756 = vmatpush1.msra.mxu0 0.0
        %757 = vmatprep.subr.mxu0 0.0
        %758 = vmatpush1.msra.mxu0 0.0
        %759 = vmatprep.subr.mxu0 0.0
        %760 = vmatpush1.msra.mxu0 0.0
        %761 = vmatprep.subr.mxu0 0.0
        %762 = vmatpush1.msra.mxu0 0.0
        %763 = vmatprep.subr.mxu0 0.0
        %764 = vmatpush1.msra.mxu0 0.0
        %765 = vmatprep.mubr.f32.mxu0 0.0
        %766 = vmatmul.mubr.f32.gmra.mrb[0].mxu0 %v613
        %v767 = vpop.f32.mrb[0].mxu0
        %v768 = vadd.f32 %v688, %v767
        %v769 = vpop.f32.mrb[0].mxu0
        %770 = vmatprep.mubr.f32.mxu0 0.0
        %771 = vmatmul.mubr.f32.gmra.mrb[0].mxu0 %v616
        %v772 = vpop.f32.mrb[0].mxu0
        %v773 = vadd.f32 %v693, %v772
        %v774 = vpop.f32.mrb[0].mxu0
        %775 = vmatprep.mubr.f32.mxu0 0.0
        %776 = vmatmul.mubr.f32.gmra.mrb[0].mxu0 %v619
        %v777 = vpop.f32.mrb[0].mxu0
        %v778 = vadd.f32 %v698, %v777
        %v779 = vpop.f32.mrb[0].mxu0
        %780 = vdwg.mxu0
        %v781 = vmax.f32 %v768, 0.0
        %v782 = vmax.f32 %v773, 0.0
        %v783 = vmax.f32 %v778, 0.0
        %s784 = scalar_lea.vmem %s178, 96
        %v785 = vld [vmem:[%s784] sm:$0xff]
        %v786 = vld [vmem:[%s784 + $0x8] sm:$0xff]
        %v787 = vld [vmem:[%s784 + $0x10] sm:$0xf]
        %v788 = vld [vmem:[%s784 + $0x1] sm:$0xff]
        %v789 = vld [vmem:[%s784 + $0x9] sm:$0xff]
        %v790 = vld [vmem:[%s784 + $0x11] sm:$0xf]
        %v791 = vld [vmem:[%s784 + $0x2] sm:$0xff]
        %v792 = vld [vmem:[%s784 + $0xa] sm:$0xff]
        %v793 = vld [vmem:[%s784 + $0x12] sm:$0xf]
        %794 = vrot.lane.b32.xlu0 %v207, 32
        %v795 = vpop.permute.xlu0 %794
        %796 = vrot.lane.b32.xlu0 %v208, 32
        %v797 = vpop.permute.xlu0 %796
        %798 = vrot.lane.b32.xlu0 %v209, 32
        %v799 = vpop.permute.xlu0 %798
        %803 = vrot.lane.b32.xlu0 %v210, 64
        %v804 = vpop.permute.xlu0 %803
        %805 = vrot.lane.b32.xlu0 %v211, 64
        %v806 = vpop.permute.xlu0 %805
        %807 = vrot.lane.b32.xlu0 %v212, 64
        %v808 = vpop.permute.xlu0 %807
        %812 = vrot.lane.b32.xlu0 %v522, 96
        %v813 = vpop.permute.xlu0 %812
        %814 = vrot.lane.b32.xlu0 %v523, 96
        %v815 = vpop.permute.xlu0 %814
        %816 = vrot.lane.b32.xlu0 %v524, 96
        %v817 = vpop.permute.xlu0 %816
        %821 = vrot.lane.b32.xlu0 %v528, 32
        %v822 = vpop.permute.xlu0 %821
        %823 = vrot.lane.b32.xlu0 %v529, 32
        %v824 = vpop.permute.xlu0 %823
        %825 = vrot.lane.b32.xlu0 %v530, 32
        %v826 = vpop.permute.xlu0 %825
        %833 = vrot.lane.b32.xlu0 %v785, 64
        %v834 = vpop.permute.xlu0 %833
        %835 = vrot.lane.b32.xlu0 %v786, 64
        %v836 = vpop.permute.xlu0 %835
        %837 = vrot.lane.b32.xlu0 %v787, 64
        %v838 = vpop.permute.xlu0 %837
        %845 = vrot.lane.b32.xlu0 %v788, 96
        %v846 = vpop.permute.xlu0 %845
        %847 = vrot.lane.b32.xlu0 %v789, 96
        %v848 = vpop.permute.xlu0 %847
        %849 = vrot.lane.b32.xlu0 %v790, 96
        %v850 = vpop.permute.xlu0 %849
        %v854 = vsel %vm285, %v204, %v795
        %v855 = vsel %vm285, %v205, %v797
        %v856 = vsel %vm285, %v206, %v799
        %v857 = vsel %vm289, %v854, %v804
        %v858 = vsel %vm289, %v855, %v806
        %v859 = vsel %vm289, %v856, %v808
        %v860 = vsel %vm293, %v857, %v813
        %v861 = vsel %vm293, %v858, %v815
        %v862 = vsel %vm293, %v859, %v817
        %v863 = vsel %vm285, %v525, %v822
        %v864 = vsel %vm285, %v526, %v824
        %v865 = vsel %vm285, %v527, %v826
        %v866 = vsel %vm289, %v863, %v834
        %v867 = vsel %vm289, %v864, %v836
        %v868 = vsel %vm289, %v865, %v838
        %v869 = vsel %vm293, %v866, %v846
        %v870 = vsel %vm293, %v867, %v848
        %v871 = vsel %vm293, %v868, %v850
        %v873 = vsel %vm285, %v791, 0
        %v876 = vsel %vm285, %v792, 0
        %v879 = vsel %vm285, %v793, 0
        %881 = vmatprep.subr.mxu0 0.0
        %882 = vmatpush1.msra.mxu0 %v306
        %883 = vmatprep.subr.mxu0 0.0
        %884 = vmatpush1.msra.mxu0 %v307
        %885 = vmatprep.subr.mxu0 0.0
        %886 = vmatpush1.msra.mxu0 %v308
        %887 = vmatprep.subr.mxu0 0.0
        %888 = vmatpush1.msra.mxu0 %v309
        %889 = vmatprep.subr.mxu0 0.0
        %890 = vmatpush1.msra.mxu0 %v310
        %891 = vmatprep.subr.mxu0 0.0
        %892 = vmatpush1.msra.mxu0 %v311
        %893 = vmatprep.subr.mxu0 0.0
        %894 = vmatpush1.msra.mxu0 %v312
        %895 = vmatprep.subr.mxu0 0.0
        %896 = vmatpush1.msra.mxu0 %v313
        %897 = vmatprep.subr.mxu0 0.0
        %898 = vmatpush1.msra.mxu0 %v314
        %899 = vmatprep.subr.mxu0 0.0
        %900 = vmatpush1.msra.mxu0 %v315
        %901 = vmatprep.subr.mxu0 0.0
        %902 = vmatpush1.msra.mxu0 %v316
        %903 = vmatprep.subr.mxu0 0.0
        %904 = vmatpush1.msra.mxu0 %v317
        %905 = vmatprep.subr.mxu0 0.0
        %906 = vmatpush1.msra.mxu0 %v318
        %907 = vmatprep.subr.mxu0 0.0
        %908 = vmatpush1.msra.mxu0 %v319
        %909 = vmatprep.subr.mxu0 0.0
        %910 = vmatpush1.msra.mxu0 %v320
        %911 = vmatprep.subr.mxu0 0.0
        %912 = vmatpush1.msra.mxu0 %v321
        %913 = vmatprep.subr.mxu0 0.0
        %914 = vmatpush1.msra.mxu0 %v322
        %915 = vmatprep.subr.mxu0 0.0
        %916 = vmatpush1.msra.mxu0 %v323
        %917 = vmatprep.subr.mxu0 0.0
        %918 = vmatpush1.msra.mxu0 %v324
        %919 = vmatprep.subr.mxu0 0.0
        %920 = vmatpush1.msra.mxu0 %v325
        %921 = vmatprep.subr.mxu0 0.0
        %922 = vmatpush1.msra.mxu0 %v326
        %923 = vmatprep.subr.mxu0 0.0
        %924 = vmatpush1.msra.mxu0 %v327
        %925 = vmatprep.subr.mxu0 0.0
        %926 = vmatpush1.msra.mxu0 %v328
        %927 = vmatprep.subr.mxu0 0.0
        %928 = vmatpush1.msra.mxu0 %v329
        %929 = vmatprep.subr.mxu0 0.0
        %930 = vmatpush1.msra.mxu0 %v330
        %931 = vmatprep.subr.mxu0 0.0
        %932 = vmatpush1.msra.mxu0 %v331
        %933 = vmatprep.subr.mxu0 0.0
        %934 = vmatpush1.msra.mxu0 %v332
        %935 = vmatprep.subr.mxu0 0.0
        %936 = vmatpush1.msra.mxu0 %v333
        %937 = vmatprep.subr.mxu0 0.0
        %938 = vmatpush1.msra.mxu0 %v334
        %939 = vmatprep.subr.mxu0 0.0
        %940 = vmatpush1.msra.mxu0 %v335
        %941 = vmatprep.subr.mxu0 0.0
        %942 = vmatpush1.msra.mxu0 %v336
        %943 = vmatprep.subr.mxu0 0.0
        %944 = vmatpush1.msra.mxu0 %v337
        %945 = vmatprep.mubr.f32.mxu0 %v869
        %946 = vmatmul.mubr.f32.gmra.mrb[0].mxu0 %v860
        %v947 = vpop.f32.mrb[0].mxu0
        %v948 = vadd.f32 %v347, %v947
        %v949 = vpop.f32.mrb[0].mxu0
        %950 = vmatprep.mubr.f32.mxu0 %v870
        %951 = vmatmul.mubr.f32.gmra.mrb[0].mxu0 %v861
        %v952 = vpop.f32.mrb[0].mxu0
        %v953 = vadd.f32 %v347, %v952
        %v954 = vpop.f32.mrb[0].mxu0
        %955 = vmatprep.mubr.f32.mxu0 %v871
        %956 = vmatmul.mubr.f32.gmra.mrb[0].mxu0 %v862
        %v957 = vpop.f32.mrb[0].mxu0
        %v958 = vadd.f32 %v347, %v957
        %v959 = vpop.f32.mrb[0].mxu0
        %960 = vdwg.mxu0
        %961 = vmatprep.subr.mxu0 0.0
        %962 = vmatpush1.msra.mxu0 %v338
        %963 = vmatprep.subr.mxu0 0.0
        %964 = vmatpush1.msra.mxu0 %v339
        %965 = vmatprep.subr.mxu0 0.0
        %966 = vmatpush1.msra.mxu0 %v340
        %967 = vmatprep.subr.mxu0 0.0
        %968 = vmatpush1.msra.mxu0 %v341
        %969 = vmatprep.subr.mxu0 0.0
        %970 = vmatpush1.msra.mxu0 0.0
        %971 = vmatprep.subr.mxu0 0.0
        %972 = vmatpush1.msra.mxu0 0.0
        %973 = vmatprep.subr.mxu0 0.0
        %974 = vmatpush1.msra.mxu0 0.0
        %975 = vmatprep.subr.mxu0 0.0
        %976 = vmatpush1.msra.mxu0 0.0
        %977 = vmatprep.subr.mxu0 0.0
        %978 = vmatpush1.msra.mxu0 0.0
        %979 = vmatprep.subr.mxu0 0.0
        %980 = vmatpush1.msra.mxu0 0.0
        %981 = vmatprep.subr.mxu0 0.0
        %982 = vmatpush1.msra.mxu0 0.0
        %983 = vmatprep.subr.mxu0 0.0
        %984 = vmatpush1.msra.mxu0 0.0
        %985 = vmatprep.subr.mxu0 0.0
        %986 = vmatpush1.msra.mxu0 0.0
        %987 = vmatprep.subr.mxu0 0.0
        %988 = vmatpush1.msra.mxu0 0.0
        %989 = vmatprep.subr.mxu0 0.0
        %990 = vmatpush1.msra.mxu0 0.0
        %991 = vmatprep.subr.mxu0 0.0
        %992 = vmatpush1.msra.mxu0 0.0
        %993 = vmatprep.subr.mxu0 0.0
        %994 = vmatpush1.msra.mxu0 0.0
        %995 = vmatprep.subr.mxu0 0.0
        %996 = vmatpush1.msra.mxu0 0.0
        %997 = vmatprep.subr.mxu0 0.0
        %998 = vmatpush1.msra.mxu0 0.0
        %999 = vmatprep.subr.mxu0 0.0
        %1000 = vmatpush1.msra.mxu0 0.0
        %1001 = vmatprep.subr.mxu0 0.0
        %1002 = vmatpush1.msra.mxu0 0.0
        %1003 = vmatprep.subr.mxu0 0.0
        %1004 = vmatpush1.msra.mxu0 0.0
        %1005 = vmatprep.subr.mxu0 0.0
        %1006 = vmatpush1.msra.mxu0 0.0
        %1007 = vmatprep.subr.mxu0 0.0
        %1008 = vmatpush1.msra.mxu0 0.0
        %1009 = vmatprep.subr.mxu0 0.0
        %1010 = vmatpush1.msra.mxu0 0.0
        %1011 = vmatprep.subr.mxu0 0.0
        %1012 = vmatpush1.msra.mxu0 0.0
        %1013 = vmatprep.subr.mxu0 0.0
        %1014 = vmatpush1.msra.mxu0 0.0
        %1015 = vmatprep.subr.mxu0 0.0
        %1016 = vmatpush1.msra.mxu0 0.0
        %1017 = vmatprep.subr.mxu0 0.0
        %1018 = vmatpush1.msra.mxu0 0.0
        %1019 = vmatprep.subr.mxu0 0.0
        %1020 = vmatpush1.msra.mxu0 0.0
        %1021 = vmatprep.subr.mxu0 0.0
        %1022 = vmatpush1.msra.mxu0 0.0
        %1023 = vmatprep.subr.mxu0 0.0
        %1024 = vmatpush1.msra.mxu0 0.0
        %1025 = vmatprep.mubr.f32.mxu0 0.0
        %1026 = vmatmul.mubr.f32.gmra.mrb[0].mxu0 %v873
        %v1027 = vpop.f32.mrb[0].mxu0
        %v1028 = vadd.f32 %v948, %v1027
        %v1029 = vpop.f32.mrb[0].mxu0
        %1030 = vmatprep.mubr.f32.mxu0 0.0
        %1031 = vmatmul.mubr.f32.gmra.mrb[0].mxu0 %v876
        %v1032 = vpop.f32.mrb[0].mxu0
        %v1033 = vadd.f32 %v953, %v1032
        %v1034 = vpop.f32.mrb[0].mxu0
        %1035 = vmatprep.mubr.f32.mxu0 0.0
        %1036 = vmatmul.mubr.f32.gmra.mrb[0].mxu0 %v879
        %v1037 = vpop.f32.mrb[0].mxu0
        %v1038 = vadd.f32 %v958, %v1037
        %v1039 = vpop.f32.mrb[0].mxu0
        %1040 = vdwg.mxu0
        %v1041 = vmax.f32 %v1028, 0.0
        %v1042 = vmax.f32 %v1033, 0.0
        %v1043 = vmax.f32 %v1038, 0.0
        %s1044 = scalar_lea.vmem %s178, 120
        %v1045 = vld [vmem:[%s1044] sm:$0xff]
        %v1046 = vld [vmem:[%s1044 + $0x8] sm:$0xff]
        %v1047 = vld [vmem:[%s1044 + $0x10] sm:$0xf]
        %v1048 = vld [vmem:[%s1044 + $0x1] sm:$0xff]
        %v1049 = vld [vmem:[%s1044 + $0x9] sm:$0xff]
        %v1050 = vld [vmem:[%s1044 + $0x11] sm:$0xf]
        %v1051 = vld [vmem:[%s1044 + $0x2] sm:$0xff]
        %v1052 = vld [vmem:[%s1044 + $0xa] sm:$0xff]
        %v1053 = vld [vmem:[%s1044 + $0x12] sm:$0xf]
        %1054 = vrot.lane.b32.xlu0 %v525, 32
        %v1055 = vpop.permute.xlu0 %1054
        %1056 = vrot.lane.b32.xlu0 %v526, 32
        %v1057 = vpop.permute.xlu0 %1056
        %1058 = vrot.lane.b32.xlu0 %v527, 32
        %v1059 = vpop.permute.xlu0 %1058
        %1063 = vrot.lane.b32.xlu0 %v528, 64
        %v1064 = vpop.permute.xlu0 %1063
        %1065 = vrot.lane.b32.xlu0 %v529, 64
        %v1066 = vpop.permute.xlu0 %1065
        %1067 = vrot.lane.b32.xlu0 %v530, 64
        %v1068 = vpop.permute.xlu0 %1067
        %1072 = vrot.lane.b32.xlu0 %v785, 96
        %v1073 = vpop.permute.xlu0 %1072
        %1074 = vrot.lane.b32.xlu0 %v786, 96
        %v1075 = vpop.permute.xlu0 %1074
        %1076 = vrot.lane.b32.xlu0 %v787, 96
        %v1077 = vpop.permute.xlu0 %1076
        %1081 = vrot.lane.b32.xlu0 %v791, 32
        %v1082 = vpop.permute.xlu0 %1081
        %1083 = vrot.lane.b32.xlu0 %v792, 32
        %v1084 = vpop.permute.xlu0 %1083
        %1085 = vrot.lane.b32.xlu0 %v793, 32
        %v1086 = vpop.permute.xlu0 %1085
        %1093 = vrot.lane.b32.xlu0 %v1045, 64
        %v1094 = vpop.permute.xlu0 %1093
        %1095 = vrot.lane.b32.xlu0 %v1046, 64
        %v1096 = vpop.permute.xlu0 %1095
        %1097 = vrot.lane.b32.xlu0 %v1047, 64
        %v1098 = vpop.permute.xlu0 %1097
        %1105 = vrot.lane.b32.xlu0 %v1048, 96
        %v1106 = vpop.permute.xlu0 %1105
        %1107 = vrot.lane.b32.xlu0 %v1049, 96
        %v1108 = vpop.permute.xlu0 %1107
        %1109 = vrot.lane.b32.xlu0 %v1050, 96
        %v1110 = vpop.permute.xlu0 %1109
        %v1114 = vsel %vm285, %v522, %v1055
        %v1115 = vsel %vm285, %v523, %v1057
        %v1116 = vsel %vm285, %v524, %v1059
        %v1117 = vsel %vm289, %v1114, %v1064
        %v1118 = vsel %vm289, %v1115, %v1066
        %v1119 = vsel %vm289, %v1116, %v1068
        %v1120 = vsel %vm293, %v1117, %v1073
        %v1121 = vsel %vm293, %v1118, %v1075
        %v1122 = vsel %vm293, %v1119, %v1077
        %v1123 = vsel %vm285, %v788, %v1082
        %v1124 = vsel %vm285, %v789, %v1084
        %v1125 = vsel %vm285, %v790, %v1086
        %v1126 = vsel %vm289, %v1123, %v1094
        %v1127 = vsel %vm289, %v1124, %v1096
        %v1128 = vsel %vm289, %v1125, %v1098
        %v1129 = vsel %vm293, %v1126, %v1106
        %v1130 = vsel %vm293, %v1127, %v1108
        %v1131 = vsel %vm293, %v1128, %v1110
        %v1133 = vsel %vm285, %v1051, 0
        %v1136 = vsel %vm285, %v1052, 0
        %v1139 = vsel %vm285, %v1053, 0
        %1141 = vmatprep.subr.mxu0 0.0
        %1142 = vmatpush1.msra.mxu0 %v306
        %1143 = vmatprep.subr.mxu0 0.0
        %1144 = vmatpush1.msra.mxu0 %v307
        %1145 = vmatprep.subr.mxu0 0.0
        %1146 = vmatpush1.msra.mxu0 %v308
        %1147 = vmatprep.subr.mxu0 0.0
        %1148 = vmatpush1.msra.mxu0 %v309
        %1149 = vmatprep.subr.mxu0 0.0
        %1150 = vmatpush1.msra.mxu0 %v310
        %1151 = vmatprep.subr.mxu0 0.0
        %1152 = vmatpush1.msra.mxu0 %v311
        %1153 = vmatprep.subr.mxu0 0.0
        %1154 = vmatpush1.msra.mxu0 %v312
        %1155 = vmatprep.subr.mxu0 0.0
        %1156 = vmatpush1.msra.mxu0 %v313
        %1157 = vmatprep.subr.mxu0 0.0
        %1158 = vmatpush1.msra.mxu0 %v314
        %1159 = vmatprep.subr.mxu0 0.0
        %1160 = vmatpush1.msra.mxu0 %v315
        %1161 = vmatprep.subr.mxu0 0.0
        %1162 = vmatpush1.msra.mxu0 %v316
        %1163 = vmatprep.subr.mxu0 0.0
        %1164 = vmatpush1.msra.mxu0 %v317
        %1165 = vmatprep.subr.mxu0 0.0
        %1166 = vmatpush1.msra.mxu0 %v318
        %1167 = vmatprep.subr.mxu0 0.0
        %1168 = vmatpush1.msra.mxu0 %v319
        %1169 = vmatprep.subr.mxu0 0.0
        %1170 = vmatpush1.msra.mxu0 %v320
        %1171 = vmatprep.subr.mxu0 0.0
        %1172 = vmatpush1.msra.mxu0 %v321
        %1173 = vmatprep.subr.mxu0 0.0
        %1174 = vmatpush1.msra.mxu0 %v322
        %1175 = vmatprep.subr.mxu0 0.0
        %1176 = vmatpush1.msra.mxu0 %v323
        %1177 = vmatprep.subr.mxu0 0.0
        %1178 = vmatpush1.msra.mxu0 %v324
        %1179 = vmatprep.subr.mxu0 0.0
        %1180 = vmatpush1.msra.mxu0 %v325
        %1181 = vmatprep.subr.mxu0 0.0
        %1182 = vmatpush1.msra.mxu0 %v326
        %1183 = vmatprep.subr.mxu0 0.0
        %1184 = vmatpush1.msra.mxu0 %v327
        %1185 = vmatprep.subr.mxu0 0.0
        %1186 = vmatpush1.msra.mxu0 %v328
        %1187 = vmatprep.subr.mxu0 0.0
        %1188 = vmatpush1.msra.mxu0 %v329
        %1189 = vmatprep.subr.mxu0 0.0
        %1190 = vmatpush1.msra.mxu0 %v330
        %1191 = vmatprep.subr.mxu0 0.0
        %1192 = vmatpush1.msra.mxu0 %v331
        %1193 = vmatprep.subr.mxu0 0.0
        %1194 = vmatpush1.msra.mxu0 %v332
        %1195 = vmatprep.subr.mxu0 0.0
        %1196 = vmatpush1.msra.mxu0 %v333
        %1197 = vmatprep.subr.mxu0 0.0
        %1198 = vmatpush1.msra.mxu0 %v334
        %1199 = vmatprep.subr.mxu0 0.0
        %1200 = vmatpush1.msra.mxu0 %v335
        %1201 = vmatprep.subr.mxu0 0.0
        %1202 = vmatpush1.msra.mxu0 %v336
        %1203 = vmatprep.subr.mxu0 0.0
        %1204 = vmatpush1.msra.mxu0 %v337
        %1205 = vmatprep.mubr.f32.mxu0 %v1129
        %1206 = vmatmul.mubr.f32.gmra.mrb[0].mxu0 %v1120
        %v1207 = vpop.f32.mrb[0].mxu0
        %v1208 = vadd.f32 %v347, %v1207
        %v1209 = vpop.f32.mrb[0].mxu0
        %1210 = vmatprep.mubr.f32.mxu0 %v1130
        %1211 = vmatmul.mubr.f32.gmra.mrb[0].mxu0 %v1121
        %v1212 = vpop.f32.mrb[0].mxu0
        %v1213 = vadd.f32 %v347, %v1212
        %v1214 = vpop.f32.mrb[0].mxu0
        %1215 = vmatprep.mubr.f32.mxu0 %v1131
        %1216 = vmatmul.mubr.f32.gmra.mrb[0].mxu0 %v1122
        %v1217 = vpop.f32.mrb[0].mxu0
        %v1218 = vadd.f32 %v347, %v1217
        %v1219 = vpop.f32.mrb[0].mxu0
        %1220 = vdwg.mxu0
        %1221 = vmatprep.subr.mxu0 0.0
        %1222 = vmatpush1.msra.mxu0 %v338
        %1223 = vmatprep.subr.mxu0 0.0
        %1224 = vmatpush1.msra.mxu0 %v339
        %1225 = vmatprep.subr.mxu0 0.0
        %1226 = vmatpush1.msra.mxu0 %v340
        %1227 = vmatprep.subr.mxu0 0.0
        %1228 = vmatpush1.msra.mxu0 %v341
        %1229 = vmatprep.subr.mxu0 0.0
        %1230 = vmatpush1.msra.mxu0 0.0
        %1231 = vmatprep.subr.mxu0 0.0
        %1232 = vmatpush1.msra.mxu0 0.0
        %1233 = vmatprep.subr.mxu0 0.0
        %1234 = vmatpush1.msra.mxu0 0.0
        %1235 = vmatprep.subr.mxu0 0.0
        %1236 = vmatpush1.msra.mxu0 0.0
        %1237 = vmatprep.subr.mxu0 0.0
        %1238 = vmatpush1.msra.mxu0 0.0
        %1239 = vmatprep.subr.mxu0 0.0
        %1240 = vmatpush1.msra.mxu0 0.0
        %1241 = vmatprep.subr.mxu0 0.0
        %1242 = vmatpush1.msra.mxu0 0.0
        %1243 = vmatprep.subr.mxu0 0.0
        %1244 = vmatpush1.msra.mxu0 0.0
        %1245 = vmatprep.subr.mxu0 0.0
        %1246 = vmatpush1.msra.mxu0 0.0
        %1247 = vmatprep.subr.mxu0 0.0
        %1248 = vmatpush1.msra.mxu0 0.0
        %1249 = vmatprep.subr.mxu0 0.0
        %1250 = vmatpush1.msra.mxu0 0.0
        %1251 = vmatprep.subr.mxu0 0.0
        %1252 = vmatpush1.msra.mxu0 0.0
        %1253 = vmatprep.subr.mxu0 0.0
        %1254 = vmatpush1.msra.mxu0 0.0
        %1255 = vmatprep.subr.mxu0 0.0
        %1256 = vmatpush1.msra.mxu0 0.0
        %1257 = vmatprep.subr.mxu0 0.0
        %1258 = vmatpush1.msra.mxu0 0.0
        %1259 = vmatprep.subr.mxu0 0.0
        %1260 = vmatpush1.msra.mxu0 0.0
        %1261 = vmatprep.subr.mxu0 0.0
        %1262 = vmatpush1.msra.mxu0 0.0
        %1263 = vmatprep.subr.mxu0 0.0
        %1264 = vmatpush1.msra.mxu0 0.0
        %1265 = vmatprep.subr.mxu0 0.0
        %1266 = vmatpush1.msra.mxu0 0.0
        %1267 = vmatprep.subr.mxu0 0.0
        %1268 = vmatpush1.msra.mxu0 0.0
        %1269 = vmatprep.subr.mxu0 0.0
        %1270 = vmatpush1.msra.mxu0 0.0
        %1271 = vmatprep.subr.mxu0 0.0
        %1272 = vmatpush1.msra.mxu0 0.0
        %1273 = vmatprep.subr.mxu0 0.0
        %1274 = vmatpush1.msra.mxu0 0.0
        %1275 = vmatprep.subr.mxu0 0.0
        %1276 = vmatpush1.msra.mxu0 0.0
        %1277 = vmatprep.subr.mxu0 0.0
        %1278 = vmatpush1.msra.mxu0 0.0
        %1279 = vmatprep.subr.mxu0 0.0
        %1280 = vmatpush1.msra.mxu0 0.0
        %1281 = vmatprep.subr.mxu0 0.0
        %1282 = vmatpush1.msra.mxu0 0.0
        %1283 = vmatprep.subr.mxu0 0.0
        %1284 = vmatpush1.msra.mxu0 0.0
        %1285 = vmatprep.mubr.f32.mxu0 0.0
        %1286 = vmatmul.mubr.f32.gmra.mrb[0].mxu0 %v1133
        %v1287 = vpop.f32.mrb[0].mxu0
        %v1288 = vadd.f32 %v1208, %v1287
        %v1289 = vpop.f32.mrb[0].mxu0
        %1290 = vmatprep.mubr.f32.mxu0 0.0
        %1291 = vmatmul.mubr.f32.gmra.mrb[0].mxu0 %v1136
        %v1292 = vpop.f32.mrb[0].mxu0
        %v1293 = vadd.f32 %v1213, %v1292
        %v1294 = vpop.f32.mrb[0].mxu0
        %1295 = vmatprep.mubr.f32.mxu0 0.0
        %1296 = vmatmul.mubr.f32.gmra.mrb[0].mxu0 %v1139
        %v1297 = vpop.f32.mrb[0].mxu0
        %v1298 = vadd.f32 %v1218, %v1297
        %v1299 = vpop.f32.mrb[0].mxu0
        %1300 = vdwg.mxu0
        %v1301 = vmax.f32 %v1288, 0.0
        %v1302 = vmax.f32 %v1293, 0.0
        %v1303 = vmax.f32 %v1298, 0.0
        %s1304 = scalar_lea.vmem %s178, 144
        %v1305 = vld [vmem:[%s1304] sm:$0xff]
        %v1306 = vld [vmem:[%s1304 + $0x8] sm:$0xff]
        %v1307 = vld [vmem:[%s1304 + $0x10] sm:$0xf]
        %v1308 = vld [vmem:[%s1304 + $0x1] sm:$0xff]
        %v1309 = vld [vmem:[%s1304 + $0x9] sm:$0xff]
        %v1310 = vld [vmem:[%s1304 + $0x11] sm:$0xf]
        %v1311 = vld [vmem:[%s1304 + $0x2] sm:$0xff]
        %v1312 = vld [vmem:[%s1304 + $0xa] sm:$0xff]
        %v1313 = vld [vmem:[%s1304 + $0x12] sm:$0xf]
        %1314 = vrot.lane.b32.xlu0 %v788, 32
        %v1315 = vpop.permute.xlu0 %1314
        %1316 = vrot.lane.b32.xlu0 %v789, 32
        %v1317 = vpop.permute.xlu0 %1316
        %1318 = vrot.lane.b32.xlu0 %v790, 32
        %v1319 = vpop.permute.xlu0 %1318
        %1323 = vrot.lane.b32.xlu0 %v791, 64
        %v1324 = vpop.permute.xlu0 %1323
        %1325 = vrot.lane.b32.xlu0 %v792, 64
        %v1326 = vpop.permute.xlu0 %1325
        %1327 = vrot.lane.b32.xlu0 %v793, 64
        %v1328 = vpop.permute.xlu0 %1327
        %1332 = vrot.lane.b32.xlu0 %v1045, 96
        %v1333 = vpop.permute.xlu0 %1332
        %1334 = vrot.lane.b32.xlu0 %v1046, 96
        %v1335 = vpop.permute.xlu0 %1334
        %1336 = vrot.lane.b32.xlu0 %v1047, 96
        %v1337 = vpop.permute.xlu0 %1336
        %1341 = vrot.lane.b32.xlu0 %v1051, 32
        %v1342 = vpop.permute.xlu0 %1341
        %1343 = vrot.lane.b32.xlu0 %v1052, 32
        %v1344 = vpop.permute.xlu0 %1343
        %1345 = vrot.lane.b32.xlu0 %v1053, 32
        %v1346 = vpop.permute.xlu0 %1345
        %1353 = vrot.lane.b32.xlu0 %v1305, 64
        %v1354 = vpop.permute.xlu0 %1353
        %1355 = vrot.lane.b32.xlu0 %v1306, 64
        %v1356 = vpop.permute.xlu0 %1355
        %1357 = vrot.lane.b32.xlu0 %v1307, 64
        %v1358 = vpop.permute.xlu0 %1357
        %1365 = vrot.lane.b32.xlu0 %v1308, 96
        %v1366 = vpop.permute.xlu0 %1365
        %1367 = vrot.lane.b32.xlu0 %v1309, 96
        %v1368 = vpop.permute.xlu0 %1367
        %1369 = vrot.lane.b32.xlu0 %v1310, 96
        %v1370 = vpop.permute.xlu0 %1369
        %v1374 = vsel %vm285, %v785, %v1315
        %v1375 = vsel %vm285, %v786, %v1317
        %v1376 = vsel %vm285, %v787, %v1319
        %v1377 = vsel %vm289, %v1374, %v1324
        %v1378 = vsel %vm289, %v1375, %v1326
        %v1379 = vsel %vm289, %v1376, %v1328
        %v1380 = vsel %vm293, %v1377, %v1333
        %v1381 = vsel %vm293, %v1378, %v1335
        %v1382 = vsel %vm293, %v1379, %v1337
        %v1383 = vsel %vm285, %v1048, %v1342
        %v1384 = vsel %vm285, %v1049, %v1344
        %v1385 = vsel %vm285, %v1050, %v1346
        %v1386 = vsel %vm289, %v1383, %v1354
        %v1387 = vsel %vm289, %v1384, %v1356
        %v1388 = vsel %vm289, %v1385, %v1358
        %v1389 = vsel %vm293, %v1386, %v1366
        %v1390 = vsel %vm293, %v1387, %v1368
        %v1391 = vsel %vm293, %v1388, %v1370
        %v1393 = vsel %vm285, %v1311, 0
        %v1396 = vsel %vm285, %v1312, 0
        %v1399 = vsel %vm285, %v1313, 0
        %1401 = vmatprep.subr.mxu0 0.0
        %1402 = vmatpush1.msra.mxu0 %v306
        %1403 = vmatprep.subr.mxu0 0.0
        %1404 = vmatpush1.msra.mxu0 %v307
        %1405 = vmatprep.subr.mxu0 0.0
        %1406 = vmatpush1.msra.mxu0 %v308
        %1407 = vmatprep.subr.mxu0 0.0
        %1408 = vmatpush1.msra.mxu0 %v309
        %1409 = vmatprep.subr.mxu0 0.0
        %1410 = vmatpush1.msra.mxu0 %v310
        %1411 = vmatprep.subr.mxu0 0.0
        %1412 = vmatpush1.msra.mxu0 %v311
        %1413 = vmatprep.subr.mxu0 0.0
        %1414 = vmatpush1.msra.mxu0 %v312
        %1415 = vmatprep.subr.mxu0 0.0
        %1416 = vmatpush1.msra.mxu0 %v313
        %1417 = vmatprep.subr.mxu0 0.0
        %1418 = vmatpush1.msra.mxu0 %v314
        %1419 = vmatprep.subr.mxu0 0.0
        %1420 = vmatpush1.msra.mxu0 %v315
        %1421 = vmatprep.subr.mxu0 0.0
        %1422 = vmatpush1.msra.mxu0 %v316
        %1423 = vmatprep.subr.mxu0 0.0
        %1424 = vmatpush1.msra.mxu0 %v317
        %1425 = vmatprep.subr.mxu0 0.0
        %1426 = vmatpush1.msra.mxu0 %v318
        %1427 = vmatprep.subr.mxu0 0.0
        %1428 = vmatpush1.msra.mxu0 %v319
        %1429 = vmatprep.subr.mxu0 0.0
        %1430 = vmatpush1.msra.mxu0 %v320
        %1431 = vmatprep.subr.mxu0 0.0
        %1432 = vmatpush1.msra.mxu0 %v321
        %1433 = vmatprep.subr.mxu0 0.0
        %1434 = vmatpush1.msra.mxu0 %v322
        %1435 = vmatprep.subr.mxu0 0.0
        %1436 = vmatpush1.msra.mxu0 %v323
        %1437 = vmatprep.subr.mxu0 0.0
        %1438 = vmatpush1.msra.mxu0 %v324
        %1439 = vmatprep.subr.mxu0 0.0
        %1440 = vmatpush1.msra.mxu0 %v325
        %1441 = vmatprep.subr.mxu0 0.0
        %1442 = vmatpush1.msra.mxu0 %v326
        %1443 = vmatprep.subr.mxu0 0.0
        %1444 = vmatpush1.msra.mxu0 %v327
        %1445 = vmatprep.subr.mxu0 0.0
        %1446 = vmatpush1.msra.mxu0 %v328
        %1447 = vmatprep.subr.mxu0 0.0
        %1448 = vmatpush1.msra.mxu0 %v329
        %1449 = vmatprep.subr.mxu0 0.0
        %1450 = vmatpush1.msra.mxu0 %v330
        %1451 = vmatprep.subr.mxu0 0.0
        %1452 = vmatpush1.msra.mxu0 %v331
        %1453 = vmatprep.subr.mxu0 0.0
        %1454 = vmatpush1.msra.mxu0 %v332
        %1455 = vmatprep.subr.mxu0 0.0
        %1456 = vmatpush1.msra.mxu0 %v333
        %1457 = vmatprep.subr.mxu0 0.0
        %1458 = vmatpush1.msra.mxu0 %v334
        %1459 = vmatprep.subr.mxu0 0.0
        %1460 = vmatpush1.msra.mxu0 %v335
        %1461 = vmatprep.subr.mxu0 0.0
        %1462 = vmatpush1.msra.mxu0 %v336
        %1463 = vmatprep.subr.mxu0 0.0
        %1464 = vmatpush1.msra.mxu0 %v337
        %1465 = vmatprep.mubr.f32.mxu0 %v1389
        %1466 = vmatmul.mubr.f32.gmra.mrb[0].mxu0 %v1380
        %v1467 = vpop.f32.mrb[0].mxu0
        %v1468 = vadd.f32 %v347, %v1467
        %v1469 = vpop.f32.mrb[0].mxu0
        %1470 = vmatprep.mubr.f32.mxu0 %v1390
        %1471 = vmatmul.mubr.f32.gmra.mrb[0].mxu0 %v1381
        %v1472 = vpop.f32.mrb[0].mxu0
        %v1473 = vadd.f32 %v347, %v1472
        %v1474 = vpop.f32.mrb[0].mxu0
        %1475 = vmatprep.mubr.f32.mxu0 %v1391
        %1476 = vmatmul.mubr.f32.gmra.mrb[0].mxu0 %v1382
        %v1477 = vpop.f32.mrb[0].mxu0
        %v1478 = vadd.f32 %v347, %v1477
        %v1479 = vpop.f32.mrb[0].mxu0
        %1480 = vdwg.mxu0
        %1481 = vmatprep.subr.mxu0 0.0
        %1482 = vmatpush1.msra.mxu0 %v338
        %1483 = vmatprep.subr.mxu0 0.0
        %1484 = vmatpush1.msra.mxu0 %v339
        %1485 = vmatprep.subr.mxu0 0.0
        %1486 = vmatpush1.msra.mxu0 %v340
        %1487 = vmatprep.subr.mxu0 0.0
        %1488 = vmatpush1.msra.mxu0 %v341
        %1489 = vmatprep.subr.mxu0 0.0
        %1490 = vmatpush1.msra.mxu0 0.0
        %1491 = vmatprep.subr.mxu0 0.0
        %1492 = vmatpush1.msra.mxu0 0.0
        %1493 = vmatprep.subr.mxu0 0.0
        %1494 = vmatpush1.msra.mxu0 0.0
        %1495 = vmatprep.subr.mxu0 0.0
        %1496 = vmatpush1.msra.mxu0 0.0
        %1497 = vmatprep.subr.mxu0 0.0
        %1498 = vmatpush1.msra.mxu0 0.0
        %1499 = vmatprep.subr.mxu0 0.0
        %1500 = vmatpush1.msra.mxu0 0.0
        %1501 = vmatprep.subr.mxu0 0.0
        %1502 = vmatpush1.msra.mxu0 0.0
        %1503 = vmatprep.subr.mxu0 0.0
        %1504 = vmatpush1.msra.mxu0 0.0
        %1505 = vmatprep.subr.mxu0 0.0
        %1506 = vmatpush1.msra.mxu0 0.0
        %1507 = vmatprep.subr.mxu0 0.0
        %1508 = vmatpush1.msra.mxu0 0.0
        %1509 = vmatprep.subr.mxu0 0.0
        %1510 = vmatpush1.msra.mxu0 0.0
        %1511 = vmatprep.subr.mxu0 0.0
        %1512 = vmatpush1.msra.mxu0 0.0
        %1513 = vmatprep.subr.mxu0 0.0
        %1514 = vmatpush1.msra.mxu0 0.0
        %1515 = vmatprep.subr.mxu0 0.0
        %1516 = vmatpush1.msra.mxu0 0.0
        %1517 = vmatprep.subr.mxu0 0.0
        %1518 = vmatpush1.msra.mxu0 0.0
        %1519 = vmatprep.subr.mxu0 0.0
        %1520 = vmatpush1.msra.mxu0 0.0
        %1521 = vmatprep.subr.mxu0 0.0
        %1522 = vmatpush1.msra.mxu0 0.0
        %1523 = vmatprep.subr.mxu0 0.0
        %1524 = vmatpush1.msra.mxu0 0.0
        %1525 = vmatprep.subr.mxu0 0.0
        %1526 = vmatpush1.msra.mxu0 0.0
        %1527 = vmatprep.subr.mxu0 0.0
        %1528 = vmatpush1.msra.mxu0 0.0
        %1529 = vmatprep.subr.mxu0 0.0
        %1530 = vmatpush1.msra.mxu0 0.0
        %1531 = vmatprep.subr.mxu0 0.0
        %1532 = vmatpush1.msra.mxu0 0.0
        %1533 = vmatprep.subr.mxu0 0.0
        %1534 = vmatpush1.msra.mxu0 0.0
        %1535 = vmatprep.subr.mxu0 0.0
        %1536 = vmatpush1.msra.mxu0 0.0
        %1537 = vmatprep.subr.mxu0 0.0
        %1538 = vmatpush1.msra.mxu0 0.0
        %1539 = vmatprep.subr.mxu0 0.0
        %1540 = vmatpush1.msra.mxu0 0.0
        %1541 = vmatprep.subr.mxu0 0.0
        %1542 = vmatpush1.msra.mxu0 0.0
        %1543 = vmatprep.subr.mxu0 0.0
        %1544 = vmatpush1.msra.mxu0 0.0
        %1545 = vmatprep.mubr.f32.mxu0 0.0
        %1546 = vmatmul.mubr.f32.gmra.mrb[0].mxu0 %v1393
        %v1547 = vpop.f32.mrb[0].mxu0
        %v1548 = vadd.f32 %v1468, %v1547
        %v1549 = vpop.f32.mrb[0].mxu0
        %1550 = vmatprep.mubr.f32.mxu0 0.0
        %1551 = vmatmul.mubr.f32.gmra.mrb[0].mxu0 %v1396
        %v1552 = vpop.f32.mrb[0].mxu0
        %v1553 = vadd.f32 %v1473, %v1552
        %v1554 = vpop.f32.mrb[0].mxu0
        %1555 = vmatprep.mubr.f32.mxu0 0.0
        %1556 = vmatmul.mubr.f32.gmra.mrb[0].mxu0 %v1399
        %v1557 = vpop.f32.mrb[0].mxu0
        %v1558 = vadd.f32 %v1478, %v1557
        %v1559 = vpop.f32.mrb[0].mxu0
        %1560 = vdwg.mxu0
        %v1561 = vmax.f32 %v1548, 0.0
        %v1562 = vmax.f32 %v1553, 0.0
        %v1563 = vmax.f32 %v1558, 0.0
        %s1564 = scalar_lea.vmem %s178, 168
        %v1565 = vld [vmem:[%s1564] sm:$0xff]
        %v1566 = vld [vmem:[%s1564 + $0x8] sm:$0xff]
        %v1567 = vld [vmem:[%s1564 + $0x10] sm:$0xf]
        %v1568 = vld [vmem:[%s1564 + $0x1] sm:$0xff]
        %v1569 = vld [vmem:[%s1564 + $0x9] sm:$0xff]
        %v1570 = vld [vmem:[%s1564 + $0x11] sm:$0xf]
        %v1571 = vld [vmem:[%s1564 + $0x2] sm:$0xff]
        %v1572 = vld [vmem:[%s1564 + $0xa] sm:$0xff]
        %v1573 = vld [vmem:[%s1564 + $0x12] sm:$0xf]
        %1574 = vrot.lane.b32.xlu0 %v1048, 32
        %v1575 = vpop.permute.xlu0 %1574
        %1576 = vrot.lane.b32.xlu0 %v1049, 32
        %v1577 = vpop.permute.xlu0 %1576
        %1578 = vrot.lane.b32.xlu0 %v1050, 32
        %v1579 = vpop.permute.xlu0 %1578
        %1583 = vrot.lane.b32.xlu0 %v1051, 64
        %v1584 = vpop.permute.xlu0 %1583
        %1585 = vrot.lane.b32.xlu0 %v1052, 64
        %v1586 = vpop.permute.xlu0 %1585
        %1587 = vrot.lane.b32.xlu0 %v1053, 64
        %v1588 = vpop.permute.xlu0 %1587
        %1592 = vrot.lane.b32.xlu0 %v1305, 96
        %v1593 = vpop.permute.xlu0 %1592
        %1594 = vrot.lane.b32.xlu0 %v1306, 96
        %v1595 = vpop.permute.xlu0 %1594
        %1596 = vrot.lane.b32.xlu0 %v1307, 96
        %v1597 = vpop.permute.xlu0 %1596
        %1601 = vrot.lane.b32.xlu0 %v1311, 32
        %v1602 = vpop.permute.xlu0 %1601
        %1603 = vrot.lane.b32.xlu0 %v1312, 32
        %v1604 = vpop.permute.xlu0 %1603
        %1605 = vrot.lane.b32.xlu0 %v1313, 32
        %v1606 = vpop.permute.xlu0 %1605
        %1613 = vrot.lane.b32.xlu0 %v1565, 64
        %v1614 = vpop.permute.xlu0 %1613
        %1615 = vrot.lane.b32.xlu0 %v1566, 64
        %v1616 = vpop.permute.xlu0 %1615
        %1617 = vrot.lane.b32.xlu0 %v1567, 64
        %v1618 = vpop.permute.xlu0 %1617
        %1625 = vrot.lane.b32.xlu0 %v1568, 96
        %v1626 = vpop.permute.xlu0 %1625
        %1627 = vrot.lane.b32.xlu0 %v1569, 96
        %v1628 = vpop.permute.xlu0 %1627
        %1629 = vrot.lane.b32.xlu0 %v1570, 96
        %v1630 = vpop.permute.xlu0 %1629
        %v1634 = vsel %vm285, %v1045, %v1575
        %v1635 = vsel %vm285, %v1046, %v1577
        %v1636 = vsel %vm285, %v1047, %v1579
        %v1637 = vsel %vm289, %v1634, %v1584
        %v1638 = vsel %vm289, %v1635, %v1586
        %v1639 = vsel %vm289, %v1636, %v1588
        %v1640 = vsel %vm293, %v1637, %v1593
        %v1641 = vsel %vm293, %v1638, %v1595
        %v1642 = vsel %vm293, %v1639, %v1597
        %v1643 = vsel %vm285, %v1308, %v1602
        %v1644 = vsel %vm285, %v1309, %v1604
        %v1645 = vsel %vm285, %v1310, %v1606
        %v1646 = vsel %vm289, %v1643, %v1614
        %v1647 = vsel %vm289, %v1644, %v1616
        %v1648 = vsel %vm289, %v1645, %v1618
        %v1649 = vsel %vm293, %v1646, %v1626
        %v1650 = vsel %vm293, %v1647, %v1628
        %v1651 = vsel %vm293, %v1648, %v1630
        %v1653 = vsel %vm285, %v1571, 0
        %v1656 = vsel %vm285, %v1572, 0
        %v1659 = vsel %vm285, %v1573, 0
        %1661 = vmatprep.subr.mxu0 0.0
        %1662 = vmatpush1.msra.mxu0 %v306
        %1663 = vmatprep.subr.mxu0 0.0
        %1664 = vmatpush1.msra.mxu0 %v307
        %1665 = vmatprep.subr.mxu0 0.0
        %1666 = vmatpush1.msra.mxu0 %v308
        %1667 = vmatprep.subr.mxu0 0.0
        %1668 = vmatpush1.msra.mxu0 %v309
        %1669 = vmatprep.subr.mxu0 0.0
        %1670 = vmatpush1.msra.mxu0 %v310
        %1671 = vmatprep.subr.mxu0 0.0
        %1672 = vmatpush1.msra.mxu0 %v311
        %1673 = vmatprep.subr.mxu0 0.0
        %1674 = vmatpush1.msra.mxu0 %v312
        %1675 = vmatprep.subr.mxu0 0.0
        %1676 = vmatpush1.msra.mxu0 %v313
        %1677 = vmatprep.subr.mxu0 0.0
        %1678 = vmatpush1.msra.mxu0 %v314
        %1679 = vmatprep.subr.mxu0 0.0
        %1680 = vmatpush1.msra.mxu0 %v315
        %1681 = vmatprep.subr.mxu0 0.0
        %1682 = vmatpush1.msra.mxu0 %v316
        %1683 = vmatprep.subr.mxu0 0.0
        %1684 = vmatpush1.msra.mxu0 %v317
        %1685 = vmatprep.subr.mxu0 0.0
        %1686 = vmatpush1.msra.mxu0 %v318
        %1687 = vmatprep.subr.mxu0 0.0
        %1688 = vmatpush1.msra.mxu0 %v319
        %1689 = vmatprep.subr.mxu0 0.0
        %1690 = vmatpush1.msra.mxu0 %v320
        %1691 = vmatprep.subr.mxu0 0.0
        %1692 = vmatpush1.msra.mxu0 %v321
        %1693 = vmatprep.subr.mxu0 0.0
        %1694 = vmatpush1.msra.mxu0 %v322
        %1695 = vmatprep.subr.mxu0 0.0
        %1696 = vmatpush1.msra.mxu0 %v323
        %1697 = vmatprep.subr.mxu0 0.0
        %1698 = vmatpush1.msra.mxu0 %v324
        %1699 = vmatprep.subr.mxu0 0.0
        %1700 = vmatpush1.msra.mxu0 %v325
        %1701 = vmatprep.subr.mxu0 0.0
        %1702 = vmatpush1.msra.mxu0 %v326
        %1703 = vmatprep.subr.mxu0 0.0
        %1704 = vmatpush1.msra.mxu0 %v327
        %1705 = vmatprep.subr.mxu0 0.0
        %1706 = vmatpush1.msra.mxu0 %v328
        %1707 = vmatprep.subr.mxu0 0.0
        %1708 = vmatpush1.msra.mxu0 %v329
        %1709 = vmatprep.subr.mxu0 0.0
        %1710 = vmatpush1.msra.mxu0 %v330
        %1711 = vmatprep.subr.mxu0 0.0
        %1712 = vmatpush1.msra.mxu0 %v331
        %1713 = vmatprep.subr.mxu0 0.0
        %1714 = vmatpush1.msra.mxu0 %v332
        %1715 = vmatprep.subr.mxu0 0.0
        %1716 = vmatpush1.msra.mxu0 %v333
        %1717 = vmatprep.subr.mxu0 0.0
        %1718 = vmatpush1.msra.mxu0 %v334
        %1719 = vmatprep.subr.mxu0 0.0
        %1720 = vmatpush1.msra.mxu0 %v335
        %1721 = vmatprep.subr.mxu0 0.0
        %1722 = vmatpush1.msra.mxu0 %v336
        %1723 = vmatprep.subr.mxu0 0.0
        %1724 = vmatpush1.msra.mxu0 %v337
        %1725 = vmatprep.mubr.f32.mxu0 %v1649
        %1726 = vmatmul.mubr.f32.gmra.mrb[0].mxu0 %v1640
        %v1727 = vpop.f32.mrb[0].mxu0
        %v1728 = vadd.f32 %v347, %v1727
        %v1729 = vpop.f32.mrb[0].mxu0
        %1730 = vmatprep.mubr.f32.mxu0 %v1650
        %1731 = vmatmul.mubr.f32.gmra.mrb[0].mxu0 %v1641
        %v1732 = vpop.f32.mrb[0].mxu0
        %v1733 = vadd.f32 %v347, %v1732
        %v1734 = vpop.f32.mrb[0].mxu0
        %1735 = vmatprep.mubr.f32.mxu0 %v1651
        %1736 = vmatmul.mubr.f32.gmra.mrb[0].mxu0 %v1642
        %v1737 = vpop.f32.mrb[0].mxu0
        %v1738 = vadd.f32 %v347, %v1737
        %v1739 = vpop.f32.mrb[0].mxu0
        %1740 = vdwg.mxu0
        %1741 = vmatprep.subr.mxu0 0.0
        %1742 = vmatpush1.msra.mxu0 %v338
        %1743 = vmatprep.subr.mxu0 0.0
        %1744 = vmatpush1.msra.mxu0 %v339
        %1745 = vmatprep.subr.mxu0 0.0
        %1746 = vmatpush1.msra.mxu0 %v340
        %1747 = vmatprep.subr.mxu0 0.0
        %1748 = vmatpush1.msra.mxu0 %v341
        %1749 = vmatprep.subr.mxu0 0.0
        %1750 = vmatpush1.msra.mxu0 0.0
        %1751 = vmatprep.subr.mxu0 0.0
        %1752 = vmatpush1.msra.mxu0 0.0
        %1753 = vmatprep.subr.mxu0 0.0
        %1754 = vmatpush1.msra.mxu0 0.0
        %1755 = vmatprep.subr.mxu0 0.0
        %1756 = vmatpush1.msra.mxu0 0.0
        %1757 = vmatprep.subr.mxu0 0.0
        %1758 = vmatpush1.msra.mxu0 0.0
        %1759 = vmatprep.subr.mxu0 0.0
        %1760 = vmatpush1.msra.mxu0 0.0
        %1761 = vmatprep.subr.mxu0 0.0
        %1762 = vmatpush1.msra.mxu0 0.0
        %1763 = vmatprep.subr.mxu0 0.0
        %1764 = vmatpush1.msra.mxu0 0.0
        %1765 = vmatprep.subr.mxu0 0.0
        %1766 = vmatpush1.msra.mxu0 0.0
        %1767 = vmatprep.subr.mxu0 0.0
        %1768 = vmatpush1.msra.mxu0 0.0
        %1769 = vmatprep.subr.mxu0 0.0
        %1770 = vmatpush1.msra.mxu0 0.0
        %1771 = vmatprep.subr.mxu0 0.0
        %1772 = vmatpush1.msra.mxu0 0.0
        %1773 = vmatprep.subr.mxu0 0.0
        %1774 = vmatpush1.msra.mxu0 0.0
        %1775 = vmatprep.subr.mxu0 0.0
        %1776 = vmatpush1.msra.mxu0 0.0
        %1777 = vmatprep.subr.mxu0 0.0
        %1778 = vmatpush1.msra.mxu0 0.0
        %1779 = vmatprep.subr.mxu0 0.0
        %1780 = vmatpush1.msra.mxu0 0.0
        %1781 = vmatprep.subr.mxu0 0.0
        %1782 = vmatpush1.msra.mxu0 0.0
        %1783 = vmatprep.subr.mxu0 0.0
        %1784 = vmatpush1.msra.mxu0 0.0
        %1785 = vmatprep.subr.mxu0 0.0
        %1786 = vmatpush1.msra.mxu0 0.0
        %1787 = vmatprep.subr.mxu0 0.0
        %1788 = vmatpush1.msra.mxu0 0.0
        %1789 = vmatprep.subr.mxu0 0.0
        %1790 = vmatpush1.msra.mxu0 0.0
        %1791 = vmatprep.subr.mxu0 0.0
        %1792 = vmatpush1.msra.mxu0 0.0
        %1793 = vmatprep.subr.mxu0 0.0
        %1794 = vmatpush1.msra.mxu0 0.0
        %1795 = vmatprep.subr.mxu0 0.0
        %1796 = vmatpush1.msra.mxu0 0.0
        %1797 = vmatprep.subr.mxu0 0.0
        %1798 = vmatpush1.msra.mxu0 0.0
        %1799 = vmatprep.subr.mxu0 0.0
        %1800 = vmatpush1.msra.mxu0 0.0
        %1801 = vmatprep.subr.mxu0 0.0
        %1802 = vmatpush1.msra.mxu0 0.0
        %1803 = vmatprep.subr.mxu0 0.0
        %1804 = vmatpush1.msra.mxu0 0.0
        %1805 = vmatprep.mubr.f32.mxu0 0.0
        %1806 = vmatmul.mubr.f32.gmra.mrb[0].mxu0 %v1653
        %v1807 = vpop.f32.mrb[0].mxu0
        %v1808 = vadd.f32 %v1728, %v1807
        %v1809 = vpop.f32.mrb[0].mxu0
        %1810 = vmatprep.mubr.f32.mxu0 0.0
        %1811 = vmatmul.mubr.f32.gmra.mrb[0].mxu0 %v1656
        %v1812 = vpop.f32.mrb[0].mxu0
        %v1813 = vadd.f32 %v1733, %v1812
        %v1814 = vpop.f32.mrb[0].mxu0
        %1815 = vmatprep.mubr.f32.mxu0 0.0
        %1816 = vmatmul.mubr.f32.gmra.mrb[0].mxu0 %v1659
        %v1817 = vpop.f32.mrb[0].mxu0
        %v1818 = vadd.f32 %v1738, %v1817
        %v1819 = vpop.f32.mrb[0].mxu0
        %1820 = vdwg.mxu0
        %v1821 = vmax.f32 %v1808, 0.0
        %v1822 = vmax.f32 %v1813, 0.0
        %v1823 = vmax.f32 %v1818, 0.0
        %s1824 = scalar_lea.vmem %s178, 192
        %v1825 = vld [vmem:[%s1824] sm:$0xff]
        %v1826 = vld [vmem:[%s1824 + $0x8] sm:$0xff]
        %v1827 = vld [vmem:[%s1824 + $0x10] sm:$0xf]
        %v1828 = vld [vmem:[%s1824 + $0x1] sm:$0xff]
        %v1829 = vld [vmem:[%s1824 + $0x9] sm:$0xff]
        %v1830 = vld [vmem:[%s1824 + $0x11] sm:$0xf]
        %v1831 = vld [vmem:[%s1824 + $0x2] sm:$0xff]
        %v1832 = vld [vmem:[%s1824 + $0xa] sm:$0xff]
        %v1833 = vld [vmem:[%s1824 + $0x12] sm:$0xf]
        %1834 = vrot.lane.b32.xlu0 %v1308, 32
        %v1835 = vpop.permute.xlu0 %1834
        %1836 = vrot.lane.b32.xlu0 %v1309, 32
        %v1837 = vpop.permute.xlu0 %1836
        %1838 = vrot.lane.b32.xlu0 %v1310, 32
        %v1839 = vpop.permute.xlu0 %1838
        %1843 = vrot.lane.b32.xlu0 %v1311, 64
        %v1844 = vpop.permute.xlu0 %1843
        %1845 = vrot.lane.b32.xlu0 %v1312, 64
        %v1846 = vpop.permute.xlu0 %1845
        %1847 = vrot.lane.b32.xlu0 %v1313, 64
        %v1848 = vpop.permute.xlu0 %1847
        %1852 = vrot.lane.b32.xlu0 %v1565, 96
        %v1853 = vpop.permute.xlu0 %1852
        %1854 = vrot.lane.b32.xlu0 %v1566, 96
        %v1855 = vpop.permute.xlu0 %1854
        %1856 = vrot.lane.b32.xlu0 %v1567, 96
        %v1857 = vpop.permute.xlu0 %1856
        %1861 = vrot.lane.b32.xlu0 %v1571, 32
        %v1862 = vpop.permute.xlu0 %1861
        %1863 = vrot.lane.b32.xlu0 %v1572, 32
        %v1864 = vpop.permute.xlu0 %1863
        %1865 = vrot.lane.b32.xlu0 %v1573, 32
        %v1866 = vpop.permute.xlu0 %1865
        %1873 = vrot.lane.b32.xlu0 %v1825, 64
        %v1874 = vpop.permute.xlu0 %1873
        %1875 = vrot.lane.b32.xlu0 %v1826, 64
        %v1876 = vpop.permute.xlu0 %1875
        %1877 = vrot.lane.b32.xlu0 %v1827, 64
        %v1878 = vpop.permute.xlu0 %1877
        %1885 = vrot.lane.b32.xlu0 %v1828, 96
        %v1886 = vpop.permute.xlu0 %1885
        %1887 = vrot.lane.b32.xlu0 %v1829, 96
        %v1888 = vpop.permute.xlu0 %1887
        %1889 = vrot.lane.b32.xlu0 %v1830, 96
        %v1890 = vpop.permute.xlu0 %1889
        %v1894 = vsel %vm285, %v1305, %v1835
        %v1895 = vsel %vm285, %v1306, %v1837
        %v1896 = vsel %vm285, %v1307, %v1839
        %v1897 = vsel %vm289, %v1894, %v1844
        %v1898 = vsel %vm289, %v1895, %v1846
        %v1899 = vsel %vm289, %v1896, %v1848
        %v1900 = vsel %vm293, %v1897, %v1853
        %v1901 = vsel %vm293, %v1898, %v1855
        %v1902 = vsel %vm293, %v1899, %v1857
        %v1903 = vsel %vm285, %v1568, %v1862
        %v1904 = vsel %vm285, %v1569, %v1864
        %v1905 = vsel %vm285, %v1570, %v1866
        %v1906 = vsel %vm289, %v1903, %v1874
        %v1907 = vsel %vm289, %v1904, %v1876
        %v1908 = vsel %vm289, %v1905, %v1878
        %v1909 = vsel %vm293, %v1906, %v1886
        %v1910 = vsel %vm293, %v1907, %v1888
        %v1911 = vsel %vm293, %v1908, %v1890
        %v1913 = vsel %vm285, %v1831, 0
        %v1916 = vsel %vm285, %v1832, 0
        %v1919 = vsel %vm285, %v1833, 0
        %1921 = vmatprep.subr.mxu0 0.0
        %1922 = vmatpush1.msra.mxu0 %v306
        %1923 = vmatprep.subr.mxu0 0.0
        %1924 = vmatpush1.msra.mxu0 %v307
        %1925 = vmatprep.subr.mxu0 0.0
        %1926 = vmatpush1.msra.mxu0 %v308
        %1927 = vmatprep.subr.mxu0 0.0
        %1928 = vmatpush1.msra.mxu0 %v309
        %1929 = vmatprep.subr.mxu0 0.0
        %1930 = vmatpush1.msra.mxu0 %v310
        %1931 = vmatprep.subr.mxu0 0.0
        %1932 = vmatpush1.msra.mxu0 %v311
        %1933 = vmatprep.subr.mxu0 0.0
        %1934 = vmatpush1.msra.mxu0 %v312
        %1935 = vmatprep.subr.mxu0 0.0
        %1936 = vmatpush1.msra.mxu0 %v313
        %1937 = vmatprep.subr.mxu0 0.0
        %1938 = vmatpush1.msra.mxu0 %v314
        %1939 = vmatprep.subr.mxu0 0.0
        %1940 = vmatpush1.msra.mxu0 %v315
        %1941 = vmatprep.subr.mxu0 0.0
        %1942 = vmatpush1.msra.mxu0 %v316
        %1943 = vmatprep.subr.mxu0 0.0
        %1944 = vmatpush1.msra.mxu0 %v317
        %1945 = vmatprep.subr.mxu0 0.0
        %1946 = vmatpush1.msra.mxu0 %v318
        %1947 = vmatprep.subr.mxu0 0.0
        %1948 = vmatpush1.msra.mxu0 %v319
        %1949 = vmatprep.subr.mxu0 0.0
        %1950 = vmatpush1.msra.mxu0 %v320
        %1951 = vmatprep.subr.mxu0 0.0
        %1952 = vmatpush1.msra.mxu0 %v321
        %1953 = vmatprep.subr.mxu0 0.0
        %1954 = vmatpush1.msra.mxu0 %v322
        %1955 = vmatprep.subr.mxu0 0.0
        %1956 = vmatpush1.msra.mxu0 %v323
        %1957 = vmatprep.subr.mxu0 0.0
        %1958 = vmatpush1.msra.mxu0 %v324
        %1959 = vmatprep.subr.mxu0 0.0
        %1960 = vmatpush1.msra.mxu0 %v325
        %1961 = vmatprep.subr.mxu0 0.0
        %1962 = vmatpush1.msra.mxu0 %v326
        %1963 = vmatprep.subr.mxu0 0.0
        %1964 = vmatpush1.msra.mxu0 %v327
        %1965 = vmatprep.subr.mxu0 0.0
        %1966 = vmatpush1.msra.mxu0 %v328
        %1967 = vmatprep.subr.mxu0 0.0
        %1968 = vmatpush1.msra.mxu0 %v329
        %1969 = vmatprep.subr.mxu0 0.0
        %1970 = vmatpush1.msra.mxu0 %v330
        %1971 = vmatprep.subr.mxu0 0.0
        %1972 = vmatpush1.msra.mxu0 %v331
        %1973 = vmatprep.subr.mxu0 0.0
        %1974 = vmatpush1.msra.mxu0 %v332
        %1975 = vmatprep.subr.mxu0 0.0
        %1976 = vmatpush1.msra.mxu0 %v333
        %1977 = vmatprep.subr.mxu0 0.0
        %1978 = vmatpush1.msra.mxu0 %v334
        %1979 = vmatprep.subr.mxu0 0.0
        %1980 = vmatpush1.msra.mxu0 %v335
        %1981 = vmatprep.subr.mxu0 0.0
        %1982 = vmatpush1.msra.mxu0 %v336
        %1983 = vmatprep.subr.mxu0 0.0
        %1984 = vmatpush1.msra.mxu0 %v337
        %1985 = vmatprep.mubr.f32.mxu0 %v1909
        %1986 = vmatmul.mubr.f32.gmra.mrb[0].mxu0 %v1900
        %v1987 = vpop.f32.mrb[0].mxu0
        %v1988 = vadd.f32 %v347, %v1987
        %v1989 = vpop.f32.mrb[0].mxu0
        %1990 = vmatprep.mubr.f32.mxu0 %v1910
        %1991 = vmatmul.mubr.f32.gmra.mrb[0].mxu0 %v1901
        %v1992 = vpop.f32.mrb[0].mxu0
        %v1993 = vadd.f32 %v347, %v1992
        %v1994 = vpop.f32.mrb[0].mxu0
        %1995 = vmatprep.mubr.f32.mxu0 %v1911
        %1996 = vmatmul.mubr.f32.gmra.mrb[0].mxu0 %v1902
        %v1997 = vpop.f32.mrb[0].mxu0
        %v1998 = vadd.f32 %v347, %v1997
        %v1999 = vpop.f32.mrb[0].mxu0
        %2000 = vdwg.mxu0
        %2001 = vmatprep.subr.mxu0 0.0
        %2002 = vmatpush1.msra.mxu0 %v338
        %2003 = vmatprep.subr.mxu0 0.0
        %2004 = vmatpush1.msra.mxu0 %v339
        %2005 = vmatprep.subr.mxu0 0.0
        %2006 = vmatpush1.msra.mxu0 %v340
        %2007 = vmatprep.subr.mxu0 0.0
        %2008 = vmatpush1.msra.mxu0 %v341
        %2009 = vmatprep.subr.mxu0 0.0
        %2010 = vmatpush1.msra.mxu0 0.0
        %2011 = vmatprep.subr.mxu0 0.0
        %2012 = vmatpush1.msra.mxu0 0.0
        %2013 = vmatprep.subr.mxu0 0.0
        %2014 = vmatpush1.msra.mxu0 0.0
        %2015 = vmatprep.subr.mxu0 0.0
        %2016 = vmatpush1.msra.mxu0 0.0
        %2017 = vmatprep.subr.mxu0 0.0
        %2018 = vmatpush1.msra.mxu0 0.0
        %2019 = vmatprep.subr.mxu0 0.0
        %2020 = vmatpush1.msra.mxu0 0.0
        %2021 = vmatprep.subr.mxu0 0.0
        %2022 = vmatpush1.msra.mxu0 0.0
        %2023 = vmatprep.subr.mxu0 0.0
        %2024 = vmatpush1.msra.mxu0 0.0
        %2025 = vmatprep.subr.mxu0 0.0
        %2026 = vmatpush1.msra.mxu0 0.0
        %2027 = vmatprep.subr.mxu0 0.0
        %2028 = vmatpush1.msra.mxu0 0.0
        %2029 = vmatprep.subr.mxu0 0.0
        %2030 = vmatpush1.msra.mxu0 0.0
        %2031 = vmatprep.subr.mxu0 0.0
        %2032 = vmatpush1.msra.mxu0 0.0
        %2033 = vmatprep.subr.mxu0 0.0
        %2034 = vmatpush1.msra.mxu0 0.0
        %2035 = vmatprep.subr.mxu0 0.0
        %2036 = vmatpush1.msra.mxu0 0.0
        %2037 = vmatprep.subr.mxu0 0.0
        %2038 = vmatpush1.msra.mxu0 0.0
        %2039 = vmatprep.subr.mxu0 0.0
        %2040 = vmatpush1.msra.mxu0 0.0
        %2041 = vmatprep.subr.mxu0 0.0
        %2042 = vmatpush1.msra.mxu0 0.0
        %2043 = vmatprep.subr.mxu0 0.0
        %2044 = vmatpush1.msra.mxu0 0.0
        %2045 = vmatprep.subr.mxu0 0.0
        %2046 = vmatpush1.msra.mxu0 0.0
        %2047 = vmatprep.subr.mxu0 0.0
        %2048 = vmatpush1.msra.mxu0 0.0
        %2049 = vmatprep.subr.mxu0 0.0
        %2050 = vmatpush1.msra.mxu0 0.0
        %2051 = vmatprep.subr.mxu0 0.0
        %2052 = vmatpush1.msra.mxu0 0.0
        %2053 = vmatprep.subr.mxu0 0.0
        %2054 = vmatpush1.msra.mxu0 0.0
        %2055 = vmatprep.subr.mxu0 0.0
        %2056 = vmatpush1.msra.mxu0 0.0
        %2057 = vmatprep.subr.mxu0 0.0
        %2058 = vmatpush1.msra.mxu0 0.0
        %2059 = vmatprep.subr.mxu0 0.0
        %2060 = vmatpush1.msra.mxu0 0.0
        %2061 = vmatprep.subr.mxu0 0.0
        %2062 = vmatpush1.msra.mxu0 0.0
        %2063 = vmatprep.subr.mxu0 0.0
        %2064 = vmatpush1.msra.mxu0 0.0
        %2065 = vmatprep.mubr.f32.mxu0 0.0
        %2066 = vmatmul.mubr.f32.gmra.mrb[0].mxu0 %v1913
        %v2067 = vpop.f32.mrb[0].mxu0
        %v2068 = vadd.f32 %v1988, %v2067
        %v2069 = vpop.f32.mrb[0].mxu0
        %2070 = vmatprep.mubr.f32.mxu0 0.0
        %2071 = vmatmul.mubr.f32.gmra.mrb[0].mxu0 %v1916
        %v2072 = vpop.f32.mrb[0].mxu0
        %v2073 = vadd.f32 %v1993, %v2072
        %v2074 = vpop.f32.mrb[0].mxu0
        %2075 = vmatprep.mubr.f32.mxu0 0.0
        %2076 = vmatmul.mubr.f32.gmra.mrb[0].mxu0 %v1919
        %v2077 = vpop.f32.mrb[0].mxu0
        %v2078 = vadd.f32 %v1998, %v2077
        %v2079 = vpop.f32.mrb[0].mxu0
        %2080 = vdwg.mxu0
        %v2081 = vmax.f32 %v2068, 0.0
        %v2082 = vmax.f32 %v2073, 0.0
        %v2083 = vmax.f32 %v2078, 0.0
        %s2084 = scalar_lea.vmem %s178, 216
        %v2085 = vld [vmem:[%s2084] sm:$0xff]
        %v2086 = vld [vmem:[%s2084 + $0x8] sm:$0xff]
        %v2087 = vld [vmem:[%s2084 + $0x10] sm:$0xf]
        %v2088 = vld [vmem:[%s2084 + $0x1] sm:$0xff]
        %v2089 = vld [vmem:[%s2084 + $0x9] sm:$0xff]
        %v2090 = vld [vmem:[%s2084 + $0x11] sm:$0xf]
        %v2091 = vld [vmem:[%s2084 + $0x2] sm:$0xff]
        %v2092 = vld [vmem:[%s2084 + $0xa] sm:$0xff]
        %v2093 = vld [vmem:[%s2084 + $0x12] sm:$0xf]
        %2094 = vrot.lane.b32.xlu0 %v1568, 32
        %v2095 = vpop.permute.xlu0 %2094
        %2096 = vrot.lane.b32.xlu0 %v1569, 32
        %v2097 = vpop.permute.xlu0 %2096
        %2098 = vrot.lane.b32.xlu0 %v1570, 32
        %v2099 = vpop.permute.xlu0 %2098
        %2103 = vrot.lane.b32.xlu0 %v1571, 64
        %v2104 = vpop.permute.xlu0 %2103
        %2105 = vrot.lane.b32.xlu0 %v1572, 64
        %v2106 = vpop.permute.xlu0 %2105
        %2107 = vrot.lane.b32.xlu0 %v1573, 64
        %v2108 = vpop.permute.xlu0 %2107
        %2112 = vrot.lane.b32.xlu0 %v1825, 96
        %v2113 = vpop.permute.xlu0 %2112
        %2114 = vrot.lane.b32.xlu0 %v1826, 96
        %v2115 = vpop.permute.xlu0 %2114
        %2116 = vrot.lane.b32.xlu0 %v1827, 96
        %v2117 = vpop.permute.xlu0 %2116
        %2121 = vrot.lane.b32.xlu0 %v1831, 32
        %v2122 = vpop.permute.xlu0 %2121
        %2123 = vrot.lane.b32.xlu0 %v1832, 32
        %v2124 = vpop.permute.xlu0 %2123
        %2125 = vrot.lane.b32.xlu0 %v1833, 32
        %v2126 = vpop.permute.xlu0 %2125
        %2133 = vrot.lane.b32.xlu0 %v2085, 64
        %v2134 = vpop.permute.xlu0 %2133
        %2135 = vrot.lane.b32.xlu0 %v2086, 64
        %v2136 = vpop.permute.xlu0 %2135
        %2137 = vrot.lane.b32.xlu0 %v2087, 64
        %v2138 = vpop.permute.xlu0 %2137
        %2145 = vrot.lane.b32.xlu0 %v2088, 96
        %v2146 = vpop.permute.xlu0 %2145
        %2147 = vrot.lane.b32.xlu0 %v2089, 96
        %v2148 = vpop.permute.xlu0 %2147
        %2149 = vrot.lane.b32.xlu0 %v2090, 96
        %v2150 = vpop.permute.xlu0 %2149
        %v2154 = vsel %vm285, %v1565, %v2095
        %v2155 = vsel %vm285, %v1566, %v2097
        %v2156 = vsel %vm285, %v1567, %v2099
        %v2157 = vsel %vm289, %v2154, %v2104
        %v2158 = vsel %vm289, %v2155, %v2106
        %v2159 = vsel %vm289, %v2156, %v2108
        %v2160 = vsel %vm293, %v2157, %v2113
        %v2161 = vsel %vm293, %v2158, %v2115
        %v2162 = vsel %vm293, %v2159, %v2117
        %v2163 = vsel %vm285, %v1828, %v2122
        %v2164 = vsel %vm285, %v1829, %v2124
        %v2165 = vsel %vm285, %v1830, %v2126
        %v2166 = vsel %vm289, %v2163, %v2134
        %v2167 = vsel %vm289, %v2164, %v2136
        %v2168 = vsel %vm289, %v2165, %v2138
        %v2169 = vsel %vm293, %v2166, %v2146
        %v2170 = vsel %vm293, %v2167, %v2148
        %v2171 = vsel %vm293, %v2168, %v2150
        %v2173 = vsel %vm285, %v2091, 0
        %v2176 = vsel %vm285, %v2092, 0
        %v2179 = vsel %vm285, %v2093, 0
        %2181 = vmatprep.subr.mxu0 0.0
        %2182 = vmatpush1.msra.mxu0 %v306
        %2183 = vmatprep.subr.mxu0 0.0
        %2184 = vmatpush1.msra.mxu0 %v307
        %2185 = vmatprep.subr.mxu0 0.0
        %2186 = vmatpush1.msra.mxu0 %v308
        %2187 = vmatprep.subr.mxu0 0.0
        %2188 = vmatpush1.msra.mxu0 %v309
        %2189 = vmatprep.subr.mxu0 0.0
        %2190 = vmatpush1.msra.mxu0 %v310
        %2191 = vmatprep.subr.mxu0 0.0
        %2192 = vmatpush1.msra.mxu0 %v311
        %2193 = vmatprep.subr.mxu0 0.0
        %2194 = vmatpush1.msra.mxu0 %v312
        %2195 = vmatprep.subr.mxu0 0.0
        %2196 = vmatpush1.msra.mxu0 %v313
        %2197 = vmatprep.subr.mxu0 0.0
        %2198 = vmatpush1.msra.mxu0 %v314
        %2199 = vmatprep.subr.mxu0 0.0
        %2200 = vmatpush1.msra.mxu0 %v315
        %2201 = vmatprep.subr.mxu0 0.0
        %2202 = vmatpush1.msra.mxu0 %v316
        %2203 = vmatprep.subr.mxu0 0.0
        %2204 = vmatpush1.msra.mxu0 %v317
        %2205 = vmatprep.subr.mxu0 0.0
        %2206 = vmatpush1.msra.mxu0 %v318
        %2207 = vmatprep.subr.mxu0 0.0
        %2208 = vmatpush1.msra.mxu0 %v319
        %2209 = vmatprep.subr.mxu0 0.0
        %2210 = vmatpush1.msra.mxu0 %v320
        %2211 = vmatprep.subr.mxu0 0.0
        %2212 = vmatpush1.msra.mxu0 %v321
        %2213 = vmatprep.subr.mxu0 0.0
        %2214 = vmatpush1.msra.mxu0 %v322
        %2215 = vmatprep.subr.mxu0 0.0
        %2216 = vmatpush1.msra.mxu0 %v323
        %2217 = vmatprep.subr.mxu0 0.0
        %2218 = vmatpush1.msra.mxu0 %v324
        %2219 = vmatprep.subr.mxu0 0.0
        %2220 = vmatpush1.msra.mxu0 %v325
        %2221 = vmatprep.subr.mxu0 0.0
        %2222 = vmatpush1.msra.mxu0 %v326
        %2223 = vmatprep.subr.mxu0 0.0
        %2224 = vmatpush1.msra.mxu0 %v327
        %2225 = vmatprep.subr.mxu0 0.0
        %2226 = vmatpush1.msra.mxu0 %v328
        %2227 = vmatprep.subr.mxu0 0.0
        %2228 = vmatpush1.msra.mxu0 %v329
        %2229 = vmatprep.subr.mxu0 0.0
        %2230 = vmatpush1.msra.mxu0 %v330
        %2231 = vmatprep.subr.mxu0 0.0
        %2232 = vmatpush1.msra.mxu0 %v331
        %2233 = vmatprep.subr.mxu0 0.0
        %2234 = vmatpush1.msra.mxu0 %v332
        %2235 = vmatprep.subr.mxu0 0.0
        %2236 = vmatpush1.msra.mxu0 %v333
        %2237 = vmatprep.subr.mxu0 0.0
        %2238 = vmatpush1.msra.mxu0 %v334
        %2239 = vmatprep.subr.mxu0 0.0
        %2240 = vmatpush1.msra.mxu0 %v335
        %2241 = vmatprep.subr.mxu0 0.0
        %2242 = vmatpush1.msra.mxu0 %v336
        %2243 = vmatprep.subr.mxu0 0.0
        %2244 = vmatpush1.msra.mxu0 %v337
        %2245 = vmatprep.mubr.f32.mxu0 %v2169
        %2246 = vmatmul.mubr.f32.gmra.mrb[0].mxu0 %v2160
        %v2247 = vpop.f32.mrb[0].mxu0
        %v2248 = vadd.f32 %v347, %v2247
        %v2249 = vpop.f32.mrb[0].mxu0
        %2250 = vmatprep.mubr.f32.mxu0 %v2170
        %2251 = vmatmul.mubr.f32.gmra.mrb[0].mxu0 %v2161
        %v2252 = vpop.f32.mrb[0].mxu0
        %v2253 = vadd.f32 %v347, %v2252
        %v2254 = vpop.f32.mrb[0].mxu0
        %2255 = vmatprep.mubr.f32.mxu0 %v2171
        %2256 = vmatmul.mubr.f32.gmra.mrb[0].mxu0 %v2162
        %v2257 = vpop.f32.mrb[0].mxu0
        %v2258 = vadd.f32 %v347, %v2257
        %v2259 = vpop.f32.mrb[0].mxu0
        %2260 = vdwg.mxu0
        %2261 = vmatprep.subr.mxu0 0.0
        %2262 = vmatpush1.msra.mxu0 %v338
        %2263 = vmatprep.subr.mxu0 0.0
        %2264 = vmatpush1.msra.mxu0 %v339
        %2265 = vmatprep.subr.mxu0 0.0
        %2266 = vmatpush1.msra.mxu0 %v340
        %2267 = vmatprep.subr.mxu0 0.0
        %2268 = vmatpush1.msra.mxu0 %v341
        %2269 = vmatprep.subr.mxu0 0.0
        %2270 = vmatpush1.msra.mxu0 0.0
        %2271 = vmatprep.subr.mxu0 0.0
        %2272 = vmatpush1.msra.mxu0 0.0
        %2273 = vmatprep.subr.mxu0 0.0
        %2274 = vmatpush1.msra.mxu0 0.0
        %2275 = vmatprep.subr.mxu0 0.0
        %2276 = vmatpush1.msra.mxu0 0.0
        %2277 = vmatprep.subr.mxu0 0.0
        %2278 = vmatpush1.msra.mxu0 0.0
        %2279 = vmatprep.subr.mxu0 0.0
        %2280 = vmatpush1.msra.mxu0 0.0
        %2281 = vmatprep.subr.mxu0 0.0
        %2282 = vmatpush1.msra.mxu0 0.0
        %2283 = vmatprep.subr.mxu0 0.0
        %2284 = vmatpush1.msra.mxu0 0.0
        %2285 = vmatprep.subr.mxu0 0.0
        %2286 = vmatpush1.msra.mxu0 0.0
        %2287 = vmatprep.subr.mxu0 0.0
        %2288 = vmatpush1.msra.mxu0 0.0
        %2289 = vmatprep.subr.mxu0 0.0
        %2290 = vmatpush1.msra.mxu0 0.0
        %2291 = vmatprep.subr.mxu0 0.0
        %2292 = vmatpush1.msra.mxu0 0.0
        %2293 = vmatprep.subr.mxu0 0.0
        %2294 = vmatpush1.msra.mxu0 0.0
        %2295 = vmatprep.subr.mxu0 0.0
        %2296 = vmatpush1.msra.mxu0 0.0
        %2297 = vmatprep.subr.mxu0 0.0
        %2298 = vmatpush1.msra.mxu0 0.0
        %2299 = vmatprep.subr.mxu0 0.0
        %2300 = vmatpush1.msra.mxu0 0.0
        %2301 = vmatprep.subr.mxu0 0.0
        %2302 = vmatpush1.msra.mxu0 0.0
        %2303 = vmatprep.subr.mxu0 0.0
        %2304 = vmatpush1.msra.mxu0 0.0
        %2305 = vmatprep.subr.mxu0 0.0
        %2306 = vmatpush1.msra.mxu0 0.0
        %2307 = vmatprep.subr.mxu0 0.0
        %2308 = vmatpush1.msra.mxu0 0.0
        %2309 = vmatprep.subr.mxu0 0.0
        %2310 = vmatpush1.msra.mxu0 0.0
        %2311 = vmatprep.subr.mxu0 0.0
        %2312 = vmatpush1.msra.mxu0 0.0
        %2313 = vmatprep.subr.mxu0 0.0
        %2314 = vmatpush1.msra.mxu0 0.0
        %2315 = vmatprep.subr.mxu0 0.0
        %2316 = vmatpush1.msra.mxu0 0.0
        %2317 = vmatprep.subr.mxu0 0.0
        %2318 = vmatpush1.msra.mxu0 0.0
        %2319 = vmatprep.subr.mxu0 0.0
        %2320 = vmatpush1.msra.mxu0 0.0
        %2321 = vmatprep.subr.mxu0 0.0
        %2322 = vmatpush1.msra.mxu0 0.0
        %2323 = vmatprep.subr.mxu0 0.0
        %2324 = vmatpush1.msra.mxu0 0.0
        %2325 = vmatprep.mubr.f32.mxu0 0.0
        %2326 = vmatmul.mubr.f32.gmra.mrb[0].mxu0 %v2173
        %v2327 = vpop.f32.mrb[0].mxu0
        %v2328 = vadd.f32 %v2248, %v2327
        %v2329 = vpop.f32.mrb[0].mxu0
        %2330 = vmatprep.mubr.f32.mxu0 0.0
        %2331 = vmatmul.mubr.f32.gmra.mrb[0].mxu0 %v2176
        %v2332 = vpop.f32.mrb[0].mxu0
        %v2333 = vadd.f32 %v2253, %v2332
        %v2334 = vpop.f32.mrb[0].mxu0
        %2335 = vmatprep.mubr.f32.mxu0 0.0
        %2336 = vmatmul.mubr.f32.gmra.mrb[0].mxu0 %v2179
        %v2337 = vpop.f32.mrb[0].mxu0
        %v2338 = vadd.f32 %v2258, %v2337
        %v2339 = vpop.f32.mrb[0].mxu0
        %2340 = vdwg.mxu0
        %v2341 = vmax.f32 %v2328, 0.0
        %v2342 = vmax.f32 %v2333, 0.0
        %v2343 = vmax.f32 %v2338, 0.0
        %s2344 = scalar_lea.vmem %s178, 240
        %v2345 = vld [vmem:[%s2344] sm:$0xff]
        %v2346 = vld [vmem:[%s2344 + $0x8] sm:$0xff]
        %v2347 = vld [vmem:[%s2344 + $0x10] sm:$0xf]
        %v2348 = vld [vmem:[%s2344 + $0x1] sm:$0xff]
        %v2349 = vld [vmem:[%s2344 + $0x9] sm:$0xff]
        %v2350 = vld [vmem:[%s2344 + $0x11] sm:$0xf]
        %v2351 = vld [vmem:[%s2344 + $0x2] sm:$0xff]
        %v2352 = vld [vmem:[%s2344 + $0xa] sm:$0xff]
        %v2353 = vld [vmem:[%s2344 + $0x12] sm:$0xf]
        %2354 = vrot.lane.b32.xlu0 %v1828, 32
        %v2355 = vpop.permute.xlu0 %2354
        %2356 = vrot.lane.b32.xlu0 %v1829, 32
        %v2357 = vpop.permute.xlu0 %2356
        %2358 = vrot.lane.b32.xlu0 %v1830, 32
        %v2359 = vpop.permute.xlu0 %2358
        %2363 = vrot.lane.b32.xlu0 %v1831, 64
        %v2364 = vpop.permute.xlu0 %2363
        %2365 = vrot.lane.b32.xlu0 %v1832, 64
        %v2366 = vpop.permute.xlu0 %2365
        %2367 = vrot.lane.b32.xlu0 %v1833, 64
        %v2368 = vpop.permute.xlu0 %2367
        %2372 = vrot.lane.b32.xlu0 %v2085, 96
        %v2373 = vpop.permute.xlu0 %2372
        %2374 = vrot.lane.b32.xlu0 %v2086, 96
        %v2375 = vpop.permute.xlu0 %2374
        %2376 = vrot.lane.b32.xlu0 %v2087, 96
        %v2377 = vpop.permute.xlu0 %2376
        %2381 = vrot.lane.b32.xlu0 %v2091, 32
        %v2382 = vpop.permute.xlu0 %2381
        %2383 = vrot.lane.b32.xlu0 %v2092, 32
        %v2384 = vpop.permute.xlu0 %2383
        %2385 = vrot.lane.b32.xlu0 %v2093, 32
        %v2386 = vpop.permute.xlu0 %2385
        %2393 = vrot.lane.b32.xlu0 %v2345, 64
        %v2394 = vpop.permute.xlu0 %2393
        %2395 = vrot.lane.b32.xlu0 %v2346, 64
        %v2396 = vpop.permute.xlu0 %2395
        %2397 = vrot.lane.b32.xlu0 %v2347, 64
        %v2398 = vpop.permute.xlu0 %2397
        %2405 = vrot.lane.b32.xlu0 %v2348, 96
        %v2406 = vpop.permute.xlu0 %2405
        %2407 = vrot.lane.b32.xlu0 %v2349, 96
        %v2408 = vpop.permute.xlu0 %2407
        %2409 = vrot.lane.b32.xlu0 %v2350, 96
        %v2410 = vpop.permute.xlu0 %2409
        %v2414 = vsel %vm285, %v1825, %v2355
        %v2415 = vsel %vm285, %v1826, %v2357
        %v2416 = vsel %vm285, %v1827, %v2359
        %v2417 = vsel %vm289, %v2414, %v2364
        %v2418 = vsel %vm289, %v2415, %v2366
        %v2419 = vsel %vm289, %v2416, %v2368
        %v2420 = vsel %vm293, %v2417, %v2373
        %v2421 = vsel %vm293, %v2418, %v2375
        %v2422 = vsel %vm293, %v2419, %v2377
        %v2423 = vsel %vm285, %v2088, %v2382
        %v2424 = vsel %vm285, %v2089, %v2384
        %v2425 = vsel %vm285, %v2090, %v2386
        %v2426 = vsel %vm289, %v2423, %v2394
        %v2427 = vsel %vm289, %v2424, %v2396
        %v2428 = vsel %vm289, %v2425, %v2398
        %v2429 = vsel %vm293, %v2426, %v2406
        %v2430 = vsel %vm293, %v2427, %v2408
        %v2431 = vsel %vm293, %v2428, %v2410
        %v2433 = vsel %vm285, %v2351, 0
        %v2436 = vsel %vm285, %v2352, 0
        %v2439 = vsel %vm285, %v2353, 0
        %2441 = vmatprep.subr.mxu0 0.0
        %2442 = vmatpush1.msra.mxu0 %v306
        %2443 = vmatprep.subr.mxu0 0.0
        %2444 = vmatpush1.msra.mxu0 %v307
        %2445 = vmatprep.subr.mxu0 0.0
        %2446 = vmatpush1.msra.mxu0 %v308
        %2447 = vmatprep.subr.mxu0 0.0
        %2448 = vmatpush1.msra.mxu0 %v309
        %2449 = vmatprep.subr.mxu0 0.0
        %2450 = vmatpush1.msra.mxu0 %v310
        %2451 = vmatprep.subr.mxu0 0.0
        %2452 = vmatpush1.msra.mxu0 %v311
        %2453 = vmatprep.subr.mxu0 0.0
        %2454 = vmatpush1.msra.mxu0 %v312
        %2455 = vmatprep.subr.mxu0 0.0
        %2456 = vmatpush1.msra.mxu0 %v313
        %2457 = vmatprep.subr.mxu0 0.0
        %2458 = vmatpush1.msra.mxu0 %v314
        %2459 = vmatprep.subr.mxu0 0.0
        %2460 = vmatpush1.msra.mxu0 %v315
        %2461 = vmatprep.subr.mxu0 0.0
        %2462 = vmatpush1.msra.mxu0 %v316
        %2463 = vmatprep.subr.mxu0 0.0
        %2464 = vmatpush1.msra.mxu0 %v317
        %2465 = vmatprep.subr.mxu0 0.0
        %2466 = vmatpush1.msra.mxu0 %v318
        %2467 = vmatprep.subr.mxu0 0.0
        %2468 = vmatpush1.msra.mxu0 %v319
        %2469 = vmatprep.subr.mxu0 0.0
        %2470 = vmatpush1.msra.mxu0 %v320
        %2471 = vmatprep.subr.mxu0 0.0
        %2472 = vmatpush1.msra.mxu0 %v321
        %2473 = vmatprep.subr.mxu0 0.0
        %2474 = vmatpush1.msra.mxu0 %v322
        %2475 = vmatprep.subr.mxu0 0.0
        %2476 = vmatpush1.msra.mxu0 %v323
        %2477 = vmatprep.subr.mxu0 0.0
        %2478 = vmatpush1.msra.mxu0 %v324
        %2479 = vmatprep.subr.mxu0 0.0
        %2480 = vmatpush1.msra.mxu0 %v325
        %2481 = vmatprep.subr.mxu0 0.0
        %2482 = vmatpush1.msra.mxu0 %v326
        %2483 = vmatprep.subr.mxu0 0.0
        %2484 = vmatpush1.msra.mxu0 %v327
        %2485 = vmatprep.subr.mxu0 0.0
        %2486 = vmatpush1.msra.mxu0 %v328
        %2487 = vmatprep.subr.mxu0 0.0
        %2488 = vmatpush1.msra.mxu0 %v329
        %2489 = vmatprep.subr.mxu0 0.0
        %2490 = vmatpush1.msra.mxu0 %v330
        %2491 = vmatprep.subr.mxu0 0.0
        %2492 = vmatpush1.msra.mxu0 %v331
        %2493 = vmatprep.subr.mxu0 0.0
        %2494 = vmatpush1.msra.mxu0 %v332
        %2495 = vmatprep.subr.mxu0 0.0
        %2496 = vmatpush1.msra.mxu0 %v333
        %2497 = vmatprep.subr.mxu0 0.0
        %2498 = vmatpush1.msra.mxu0 %v334
        %2499 = vmatprep.subr.mxu0 0.0
        %2500 = vmatpush1.msra.mxu0 %v335
        %2501 = vmatprep.subr.mxu0 0.0
        %2502 = vmatpush1.msra.mxu0 %v336
        %2503 = vmatprep.subr.mxu0 0.0
        %2504 = vmatpush1.msra.mxu0 %v337
        %2505 = vmatprep.mubr.f32.mxu0 %v2429
        %2506 = vmatmul.mubr.f32.gmra.mrb[0].mxu0 %v2420
        %v2507 = vpop.f32.mrb[0].mxu0
        %v2508 = vadd.f32 %v347, %v2507
        %v2509 = vpop.f32.mrb[0].mxu0
        %2510 = vmatprep.mubr.f32.mxu0 %v2430
        %2511 = vmatmul.mubr.f32.gmra.mrb[0].mxu0 %v2421
        %v2512 = vpop.f32.mrb[0].mxu0
        %v2513 = vadd.f32 %v347, %v2512
        %v2514 = vpop.f32.mrb[0].mxu0
        %2515 = vmatprep.mubr.f32.mxu0 %v2431
        %2516 = vmatmul.mubr.f32.gmra.mrb[0].mxu0 %v2422
        %v2517 = vpop.f32.mrb[0].mxu0
        %v2518 = vadd.f32 %v347, %v2517
        %v2519 = vpop.f32.mrb[0].mxu0
        %2520 = vdwg.mxu0
        %2521 = vmatprep.subr.mxu0 0.0
        %2522 = vmatpush1.msra.mxu0 %v338
        %2523 = vmatprep.subr.mxu0 0.0
        %2524 = vmatpush1.msra.mxu0 %v339
        %2525 = vmatprep.subr.mxu0 0.0
        %2526 = vmatpush1.msra.mxu0 %v340
        %2527 = vmatprep.subr.mxu0 0.0
        %2528 = vmatpush1.msra.mxu0 %v341
        %2529 = vmatprep.subr.mxu0 0.0
        %2530 = vmatpush1.msra.mxu0 0.0
        %2531 = vmatprep.subr.mxu0 0.0
        %2532 = vmatpush1.msra.mxu0 0.0
        %2533 = vmatprep.subr.mxu0 0.0
        %2534 = vmatpush1.msra.mxu0 0.0
        %2535 = vmatprep.subr.mxu0 0.0
        %2536 = vmatpush1.msra.mxu0 0.0
        %2537 = vmatprep.subr.mxu0 0.0
        %2538 = vmatpush1.msra.mxu0 0.0
        %2539 = vmatprep.subr.mxu0 0.0
        %2540 = vmatpush1.msra.mxu0 0.0
        %2541 = vmatprep.subr.mxu0 0.0
        %2542 = vmatpush1.msra.mxu0 0.0
        %2543 = vmatprep.subr.mxu0 0.0
        %2544 = vmatpush1.msra.mxu0 0.0
        %2545 = vmatprep.subr.mxu0 0.0
        %2546 = vmatpush1.msra.mxu0 0.0
        %2547 = vmatprep.subr.mxu0 0.0
        %2548 = vmatpush1.msra.mxu0 0.0
        %2549 = vmatprep.subr.mxu0 0.0
        %2550 = vmatpush1.msra.mxu0 0.0
        %2551 = vmatprep.subr.mxu0 0.0
        %2552 = vmatpush1.msra.mxu0 0.0
        %2553 = vmatprep.subr.mxu0 0.0
        %2554 = vmatpush1.msra.mxu0 0.0
        %2555 = vmatprep.subr.mxu0 0.0
        %2556 = vmatpush1.msra.mxu0 0.0
        %2557 = vmatprep.subr.mxu0 0.0
        %2558 = vmatpush1.msra.mxu0 0.0
        %2559 = vmatprep.subr.mxu0 0.0
        %2560 = vmatpush1.msra.mxu0 0.0
        %2561 = vmatprep.subr.mxu0 0.0
        %2562 = vmatpush1.msra.mxu0 0.0
        %2563 = vmatprep.subr.mxu0 0.0
        %2564 = vmatpush1.msra.mxu0 0.0
        %2565 = vmatprep.subr.mxu0 0.0
        %2566 = vmatpush1.msra.mxu0 0.0
        %2567 = vmatprep.subr.mxu0 0.0
        %2568 = vmatpush1.msra.mxu0 0.0
        %2569 = vmatprep.subr.mxu0 0.0
        %2570 = vmatpush1.msra.mxu0 0.0
        %2571 = vmatprep.subr.mxu0 0.0
        %2572 = vmatpush1.msra.mxu0 0.0
        %2573 = vmatprep.subr.mxu0 0.0
        %2574 = vmatpush1.msra.mxu0 0.0
        %2575 = vmatprep.subr.mxu0 0.0
        %2576 = vmatpush1.msra.mxu0 0.0
        %2577 = vmatprep.subr.mxu0 0.0
        %2578 = vmatpush1.msra.mxu0 0.0
        %2579 = vmatprep.subr.mxu0 0.0
        %2580 = vmatpush1.msra.mxu0 0.0
        %2581 = vmatprep.subr.mxu0 0.0
        %2582 = vmatpush1.msra.mxu0 0.0
        %2583 = vmatprep.subr.mxu0 0.0
        %2584 = vmatpush1.msra.mxu0 0.0
        %2585 = vmatprep.mubr.f32.mxu0 0.0
        %2586 = vmatmul.mubr.f32.gmra.mrb[0].mxu0 %v2433
        %v2587 = vpop.f32.mrb[0].mxu0
        %v2588 = vadd.f32 %v2508, %v2587
        %v2589 = vpop.f32.mrb[0].mxu0
        %2590 = vmatprep.mubr.f32.mxu0 0.0
        %2591 = vmatmul.mubr.f32.gmra.mrb[0].mxu0 %v2436
        %v2592 = vpop.f32.mrb[0].mxu0
        %v2593 = vadd.f32 %v2513, %v2592
        %v2594 = vpop.f32.mrb[0].mxu0
        %2595 = vmatprep.mubr.f32.mxu0 0.0
        %2596 = vmatmul.mubr.f32.gmra.mrb[0].mxu0 %v2439
        %v2597 = vpop.f32.mrb[0].mxu0
        %v2598 = vadd.f32 %v2518, %v2597
        %v2599 = vpop.f32.mrb[0].mxu0
        %2600 = vdwg.mxu0
        %v2601 = vmax.f32 %v2588, 0.0
        %v2602 = vmax.f32 %v2593, 0.0
        %v2603 = vmax.f32 %v2598, 0.0
        %s2604 = scalar_lea.vmem %s178, 264
        %v2605 = vld [vmem:[%s2604] sm:$0xff]
        %v2606 = vld [vmem:[%s2604 + $0x8] sm:$0xff]
        %v2607 = vld [vmem:[%s2604 + $0x10] sm:$0xf]
        %v2608 = vld [vmem:[%s2604 + $0x1] sm:$0xff]
        %v2609 = vld [vmem:[%s2604 + $0x9] sm:$0xff]
        %v2610 = vld [vmem:[%s2604 + $0x11] sm:$0xf]
        %v2611 = vld [vmem:[%s2604 + $0x2] sm:$0xff]
        %v2612 = vld [vmem:[%s2604 + $0xa] sm:$0xff]
        %v2613 = vld [vmem:[%s2604 + $0x12] sm:$0xf]
        %2614 = vrot.lane.b32.xlu0 %v2088, 32
        %v2615 = vpop.permute.xlu0 %2614
        %2616 = vrot.lane.b32.xlu0 %v2089, 32
        %v2617 = vpop.permute.xlu0 %2616
        %2618 = vrot.lane.b32.xlu0 %v2090, 32
        %v2619 = vpop.permute.xlu0 %2618
        %2623 = vrot.lane.b32.xlu0 %v2091, 64
        %v2624 = vpop.permute.xlu0 %2623
        %2625 = vrot.lane.b32.xlu0 %v2092, 64
        %v2626 = vpop.permute.xlu0 %2625
        %2627 = vrot.lane.b32.xlu0 %v2093, 64
        %v2628 = vpop.permute.xlu0 %2627
        %2632 = vrot.lane.b32.xlu0 %v2345, 96
        %v2633 = vpop.permute.xlu0 %2632
        %2634 = vrot.lane.b32.xlu0 %v2346, 96
        %v2635 = vpop.permute.xlu0 %2634
        %2636 = vrot.lane.b32.xlu0 %v2347, 96
        %v2637 = vpop.permute.xlu0 %2636
        %2641 = vrot.lane.b32.xlu0 %v2351, 32
        %v2642 = vpop.permute.xlu0 %2641
        %2643 = vrot.lane.b32.xlu0 %v2352, 32
        %v2644 = vpop.permute.xlu0 %2643
        %2645 = vrot.lane.b32.xlu0 %v2353, 32
        %v2646 = vpop.permute.xlu0 %2645
        %2653 = vrot.lane.b32.xlu0 %v2605, 64
        %v2654 = vpop.permute.xlu0 %2653
        %2655 = vrot.lane.b32.xlu0 %v2606, 64
        %v2656 = vpop.permute.xlu0 %2655
        %2657 = vrot.lane.b32.xlu0 %v2607, 64
        %v2658 = vpop.permute.xlu0 %2657
        %2665 = vrot.lane.b32.xlu0 %v2608, 96
        %v2666 = vpop.permute.xlu0 %2665
        %2667 = vrot.lane.b32.xlu0 %v2609, 96
        %v2668 = vpop.permute.xlu0 %2667
        %2669 = vrot.lane.b32.xlu0 %v2610, 96
        %v2670 = vpop.permute.xlu0 %2669
        %v2674 = vsel %vm285, %v2085, %v2615
        %v2675 = vsel %vm285, %v2086, %v2617
        %v2676 = vsel %vm285, %v2087, %v2619
        %v2677 = vsel %vm289, %v2674, %v2624
        %v2678 = vsel %vm289, %v2675, %v2626
        %v2679 = vsel %vm289, %v2676, %v2628
        %v2680 = vsel %vm293, %v2677, %v2633
        %v2681 = vsel %vm293, %v2678, %v2635
        %v2682 = vsel %vm293, %v2679, %v2637
        %v2683 = vsel %vm285, %v2348, %v2642
        %v2684 = vsel %vm285, %v2349, %v2644
        %v2685 = vsel %vm285, %v2350, %v2646
        %v2686 = vsel %vm289, %v2683, %v2654
        %v2687 = vsel %vm289, %v2684, %v2656
        %v2688 = vsel %vm289, %v2685, %v2658
        %v2689 = vsel %vm293, %v2686, %v2666
        %v2690 = vsel %vm293, %v2687, %v2668
        %v2691 = vsel %vm293, %v2688, %v2670
        %v2693 = vsel %vm285, %v2611, 0
        %v2696 = vsel %vm285, %v2612, 0
        %v2699 = vsel %vm285, %v2613, 0
        %2701 = vmatprep.subr.mxu0 0.0
        %2702 = vmatpush1.msra.mxu0 %v306
        %2703 = vmatprep.subr.mxu0 0.0
        %2704 = vmatpush1.msra.mxu0 %v307
        %2705 = vmatprep.subr.mxu0 0.0
        %2706 = vmatpush1.msra.mxu0 %v308
        %2707 = vmatprep.subr.mxu0 0.0
        %2708 = vmatpush1.msra.mxu0 %v309
        %2709 = vmatprep.subr.mxu0 0.0
        %2710 = vmatpush1.msra.mxu0 %v310
        %2711 = vmatprep.subr.mxu0 0.0
        %2712 = vmatpush1.msra.mxu0 %v311
        %2713 = vmatprep.subr.mxu0 0.0
        %2714 = vmatpush1.msra.mxu0 %v312
        %2715 = vmatprep.subr.mxu0 0.0
        %2716 = vmatpush1.msra.mxu0 %v313
        %2717 = vmatprep.subr.mxu0 0.0
        %2718 = vmatpush1.msra.mxu0 %v314
        %2719 = vmatprep.subr.mxu0 0.0
        %2720 = vmatpush1.msra.mxu0 %v315
        %2721 = vmatprep.subr.mxu0 0.0
        %2722 = vmatpush1.msra.mxu0 %v316
        %2723 = vmatprep.subr.mxu0 0.0
        %2724 = vmatpush1.msra.mxu0 %v317
        %2725 = vmatprep.subr.mxu0 0.0
        %2726 = vmatpush1.msra.mxu0 %v318
        %2727 = vmatprep.subr.mxu0 0.0
        %2728 = vmatpush1.msra.mxu0 %v319
        %2729 = vmatprep.subr.mxu0 0.0
        %2730 = vmatpush1.msra.mxu0 %v320
        %2731 = vmatprep.subr.mxu0 0.0
        %2732 = vmatpush1.msra.mxu0 %v321
        %2733 = vmatprep.subr.mxu0 0.0
        %2734 = vmatpush1.msra.mxu0 %v322
        %2735 = vmatprep.subr.mxu0 0.0
        %2736 = vmatpush1.msra.mxu0 %v323
        %2737 = vmatprep.subr.mxu0 0.0
        %2738 = vmatpush1.msra.mxu0 %v324
        %2739 = vmatprep.subr.mxu0 0.0
        %2740 = vmatpush1.msra.mxu0 %v325
        %2741 = vmatprep.subr.mxu0 0.0
        %2742 = vmatpush1.msra.mxu0 %v326
        %2743 = vmatprep.subr.mxu0 0.0
        %2744 = vmatpush1.msra.mxu0 %v327
        %2745 = vmatprep.subr.mxu0 0.0
        %2746 = vmatpush1.msra.mxu0 %v328
        %2747 = vmatprep.subr.mxu0 0.0
        %2748 = vmatpush1.msra.mxu0 %v329
        %2749 = vmatprep.subr.mxu0 0.0
        %2750 = vmatpush1.msra.mxu0 %v330
        %2751 = vmatprep.subr.mxu0 0.0
        %2752 = vmatpush1.msra.mxu0 %v331
        %2753 = vmatprep.subr.mxu0 0.0
        %2754 = vmatpush1.msra.mxu0 %v332
        %2755 = vmatprep.subr.mxu0 0.0
        %2756 = vmatpush1.msra.mxu0 %v333
        %2757 = vmatprep.subr.mxu0 0.0
        %2758 = vmatpush1.msra.mxu0 %v334
        %2759 = vmatprep.subr.mxu0 0.0
        %2760 = vmatpush1.msra.mxu0 %v335
        %2761 = vmatprep.subr.mxu0 0.0
        %2762 = vmatpush1.msra.mxu0 %v336
        %2763 = vmatprep.subr.mxu0 0.0
        %2764 = vmatpush1.msra.mxu0 %v337
        %2765 = vmatprep.mubr.f32.mxu0 %v2689
        %2766 = vmatmul.mubr.f32.gmra.mrb[0].mxu0 %v2680
        %v2767 = vpop.f32.mrb[0].mxu0
        %v2768 = vadd.f32 %v347, %v2767
        %v2769 = vpop.f32.mrb[0].mxu0
        %2770 = vmatprep.mubr.f32.mxu0 %v2690
        %2771 = vmatmul.mubr.f32.gmra.mrb[0].mxu0 %v2681
        %v2772 = vpop.f32.mrb[0].mxu0
        %v2773 = vadd.f32 %v347, %v2772
        %v2774 = vpop.f32.mrb[0].mxu0
        %2775 = vmatprep.mubr.f32.mxu0 %v2691
        %2776 = vmatmul.mubr.f32.gmra.mrb[0].mxu0 %v2682
        %v2777 = vpop.f32.mrb[0].mxu0
        %v2778 = vadd.f32 %v347, %v2777
        %v2779 = vpop.f32.mrb[0].mxu0
        %2780 = vdwg.mxu0
        %2781 = vmatprep.subr.mxu0 0.0
        %2782 = vmatpush1.msra.mxu0 %v338
        %2783 = vmatprep.subr.mxu0 0.0
        %2784 = vmatpush1.msra.mxu0 %v339
        %2785 = vmatprep.subr.mxu0 0.0
        %2786 = vmatpush1.msra.mxu0 %v340
        %2787 = vmatprep.subr.mxu0 0.0
        %2788 = vmatpush1.msra.mxu0 %v341
        %2789 = vmatprep.subr.mxu0 0.0
        %2790 = vmatpush1.msra.mxu0 0.0
        %2791 = vmatprep.subr.mxu0 0.0
        %2792 = vmatpush1.msra.mxu0 0.0
        %2793 = vmatprep.subr.mxu0 0.0
        %2794 = vmatpush1.msra.mxu0 0.0
        %2795 = vmatprep.subr.mxu0 0.0
        %2796 = vmatpush1.msra.mxu0 0.0
        %2797 = vmatprep.subr.mxu0 0.0
        %2798 = vmatpush1.msra.mxu0 0.0
        %2799 = vmatprep.subr.mxu0 0.0
        %2800 = vmatpush1.msra.mxu0 0.0
        %2801 = vmatprep.subr.mxu0 0.0
        %2802 = vmatpush1.msra.mxu0 0.0
        %2803 = vmatprep.subr.mxu0 0.0
        %2804 = vmatpush1.msra.mxu0 0.0
        %2805 = vmatprep.subr.mxu0 0.0
        %2806 = vmatpush1.msra.mxu0 0.0
        %2807 = vmatprep.subr.mxu0 0.0
        %2808 = vmatpush1.msra.mxu0 0.0
        %2809 = vmatprep.subr.mxu0 0.0
        %2810 = vmatpush1.msra.mxu0 0.0
        %2811 = vmatprep.subr.mxu0 0.0
        %2812 = vmatpush1.msra.mxu0 0.0
        %2813 = vmatprep.subr.mxu0 0.0
        %2814 = vmatpush1.msra.mxu0 0.0
        %2815 = vmatprep.subr.mxu0 0.0
        %2816 = vmatpush1.msra.mxu0 0.0
        %2817 = vmatprep.subr.mxu0 0.0
        %2818 = vmatpush1.msra.mxu0 0.0
        %2819 = vmatprep.subr.mxu0 0.0
        %2820 = vmatpush1.msra.mxu0 0.0
        %2821 = vmatprep.subr.mxu0 0.0
        %2822 = vmatpush1.msra.mxu0 0.0
        %2823 = vmatprep.subr.mxu0 0.0
        %2824 = vmatpush1.msra.mxu0 0.0
        %2825 = vmatprep.subr.mxu0 0.0
        %2826 = vmatpush1.msra.mxu0 0.0
        %2827 = vmatprep.subr.mxu0 0.0
        %2828 = vmatpush1.msra.mxu0 0.0
        %2829 = vmatprep.subr.mxu0 0.0
        %2830 = vmatpush1.msra.mxu0 0.0
        %2831 = vmatprep.subr.mxu0 0.0
        %2832 = vmatpush1.msra.mxu0 0.0
        %2833 = vmatprep.subr.mxu0 0.0
        %2834 = vmatpush1.msra.mxu0 0.0
        %2835 = vmatprep.subr.mxu0 0.0
        %2836 = vmatpush1.msra.mxu0 0.0
        %2837 = vmatprep.subr.mxu0 0.0
        %2838 = vmatpush1.msra.mxu0 0.0
        %2839 = vmatprep.subr.mxu0 0.0
        %2840 = vmatpush1.msra.mxu0 0.0
        %2841 = vmatprep.subr.mxu0 0.0
        %2842 = vmatpush1.msra.mxu0 0.0
        %2843 = vmatprep.subr.mxu0 0.0
        %2844 = vmatpush1.msra.mxu0 0.0
        %2845 = vmatprep.mubr.f32.mxu0 0.0
        %2846 = vmatmul.mubr.f32.gmra.mrb[0].mxu0 %v2693
        %v2847 = vpop.f32.mrb[0].mxu0
        %v2848 = vadd.f32 %v2768, %v2847
        %v2849 = vpop.f32.mrb[0].mxu0
        %2850 = vmatprep.mubr.f32.mxu0 0.0
        %2851 = vmatmul.mubr.f32.gmra.mrb[0].mxu0 %v2696
        %v2852 = vpop.f32.mrb[0].mxu0
        %v2853 = vadd.f32 %v2773, %v2852
        %v2854 = vpop.f32.mrb[0].mxu0
        %2855 = vmatprep.mubr.f32.mxu0 0.0
        %2856 = vmatmul.mubr.f32.gmra.mrb[0].mxu0 %v2699
        %v2857 = vpop.f32.mrb[0].mxu0
        %v2858 = vadd.f32 %v2778, %v2857
        %v2859 = vpop.f32.mrb[0].mxu0
        %2860 = vdwg.mxu0
        %v2861 = vmax.f32 %v2848, 0.0
        %v2862 = vmax.f32 %v2853, 0.0
        %v2863 = vmax.f32 %v2858, 0.0
        %s2864 = scalar_lea.vmem %s178, 288
        %v2865 = vld [vmem:[%s2864] sm:$0xff]
        %v2866 = vld [vmem:[%s2864 + $0x8] sm:$0xff]
        %v2867 = vld [vmem:[%s2864 + $0x10] sm:$0xf]
        %v2868 = vld [vmem:[%s2864 + $0x1] sm:$0xff]
        %v2869 = vld [vmem:[%s2864 + $0x9] sm:$0xff]
        %v2870 = vld [vmem:[%s2864 + $0x11] sm:$0xf]
        %v2871 = vld [vmem:[%s2864 + $0x2] sm:$0xff]
        %v2872 = vld [vmem:[%s2864 + $0xa] sm:$0xff]
        %v2873 = vld [vmem:[%s2864 + $0x12] sm:$0xf]
        %2874 = vrot.lane.b32.xlu0 %v2348, 32
        %v2875 = vpop.permute.xlu0 %2874
        %2876 = vrot.lane.b32.xlu0 %v2349, 32
        %v2877 = vpop.permute.xlu0 %2876
        %2878 = vrot.lane.b32.xlu0 %v2350, 32
        %v2879 = vpop.permute.xlu0 %2878
        %2883 = vrot.lane.b32.xlu0 %v2351, 64
        %v2884 = vpop.permute.xlu0 %2883
        %2885 = vrot.lane.b32.xlu0 %v2352, 64
        %v2886 = vpop.permute.xlu0 %2885
        %2887 = vrot.lane.b32.xlu0 %v2353, 64
        %v2888 = vpop.permute.xlu0 %2887
        %2892 = vrot.lane.b32.xlu0 %v2605, 96
        %v2893 = vpop.permute.xlu0 %2892
        %2894 = vrot.lane.b32.xlu0 %v2606, 96
        %v2895 = vpop.permute.xlu0 %2894
        %2896 = vrot.lane.b32.xlu0 %v2607, 96
        %v2897 = vpop.permute.xlu0 %2896
        %2901 = vrot.lane.b32.xlu0 %v2611, 32
        %v2902 = vpop.permute.xlu0 %2901
        %2903 = vrot.lane.b32.xlu0 %v2612, 32
        %v2904 = vpop.permute.xlu0 %2903
        %2905 = vrot.lane.b32.xlu0 %v2613, 32
        %v2906 = vpop.permute.xlu0 %2905
        %2913 = vrot.lane.b32.xlu0 %v2865, 64
        %v2914 = vpop.permute.xlu0 %2913
        %2915 = vrot.lane.b32.xlu0 %v2866, 64
        %v2916 = vpop.permute.xlu0 %2915
        %2917 = vrot.lane.b32.xlu0 %v2867, 64
        %v2918 = vpop.permute.xlu0 %2917
        %2925 = vrot.lane.b32.xlu0 %v2868, 96
        %v2926 = vpop.permute.xlu0 %2925
        %2927 = vrot.lane.b32.xlu0 %v2869, 96
        %v2928 = vpop.permute.xlu0 %2927
        %2929 = vrot.lane.b32.xlu0 %v2870, 96
        %v2930 = vpop.permute.xlu0 %2929
        %v2934 = vsel %vm285, %v2345, %v2875
        %v2935 = vsel %vm285, %v2346, %v2877
        %v2936 = vsel %vm285, %v2347, %v2879
        %v2937 = vsel %vm289, %v2934, %v2884
        %v2938 = vsel %vm289, %v2935, %v2886
        %v2939 = vsel %vm289, %v2936, %v2888
        %v2940 = vsel %vm293, %v2937, %v2893
        %v2941 = vsel %vm293, %v2938, %v2895
        %v2942 = vsel %vm293, %v2939, %v2897
        %v2943 = vsel %vm285, %v2608, %v2902
        %v2944 = vsel %vm285, %v2609, %v2904
        %v2945 = vsel %vm285, %v2610, %v2906
        %v2946 = vsel %vm289, %v2943, %v2914
        %v2947 = vsel %vm289, %v2944, %v2916
        %v2948 = vsel %vm289, %v2945, %v2918
        %v2949 = vsel %vm293, %v2946, %v2926
        %v2950 = vsel %vm293, %v2947, %v2928
        %v2951 = vsel %vm293, %v2948, %v2930
        %v2953 = vsel %vm285, %v2871, 0
        %v2956 = vsel %vm285, %v2872, 0
        %v2959 = vsel %vm285, %v2873, 0
        %2961 = vmatprep.subr.mxu0 0.0
        %2962 = vmatpush1.msra.mxu0 %v306
        %2963 = vmatprep.subr.mxu0 0.0
        %2964 = vmatpush1.msra.mxu0 %v307
        %2965 = vmatprep.subr.mxu0 0.0
        %2966 = vmatpush1.msra.mxu0 %v308
        %2967 = vmatprep.subr.mxu0 0.0
        %2968 = vmatpush1.msra.mxu0 %v309
        %2969 = vmatprep.subr.mxu0 0.0
        %2970 = vmatpush1.msra.mxu0 %v310
        %2971 = vmatprep.subr.mxu0 0.0
        %2972 = vmatpush1.msra.mxu0 %v311
        %2973 = vmatprep.subr.mxu0 0.0
        %2974 = vmatpush1.msra.mxu0 %v312
        %2975 = vmatprep.subr.mxu0 0.0
        %2976 = vmatpush1.msra.mxu0 %v313
        %2977 = vmatprep.subr.mxu0 0.0
        %2978 = vmatpush1.msra.mxu0 %v314
        %2979 = vmatprep.subr.mxu0 0.0
        %2980 = vmatpush1.msra.mxu0 %v315
        %2981 = vmatprep.subr.mxu0 0.0
        %2982 = vmatpush1.msra.mxu0 %v316
        %2983 = vmatprep.subr.mxu0 0.0
        %2984 = vmatpush1.msra.mxu0 %v317
        %2985 = vmatprep.subr.mxu0 0.0
        %2986 = vmatpush1.msra.mxu0 %v318
        %2987 = vmatprep.subr.mxu0 0.0
        %2988 = vmatpush1.msra.mxu0 %v319
        %2989 = vmatprep.subr.mxu0 0.0
        %2990 = vmatpush1.msra.mxu0 %v320
        %2991 = vmatprep.subr.mxu0 0.0
        %2992 = vmatpush1.msra.mxu0 %v321
        %2993 = vmatprep.subr.mxu0 0.0
        %2994 = vmatpush1.msra.mxu0 %v322
        %2995 = vmatprep.subr.mxu0 0.0
        %2996 = vmatpush1.msra.mxu0 %v323
        %2997 = vmatprep.subr.mxu0 0.0
        %2998 = vmatpush1.msra.mxu0 %v324
        %2999 = vmatprep.subr.mxu0 0.0
        %3000 = vmatpush1.msra.mxu0 %v325
        %3001 = vmatprep.subr.mxu0 0.0
        %3002 = vmatpush1.msra.mxu0 %v326
        %3003 = vmatprep.subr.mxu0 0.0
        %3004 = vmatpush1.msra.mxu0 %v327
        %3005 = vmatprep.subr.mxu0 0.0
        %3006 = vmatpush1.msra.mxu0 %v328
        %3007 = vmatprep.subr.mxu0 0.0
        %3008 = vmatpush1.msra.mxu0 %v329
        %3009 = vmatprep.subr.mxu0 0.0
        %3010 = vmatpush1.msra.mxu0 %v330
        %3011 = vmatprep.subr.mxu0 0.0
        %3012 = vmatpush1.msra.mxu0 %v331
        %3013 = vmatprep.subr.mxu0 0.0
        %3014 = vmatpush1.msra.mxu0 %v332
        %3015 = vmatprep.subr.mxu0 0.0
        %3016 = vmatpush1.msra.mxu0 %v333
        %3017 = vmatprep.subr.mxu0 0.0
        %3018 = vmatpush1.msra.mxu0 %v334
        %3019 = vmatprep.subr.mxu0 0.0
        %3020 = vmatpush1.msra.mxu0 %v335
        %3021 = vmatprep.subr.mxu0 0.0
        %3022 = vmatpush1.msra.mxu0 %v336
        %3023 = vmatprep.subr.mxu0 0.0
        %3024 = vmatpush1.msra.mxu0 %v337
        %3025 = vmatprep.mubr.f32.mxu0 %v2949
        %3026 = vmatmul.mubr.f32.gmra.mrb[0].mxu0 %v2940
        %v3027 = vpop.f32.mrb[0].mxu0
        %v3028 = vadd.f32 %v347, %v3027
        %v3029 = vpop.f32.mrb[0].mxu0
        %3030 = vmatprep.mubr.f32.mxu0 %v2950
        %3031 = vmatmul.mubr.f32.gmra.mrb[0].mxu0 %v2941
        %v3032 = vpop.f32.mrb[0].mxu0
        %v3033 = vadd.f32 %v347, %v3032
        %v3034 = vpop.f32.mrb[0].mxu0
        %3035 = vmatprep.mubr.f32.mxu0 %v2951
        %3036 = vmatmul.mubr.f32.gmra.mrb[0].mxu0 %v2942
        %v3037 = vpop.f32.mrb[0].mxu0
        %v3038 = vadd.f32 %v347, %v3037
        %v3039 = vpop.f32.mrb[0].mxu0
        %3040 = vdwg.mxu0
        %3041 = vmatprep.subr.mxu0 0.0
        %3042 = vmatpush1.msra.mxu0 %v338
        %3043 = vmatprep.subr.mxu0 0.0
        %3044 = vmatpush1.msra.mxu0 %v339
        %3045 = vmatprep.subr.mxu0 0.0
        %3046 = vmatpush1.msra.mxu0 %v340
        %3047 = vmatprep.subr.mxu0 0.0
        %3048 = vmatpush1.msra.mxu0 %v341
        %3049 = vmatprep.subr.mxu0 0.0
        %3050 = vmatpush1.msra.mxu0 0.0
        %3051 = vmatprep.subr.mxu0 0.0
        %3052 = vmatpush1.msra.mxu0 0.0
        %3053 = vmatprep.subr.mxu0 0.0
        %3054 = vmatpush1.msra.mxu0 0.0
        %3055 = vmatprep.subr.mxu0 0.0
        %3056 = vmatpush1.msra.mxu0 0.0
        %3057 = vmatprep.subr.mxu0 0.0
        %3058 = vmatpush1.msra.mxu0 0.0
        %3059 = vmatprep.subr.mxu0 0.0
        %3060 = vmatpush1.msra.mxu0 0.0
        %3061 = vmatprep.subr.mxu0 0.0
        %3062 = vmatpush1.msra.mxu0 0.0
        %3063 = vmatprep.subr.mxu0 0.0
        %3064 = vmatpush1.msra.mxu0 0.0
        %3065 = vmatprep.subr.mxu0 0.0
        %3066 = vmatpush1.msra.mxu0 0.0
        %3067 = vmatprep.subr.mxu0 0.0
        %3068 = vmatpush1.msra.mxu0 0.0
        %3069 = vmatprep.subr.mxu0 0.0
        %3070 = vmatpush1.msra.mxu0 0.0
        %3071 = vmatprep.subr.mxu0 0.0
        %3072 = vmatpush1.msra.mxu0 0.0
        %3073 = vmatprep.subr.mxu0 0.0
        %3074 = vmatpush1.msra.mxu0 0.0
        %3075 = vmatprep.subr.mxu0 0.0
        %3076 = vmatpush1.msra.mxu0 0.0
        %3077 = vmatprep.subr.mxu0 0.0
        %3078 = vmatpush1.msra.mxu0 0.0
        %3079 = vmatprep.subr.mxu0 0.0
        %3080 = vmatpush1.msra.mxu0 0.0
        %3081 = vmatprep.subr.mxu0 0.0
        %3082 = vmatpush1.msra.mxu0 0.0
        %3083 = vmatprep.subr.mxu0 0.0
        %3084 = vmatpush1.msra.mxu0 0.0
        %3085 = vmatprep.subr.mxu0 0.0
        %3086 = vmatpush1.msra.mxu0 0.0
        %3087 = vmatprep.subr.mxu0 0.0
        %3088 = vmatpush1.msra.mxu0 0.0
        %3089 = vmatprep.subr.mxu0 0.0
        %3090 = vmatpush1.msra.mxu0 0.0
        %3091 = vmatprep.subr.mxu0 0.0
        %3092 = vmatpush1.msra.mxu0 0.0
        %3093 = vmatprep.subr.mxu0 0.0
        %3094 = vmatpush1.msra.mxu0 0.0
        %3095 = vmatprep.subr.mxu0 0.0
        %3096 = vmatpush1.msra.mxu0 0.0
        %3097 = vmatprep.subr.mxu0 0.0
        %3098 = vmatpush1.msra.mxu0 0.0
        %3099 = vmatprep.subr.mxu0 0.0
        %3100 = vmatpush1.msra.mxu0 0.0
        %3101 = vmatprep.subr.mxu0 0.0
        %3102 = vmatpush1.msra.mxu0 0.0
        %3103 = vmatprep.subr.mxu0 0.0
        %3104 = vmatpush1.msra.mxu0 0.0
        %3105 = vmatprep.mubr.f32.mxu0 0.0
        %3106 = vmatmul.mubr.f32.gmra.mrb[0].mxu0 %v2953
        %v3107 = vpop.f32.mrb[0].mxu0
        %v3108 = vadd.f32 %v3028, %v3107
        %v3109 = vpop.f32.mrb[0].mxu0
        %3110 = vmatprep.mubr.f32.mxu0 0.0
        %3111 = vmatmul.mubr.f32.gmra.mrb[0].mxu0 %v2956
        %v3112 = vpop.f32.mrb[0].mxu0
        %v3113 = vadd.f32 %v3033, %v3112
        %v3114 = vpop.f32.mrb[0].mxu0
        %3115 = vmatprep.mubr.f32.mxu0 0.0
        %3116 = vmatmul.mubr.f32.gmra.mrb[0].mxu0 %v2959
        %v3117 = vpop.f32.mrb[0].mxu0
        %v3118 = vadd.f32 %v3038, %v3117
        %v3119 = vpop.f32.mrb[0].mxu0
        %3120 = vdwg.mxu0
        %v3121 = vmax.f32 %v3108, 0.0
        %v3122 = vmax.f32 %v3113, 0.0
        %v3123 = vmax.f32 %v3118, 0.0
        %s3124 = scalar_lea.vmem %s178, 312
        %v3125 = vld [vmem:[%s3124] sm:$0xff]
        %v3126 = vld [vmem:[%s3124 + $0x8] sm:$0xff]
        %v3127 = vld [vmem:[%s3124 + $0x10] sm:$0xf]
        %v3128 = vld [vmem:[%s3124 + $0x1] sm:$0xff]
        %v3129 = vld [vmem:[%s3124 + $0x9] sm:$0xff]
        %v3130 = vld [vmem:[%s3124 + $0x11] sm:$0xf]
        %v3131 = vld [vmem:[%s3124 + $0x2] sm:$0xff]
        %v3132 = vld [vmem:[%s3124 + $0xa] sm:$0xff]
        %v3133 = vld [vmem:[%s3124 + $0x12] sm:$0xf]
        %3134 = vrot.lane.b32.xlu0 %v2608, 32
        %v3135 = vpop.permute.xlu0 %3134
        %3136 = vrot.lane.b32.xlu0 %v2609, 32
        %v3137 = vpop.permute.xlu0 %3136
        %3138 = vrot.lane.b32.xlu0 %v2610, 32
        %v3139 = vpop.permute.xlu0 %3138
        %3143 = vrot.lane.b32.xlu0 %v2611, 64
        %v3144 = vpop.permute.xlu0 %3143
        %3145 = vrot.lane.b32.xlu0 %v2612, 64
        %v3146 = vpop.permute.xlu0 %3145
        %3147 = vrot.lane.b32.xlu0 %v2613, 64
        %v3148 = vpop.permute.xlu0 %3147
        %3152 = vrot.lane.b32.xlu0 %v2865, 96
        %v3153 = vpop.permute.xlu0 %3152
        %3154 = vrot.lane.b32.xlu0 %v2866, 96
        %v3155 = vpop.permute.xlu0 %3154
        %3156 = vrot.lane.b32.xlu0 %v2867, 96
        %v3157 = vpop.permute.xlu0 %3156
        %3161 = vrot.lane.b32.xlu0 %v2871, 32
        %v3162 = vpop.permute.xlu0 %3161
        %3163 = vrot.lane.b32.xlu0 %v2872, 32
        %v3164 = vpop.permute.xlu0 %3163
        %3165 = vrot.lane.b32.xlu0 %v2873, 32
        %v3166 = vpop.permute.xlu0 %3165
        %3173 = vrot.lane.b32.xlu0 %v3125, 64
        %v3174 = vpop.permute.xlu0 %3173
        %3175 = vrot.lane.b32.xlu0 %v3126, 64
        %v3176 = vpop.permute.xlu0 %3175
        %3177 = vrot.lane.b32.xlu0 %v3127, 64
        %v3178 = vpop.permute.xlu0 %3177
        %3185 = vrot.lane.b32.xlu0 %v3128, 96
        %v3186 = vpop.permute.xlu0 %3185
        %3187 = vrot.lane.b32.xlu0 %v3129, 96
        %v3188 = vpop.permute.xlu0 %3187
        %3189 = vrot.lane.b32.xlu0 %v3130, 96
        %v3190 = vpop.permute.xlu0 %3189
        %v3194 = vsel %vm285, %v2605, %v3135
        %v3195 = vsel %vm285, %v2606, %v3137
        %v3196 = vsel %vm285, %v2607, %v3139
        %v3197 = vsel %vm289, %v3194, %v3144
        %v3198 = vsel %vm289, %v3195, %v3146
        %v3199 = vsel %vm289, %v3196, %v3148
        %v3200 = vsel %vm293, %v3197, %v3153
        %v3201 = vsel %vm293, %v3198, %v3155
        %v3202 = vsel %vm293, %v3199, %v3157
        %v3203 = vsel %vm285, %v2868, %v3162
        %v3204 = vsel %vm285, %v2869, %v3164
        %v3205 = vsel %vm285, %v2870, %v3166
        %v3206 = vsel %vm289, %v3203, %v3174
        %v3207 = vsel %vm289, %v3204, %v3176
        %v3208 = vsel %vm289, %v3205, %v3178
        %v3209 = vsel %vm293, %v3206, %v3186
        %v3210 = vsel %vm293, %v3207, %v3188
        %v3211 = vsel %vm293, %v3208, %v3190
        %v3213 = vsel %vm285, %v3131, 0
        %v3216 = vsel %vm285, %v3132, 0
        %v3219 = vsel %vm285, %v3133, 0
        %3221 = vmatprep.subr.mxu0 0.0
        %3222 = vmatpush1.msra.mxu0 %v306
        %3223 = vmatprep.subr.mxu0 0.0
        %3224 = vmatpush1.msra.mxu0 %v307
        %3225 = vmatprep.subr.mxu0 0.0
        %3226 = vmatpush1.msra.mxu0 %v308
        %3227 = vmatprep.subr.mxu0 0.0
        %3228 = vmatpush1.msra.mxu0 %v309
        %3229 = vmatprep.subr.mxu0 0.0
        %3230 = vmatpush1.msra.mxu0 %v310
        %3231 = vmatprep.subr.mxu0 0.0
        %3232 = vmatpush1.msra.mxu0 %v311
        %3233 = vmatprep.subr.mxu0 0.0
        %3234 = vmatpush1.msra.mxu0 %v312
        %3235 = vmatprep.subr.mxu0 0.0
        %3236 = vmatpush1.msra.mxu0 %v313
        %3237 = vmatprep.subr.mxu0 0.0
        %3238 = vmatpush1.msra.mxu0 %v314
        %3239 = vmatprep.subr.mxu0 0.0
        %3240 = vmatpush1.msra.mxu0 %v315
        %3241 = vmatprep.subr.mxu0 0.0
        %3242 = vmatpush1.msra.mxu0 %v316
        %3243 = vmatprep.subr.mxu0 0.0
        %3244 = vmatpush1.msra.mxu0 %v317
        %3245 = vmatprep.subr.mxu0 0.0
        %3246 = vmatpush1.msra.mxu0 %v318
        %3247 = vmatprep.subr.mxu0 0.0
        %3248 = vmatpush1.msra.mxu0 %v319
        %3249 = vmatprep.subr.mxu0 0.0
        %3250 = vmatpush1.msra.mxu0 %v320
        %3251 = vmatprep.subr.mxu0 0.0
        %3252 = vmatpush1.msra.mxu0 %v321
        %3253 = vmatprep.subr.mxu0 0.0
        %3254 = vmatpush1.msra.mxu0 %v322
        %3255 = vmatprep.subr.mxu0 0.0
        %3256 = vmatpush1.msra.mxu0 %v323
        %3257 = vmatprep.subr.mxu0 0.0
        %3258 = vmatpush1.msra.mxu0 %v324
        %3259 = vmatprep.subr.mxu0 0.0
        %3260 = vmatpush1.msra.mxu0 %v325
        %3261 = vmatprep.subr.mxu0 0.0
        %3262 = vmatpush1.msra.mxu0 %v326
        %3263 = vmatprep.subr.mxu0 0.0
        %3264 = vmatpush1.msra.mxu0 %v327
        %3265 = vmatprep.subr.mxu0 0.0
        %3266 = vmatpush1.msra.mxu0 %v328
        %3267 = vmatprep.subr.mxu0 0.0
        %3268 = vmatpush1.msra.mxu0 %v329
        %3269 = vmatprep.subr.mxu0 0.0
        %3270 = vmatpush1.msra.mxu0 %v330
        %3271 = vmatprep.subr.mxu0 0.0
        %3272 = vmatpush1.msra.mxu0 %v331
        %3273 = vmatprep.subr.mxu0 0.0
        %3274 = vmatpush1.msra.mxu0 %v332
        %3275 = vmatprep.subr.mxu0 0.0
        %3276 = vmatpush1.msra.mxu0 %v333
        %3277 = vmatprep.subr.mxu0 0.0
        %3278 = vmatpush1.msra.mxu0 %v334
        %3279 = vmatprep.subr.mxu0 0.0
        %3280 = vmatpush1.msra.mxu0 %v335
        %3281 = vmatprep.subr.mxu0 0.0
        %3282 = vmatpush1.msra.mxu0 %v336
        %3283 = vmatprep.subr.mxu0 0.0
        %3284 = vmatpush1.msra.mxu0 %v337
        %3285 = vmatprep.mubr.f32.mxu0 %v3209
        %3286 = vmatmul.mubr.f32.gmra.mrb[0].mxu0 %v3200
        %v3287 = vpop.f32.mrb[0].mxu0
        %v3288 = vadd.f32 %v347, %v3287
        %v3289 = vpop.f32.mrb[0].mxu0
        %3290 = vmatprep.mubr.f32.mxu0 %v3210
        %3291 = vmatmul.mubr.f32.gmra.mrb[0].mxu0 %v3201
        %v3292 = vpop.f32.mrb[0].mxu0
        %v3293 = vadd.f32 %v347, %v3292
        %v3294 = vpop.f32.mrb[0].mxu0
        %3295 = vmatprep.mubr.f32.mxu0 %v3211
        %3296 = vmatmul.mubr.f32.gmra.mrb[0].mxu0 %v3202
        %v3297 = vpop.f32.mrb[0].mxu0
        %v3298 = vadd.f32 %v347, %v3297
        %v3299 = vpop.f32.mrb[0].mxu0
        %3300 = vdwg.mxu0
        %3301 = vmatprep.subr.mxu0 0.0
        %3302 = vmatpush1.msra.mxu0 %v338
        %3303 = vmatprep.subr.mxu0 0.0
        %3304 = vmatpush1.msra.mxu0 %v339
        %3305 = vmatprep.subr.mxu0 0.0
        %3306 = vmatpush1.msra.mxu0 %v340
        %3307 = vmatprep.subr.mxu0 0.0
        %3308 = vmatpush1.msra.mxu0 %v341
        %3309 = vmatprep.subr.mxu0 0.0
        %3310 = vmatpush1.msra.mxu0 0.0
        %3311 = vmatprep.subr.mxu0 0.0
        %3312 = vmatpush1.msra.mxu0 0.0
        %3313 = vmatprep.subr.mxu0 0.0
        %3314 = vmatpush1.msra.mxu0 0.0
        %3315 = vmatprep.subr.mxu0 0.0
        %3316 = vmatpush1.msra.mxu0 0.0
        %3317 = vmatprep.subr.mxu0 0.0
        %3318 = vmatpush1.msra.mxu0 0.0
        %3319 = vmatprep.subr.mxu0 0.0
        %3320 = vmatpush1.msra.mxu0 0.0
        %3321 = vmatprep.subr.mxu0 0.0
        %3322 = vmatpush1.msra.mxu0 0.0
        %3323 = vmatprep.subr.mxu0 0.0
        %3324 = vmatpush1.msra.mxu0 0.0
        %3325 = vmatprep.subr.mxu0 0.0
        %3326 = vmatpush1.msra.mxu0 0.0
        %3327 = vmatprep.subr.mxu0 0.0
        %3328 = vmatpush1.msra.mxu0 0.0
        %3329 = vmatprep.subr.mxu0 0.0
        %3330 = vmatpush1.msra.mxu0 0.0
        %3331 = vmatprep.subr.mxu0 0.0
        %3332 = vmatpush1.msra.mxu0 0.0
        %3333 = vmatprep.subr.mxu0 0.0
        %3334 = vmatpush1.msra.mxu0 0.0
        %3335 = vmatprep.subr.mxu0 0.0
        %3336 = vmatpush1.msra.mxu0 0.0
        %3337 = vmatprep.subr.mxu0 0.0
        %3338 = vmatpush1.msra.mxu0 0.0
        %3339 = vmatprep.subr.mxu0 0.0
        %3340 = vmatpush1.msra.mxu0 0.0
        %3341 = vmatprep.subr.mxu0 0.0
        %3342 = vmatpush1.msra.mxu0 0.0
        %3343 = vmatprep.subr.mxu0 0.0
        %3344 = vmatpush1.msra.mxu0 0.0
        %3345 = vmatprep.subr.mxu0 0.0
        %3346 = vmatpush1.msra.mxu0 0.0
        %3347 = vmatprep.subr.mxu0 0.0
        %3348 = vmatpush1.msra.mxu0 0.0
        %3349 = vmatprep.subr.mxu0 0.0
        %3350 = vmatpush1.msra.mxu0 0.0
        %3351 = vmatprep.subr.mxu0 0.0
        %3352 = vmatpush1.msra.mxu0 0.0
        %3353 = vmatprep.subr.mxu0 0.0
        %3354 = vmatpush1.msra.mxu0 0.0
        %3355 = vmatprep.subr.mxu0 0.0
        %3356 = vmatpush1.msra.mxu0 0.0
        %3357 = vmatprep.subr.mxu0 0.0
        %3358 = vmatpush1.msra.mxu0 0.0
        %3359 = vmatprep.subr.mxu0 0.0
        %3360 = vmatpush1.msra.mxu0 0.0
        %3361 = vmatprep.subr.mxu0 0.0
        %3362 = vmatpush1.msra.mxu0 0.0
        %3363 = vmatprep.subr.mxu0 0.0
        %3364 = vmatpush1.msra.mxu0 0.0
        %3365 = vmatprep.mubr.f32.mxu0 0.0
        %3366 = vmatmul.mubr.f32.gmra.mrb[0].mxu0 %v3213
        %v3367 = vpop.f32.mrb[0].mxu0
        %v3368 = vadd.f32 %v3288, %v3367
        %v3369 = vpop.f32.mrb[0].mxu0
        %3370 = vmatprep.mubr.f32.mxu0 0.0
        %3371 = vmatmul.mubr.f32.gmra.mrb[0].mxu0 %v3216
        %v3372 = vpop.f32.mrb[0].mxu0
        %v3373 = vadd.f32 %v3293, %v3372
        %v3374 = vpop.f32.mrb[0].mxu0
        %3375 = vmatprep.mubr.f32.mxu0 0.0
        %3376 = vmatmul.mubr.f32.gmra.mrb[0].mxu0 %v3219
        %v3377 = vpop.f32.mrb[0].mxu0
        %v3378 = vadd.f32 %v3298, %v3377
        %v3379 = vpop.f32.mrb[0].mxu0
        %3380 = vdwg.mxu0
        %v3381 = vmax.f32 %v3368, 0.0
        %v3382 = vmax.f32 %v3373, 0.0
        %v3383 = vmax.f32 %v3378, 0.0
        %s3384 = scalar_lea.vmem %s178, 336
        %v3385 = vld [vmem:[%s3384] sm:$0xff]
        %v3386 = vld [vmem:[%s3384 + $0x8] sm:$0xff]
        %v3387 = vld [vmem:[%s3384 + $0x10] sm:$0xf]
        %v3388 = vld [vmem:[%s3384 + $0x1] sm:$0xff]
        %v3389 = vld [vmem:[%s3384 + $0x9] sm:$0xff]
        %v3390 = vld [vmem:[%s3384 + $0x11] sm:$0xf]
        %v3391 = vld [vmem:[%s3384 + $0x2] sm:$0xff]
        %v3392 = vld [vmem:[%s3384 + $0xa] sm:$0xff]
        %v3393 = vld [vmem:[%s3384 + $0x12] sm:$0xf]
        %3394 = vrot.lane.b32.xlu0 %v2868, 32
        %v3395 = vpop.permute.xlu0 %3394
        %3396 = vrot.lane.b32.xlu0 %v2869, 32
        %v3397 = vpop.permute.xlu0 %3396
        %3398 = vrot.lane.b32.xlu0 %v2870, 32
        %v3399 = vpop.permute.xlu0 %3398
        %3403 = vrot.lane.b32.xlu0 %v2871, 64
        %v3404 = vpop.permute.xlu0 %3403
        %3405 = vrot.lane.b32.xlu0 %v2872, 64
        %v3406 = vpop.permute.xlu0 %3405
        %3407 = vrot.lane.b32.xlu0 %v2873, 64
        %v3408 = vpop.permute.xlu0 %3407
        %3412 = vrot.lane.b32.xlu0 %v3125, 96
        %v3413 = vpop.permute.xlu0 %3412
        %3414 = vrot.lane.b32.xlu0 %v3126, 96
        %v3415 = vpop.permute.xlu0 %3414
        %3416 = vrot.lane.b32.xlu0 %v3127, 96
        %v3417 = vpop.permute.xlu0 %3416
        %3421 = vrot.lane.b32.xlu0 %v3131, 32
        %v3422 = vpop.permute.xlu0 %3421
        %3423 = vrot.lane.b32.xlu0 %v3132, 32
        %v3424 = vpop.permute.xlu0 %3423
        %3425 = vrot.lane.b32.xlu0 %v3133, 32
        %v3426 = vpop.permute.xlu0 %3425
        %3433 = vrot.lane.b32.xlu0 %v3385, 64
        %v3434 = vpop.permute.xlu0 %3433
        %3435 = vrot.lane.b32.xlu0 %v3386, 64
        %v3436 = vpop.permute.xlu0 %3435
        %3437 = vrot.lane.b32.xlu0 %v3387, 64
        %v3438 = vpop.permute.xlu0 %3437
        %3445 = vrot.lane.b32.xlu0 %v3388, 96
        %v3446 = vpop.permute.xlu0 %3445
        %3447 = vrot.lane.b32.xlu0 %v3389, 96
        %v3448 = vpop.permute.xlu0 %3447
        %3449 = vrot.lane.b32.xlu0 %v3390, 96
        %v3450 = vpop.permute.xlu0 %3449
        %v3454 = vsel %vm285, %v2865, %v3395
        %v3455 = vsel %vm285, %v2866, %v3397
        %v3456 = vsel %vm285, %v2867, %v3399
        %v3457 = vsel %vm289, %v3454, %v3404
        %v3458 = vsel %vm289, %v3455, %v3406
        %v3459 = vsel %vm289, %v3456, %v3408
        %v3460 = vsel %vm293, %v3457, %v3413
        %v3461 = vsel %vm293, %v3458, %v3415
        %v3462 = vsel %vm293, %v3459, %v3417
        %v3463 = vsel %vm285, %v3128, %v3422
        %v3464 = vsel %vm285, %v3129, %v3424
        %v3465 = vsel %vm285, %v3130, %v3426
        %v3466 = vsel %vm289, %v3463, %v3434
        %v3467 = vsel %vm289, %v3464, %v3436
        %v3468 = vsel %vm289, %v3465, %v3438
        %v3469 = vsel %vm293, %v3466, %v3446
        %v3470 = vsel %vm293, %v3467, %v3448
        %v3471 = vsel %vm293, %v3468, %v3450
        %v3473 = vsel %vm285, %v3391, 0
        %v3476 = vsel %vm285, %v3392, 0
        %v3479 = vsel %vm285, %v3393, 0
        %3481 = vmatprep.subr.mxu0 0.0
        %3482 = vmatpush1.msra.mxu0 %v306
        %3483 = vmatprep.subr.mxu0 0.0
        %3484 = vmatpush1.msra.mxu0 %v307
        %3485 = vmatprep.subr.mxu0 0.0
        %3486 = vmatpush1.msra.mxu0 %v308
        %3487 = vmatprep.subr.mxu0 0.0
        %3488 = vmatpush1.msra.mxu0 %v309
        %3489 = vmatprep.subr.mxu0 0.0
        %3490 = vmatpush1.msra.mxu0 %v310
        %3491 = vmatprep.subr.mxu0 0.0
        %3492 = vmatpush1.msra.mxu0 %v311
        %3493 = vmatprep.subr.mxu0 0.0
        %3494 = vmatpush1.msra.mxu0 %v312
        %3495 = vmatprep.subr.mxu0 0.0
        %3496 = vmatpush1.msra.mxu0 %v313
        %3497 = vmatprep.subr.mxu0 0.0
        %3498 = vmatpush1.msra.mxu0 %v314
        %3499 = vmatprep.subr.mxu0 0.0
        %3500 = vmatpush1.msra.mxu0 %v315
        %3501 = vmatprep.subr.mxu0 0.0
        %3502 = vmatpush1.msra.mxu0 %v316
        %3503 = vmatprep.subr.mxu0 0.0
        %3504 = vmatpush1.msra.mxu0 %v317
        %3505 = vmatprep.subr.mxu0 0.0
        %3506 = vmatpush1.msra.mxu0 %v318
        %3507 = vmatprep.subr.mxu0 0.0
        %3508 = vmatpush1.msra.mxu0 %v319
        %3509 = vmatprep.subr.mxu0 0.0
        %3510 = vmatpush1.msra.mxu0 %v320
        %3511 = vmatprep.subr.mxu0 0.0
        %3512 = vmatpush1.msra.mxu0 %v321
        %3513 = vmatprep.subr.mxu0 0.0
        %3514 = vmatpush1.msra.mxu0 %v322
        %3515 = vmatprep.subr.mxu0 0.0
        %3516 = vmatpush1.msra.mxu0 %v323
        %3517 = vmatprep.subr.mxu0 0.0
        %3518 = vmatpush1.msra.mxu0 %v324
        %3519 = vmatprep.subr.mxu0 0.0
        %3520 = vmatpush1.msra.mxu0 %v325
        %3521 = vmatprep.subr.mxu0 0.0
        %3522 = vmatpush1.msra.mxu0 %v326
        %3523 = vmatprep.subr.mxu0 0.0
        %3524 = vmatpush1.msra.mxu0 %v327
        %3525 = vmatprep.subr.mxu0 0.0
        %3526 = vmatpush1.msra.mxu0 %v328
        %3527 = vmatprep.subr.mxu0 0.0
        %3528 = vmatpush1.msra.mxu0 %v329
        %3529 = vmatprep.subr.mxu0 0.0
        %3530 = vmatpush1.msra.mxu0 %v330
        %3531 = vmatprep.subr.mxu0 0.0
        %3532 = vmatpush1.msra.mxu0 %v331
        %3533 = vmatprep.subr.mxu0 0.0
        %3534 = vmatpush1.msra.mxu0 %v332
        %3535 = vmatprep.subr.mxu0 0.0
        %3536 = vmatpush1.msra.mxu0 %v333
        %3537 = vmatprep.subr.mxu0 0.0
        %3538 = vmatpush1.msra.mxu0 %v334
        %3539 = vmatprep.subr.mxu0 0.0
        %3540 = vmatpush1.msra.mxu0 %v335
        %3541 = vmatprep.subr.mxu0 0.0
        %3542 = vmatpush1.msra.mxu0 %v336
        %3543 = vmatprep.subr.mxu0 0.0
        %3544 = vmatpush1.msra.mxu0 %v337
        %3545 = vmatprep.mubr.f32.mxu0 %v3469
        %3546 = vmatmul.mubr.f32.gmra.mrb[0].mxu0 %v3460
        %v3547 = vpop.f32.mrb[0].mxu0
        %v3548 = vadd.f32 %v347, %v3547
        %v3549 = vpop.f32.mrb[0].mxu0
        %3550 = vmatprep.mubr.f32.mxu0 %v3470
        %3551 = vmatmul.mubr.f32.gmra.mrb[0].mxu0 %v3461
        %v3552 = vpop.f32.mrb[0].mxu0
        %v3553 = vadd.f32 %v347, %v3552
        %v3554 = vpop.f32.mrb[0].mxu0
        %3555 = vmatprep.mubr.f32.mxu0 %v3471
        %3556 = vmatmul.mubr.f32.gmra.mrb[0].mxu0 %v3462
        %v3557 = vpop.f32.mrb[0].mxu0
        %v3558 = vadd.f32 %v347, %v3557
        %v3559 = vpop.f32.mrb[0].mxu0
        %3560 = vdwg.mxu0
        %3561 = vmatprep.subr.mxu0 0.0
        %3562 = vmatpush1.msra.mxu0 %v338
        %3563 = vmatprep.subr.mxu0 0.0
        %3564 = vmatpush1.msra.mxu0 %v339
        %3565 = vmatprep.subr.mxu0 0.0
        %3566 = vmatpush1.msra.mxu0 %v340
        %3567 = vmatprep.subr.mxu0 0.0
        %3568 = vmatpush1.msra.mxu0 %v341
        %3569 = vmatprep.subr.mxu0 0.0
        %3570 = vmatpush1.msra.mxu0 0.0
        %3571 = vmatprep.subr.mxu0 0.0
        %3572 = vmatpush1.msra.mxu0 0.0
        %3573 = vmatprep.subr.mxu0 0.0
        %3574 = vmatpush1.msra.mxu0 0.0
        %3575 = vmatprep.subr.mxu0 0.0
        %3576 = vmatpush1.msra.mxu0 0.0
        %3577 = vmatprep.subr.mxu0 0.0
        %3578 = vmatpush1.msra.mxu0 0.0
        %3579 = vmatprep.subr.mxu0 0.0
        %3580 = vmatpush1.msra.mxu0 0.0
        %3581 = vmatprep.subr.mxu0 0.0
        %3582 = vmatpush1.msra.mxu0 0.0
        %3583 = vmatprep.subr.mxu0 0.0
        %3584 = vmatpush1.msra.mxu0 0.0
        %3585 = vmatprep.subr.mxu0 0.0
        %3586 = vmatpush1.msra.mxu0 0.0
        %3587 = vmatprep.subr.mxu0 0.0
        %3588 = vmatpush1.msra.mxu0 0.0
        %3589 = vmatprep.subr.mxu0 0.0
        %3590 = vmatpush1.msra.mxu0 0.0
        %3591 = vmatprep.subr.mxu0 0.0
        %3592 = vmatpush1.msra.mxu0 0.0
        %3593 = vmatprep.subr.mxu0 0.0
        %3594 = vmatpush1.msra.mxu0 0.0
        %3595 = vmatprep.subr.mxu0 0.0
        %3596 = vmatpush1.msra.mxu0 0.0
        %3597 = vmatprep.subr.mxu0 0.0
        %3598 = vmatpush1.msra.mxu0 0.0
        %3599 = vmatprep.subr.mxu0 0.0
        %3600 = vmatpush1.msra.mxu0 0.0
        %3601 = vmatprep.subr.mxu0 0.0
        %3602 = vmatpush1.msra.mxu0 0.0
        %3603 = vmatprep.subr.mxu0 0.0
        %3604 = vmatpush1.msra.mxu0 0.0
        %3605 = vmatprep.subr.mxu0 0.0
        %3606 = vmatpush1.msra.mxu0 0.0
        %3607 = vmatprep.subr.mxu0 0.0
        %3608 = vmatpush1.msra.mxu0 0.0
        %3609 = vmatprep.subr.mxu0 0.0
        %3610 = vmatpush1.msra.mxu0 0.0
        %3611 = vmatprep.subr.mxu0 0.0
        %3612 = vmatpush1.msra.mxu0 0.0
        %3613 = vmatprep.subr.mxu0 0.0
        %3614 = vmatpush1.msra.mxu0 0.0
        %3615 = vmatprep.subr.mxu0 0.0
        %3616 = vmatpush1.msra.mxu0 0.0
        %3617 = vmatprep.subr.mxu0 0.0
        %3618 = vmatpush1.msra.mxu0 0.0
        %3619 = vmatprep.subr.mxu0 0.0
        %3620 = vmatpush1.msra.mxu0 0.0
        %3621 = vmatprep.subr.mxu0 0.0
        %3622 = vmatpush1.msra.mxu0 0.0
        %3623 = vmatprep.subr.mxu0 0.0
        %3624 = vmatpush1.msra.mxu0 0.0
        %3625 = vmatprep.mubr.f32.mxu0 0.0
        %3626 = vmatmul.mubr.f32.gmra.mrb[0].mxu0 %v3473
        %v3627 = vpop.f32.mrb[0].mxu0
        %v3628 = vadd.f32 %v3548, %v3627
        %v3629 = vpop.f32.mrb[0].mxu0
        %3630 = vmatprep.mubr.f32.mxu0 0.0
        %3631 = vmatmul.mubr.f32.gmra.mrb[0].mxu0 %v3476
        %v3632 = vpop.f32.mrb[0].mxu0
        %v3633 = vadd.f32 %v3553, %v3632
        %v3634 = vpop.f32.mrb[0].mxu0
        %3635 = vmatprep.mubr.f32.mxu0 0.0
        %3636 = vmatmul.mubr.f32.gmra.mrb[0].mxu0 %v3479
        %v3637 = vpop.f32.mrb[0].mxu0
        %v3638 = vadd.f32 %v3558, %v3637
        %v3639 = vpop.f32.mrb[0].mxu0
        %3640 = vdwg.mxu0
        %v3641 = vmax.f32 %v3628, 0.0
        %v3642 = vmax.f32 %v3633, 0.0
        %v3643 = vmax.f32 %v3638, 0.0
        %s3644 = scalar_lea.vmem %s178, 360
        %v3645 = vld [vmem:[%s3644] sm:$0xff]
        %v3646 = vld [vmem:[%s3644 + $0x8] sm:$0xff]
        %v3647 = vld [vmem:[%s3644 + $0x10] sm:$0xf]
        %v3648 = vld [vmem:[%s3644 + $0x1] sm:$0xff]
        %v3649 = vld [vmem:[%s3644 + $0x9] sm:$0xff]
        %v3650 = vld [vmem:[%s3644 + $0x11] sm:$0xf]
        %v3651 = vld [vmem:[%s3644 + $0x2] sm:$0xff]
        %v3652 = vld [vmem:[%s3644 + $0xa] sm:$0xff]
        %v3653 = vld [vmem:[%s3644 + $0x12] sm:$0xf]
        %3654 = vrot.lane.b32.xlu0 %v3128, 32
        %v3655 = vpop.permute.xlu0 %3654
        %3656 = vrot.lane.b32.xlu0 %v3129, 32
        %v3657 = vpop.permute.xlu0 %3656
        %3658 = vrot.lane.b32.xlu0 %v3130, 32
        %v3659 = vpop.permute.xlu0 %3658
        %3663 = vrot.lane.b32.xlu0 %v3131, 64
        %v3664 = vpop.permute.xlu0 %3663
        %3665 = vrot.lane.b32.xlu0 %v3132, 64
        %v3666 = vpop.permute.xlu0 %3665
        %3667 = vrot.lane.b32.xlu0 %v3133, 64
        %v3668 = vpop.permute.xlu0 %3667
        %3672 = vrot.lane.b32.xlu0 %v3385, 96
        %v3673 = vpop.permute.xlu0 %3672
        %3674 = vrot.lane.b32.xlu0 %v3386, 96
        %v3675 = vpop.permute.xlu0 %3674
        %3676 = vrot.lane.b32.xlu0 %v3387, 96
        %v3677 = vpop.permute.xlu0 %3676
        %3681 = vrot.lane.b32.xlu0 %v3391, 32
        %v3682 = vpop.permute.xlu0 %3681
        %3683 = vrot.lane.b32.xlu0 %v3392, 32
        %v3684 = vpop.permute.xlu0 %3683
        %3685 = vrot.lane.b32.xlu0 %v3393, 32
        %v3686 = vpop.permute.xlu0 %3685
        %3693 = vrot.lane.b32.xlu0 %v3645, 64
        %v3694 = vpop.permute.xlu0 %3693
        %3695 = vrot.lane.b32.xlu0 %v3646, 64
        %v3696 = vpop.permute.xlu0 %3695
        %3697 = vrot.lane.b32.xlu0 %v3647, 64
        %v3698 = vpop.permute.xlu0 %3697
        %3705 = vrot.lane.b32.xlu0 %v3648, 96
        %v3706 = vpop.permute.xlu0 %3705
        %3707 = vrot.lane.b32.xlu0 %v3649, 96
        %v3708 = vpop.permute.xlu0 %3707
        %3709 = vrot.lane.b32.xlu0 %v3650, 96
        %v3710 = vpop.permute.xlu0 %3709
        %v3714 = vsel %vm285, %v3125, %v3655
        %v3715 = vsel %vm285, %v3126, %v3657
        %v3716 = vsel %vm285, %v3127, %v3659
        %v3717 = vsel %vm289, %v3714, %v3664
        %v3718 = vsel %vm289, %v3715, %v3666
        %v3719 = vsel %vm289, %v3716, %v3668
        %v3720 = vsel %vm293, %v3717, %v3673
        %v3721 = vsel %vm293, %v3718, %v3675
        %v3722 = vsel %vm293, %v3719, %v3677
        %v3723 = vsel %vm285, %v3388, %v3682
        %v3724 = vsel %vm285, %v3389, %v3684
        %v3725 = vsel %vm285, %v3390, %v3686
        %v3726 = vsel %vm289, %v3723, %v3694
        %v3727 = vsel %vm289, %v3724, %v3696
        %v3728 = vsel %vm289, %v3725, %v3698
        %v3729 = vsel %vm293, %v3726, %v3706
        %v3730 = vsel %vm293, %v3727, %v3708
        %v3731 = vsel %vm293, %v3728, %v3710
        %v3733 = vsel %vm285, %v3651, 0
        %v3736 = vsel %vm285, %v3652, 0
        %v3739 = vsel %vm285, %v3653, 0
        %3741 = vmatprep.subr.mxu0 0.0
        %3742 = vmatpush1.msra.mxu0 %v306
        %3743 = vmatprep.subr.mxu0 0.0
        %3744 = vmatpush1.msra.mxu0 %v307
        %3745 = vmatprep.subr.mxu0 0.0
        %3746 = vmatpush1.msra.mxu0 %v308
        %3747 = vmatprep.subr.mxu0 0.0
        %3748 = vmatpush1.msra.mxu0 %v309
        %3749 = vmatprep.subr.mxu0 0.0
        %3750 = vmatpush1.msra.mxu0 %v310
        %3751 = vmatprep.subr.mxu0 0.0
        %3752 = vmatpush1.msra.mxu0 %v311
        %3753 = vmatprep.subr.mxu0 0.0
        %3754 = vmatpush1.msra.mxu0 %v312
        %3755 = vmatprep.subr.mxu0 0.0
        %3756 = vmatpush1.msra.mxu0 %v313
        %3757 = vmatprep.subr.mxu0 0.0
        %3758 = vmatpush1.msra.mxu0 %v314
        %3759 = vmatprep.subr.mxu0 0.0
        %3760 = vmatpush1.msra.mxu0 %v315
        %3761 = vmatprep.subr.mxu0 0.0
        %3762 = vmatpush1.msra.mxu0 %v316
        %3763 = vmatprep.subr.mxu0 0.0
        %3764 = vmatpush1.msra.mxu0 %v317
        %3765 = vmatprep.subr.mxu0 0.0
        %3766 = vmatpush1.msra.mxu0 %v318
        %3767 = vmatprep.subr.mxu0 0.0
        %3768 = vmatpush1.msra.mxu0 %v319
        %3769 = vmatprep.subr.mxu0 0.0
        %3770 = vmatpush1.msra.mxu0 %v320
        %3771 = vmatprep.subr.mxu0 0.0
        %3772 = vmatpush1.msra.mxu0 %v321
        %3773 = vmatprep.subr.mxu0 0.0
        %3774 = vmatpush1.msra.mxu0 %v322
        %3775 = vmatprep.subr.mxu0 0.0
        %3776 = vmatpush1.msra.mxu0 %v323
        %3777 = vmatprep.subr.mxu0 0.0
        %3778 = vmatpush1.msra.mxu0 %v324
        %3779 = vmatprep.subr.mxu0 0.0
        %3780 = vmatpush1.msra.mxu0 %v325
        %3781 = vmatprep.subr.mxu0 0.0
        %3782 = vmatpush1.msra.mxu0 %v326
        %3783 = vmatprep.subr.mxu0 0.0
        %3784 = vmatpush1.msra.mxu0 %v327
        %3785 = vmatprep.subr.mxu0 0.0
        %3786 = vmatpush1.msra.mxu0 %v328
        %3787 = vmatprep.subr.mxu0 0.0
        %3788 = vmatpush1.msra.mxu0 %v329
        %3789 = vmatprep.subr.mxu0 0.0
        %3790 = vmatpush1.msra.mxu0 %v330
        %3791 = vmatprep.subr.mxu0 0.0
        %3792 = vmatpush1.msra.mxu0 %v331
        %3793 = vmatprep.subr.mxu0 0.0
        %3794 = vmatpush1.msra.mxu0 %v332
        %3795 = vmatprep.subr.mxu0 0.0
        %3796 = vmatpush1.msra.mxu0 %v333
        %3797 = vmatprep.subr.mxu0 0.0
        %3798 = vmatpush1.msra.mxu0 %v334
        %3799 = vmatprep.subr.mxu0 0.0
        %3800 = vmatpush1.msra.mxu0 %v335
        %3801 = vmatprep.subr.mxu0 0.0
        %3802 = vmatpush1.msra.mxu0 %v336
        %3803 = vmatprep.subr.mxu0 0.0
        %3804 = vmatpush1.msra.mxu0 %v337
        %3805 = vmatprep.mubr.f32.mxu0 %v3729
        %3806 = vmatmul.mubr.f32.gmra.mrb[0].mxu0 %v3720
        %v3807 = vpop.f32.mrb[0].mxu0
        %v3808 = vadd.f32 %v347, %v3807
        %v3809 = vpop.f32.mrb[0].mxu0
        %3810 = vmatprep.mubr.f32.mxu0 %v3730
        %3811 = vmatmul.mubr.f32.gmra.mrb[0].mxu0 %v3721
        %v3812 = vpop.f32.mrb[0].mxu0
        %v3813 = vadd.f32 %v347, %v3812
        %v3814 = vpop.f32.mrb[0].mxu0
        %3815 = vmatprep.mubr.f32.mxu0 %v3731
        %3816 = vmatmul.mubr.f32.gmra.mrb[0].mxu0 %v3722
        %v3817 = vpop.f32.mrb[0].mxu0
        %v3818 = vadd.f32 %v347, %v3817
        %v3819 = vpop.f32.mrb[0].mxu0
        %3820 = vdwg.mxu0
        %3821 = vmatprep.subr.mxu0 0.0
        %3822 = vmatpush1.msra.mxu0 %v338
        %3823 = vmatprep.subr.mxu0 0.0
        %3824 = vmatpush1.msra.mxu0 %v339
        %3825 = vmatprep.subr.mxu0 0.0
        %3826 = vmatpush1.msra.mxu0 %v340
        %3827 = vmatprep.subr.mxu0 0.0
        %3828 = vmatpush1.msra.mxu0 %v341
        %3829 = vmatprep.subr.mxu0 0.0
        %3830 = vmatpush1.msra.mxu0 0.0
        %3831 = vmatprep.subr.mxu0 0.0
        %3832 = vmatpush1.msra.mxu0 0.0
        %3833 = vmatprep.subr.mxu0 0.0
        %3834 = vmatpush1.msra.mxu0 0.0
        %3835 = vmatprep.subr.mxu0 0.0
        %3836 = vmatpush1.msra.mxu0 0.0
        %3837 = vmatprep.subr.mxu0 0.0
        %3838 = vmatpush1.msra.mxu0 0.0
        %3839 = vmatprep.subr.mxu0 0.0
        %3840 = vmatpush1.msra.mxu0 0.0
        %3841 = vmatprep.subr.mxu0 0.0
        %3842 = vmatpush1.msra.mxu0 0.0
        %3843 = vmatprep.subr.mxu0 0.0
        %3844 = vmatpush1.msra.mxu0 0.0
        %3845 = vmatprep.subr.mxu0 0.0
        %3846 = vmatpush1.msra.mxu0 0.0
        %3847 = vmatprep.subr.mxu0 0.0
        %3848 = vmatpush1.msra.mxu0 0.0
        %3849 = vmatprep.subr.mxu0 0.0
        %3850 = vmatpush1.msra.mxu0 0.0
        %3851 = vmatprep.subr.mxu0 0.0
        %3852 = vmatpush1.msra.mxu0 0.0
        %3853 = vmatprep.subr.mxu0 0.0
        %3854 = vmatpush1.msra.mxu0 0.0
        %3855 = vmatprep.subr.mxu0 0.0
        %3856 = vmatpush1.msra.mxu0 0.0
        %3857 = vmatprep.subr.mxu0 0.0
        %3858 = vmatpush1.msra.mxu0 0.0
        %3859 = vmatprep.subr.mxu0 0.0
        %3860 = vmatpush1.msra.mxu0 0.0
        %3861 = vmatprep.subr.mxu0 0.0
        %3862 = vmatpush1.msra.mxu0 0.0
        %3863 = vmatprep.subr.mxu0 0.0
        %3864 = vmatpush1.msra.mxu0 0.0
        %3865 = vmatprep.subr.mxu0 0.0
        %3866 = vmatpush1.msra.mxu0 0.0
        %3867 = vmatprep.subr.mxu0 0.0
        %3868 = vmatpush1.msra.mxu0 0.0
        %3869 = vmatprep.subr.mxu0 0.0
        %3870 = vmatpush1.msra.mxu0 0.0
        %3871 = vmatprep.subr.mxu0 0.0
        %3872 = vmatpush1.msra.mxu0 0.0
        %3873 = vmatprep.subr.mxu0 0.0
        %3874 = vmatpush1.msra.mxu0 0.0
        %3875 = vmatprep.subr.mxu0 0.0
        %3876 = vmatpush1.msra.mxu0 0.0
        %3877 = vmatprep.subr.mxu0 0.0
        %3878 = vmatpush1.msra.mxu0 0.0
        %3879 = vmatprep.subr.mxu0 0.0
        %3880 = vmatpush1.msra.mxu0 0.0
        %3881 = vmatprep.subr.mxu0 0.0
        %3882 = vmatpush1.msra.mxu0 0.0
        %3883 = vmatprep.subr.mxu0 0.0
        %3884 = vmatpush1.msra.mxu0 0.0
        %3885 = vmatprep.mubr.f32.mxu0 0.0
        %3886 = vmatmul.mubr.f32.gmra.mrb[0].mxu0 %v3733
        %v3887 = vpop.f32.mrb[0].mxu0
        %v3888 = vadd.f32 %v3808, %v3887
        %v3889 = vpop.f32.mrb[0].mxu0
        %3890 = vmatprep.mubr.f32.mxu0 0.0
        %3891 = vmatmul.mubr.f32.gmra.mrb[0].mxu0 %v3736
        %v3892 = vpop.f32.mrb[0].mxu0
        %v3893 = vadd.f32 %v3813, %v3892
        %v3894 = vpop.f32.mrb[0].mxu0
        %3895 = vmatprep.mubr.f32.mxu0 0.0
        %3896 = vmatmul.mubr.f32.gmra.mrb[0].mxu0 %v3739
        %v3897 = vpop.f32.mrb[0].mxu0
        %v3898 = vadd.f32 %v3818, %v3897
        %v3899 = vpop.f32.mrb[0].mxu0
        %3900 = vdwg.mxu0
        %v3901 = vmax.f32 %v3888, 0.0
        %v3902 = vmax.f32 %v3893, 0.0
        %v3903 = vmax.f32 %v3898, 0.0
        %v3904 = vmax.f32 %v518, %v781
        %v3905 = vmax.f32 %v519, %v782
        %v3906 = vmax.f32 %v520, %v783
        %v3908 = vrot.slane %v3904, 1
        %v3910 = vmax.f32 %v3904, %v3908
        %v3912 = vrot.slane %v3905, 1
        %v3914 = vmax.f32 %v3905, %v3912
        %v3916 = vrot.slane %v3906, 1
        %v3918 = vmax.f32 %v3906, %v3916
        %v3920 = vrot.slane %v3910, 1
        %v3922 = vrot.slane %v3910, 2
        %v3924 = vrot.slane %v3910, 3
        %v3927 = vrot.slane %v3914, 4
        %v3929 = vrot.slane %v3914, 5
        %v3931 = vrot.slane %v3914, 6
        %v3933 = vrot.slane %v3914, 7
        %v3936 = vrot.slane %v3918, 1
        %vm3938 = vcmask 1040384
        %v3939 = vsel %vm3938, %v3910, %v3920
        %vm3940 = vcmask 1041408
        %v3941 = vsel %vm3940, %v3939, %v3922
        %vm3942 = vcmask 1042432
        %v3943 = vsel %vm3942, %v3941, %v3924
        %vm3944 = vcmask 1043456
        %v3945 = vsel %vm3944, %v3943, %v3927
        %vm3946 = vcmask 1044480
        %v3947 = vsel %vm3946, %v3945, %v3929
        %vm3948 = vcmask 1045504
        %v3949 = vsel %vm3948, %v3947, %v3931
        %vm3950 = vcmask 1046528
        %v3951 = vsel %vm3950, %v3949, %v3933
        %v3952 = vsel %vm3938, %v3918, %v3936
        %v3953 = vmax.f32 %v1041, %v1301
        %v3954 = vmax.f32 %v1042, %v1302
        %v3955 = vmax.f32 %v1043, %v1303
        %v3957 = vrot.slane %v3953, 1
        %v3959 = vmax.f32 %v3953, %v3957
        %v3961 = vrot.slane %v3954, 1
        %v3963 = vmax.f32 %v3954, %v3961
        %v3965 = vrot.slane %v3955, 1
        %v3967 = vmax.f32 %v3955, %v3965
        %v3969 = vrot.slane %v3959, 1
        %v3971 = vrot.slane %v3959, 2
        %v3973 = vrot.slane %v3959, 3
        %v3976 = vrot.slane %v3963, 4
        %v3978 = vrot.slane %v3963, 5
        %v3980 = vrot.slane %v3963, 6
        %v3982 = vrot.slane %v3963, 7
        %v3985 = vrot.slane %v3967, 1
        %v3987 = vsel %vm3938, %v3959, %v3969
        %v3988 = vsel %vm3940, %v3987, %v3971
        %v3989 = vsel %vm3942, %v3988, %v3973
        %v3990 = vsel %vm3944, %v3989, %v3976
        %v3991 = vsel %vm3946, %v3990, %v3978
        %v3992 = vsel %vm3948, %v3991, %v3980
        %v3993 = vsel %vm3950, %v3992, %v3982
        %v3994 = vsel %vm3938, %v3967, %v3985
        %v3995 = vmax.f32 %v1561, %v1821
        %v3996 = vmax.f32 %v1562, %v1822
        %v3997 = vmax.f32 %v1563, %v1823
        %v3999 = vrot.slane %v3995, 1
        %v4001 = vmax.f32 %v3995, %v3999
        %v4003 = vrot.slane %v3996, 1
        %v4005 = vmax.f32 %v3996, %v4003
        %v4007 = vrot.slane %v3997, 1
        %v4009 = vmax.f32 %v3997, %v4007
        %v4011 = vrot.slane %v4001, 1
        %v4013 = vrot.slane %v4001, 2
        %v4015 = vrot.slane %v4001, 3
        %v4018 = vrot.slane %v4005, 4
        %v4020 = vrot.slane %v4005, 5
        %v4022 = vrot.slane %v4005, 6
        %v4024 = vrot.slane %v4005, 7
        %v4027 = vrot.slane %v4009, 1
        %v4029 = vsel %vm3938, %v4001, %v4011
        %v4030 = vsel %vm3940, %v4029, %v4013
        %v4031 = vsel %vm3942, %v4030, %v4015
        %v4032 = vsel %vm3944, %v4031, %v4018
        %v4033 = vsel %vm3946, %v4032, %v4020
        %v4034 = vsel %vm3948, %v4033, %v4022
        %v4035 = vsel %vm3950, %v4034, %v4024
        %v4036 = vsel %vm3938, %v4009, %v4027
        %v4037 = vmax.f32 %v2081, %v2341
        %v4038 = vmax.f32 %v2082, %v2342
        %v4039 = vmax.f32 %v2083, %v2343
        %v4041 = vrot.slane %v4037, 1
        %v4043 = vmax.f32 %v4037, %v4041
        %v4045 = vrot.slane %v4038, 1
        %v4047 = vmax.f32 %v4038, %v4045
        %v4049 = vrot.slane %v4039, 1
        %v4051 = vmax.f32 %v4039, %v4049
        %v4053 = vrot.slane %v4043, 1
        %v4055 = vrot.slane %v4043, 2
        %v4057 = vrot.slane %v4043, 3
        %v4060 = vrot.slane %v4047, 4
        %v4062 = vrot.slane %v4047, 5
        %v4064 = vrot.slane %v4047, 6
        %v4066 = vrot.slane %v4047, 7
        %v4069 = vrot.slane %v4051, 1
        %v4071 = vsel %vm3938, %v4043, %v4053
        %v4072 = vsel %vm3940, %v4071, %v4055
        %v4073 = vsel %vm3942, %v4072, %v4057
        %v4074 = vsel %vm3944, %v4073, %v4060
        %v4075 = vsel %vm3946, %v4074, %v4062
        %v4076 = vsel %vm3948, %v4075, %v4064
        %v4077 = vsel %vm3950, %v4076, %v4066
        %v4078 = vsel %vm3938, %v4051, %v4069
        %v4079 = vmax.f32 %v2601, %v2861
        %v4080 = vmax.f32 %v2602, %v2862
        %v4081 = vmax.f32 %v2603, %v2863
        %v4083 = vrot.slane %v4079, 1
        %v4085 = vmax.f32 %v4079, %v4083
        %v4087 = vrot.slane %v4080, 1
        %v4089 = vmax.f32 %v4080, %v4087
        %v4091 = vrot.slane %v4081, 1
        %v4093 = vmax.f32 %v4081, %v4091
        %v4095 = vrot.slane %v4085, 1
        %v4097 = vrot.slane %v4085, 2
        %v4099 = vrot.slane %v4085, 3
        %v4102 = vrot.slane %v4089, 4
        %v4104 = vrot.slane %v4089, 5
        %v4106 = vrot.slane %v4089, 6
        %v4108 = vrot.slane %v4089, 7
        %v4111 = vrot.slane %v4093, 1
        %v4113 = vsel %vm3938, %v4085, %v4095
        %v4114 = vsel %vm3940, %v4113, %v4097
        %v4115 = vsel %vm3942, %v4114, %v4099
        %v4116 = vsel %vm3944, %v4115, %v4102
        %v4117 = vsel %vm3946, %v4116, %v4104
        %v4118 = vsel %vm3948, %v4117, %v4106
        %v4119 = vsel %vm3950, %v4118, %v4108
        %v4120 = vsel %vm3938, %v4093, %v4111
        %v4121 = vmax.f32 %v3121, %v3381
        %v4122 = vmax.f32 %v3122, %v3382
        %v4123 = vmax.f32 %v3123, %v3383
        %v4125 = vrot.slane %v4121, 1
        %v4127 = vmax.f32 %v4121, %v4125
        %v4129 = vrot.slane %v4122, 1
        %v4131 = vmax.f32 %v4122, %v4129
        %v4133 = vrot.slane %v4123, 1
        %v4135 = vmax.f32 %v4123, %v4133
        %v4137 = vrot.slane %v4127, 1
        %v4139 = vrot.slane %v4127, 2
        %v4141 = vrot.slane %v4127, 3
        %v4144 = vrot.slane %v4131, 4
        %v4146 = vrot.slane %v4131, 5
        %v4148 = vrot.slane %v4131, 6
        %v4150 = vrot.slane %v4131, 7
        %v4153 = vrot.slane %v4135, 1
        %v4155 = vsel %vm3938, %v4127, %v4137
        %v4156 = vsel %vm3940, %v4155, %v4139
        %v4157 = vsel %vm3942, %v4156, %v4141
        %v4158 = vsel %vm3944, %v4157, %v4144
        %v4159 = vsel %vm3946, %v4158, %v4146
        %v4160 = vsel %vm3948, %v4159, %v4148
        %v4161 = vsel %vm3950, %v4160, %v4150
        %v4162 = vsel %vm3938, %v4135, %v4153
        %v4163 = vmax.f32 %v3641, %v3901
        %v4164 = vmax.f32 %v3642, %v3902
        %v4165 = vmax.f32 %v3643, %v3903
        %v4167 = vrot.slane %v4163, 1
        %v4169 = vmax.f32 %v4163, %v4167
        %v4171 = vrot.slane %v4164, 1
        %v4173 = vmax.f32 %v4164, %v4171
        %v4175 = vrot.slane %v4165, 1
        %v4177 = vmax.f32 %v4165, %v4175
        %v4179 = vrot.slane %v4169, 1
        %v4181 = vrot.slane %v4169, 2
        %v4183 = vrot.slane %v4169, 3
        %v4186 = vrot.slane %v4173, 4
        %v4188 = vrot.slane %v4173, 5
        %v4190 = vrot.slane %v4173, 6
        %v4192 = vrot.slane %v4173, 7
        %v4195 = vrot.slane %v4177, 1
        %v4197 = vsel %vm3938, %v4169, %v4179
        %v4198 = vsel %vm3940, %v4197, %v4181
        %v4199 = vsel %vm3942, %v4198, %v4183
        %v4200 = vsel %vm3944, %v4199, %v4186
        %v4201 = vsel %vm3946, %v4200, %v4188
        %v4202 = vsel %vm3948, %v4201, %v4190
        %v4203 = vsel %vm3950, %v4202, %v4192
        %v4204 = vsel %vm3938, %v4177, %v4195
        %4205 = vst.msk [vmem:[%s183] sm:$0xff] %vm289, %v3951
        %vm4206 = vcmask 517120
        %4207 = vst.msk [vmem:[%s183 + $0x8] sm:$0x3] %vm4206, %v3952
        %4208 = vst.msk [vmem:[%s183 + $0x10] sm:$0xff] %vm289, %v3993
        %4209 = vst.msk [vmem:[%s183 + $0x18] sm:$0x3] %vm4206, %v3994
        %4210 = vst.msk [vmem:[%s183 + $0x20] sm:$0xff] %vm289, %v4035
        %4211 = vst.msk [vmem:[%s183 + $0x28] sm:$0x3] %vm4206, %v4036
        %4212 = vst.msk [vmem:[%s183 + $0x30] sm:$0xff] %vm289, %v4077
        %4213 = vst.msk [vmem:[%s183 + $0x38] sm:$0x3] %vm4206, %v4078
        %4214 = vst.msk [vmem:[%s183 + $0x40] sm:$0xff] %vm289, %v4119
        %4215 = vst.msk [vmem:[%s183 + $0x48] sm:$0x3] %vm4206, %v4120
        %4216 = vst.msk [vmem:[%s183 + $0x50] sm:$0xff] %vm289, %v4161
        %4217 = vst.msk [vmem:[%s183 + $0x58] sm:$0x3] %vm4206, %v4162
        %4218 = vst.msk [vmem:[%s183 + $0x60] sm:$0xff] %vm289, %v4203
        %4219 = vst.msk [vmem:[%s183 + $0x68] sm:$0x3] %vm4206, %v4204
        %p4220 = scmp.lt.s32.totalorder %s15, 1
        %s4221 = scalar_select %p4220, %s15, 1
        %s4222 = smul.addr %s4221, 14
        %s4223 = smul.addr %s4222, 8
        %s4224 = scalar_lea.vmem %s3, %s4223
        // Predicated region
        $region37: #{cnn_forward.4} parent=31 // pred_check
          %p4225 = pneg %p101
        $region38: #{cnn_forward.4} parent=31 // pred_check_branch
          %4227 = sbr.rel (%p4225) target = $region40
        $region39: #{cnn_forward.4} parent=31 // pred_region
          _
        $region40: #{cnn_forward.4} parent=31 // pred_fallthru
          _
      $region32: #{cnn_forward.4} parent=5 // pred_fallthru
        _
      %p4228 = scmp.le.s32.totalorder 2, %s10
      // Predicated region
      $region41: #{cnn_forward.4} parent=5 // pred_check
        %p4229 = pneg %p4228
      $region42: #{cnn_forward.4} parent=5 // pred_check_branch
        %4231 = sbr.rel (%p4229) target = $region44
      $region43: #{cnn_forward.4} parent=5 // pred_region
        %s4232 = ssub.s32 %s10, 2
        // Predicated region
        $region45: #{cnn_forward.4} parent=43 // pred_check
          %p4233 = pneg %p107
        $region46: #{cnn_forward.4} parent=43 // pred_check_branch
          %4235 = sbr.rel (%p4233) target = $region48
        $region47: #{cnn_forward.4} parent=43 // pred_region
          %p4236 = scmp.lt.s32.totalorder %s16, 1
          %s4237 = scalar_select %p4236, %s16, 1
          %s4238 = smul.addr %s4237, 14
          %s4239 = smul.addr %s4238, 8
          %s4240 = scalar_lea.vmem %s3, %s4239
        $region48: #{cnn_forward.4} parent=43 // pred_fallthru
          _
      $region44: #{cnn_forward.4} parent=5 // pred_fallthru
        _
    $region6: #{cnn_forward.4} parent=1 // loop_footer
      %s14 = sadd.s32 1, %s10
    $region7: #{cnn_forward.4} parent=1 // loop_footer_branch
      %9 = sbr.rel target = $region3
    $region8: #{cnn_forward.4} parent=1 // loop_exit
      _
    %4241 = vsyncpa [#allocation3], 1
    %s4242 = scalar_lea.sflag [#allocation3], 1
    %4243 = vsyncpa %s4242, 1

</llo_original>
